<compile_context>
chip_gen: v6e
topology: v6e:2x2x1
jax: 0.10.0
libtpu: 0.0.40
codegen_flags: <defaults>
</compile_context>

<pallas_src>
import functools

import jax
import jax.numpy as jnp
import numpy as np
from jax.experimental import pallas as pl
from jax.experimental.pallas import tpu as pltpu


def _round_up(v, m):
    return ((v + m - 1) // m) * m


# Transposed-conv tap map: for output parity r and padded-input offset a,
# _KMAP[r][a] is the ConvTranspose3d kernel index feeding that tap (-1 = none).
_KMAP = ((3, 1, -1), (-1, 2, 0))
_DOT_PRECISION = jax.lax.Precision.HIGHEST  # [R4] true-f32 MXU passes


def _upconv_kernel(x_ref, w0_ref, w1_ref, o_ref, col_ref, *, S_dh, S_w, Wout_p):
    """One batch sample.

    x_ref  : (Cin_p, Win)         channels on sublanes, flat padded DHW on lanes
    w0_ref : (4*Cout, 18*Cin_p)   rd=0 parity-x-tap weights (taps a in {0,1})
    w1_ref : (4*Cout, 18*Cin_p)   rd=1 parity-x-tap weights (taps a in {1,2})
    o_ref  : (8*Cout, Wout_p)     flat output, Wout_p = round_up(D*(H+2)*(W+2), 128)
    col_ref: (27*Cin_p, Wout_p)   VMEM im2col scratch (tap-major rows)
    """
    cin_p = x_ref.shape[0]
    x = x_ref[...]                                    # ~9 vregs at toy size
    # im2col: 27 static lane-offset slices of the flattened padded input.
    # TODO(synk): at production sizes split Wout_p into 128-aligned sub-tiles
    # and interleave these copies with per-sub-tile dots so the XLU/vst im2col
    # work hides under the MXU (review: software-pipeline im2col vs matmul).
    tap = 0
    for a in range(3):
        for b in range(3):
            for c in range(3):
                s = a * S_dh + b * S_w + c            # static flat offset
                col_ref[tap * cin_p:(tap + 1) * cin_p, :] = x[:, s:s + Wout_p]
                tap += 1
    # [R1] Depth-parity split over two contiguous row-slices of col_ref.
    nine = 9 * cin_p
    m_half = o_ref.shape[0] // 2
    o_ref[0:m_half, :] = jnp.dot(
        w0_ref[...], col_ref[0:2 * nine, :],
        preferred_element_type=jnp.float32,
        precision=_DOT_PRECISION).astype(o_ref.dtype)
    o_ref[m_half:, :] = jnp.dot(
        w1_ref[...], col_ref[nine:, :],
        preferred_element_type=jnp.float32,
        precision=_DOT_PRECISION).astype(o_ref.dtype)


def build_upconv_weight_slabs(weight_io444, cin_p=None):
    """[R3] Precompute the two depth-parity weight slabs once per weight.

    weight_io444: (Cin, Cout, 4, 4, 4) ConvTranspose3d weight.
    returns (w_rd0, w_rd1), each (4*Cout, 18*Cin_p) float32, column order
    tap-major (a, b, c) x channel, matching the kernel's im2col row order.
    """
    Cin, Cout = weight_io444.shape[0], weight_io444.shape[1]
    assert weight_io444.shape == (Cin, Cout, 4, 4, 4)
    if cin_p is None:
        cin_p = _round_up(Cin, 8)
    w_oi = jnp.transpose(weight_io444.astype(jnp.float32),
                         (1, 0, 2, 3, 4))                      # (Cout, Cin, 4,4,4)
    zero_tap = jnp.zeros((Cout, cin_p), jnp.float32)
    slabs = []
    for rd, a_range in ((0, (0, 1)), (1, (1, 2))):
        parity_blocks = []
        for rh in (0, 1):
            for rw in (0, 1):
                taps = []
                for a in a_range:
                    for b in range(3):
                        for c in range(3):
                            kd, kh, kw = _KMAP[rd][a], _KMAP[rh][b], _KMAP[rw][c]
                            if kd < 0 or kh < 0 or kw < 0:
                                taps.append(zero_tap)
                            else:
                                t = w_oi[:, :, kd, kh, kw]      # (Cout, Cin)
                                taps.append(jnp.pad(t, ((0, 0), (0, cin_p - Cin))))
                parity_blocks.append(jnp.stack(taps, axis=1))   # (Cout, 18, cin_p)
        slabs.append(jnp.stack(parity_blocks, axis=0).reshape(4 * Cout, 18 * cin_p))
    # TODO(synk): if the accuracy budget allows, cast the slabs (and the input)
    # to bfloat16 with f32 accumulation and round cin_p to 16 for bf16 packing.
    return slabs[0], slabs[1]


@jax.jit
def upconv_block_forward(x_ncdhw, w_rd0, w_rd1):
    """UpConvBlock forward: ConvTranspose3d(k=4, s=2, bias=False) + 1-voxel crop.

    x_ncdhw:      (N, Cin, D, H, W) float32 (PyTorch NCDHW layout)
    w_rd0, w_rd1: slabs from build_upconv_weight_slabs
    returns:      (N, Cout, 2D, 2H, 2W)
    """
    N, Cin, D, H, W = x_ncdhw.shape
    M_half, K_half = w_rd0.shape
    assert w_rd1.shape == (M_half, K_half)
    Cout = M_half // 4
    Cin_p = K_half // 18
    assert Cin_p >= Cin and Cin_p % 8 == 0

    S_w = W + 2
    S_dh = (H + 2) * S_w
    P = (D + 2) * S_dh                       # flat padded spatial size
    Wout = D * S_dh                          # valid flat output width
    Wout_p = _round_up(Wout, 128)            # [R2] lane-dense output width
    s_max = 2 * S_dh + 2 * S_w + 2           # largest tap offset
    Win = _round_up(Wout_p + s_max, 128)     # lane-aligned flat input width
    assert Win >= Wout_p + s_max and Win >= P  # [R5] no OOB tap reads

    # --- glue: zero-pad channels + spatial halo, flatten spatial onto lanes.
    # TODO(synk): this pad materialises a second copy of x in HBM; at
    # production sizes pass x with memory_space=pl.ANY, memset a VMEM scratch
    # once per grid step and DMA only the interior (Cin, D, H, W) block into it.
    xp = jnp.pad(x_ncdhw.astype(jnp.float32),
                 ((0, 0), (0, Cin_p - Cin), (1, 1), (1, 1), (1, 1)))
    xf = jnp.pad(xp.reshape(N, Cin_p, P), ((0, 0), (0, 0), (0, Win - P)))

    kernel = functools.partial(_upconv_kernel, S_dh=S_dh, S_w=S_w, Wout_p=Wout_p)
    out_flat = pl.pallas_call(
        kernel,
        out_shape=jax.ShapeDtypeStruct((N, 2 * M_half, Wout_p), jnp.float32),
        grid=(N,),
        in_specs=[
            pl.BlockSpec((None, Cin_p, Win), lambda n: (n, 0, 0)),
            pl.BlockSpec((M_half, K_half), lambda n: (0, 0)),
            pl.BlockSpec((M_half, K_half), lambda n: (0, 0)),
        ],
        out_specs=pl.BlockSpec((None, 2 * M_half, Wout_p), lambda n: (n, 0, 0)),
        scratch_shapes=[pltpu.VMEM((27 * Cin_p, Wout_p), jnp.float32)],
        # TODO(synk): for production D,H,W,Cin add a "parallel" D-tile grid
        # axis (input block takes a +2-plane halo) sized so the 27x-replicated
        # col scratch fits v7x's 64 MiB VMEM and both of its TensorCores stay
        # busy at N==1; v6e/v5e can take ~2x that tile with 128 MiB VMEM.
        compiler_params=pltpu.CompilerParams(
            dimension_semantics=("parallel",),
            vmem_limit_bytes=48 * 1024 * 1024),   # headroom; ~1.4 MiB used here
    )(xf, w_rd0, w_rd1)

    # --- glue: crop lane pad + halo columns, interleave the 8 parity grids.
    # Columns beyond Wout / the (H+2)(W+2) halo are garbage by construction
    # and are dropped here; never consume out_flat directly.
    # TODO(synk): the stride-2 parity interleave re-reads/re-writes the whole
    # output in HBM; move at least the innermost (W, rw) lane interleave into
    # the kernel (XLU) if this transpose shows up at production sizes.
    y = out_flat[:, :, :Wout].reshape(N, 2, 2, 2, Cout, D, H + 2, W + 2)
    y = y[..., :H, :W]                                # drop halo columns
    y = jnp.transpose(y, (0, 4, 5, 1, 6, 2, 7, 3))    # (N,Cout,D,rd,H,rh,W,rw)
    y = y.reshape(N, Cout, 2 * D, 2 * H, 2 * W)
    return y.astype(x_ncdhw.dtype)


def _reference(x, weight):
    """Direct ConvTranspose3d(k=4, s=2, no bias) + crop, mirroring PyTorch."""
    N, Cin, D, H, W = x.shape
    Cout = weight.shape[1]
    out = jnp.zeros((N, Cout, 2 * D + 2, 2 * H + 2, 2 * W + 2), jnp.float32)
    for kd in range(4):
        for kh in range(4):
            for kw in range(4):
                t = jnp.einsum('ncdhw,cm->nmdhw', x, weight[:, :, kd, kh, kw],
                               precision=jax.lax.Precision.HIGHEST)
                out = out.at[:, :,
                             kd:kd + 2 * D:2,
                             kh:kh + 2 * H:2,
                             kw:kw + 2 * W:2].add(t)
    return out[:, :, 1:-1, 1:-1, 1:-1]


if __name__ == "__main__":
    # Small shapes consistent with the module: batch=2, in_ch=4, out_ch=8, 8^3.
    N, Cin, Cout, D, H, W = 2, 4, 8, 8, 8, 8

    key = jax.random.PRNGKey(0)
    kx, kw = jax.random.split(key, 2)
    x = jax.random.normal(kx, (N, Cin, D, H, W), dtype=jnp.float32)
    weight = 0.1 * jax.random.normal(kw, (Cin, Cout, 4, 4, 4), dtype=jnp.float32)

    # [R3] Weight slabs are built once at weight-load time, not per call.
    w_rd0, w_rd1 = build_upconv_weight_slabs(weight)
    w_rd0, w_rd1 = jax.block_until_ready((w_rd0, w_rd1))

    out = upconv_block_forward(x, w_rd0, w_rd1)
    out = jax.block_until_ready(out)
    assert out.shape == (N, Cout, 2 * D, 2 * H, 2 * W), out.shape

    ref = jax.block_until_ready(_reference(x, weight))
    np.testing.assert_allclose(np.asarray(out), np.asarray(ref),
                               rtol=1e-3, atol=1e-4)

    print("KERNEL_OK")
</pallas_src>

<mosaic_0001>
module attributes {stable_mosaic.version = 11 : i64} {
  func.func @_upconv_kernel(%arg0: i32, %arg1: memref<1x8x1152xf32, #tpu.memory_space<vmem>>, %arg2: memref<32x144xf32, #tpu.memory_space<vmem>>, %arg3: memref<32x144xf32, #tpu.memory_space<vmem>>, %arg4: memref<1x64x896xf32, #tpu.memory_space<vmem>>, %arg5: memref<216x896xf32, #tpu.memory_space<vmem>>) attributes {dimension_semantics = [#tpu.dimension_semantics<parallel>], iteration_bounds = array<i64: 2>, scalar_prefetch = 0 : i64, scratch_operands = 1 : i64, tpu.core_type = #tpu.core_type<tc>, window_params = [{transform_indices = @transform_0, window_bounds = array<i64: 1, 8, 1152>}, {pipeline_mode = #tpu.pipeline_mode<synchronous>, transform_indices = @transform_1, window_bounds = array<i64: 32, 144>}, {pipeline_mode = #tpu.pipeline_mode<synchronous>, transform_indices = @transform_2, window_bounds = array<i64: 32, 144>}, {transform_indices = @transform_3, window_bounds = array<i64: 1, 64, 896>}]} {
    %c0 = arith.constant 0 : index
    %c0_0 = arith.constant 0 : index
    %c0_1 = arith.constant 0 : index
    %0 = vector.load %arg1[%c0, %c0_0, %c0_1] : memref<1x8x1152xf32, #tpu.memory_space<vmem>>, vector<1x8x1152xf32>
    %1 = vector.shape_cast %0 : vector<1x8x1152xf32> to vector<8x1152xf32>
    %2 = vector.extract_strided_slice %1 {offsets = [0, 0], sizes = [8, 896], strides = [1, 1]} : vector<8x1152xf32> to vector<8x896xf32>
    %c0_2 = arith.constant 0 : index
    %c0_3 = arith.constant 0 : index
    %3 = vector.load %arg5[%c0_2, %c0_3] : memref<216x896xf32, #tpu.memory_space<vmem>>, vector<8x896xf32>
    tpu.vector_store %arg5[%c0_2, %c0_3], %2 {strides = array<i32>} : memref<216x896xf32, #tpu.memory_space<vmem>>, vector<8x896xf32>,
    %4 = vector.extract_strided_slice %1 {offsets = [0, 1], sizes = [8, 896], strides = [1, 1]} : vector<8x1152xf32> to vector<8x896xf32>
    %c8 = arith.constant 8 : index
    %c0_4 = arith.constant 0 : index
    %5 = vector.load %arg5[%c8, %c0_4] : memref<216x896xf32, #tpu.memory_space<vmem>>, vector<8x896xf32>
    tpu.vector_store %arg5[%c8, %c0_4], %4 {strides = array<i32>} : memref<216x896xf32, #tpu.memory_space<vmem>>, vector<8x896xf32>,
    %6 = vector.extract_strided_slice %1 {offsets = [0, 2], sizes = [8, 896], strides = [1, 1]} : vector<8x1152xf32> to vector<8x896xf32>
    %c16 = arith.constant 16 : index
    %c0_5 = arith.constant 0 : index
    %7 = vector.load %arg5[%c16, %c0_5] : memref<216x896xf32, #tpu.memory_space<vmem>>, vector<8x896xf32>
    tpu.vector_store %arg5[%c16, %c0_5], %6 {strides = array<i32>} : memref<216x896xf32, #tpu.memory_space<vmem>>, vector<8x896xf32>,
    %8 = vector.extract_strided_slice %1 {offsets = [0, 10], sizes = [8, 896], strides = [1, 1]} : vector<8x1152xf32> to vector<8x896xf32>
    %c24 = arith.constant 24 : index
    %c0_6 = arith.constant 0 : index
    %9 = vector.load %arg5[%c24, %c0_6] : memref<216x896xf32, #tpu.memory_space<vmem>>, vector<8x896xf32>
    tpu.vector_store %arg5[%c24, %c0_6], %8 {strides = array<i32>} : memref<216x896xf32, #tpu.memory_space<vmem>>, vector<8x896xf32>,
    %10 = vector.extract_strided_slice %1 {offsets = [0, 11], sizes = [8, 896], strides = [1, 1]} : vector<8x1152xf32> to vector<8x896xf32>
    %c32 = arith.constant 32 : index
    %c0_7 = arith.constant 0 : index
    %11 = vector.load %arg5[%c32, %c0_7] : memref<216x896xf32, #tpu.memory_space<vmem>>, vector<8x896xf32>
    tpu.vector_store %arg5[%c32, %c0_7], %10 {strides = array<i32>} : memref<216x896xf32, #tpu.memory_space<vmem>>, vector<8x896xf32>,
    %12 = vector.extract_strided_slice %1 {offsets = [0, 12], sizes = [8, 896], strides = [1, 1]} : vector<8x1152xf32> to vector<8x896xf32>
    %c40 = arith.constant 40 : index
    %c0_8 = arith.constant 0 : index
    %13 = vector.load %arg5[%c40, %c0_8] : memref<216x896xf32, #tpu.memory_space<vmem>>, vector<8x896xf32>
    tpu.vector_store %arg5[%c40, %c0_8], %12 {strides = array<i32>} : memref<216x896xf32, #tpu.memory_space<vmem>>, vector<8x896xf32>,
    %14 = vector.extract_strided_slice %1 {offsets = [0, 20], sizes = [8, 896], strides = [1, 1]} : vector<8x1152xf32> to vector<8x896xf32>
    %c48 = arith.constant 48 : index
    %c0_9 = arith.constant 0 : index
    %15 = vector.load %arg5[%c48, %c0_9] : memref<216x896xf32, #tpu.memory_space<vmem>>, vector<8x896xf32>
    tpu.vector_store %arg5[%c48, %c0_9], %14 {strides = array<i32>} : memref<216x896xf32, #tpu.memory_space<vmem>>, vector<8x896xf32>,
    %16 = vector.extract_strided_slice %1 {offsets = [0, 21], sizes = [8, 896], strides = [1, 1]} : vector<8x1152xf32> to vector<8x896xf32>
    %c56 = arith.constant 56 : index
    %c0_10 = arith.constant 0 : index
    %17 = vector.load %arg5[%c56, %c0_10] : memref<216x896xf32, #tpu.memory_space<vmem>>, vector<8x896xf32>
    tpu.vector_store %arg5[%c56, %c0_10], %16 {strides = array<i32>} : memref<216x896xf32, #tpu.memory_space<vmem>>, vector<8x896xf32>,
    %18 = vector.extract_strided_slice %1 {offsets = [0, 22], sizes = [8, 896], strides = [1, 1]} : vector<8x1152xf32> to vector<8x896xf32>
    %c64 = arith.constant 64 : index
    %c0_11 = arith.constant 0 : index
    %19 = vector.load %arg5[%c64, %c0_11] : memref<216x896xf32, #tpu.memory_space<vmem>>, vector<8x896xf32>
    tpu.vector_store %arg5[%c64, %c0_11], %18 {strides = array<i32>} : memref<216x896xf32, #tpu.memory_space<vmem>>, vector<8x896xf32>,
    %20 = vector.extract_strided_slice %1 {offsets = [0, 100], sizes = [8, 896], strides = [1, 1]} : vector<8x1152xf32> to vector<8x896xf32>
    %c72 = arith.constant 72 : index
    %c0_12 = arith.constant 0 : index
    %21 = vector.load %arg5[%c72, %c0_12] : memref<216x896xf32, #tpu.memory_space<vmem>>, vector<8x896xf32>
    tpu.vector_store %arg5[%c72, %c0_12], %20 {strides = array<i32>} : memref<216x896xf32, #tpu.memory_space<vmem>>, vector<8x896xf32>,
    %22 = vector.extract_strided_slice %1 {offsets = [0, 101], sizes = [8, 896], strides = [1, 1]} : vector<8x1152xf32> to vector<8x896xf32>
    %c80 = arith.constant 80 : index
    %c0_13 = arith.constant 0 : index
    %23 = vector.load %arg5[%c80, %c0_13] : memref<216x896xf32, #tpu.memory_space<vmem>>, vector<8x896xf32>
    tpu.vector_store %arg5[%c80, %c0_13], %22 {strides = array<i32>} : memref<216x896xf32, #tpu.memory_space<vmem>>, vector<8x896xf32>,
    %24 = vector.extract_strided_slice %1 {offsets = [0, 102], sizes = [8, 896], strides = [1, 1]} : vector<8x1152xf32> to vector<8x896xf32>
    %c88 = arith.constant 88 : index
    %c0_14 = arith.constant 0 : index
    %25 = vector.load %arg5[%c88, %c0_14] : memref<216x896xf32, #tpu.memory_space<vmem>>, vector<8x896xf32>
    tpu.vector_store %arg5[%c88, %c0_14], %24 {strides = array<i32>} : memref<216x896xf32, #tpu.memory_space<vmem>>, vector<8x896xf32>,
    %26 = vector.extract_strided_slice %1 {offsets = [0, 110], sizes = [8, 896], strides = [1, 1]} : vector<8x1152xf32> to vector<8x896xf32>
    %c96 = arith.constant 96 : index
    %c0_15 = arith.constant 0 : index
    %27 = vector.load %arg5[%c96, %c0_15] : memref<216x896xf32, #tpu.memory_space<vmem>>, vector<8x896xf32>
    tpu.vector_store %arg5[%c96, %c0_15], %26 {strides = array<i32>} : memref<216x896xf32, #tpu.memory_space<vmem>>, vector<8x896xf32>,
    %28 = vector.extract_strided_slice %1 {offsets = [0, 111], sizes = [8, 896], strides = [1, 1]} : vector<8x1152xf32> to vector<8x896xf32>
    %c104 = arith.constant 104 : index
    %c0_16 = arith.constant 0 : index
    %29 = vector.load %arg5[%c104, %c0_16] : memref<216x896xf32, #tpu.memory_space<vmem>>, vector<8x896xf32>
    tpu.vector_store %arg5[%c104, %c0_16], %28 {strides = array<i32>} : memref<216x896xf32, #tpu.memory_space<vmem>>, vector<8x896xf32>,
    %30 = vector.extract_strided_slice %1 {offsets = [0, 112], sizes = [8, 896], strides = [1, 1]} : vector<8x1152xf32> to vector<8x896xf32>
    %c112 = arith.constant 112 : index
    %c0_17 = arith.constant 0 : index
    %31 = vector.load %arg5[%c112, %c0_17] : memref<216x896xf32, #tpu.memory_space<vmem>>, vector<8x896xf32>
    tpu.vector_store %arg5[%c112, %c0_17], %30 {strides = array<i32>} : memref<216x896xf32, #tpu.memory_space<vmem>>, vector<8x896xf32>,
    %32 = vector.extract_strided_slice %1 {offsets = [0, 120], sizes = [8, 896], strides = [1, 1]} : vector<8x1152xf32> to vector<8x896xf32>
    %c120 = arith.constant 120 : index
    %c0_18 = arith.constant 0 : index
    %33 = vector.load %arg5[%c120, %c0_18] : memref<216x896xf32, #tpu.memory_space<vmem>>, vector<8x896xf32>
    tpu.vector_store %arg5[%c120, %c0_18], %32 {strides = array<i32>} : memref<216x896xf32, #tpu.memory_space<vmem>>, vector<8x896xf32>,
    %34 = vector.extract_strided_slice %1 {offsets = [0, 121], sizes = [8, 896], strides = [1, 1]} : vector<8x1152xf32> to vector<8x896xf32>
    %c128 = arith.constant 128 : index
    %c0_19 = arith.constant 0 : index
    %35 = vector.load %arg5[%c128, %c0_19] : memref<216x896xf32, #tpu.memory_space<vmem>>, vector<8x896xf32>
    tpu.vector_store %arg5[%c128, %c0_19], %34 {strides = array<i32>} : memref<216x896xf32, #tpu.memory_space<vmem>>, vector<8x896xf32>,
    %36 = vector.extract_strided_slice %1 {offsets = [0, 122], sizes = [8, 896], strides = [1, 1]} : vector<8x1152xf32> to vector<8x896xf32>
    %c136 = arith.constant 136 : index
    %c0_20 = arith.constant 0 : index
    %37 = vector.load %arg5[%c136, %c0_20] : memref<216x896xf32, #tpu.memory_space<vmem>>, vector<8x896xf32>
    tpu.vector_store %arg5[%c136, %c0_20], %36 {strides = array<i32>} : memref<216x896xf32, #tpu.memory_space<vmem>>, vector<8x896xf32>,
    %38 = vector.extract_strided_slice %1 {offsets = [0, 200], sizes = [8, 896], strides = [1, 1]} : vector<8x1152xf32> to vector<8x896xf32>
    %c144 = arith.constant 144 : index
    %c0_21 = arith.constant 0 : index
    %39 = vector.load %arg5[%c144, %c0_21] : memref<216x896xf32, #tpu.memory_space<vmem>>, vector<8x896xf32>
    tpu.vector_store %arg5[%c144, %c0_21], %38 {strides = array<i32>} : memref<216x896xf32, #tpu.memory_space<vmem>>, vector<8x896xf32>,
    %40 = vector.extract_strided_slice %1 {offsets = [0, 201], sizes = [8, 896], strides = [1, 1]} : vector<8x1152xf32> to vector<8x896xf32>
    %c152 = arith.constant 152 : index
    %c0_22 = arith.constant 0 : index
    %41 = vector.load %arg5[%c152, %c0_22] : memref<216x896xf32, #tpu.memory_space<vmem>>, vector<8x896xf32>
    tpu.vector_store %arg5[%c152, %c0_22], %40 {strides = array<i32>} : memref<216x896xf32, #tpu.memory_space<vmem>>, vector<8x896xf32>,
    %42 = vector.extract_strided_slice %1 {offsets = [0, 202], sizes = [8, 896], strides = [1, 1]} : vector<8x1152xf32> to vector<8x896xf32>
    %c160 = arith.constant 160 : index
    %c0_23 = arith.constant 0 : index
    %43 = vector.load %arg5[%c160, %c0_23] : memref<216x896xf32, #tpu.memory_space<vmem>>, vector<8x896xf32>
    tpu.vector_store %arg5[%c160, %c0_23], %42 {strides = array<i32>} : memref<216x896xf32, #tpu.memory_space<vmem>>, vector<8x896xf32>,
    %44 = vector.extract_strided_slice %1 {offsets = [0, 210], sizes = [8, 896], strides = [1, 1]} : vector<8x1152xf32> to vector<8x896xf32>
    %c168 = arith.constant 168 : index
    %c0_24 = arith.constant 0 : index
    %45 = vector.load %arg5[%c168, %c0_24] : memref<216x896xf32, #tpu.memory_space<vmem>>, vector<8x896xf32>
    tpu.vector_store %arg5[%c168, %c0_24], %44 {strides = array<i32>} : memref<216x896xf32, #tpu.memory_space<vmem>>, vector<8x896xf32>,
    %46 = vector.extract_strided_slice %1 {offsets = [0, 211], sizes = [8, 896], strides = [1, 1]} : vector<8x1152xf32> to vector<8x896xf32>
    %c176 = arith.constant 176 : index
    %c0_25 = arith.constant 0 : index
    %47 = vector.load %arg5[%c176, %c0_25] : memref<216x896xf32, #tpu.memory_space<vmem>>, vector<8x896xf32>
    tpu.vector_store %arg5[%c176, %c0_25], %46 {strides = array<i32>} : memref<216x896xf32, #tpu.memory_space<vmem>>, vector<8x896xf32>,
    %48 = vector.extract_strided_slice %1 {offsets = [0, 212], sizes = [8, 896], strides = [1, 1]} : vector<8x1152xf32> to vector<8x896xf32>
    %c184 = arith.constant 184 : index
    %c0_26 = arith.constant 0 : index
    %49 = vector.load %arg5[%c184, %c0_26] : memref<216x896xf32, #tpu.memory_space<vmem>>, vector<8x896xf32>
    tpu.vector_store %arg5[%c184, %c0_26], %48 {strides = array<i32>} : memref<216x896xf32, #tpu.memory_space<vmem>>, vector<8x896xf32>,
    %50 = vector.extract_strided_slice %1 {offsets = [0, 220], sizes = [8, 896], strides = [1, 1]} : vector<8x1152xf32> to vector<8x896xf32>
    %c192 = arith.constant 192 : index
    %c0_27 = arith.constant 0 : index
    %51 = vector.load %arg5[%c192, %c0_27] : memref<216x896xf32, #tpu.memory_space<vmem>>, vector<8x896xf32>
    tpu.vector_store %arg5[%c192, %c0_27], %50 {strides = array<i32>} : memref<216x896xf32, #tpu.memory_space<vmem>>, vector<8x896xf32>,
    %52 = vector.extract_strided_slice %1 {offsets = [0, 221], sizes = [8, 896], strides = [1, 1]} : vector<8x1152xf32> to vector<8x896xf32>
    %c200 = arith.constant 200 : index
    %c0_28 = arith.constant 0 : index
    %53 = vector.load %arg5[%c200, %c0_28] : memref<216x896xf32, #tpu.memory_space<vmem>>, vector<8x896xf32>
    tpu.vector_store %arg5[%c200, %c0_28], %52 {strides = array<i32>} : memref<216x896xf32, #tpu.memory_space<vmem>>, vector<8x896xf32>,
    %54 = vector.extract_strided_slice %1 {offsets = [0, 222], sizes = [8, 896], strides = [1, 1]} : vector<8x1152xf32> to vector<8x896xf32>
    %c208 = arith.constant 208 : index
    %c0_29 = arith.constant 0 : index
    %55 = vector.load %arg5[%c208, %c0_29] : memref<216x896xf32, #tpu.memory_space<vmem>>, vector<8x896xf32>
    tpu.vector_store %arg5[%c208, %c0_29], %54 {strides = array<i32>} : memref<216x896xf32, #tpu.memory_space<vmem>>, vector<8x896xf32>,
    %c0_30 = arith.constant 0 : index
    %c0_31 = arith.constant 0 : index
    %56 = vector.load %arg2[%c0_30, %c0_31] : memref<32x144xf32, #tpu.memory_space<vmem>>, vector<32x144xf32>
    %c0_32 = arith.constant 0 : index
    %c0_33 = arith.constant 0 : index
    %57 = vector.load %arg5[%c0_32, %c0_33] : memref<216x896xf32, #tpu.memory_space<vmem>>, vector<144x896xf32>
    %cst = arith.constant dense<0.000000e+00> : vector<32x896xf32>
    %58 = tpu.matmul %56, %57, %cst {dimension_numbers = #tpu.dot_dimension_numbers<[1], [0], [0], [1], [0, 0, 1, 1], [], []>, precision = #tpu.contract_precision<fp32>} : vector<32x144xf32>, vector<144x896xf32>, vector<32x896xf32> -> vector<32x896xf32>
    %c0_34 = arith.constant 0 : index
    %c0_35 = arith.constant 0 : index
    %c0_36 = arith.constant 0 : index
    %59 = vector.load %arg4[%c0_34, %c0_35, %c0_36] : memref<1x64x896xf32, #tpu.memory_space<vmem>>, vector<1x32x896xf32>
    %60 = vector.shape_cast %59 : vector<1x32x896xf32> to vector<32x896xf32>
    %61 = vector.shape_cast %58 : vector<32x896xf32> to vector<1x32x896xf32>
    tpu.vector_store %arg4[%c0_34, %c0_35, %c0_36], %61 {strides = array<i32>} : memref<1x64x896xf32, #tpu.memory_space<vmem>>, vector<1x32x896xf32>,
    %c0_37 = arith.constant 0 : index
    %c0_38 = arith.constant 0 : index
    %62 = vector.load %arg3[%c0_37, %c0_38] : memref<32x144xf32, #tpu.memory_space<vmem>>, vector<32x144xf32>
    %c72_39 = arith.constant 72 : index
    %c0_40 = arith.constant 0 : index
    %63 = vector.load %arg5[%c72_39, %c0_40] : memref<216x896xf32, #tpu.memory_space<vmem>>, vector<144x896xf32>
    %cst_41 = arith.constant dense<0.000000e+00> : vector<32x896xf32>
    %64 = tpu.matmul %62, %63, %cst_41 {dimension_numbers = #tpu.dot_dimension_numbers<[1], [0], [0], [1], [0, 0, 1, 1], [], []>, precision = #tpu.contract_precision<fp32>} : vector<32x144xf32>, vector<144x896xf32>, vector<32x896xf32> -> vector<32x896xf32>
    %c0_42 = arith.constant 0 : index
    %c32_43 = arith.constant 32 : index
    %c0_44 = arith.constant 0 : index
    %65 = vector.load %arg4[%c0_42, %c32_43, %c0_44] : memref<1x64x896xf32, #tpu.memory_space<vmem>>, vector<1x32x896xf32>
    %66 = vector.shape_cast %65 : vector<1x32x896xf32> to vector<32x896xf32>
    %67 = vector.shape_cast %64 : vector<32x896xf32> to vector<1x32x896xf32>
    tpu.vector_store %arg4[%c0_42, %c32_43, %c0_44], %67 {strides = array<i32>} : memref<1x64x896xf32, #tpu.memory_space<vmem>>, vector<1x32x896xf32>,
    return
  }
  func.func @transform_0(%arg0: i32) -> (i32, i32, i32) {
    %c0_i32 = arith.constant 0 : i32
    %c0_i32_0 = arith.constant 0 : i32
    %c0_i32_1 = arith.constant 0 : i32
    return %arg0, %c0_i32, %c0_i32_0 : i32, i32, i32
  }
  func.func @transform_1(%arg0: i32) -> (i32, i32) {
    %c0_i32 = arith.constant 0 : i32
    %c0_i32_0 = arith.constant 0 : i32
    %c0_i32_1 = arith.constant 0 : i32
    return %c0_i32, %c0_i32_0 : i32, i32
  }
  func.func @transform_2(%arg0: i32) -> (i32, i32) {
    %c0_i32 = arith.constant 0 : i32
    %c0_i32_0 = arith.constant 0 : i32
    %c0_i32_1 = arith.constant 0 : i32
    return %c0_i32, %c0_i32_0 : i32, i32
  }
  func.func @transform_3(%arg0: i32) -> (i32, i32, i32) {
    %c0_i32 = arith.constant 0 : i32
    %c0_i32_0 = arith.constant 0 : i32
    %c0_i32_1 = arith.constant 0 : i32
    return %arg0, %c0_i32, %c0_i32_0 : i32, i32, i32
  }
}

</mosaic_0001>

<llo_original>
// kernel: upconv_block_forward.1
$region0: #{upconv_block_forward.1}
  #allocation0 [shape = 'u32[]', space=smem, size = 0x4, offset = 0x4, fixed_abs, tag = 'smem constant byte address 0x4 - core index']
  #allocation1 [shape = 'u32[144,128]{1,0:T(1,128)}', space=vmem, size = 0x12000, scoped, tag = 'internal scratch']
  #allocation2 [shape = 'f32[216,896]{1,0:T(8,128)}', space=vmem, size = 0xbd000, scoped, tag = 'scratch operand']
  %s0 = inlined_call_operand.vmem [shape: f32[2,8,1152], index: 0, kind: input, shape index: {}]
  %s1 = inlined_call_operand.hbm [shape: f32[32,144], index: 1, kind: input, shape index: {}]
  %s2 = inlined_call_operand.hbm [shape: f32[32,144], index: 2, kind: input, shape index: {}]
  %s3 = inlined_call_operand.vmem [shape: f32[2,64,896], index: 3, kind: output, shape index: {}]
  %s4 = sld [smem:[#allocation0]]
  $region53: #{upconv_block_forward.1} parent=0
    _
  %s6 = ssub.s32 1, %s4
  %s7 = scalar_select 0, %s6, %s4
  $region1: #{upconv_block_forward.1} parent=0
    #allocation3 [shape = 'u8[32768]{0}', space=vmem, size = 0x8000, scoped, tag = 'input window, operand 1, single buffered']
    #allocation4 [shape = 's32[2]{0}', space=sflag, size = 0x8, scoped, tag = 'scoped memory for upconv_block_forward.1']
    #allocation5 [shape = 'u8[32768]{0}', space=vmem, size = 0x8000, scoped, tag = 'input window, operand 2, single buffered']
    #allocation6 [shape = 's32[1]{0}', space=sflag, size = 0x4, scoped, tag = 'scoped memory for upconv_block_forward.1']
    %8 = vsyncpa [#allocation4], 0
    %9 = vsyncpa [#allocation6], 0
    loop: start=0, step=1, limit=4
    $region2: #{upconv_block_forward.1} parent=1 // loop_pre_header
      _
    $region3: #{upconv_block_forward.1} parent=1 // loop_header
      %s11 = sphi 0, %s15
      %p12 = scmp.ge.s32.totalorder %s11, 4
      %s21 = sphi 0, %s23
      %s24 = sphi 0, %s21
      %s25 = sphi 0, %s24
      %s41 = sphi 0, %s25
      %s45 = sphi 0, %s45
      %s47 = sphi 0, %s45
      %s48 = sphi 0, %s47
      %s62 = sphi 0, %s48
      %s66 = sphi 0, %s66
      %s68 = sphi 0, %s66
      %s69 = sphi 0, %s68
      %s83 = sphi 0, %s69
      %s89 = sphi 0, %s91
      %s92 = sphi 0, %s89
      %s93 = sphi 0, %s92
      %s109 = sphi 0, %s93
    $region4: #{upconv_block_forward.1} parent=1 // loop_header_branch
      %14 = sbr.rel (%p12) target = $region8
    $region5: #{upconv_block_forward.1} parent=1 // loop_body
      %s16 = ssub.s32 %s11, 1
      %s17 = ssub.s32 %s11, 2
      %s18 = sadd.s32 %s11, 1
      %s19 = ssub.s32 %s11, %s18
      %p20 = scmp.eq.s32.totalorder %s19, 0
      %s22 = sadd.s32 %s21, 1
      %s23 = scalar_select %p20, %s21, %s22
      %p26 = pneg %p20
      %p27 = scmp.eq.s32.totalorder %s11, 1
      %p28 = por %p26, %p27
      %p29 = scmp.ne.s32.totalorder %s21, %s24
      %p30 = scmp.eq.s32.totalorder %s11, 0
      %p31 = por %p29, %p30
      %p32 = scmp.ne.s32.totalorder %s21, %s24
      %p33 = scmp.eq.s32.totalorder %s16, 1
      %p34 = por %p32, %p33
      %p35 = scmp.ne.s32.totalorder %s24, %s25
      %p36 = scmp.eq.s32.totalorder %s16, 0
      %p37 = por %p35, %p36
      %p38 = scmp.ne.s32.totalorder %s24, %s25
      %p39 = scmp.eq.s32.totalorder %s17, 1
      %p40 = por %p38, %p39
      %p42 = scmp.ne.s32.totalorder %s25, %s41
      %p43 = scmp.eq.s32.totalorder %s17, 0
      %p44 = por %p42, %p43
      %s46 = sadd.s32 %s45, 1
      %p49 = scmp.eq.s32.totalorder %s11, 1
      %p50 = scmp.ne.s32.totalorder %s45, %s47
      %p51 = scmp.eq.s32.totalorder %s11, 0
      %p52 = por %p50, %p51
      %p53 = scmp.ne.s32.totalorder %s45, %s47
      %p54 = scmp.eq.s32.totalorder %s16, 1
      %p55 = por %p53, %p54
      %p56 = scmp.ne.s32.totalorder %s47, %s48
      %p57 = scmp.eq.s32.totalorder %s16, 0
      %p58 = por %p56, %p57
      %p59 = scmp.ne.s32.totalorder %s47, %s48
      %p60 = scmp.eq.s32.totalorder %s17, 1
      %p61 = por %p59, %p60
      %p63 = scmp.ne.s32.totalorder %s48, %s62
      %p64 = scmp.eq.s32.totalorder %s17, 0
      %p65 = por %p63, %p64
      %s67 = sadd.s32 %s66, 1
      %p70 = scmp.eq.s32.totalorder %s11, 1
      %p71 = scmp.ne.s32.totalorder %s66, %s68
      %p72 = scmp.eq.s32.totalorder %s11, 0
      %p73 = por %p71, %p72
      %p74 = scmp.ne.s32.totalorder %s66, %s68
      %p75 = scmp.eq.s32.totalorder %s16, 1
      %p76 = por %p74, %p75
      %p77 = scmp.ne.s32.totalorder %s68, %s69
      %p78 = scmp.eq.s32.totalorder %s16, 0
      %p79 = por %p77, %p78
      %p80 = scmp.ne.s32.totalorder %s68, %s69
      %p81 = scmp.eq.s32.totalorder %s17, 1
      %p82 = por %p80, %p81
      %p84 = scmp.ne.s32.totalorder %s69, %s83
      %p85 = scmp.eq.s32.totalorder %s17, 0
      %p86 = por %p84, %p85
      %s87 = ssub.s32 %s11, %s18
      %p88 = scmp.eq.s32.totalorder %s87, 0
      %s90 = sadd.s32 %s89, 1
      %s91 = scalar_select %p88, %s89, %s90
      %p94 = pneg %p88
      %p95 = scmp.eq.s32.totalorder %s11, 1
      %p96 = por %p94, %p95
      %p97 = scmp.ne.s32.totalorder %s89, %s92
      %p98 = scmp.eq.s32.totalorder %s11, 0
      %p99 = por %p97, %p98
      %p100 = scmp.ne.s32.totalorder %s89, %s92
      %p101 = scmp.eq.s32.totalorder %s16, 1
      %p102 = por %p100, %p101
      %p103 = scmp.ne.s32.totalorder %s92, %s93
      %p104 = scmp.eq.s32.totalorder %s16, 0
      %p105 = por %p103, %p104
      %p106 = scmp.ne.s32.totalorder %s92, %s93
      %p107 = scmp.eq.s32.totalorder %s17, 1
      %p108 = por %p106, %p107
      %p110 = scmp.ne.s32.totalorder %s93, %s109
      %p111 = scmp.eq.s32.totalorder %s17, 0
      %p112 = por %p110, %p111
      %p113 = scmp.le.s32.totalorder 1, %s11
      %p114 = scmp.lt.s32.totalorder %s11, 3
      %p115 = pnand %p113, %p114
      %p116 = pneg %p115
      // Predicated region
      $region9: #{upconv_block_forward.1} parent=5 // pred_check
        _
      $region10: #{upconv_block_forward.1} parent=5 // pred_check_branch
        %118 = sbr.rel (%p115) target = $region12
      $region11: #{upconv_block_forward.1} parent=5 // pred_region
        %s119 = ssub.s32 %s11, 1
        // Predicated region
        $region13: #{upconv_block_forward.1} parent=11 // pred_check
          %p120 = pneg %p58
        $region14: #{upconv_block_forward.1} parent=11 // pred_check_branch
          %122 = sbr.rel (%p120) target = $region16
        $region15: #{upconv_block_forward.1} parent=11 // pred_region
          %s124 = ssub.s32 1024, 1024
          %125 = vsyncadd [#allocation4], %s124
          %s126 = sshll.u32 [#allocation3], 4
          %s127 = int_to_ptr.vmem [resolvable:$true] %s126
          %132 = dma.hbm_to_vmem [thread:$0]  %s1, 1024, %s127, [#allocation4], 256, 256, 16
        $region16: #{upconv_block_forward.1} parent=11 // pred_fallthru
          _
        // Predicated region
        $region17: #{upconv_block_forward.1} parent=11 // pred_check
          %p133 = pneg %p79
        $region18: #{upconv_block_forward.1} parent=11 // pred_check_branch
          %135 = sbr.rel (%p133) target = $region20
        $region19: #{upconv_block_forward.1} parent=11 // pred_region
          %s137 = ssub.s32 1024, 1024
          %138 = vsyncadd [#allocation6], %s137
          %s139 = sshll.u32 [#allocation5], 4
          %s140 = int_to_ptr.vmem [resolvable:$true] %s139
          %145 = dma.hbm_to_vmem [thread:$0]  %s2, 1024, %s140, [#allocation6], 256, 256, 16
        $region20: #{upconv_block_forward.1} parent=11 // pred_fallthru
          _
      $region12: #{upconv_block_forward.1} parent=5 // pred_fallthru
        _
      %p146 = scmp.lt.s32.totalorder %s11, 2
      // Predicated region
      $region21: #{upconv_block_forward.1} parent=5 // pred_check
        %p147 = pneg %p146
      $region22: #{upconv_block_forward.1} parent=5 // pred_check_branch
        %149 = sbr.rel (%p147) target = $region24
      $region23: #{upconv_block_forward.1} parent=5 // pred_region
        // Predicated region
        $region25: #{upconv_block_forward.1} parent=23 // pred_check
          %p150 = pneg %p31
        $region26: #{upconv_block_forward.1} parent=23 // pred_check_branch
          %152 = sbr.rel (%p150) target = $region28
        $region27: #{upconv_block_forward.1} parent=23 // pred_region
          %p153 = scmp.lt.s32.totalorder %s11, 1
          %s154 = scalar_select %p153, %s11, 1
          %s155 = smul.addr %s154, 9
          %s156 = smul.addr %s155, 8
          %s157 = scalar_lea.vmem %s0, %s156
        $region28: #{upconv_block_forward.1} parent=23 // pred_fallthru
          _
      $region24: #{upconv_block_forward.1} parent=5 // pred_fallthru
        _
      %p158 = scmp.le.s32.totalorder 1, %s11
      %p159 = scmp.lt.s32.totalorder %s11, 3
      %p160 = pnand %p158, %p159
      %p161 = pneg %p160
      // Predicated region
      $region29: #{upconv_block_forward.1} parent=5 // pred_check
        _
      $region30: #{upconv_block_forward.1} parent=5 // pred_check_branch
        %163 = sbr.rel (%p160) target = $region32
      $region31: #{upconv_block_forward.1} parent=5 // pred_region
        %s164 = ssub.s32 %s11, 1
        // Predicated region
        $region33: #{upconv_block_forward.1} parent=31 // pred_check
          %p165 = pneg %p58
        $region34: #{upconv_block_forward.1} parent=31 // pred_check_branch
          %167 = sbr.rel (%p165) target = $region36
        $region35: #{upconv_block_forward.1} parent=31 // pred_region
          %168 = dma.done [#allocation4], 1024
        $region36: #{upconv_block_forward.1} parent=31 // pred_fallthru
          _
        // Predicated region
        $region37: #{upconv_block_forward.1} parent=31 // pred_check
          %p169 = pneg %p79
        $region38: #{upconv_block_forward.1} parent=31 // pred_check_branch
          %171 = sbr.rel (%p169) target = $region40
        $region39: #{upconv_block_forward.1} parent=31 // pred_region
          %172 = dma.done [#allocation6], 1024
        $region40: #{upconv_block_forward.1} parent=31 // pred_fallthru
          _
        %p173 = scmp.lt.s32.totalorder %s16, 1
        %s174 = scalar_select %p173, %s16, 1
        %s175 = smul.addr %s174, 9
        %s176 = smul.addr %s175, 8
        %s177 = scalar_lea.vmem %s0, %s176
        %p178 = pneg %p37
        %p179 = pneg %p34
        %p180 = pneg %p58
        %p181 = pneg %p55
        %p182 = pneg %p79
        %p183 = pneg %p76
        %p184 = pneg %p105
        %p185 = pneg %p102
        %p186 = scmp.lt.s32.totalorder %s16, 1
        %s187 = scalar_select %p186, %s16, 1
        %s188 = smul.addr %s187, 56
        %s189 = smul.addr %s188, 8
        %s190 = scalar_lea.vmem %s3, %s189
        %p191 = scmp.lt.s32.totalorder %s16, 1
        %s192 = scalar_select %p191, %s16, 1
        %s193 = smul.addr %s192, 9
        %s194 = smul.addr %s193, 8
        %s195 = scalar_lea.vmem %s0, %s194
        %p196 = scmp.lt.s32.totalorder %s16, 1
        %s197 = scalar_select %p196, %s16, 1
        %s198 = smul.addr %s197, 56
        %s199 = smul.addr %s198, 8
        %s200 = scalar_lea.vmem %s3, %s199
        %v201 = vld [vmem:[%s195] sm:$0xff]
        %v202 = vld [vmem:[%s195 + $0x8] sm:$0xff]
        %v203 = vld [vmem:[%s195 + $0x10] sm:$0xff]
        %v204 = vld [vmem:[%s195 + $0x18] sm:$0xff]
        %v205 = vld [vmem:[%s195 + $0x20] sm:$0xff]
        %v206 = vld [vmem:[%s195 + $0x28] sm:$0xff]
        %v207 = vld [vmem:[%s195 + $0x30] sm:$0xff]
        %v208 = vld [vmem:[%s195 + $0x38] sm:$0xff]
        %v209 = vld [vmem:[%s195 + $0x40] sm:$0xff]
        %210 = vst [vmem:[#allocation2] sm:$0xff] %v201
        %211 = vst [vmem:[#allocation2 + $0x8] sm:$0xff] %v202
        %212 = vst [vmem:[#allocation2 + $0x10] sm:$0xff] %v203
        %213 = vst [vmem:[#allocation2 + $0x18] sm:$0xff] %v204
        %214 = vst [vmem:[#allocation2 + $0x20] sm:$0xff] %v205
        %215 = vst [vmem:[#allocation2 + $0x28] sm:$0xff] %v206
        %216 = vst [vmem:[#allocation2 + $0x30] sm:$0xff] %v207
        %225 = vrot.lane.b32.xlu0 %v201, 127
        %v226 = vpop.permute.xlu0 %225
        %227 = vrot.lane.b32.xlu0 %v202, 127
        %v228 = vpop.permute.xlu0 %227
        %229 = vrot.lane.b32.xlu0 %v203, 127
        %v230 = vpop.permute.xlu0 %229
        %231 = vrot.lane.b32.xlu0 %v204, 127
        %v232 = vpop.permute.xlu0 %231
        %233 = vrot.lane.b32.xlu0 %v205, 127
        %v234 = vpop.permute.xlu0 %233
        %235 = vrot.lane.b32.xlu0 %v206, 127
        %v236 = vpop.permute.xlu0 %235
        %237 = vrot.lane.b32.xlu0 %v207, 127
        %v238 = vpop.permute.xlu0 %237
        %239 = vrot.lane.b32.xlu0 %v208, 127
        %v240 = vpop.permute.xlu0 %239
        %vm241 = vcmask 1039360
        %v242 = vsel %vm241, %v226, %v228
        %v243 = vsel %vm241, %v228, %v230
        %v244 = vsel %vm241, %v230, %v232
        %v245 = vsel %vm241, %v232, %v234
        %v246 = vsel %vm241, %v234, %v236
        %v247 = vsel %vm241, %v236, %v238
        %v248 = vsel %vm241, %v238, %v240
        %256 = vst [vmem:[#allocation2 + $0x38] sm:$0xff] %v242
        %257 = vst [vmem:[#allocation2 + $0x40] sm:$0xff] %v243
        %258 = vst [vmem:[#allocation2 + $0x48] sm:$0xff] %v244
        %259 = vst [vmem:[#allocation2 + $0x50] sm:$0xff] %v245
        %260 = vst [vmem:[#allocation2 + $0x58] sm:$0xff] %v246
        %261 = vst [vmem:[#allocation2 + $0x60] sm:$0xff] %v247
        %262 = vst [vmem:[#allocation2 + $0x68] sm:$0xff] %v248
        %263 = vrot.lane.b32.xlu0 %v201, 126
        %v264 = vpop.permute.xlu0 %263
        %265 = vrot.lane.b32.xlu0 %v202, 126
        %v266 = vpop.permute.xlu0 %265
        %267 = vrot.lane.b32.xlu0 %v203, 126
        %v268 = vpop.permute.xlu0 %267
        %269 = vrot.lane.b32.xlu0 %v204, 126
        %v270 = vpop.permute.xlu0 %269
        %271 = vrot.lane.b32.xlu0 %v205, 126
        %v272 = vpop.permute.xlu0 %271
        %273 = vrot.lane.b32.xlu0 %v206, 126
        %v274 = vpop.permute.xlu0 %273
        %275 = vrot.lane.b32.xlu0 %v207, 126
        %v276 = vpop.permute.xlu0 %275
        %277 = vrot.lane.b32.xlu0 %v208, 126
        %v278 = vpop.permute.xlu0 %277
        %vm279 = vcmask 1031168
        %v280 = vsel %vm279, %v264, %v266
        %v281 = vsel %vm279, %v266, %v268
        %v282 = vsel %vm279, %v268, %v270
        %v283 = vsel %vm279, %v270, %v272
        %v284 = vsel %vm279, %v272, %v274
        %v285 = vsel %vm279, %v274, %v276
        %v286 = vsel %vm279, %v276, %v278
        %294 = vst [vmem:[#allocation2 + $0x70] sm:$0xff] %v280
        %295 = vst [vmem:[#allocation2 + $0x78] sm:$0xff] %v281
        %296 = vst [vmem:[#allocation2 + $0x80] sm:$0xff] %v282
        %297 = vst [vmem:[#allocation2 + $0x88] sm:$0xff] %v283
        %298 = vst [vmem:[#allocation2 + $0x90] sm:$0xff] %v284
        %299 = vst [vmem:[#allocation2 + $0x98] sm:$0xff] %v285
        %300 = vst [vmem:[#allocation2 + $0xa0] sm:$0xff] %v286
        %301 = vrot.lane.b32.xlu0 %v201, 118
        %v302 = vpop.permute.xlu0 %301
        %303 = vrot.lane.b32.xlu0 %v202, 118
        %v304 = vpop.permute.xlu0 %303
        %305 = vrot.lane.b32.xlu0 %v203, 118
        %v306 = vpop.permute.xlu0 %305
        %307 = vrot.lane.b32.xlu0 %v204, 118
        %v308 = vpop.permute.xlu0 %307
        %309 = vrot.lane.b32.xlu0 %v205, 118
        %v310 = vpop.permute.xlu0 %309
        %311 = vrot.lane.b32.xlu0 %v206, 118
        %v312 = vpop.permute.xlu0 %311
        %313 = vrot.lane.b32.xlu0 %v207, 118
        %v314 = vpop.permute.xlu0 %313
        %315 = vrot.lane.b32.xlu0 %v208, 118
        %v316 = vpop.permute.xlu0 %315
        %vm317 = vcmask 965632
        %v318 = vsel %vm317, %v302, %v304
        %v319 = vsel %vm317, %v304, %v306
        %v320 = vsel %vm317, %v306, %v308
        %v321 = vsel %vm317, %v308, %v310
        %v322 = vsel %vm317, %v310, %v312
        %v323 = vsel %vm317, %v312, %v314
        %v324 = vsel %vm317, %v314, %v316
        %332 = vst [vmem:[#allocation2 + $0xa8] sm:$0xff] %v318
        %333 = vst [vmem:[#allocation2 + $0xb0] sm:$0xff] %v319
        %334 = vst [vmem:[#allocation2 + $0xb8] sm:$0xff] %v320
        %335 = vst [vmem:[#allocation2 + $0xc0] sm:$0xff] %v321
        %336 = vst [vmem:[#allocation2 + $0xc8] sm:$0xff] %v322
        %337 = vst [vmem:[#allocation2 + $0xd0] sm:$0xff] %v323
        %338 = vst [vmem:[#allocation2 + $0xd8] sm:$0xff] %v324
        %339 = vrot.lane.b32.xlu0 %v201, 117
        %v340 = vpop.permute.xlu0 %339
        %341 = vrot.lane.b32.xlu0 %v202, 117
        %v342 = vpop.permute.xlu0 %341
        %343 = vrot.lane.b32.xlu0 %v203, 117
        %v344 = vpop.permute.xlu0 %343
        %345 = vrot.lane.b32.xlu0 %v204, 117
        %v346 = vpop.permute.xlu0 %345
        %347 = vrot.lane.b32.xlu0 %v205, 117
        %v348 = vpop.permute.xlu0 %347
        %349 = vrot.lane.b32.xlu0 %v206, 117
        %v350 = vpop.permute.xlu0 %349
        %351 = vrot.lane.b32.xlu0 %v207, 117
        %v352 = vpop.permute.xlu0 %351
        %353 = vrot.lane.b32.xlu0 %v208, 117
        %v354 = vpop.permute.xlu0 %353
        %vm355 = vcmask 957440
        %v356 = vsel %vm355, %v340, %v342
        %v357 = vsel %vm355, %v342, %v344
        %v358 = vsel %vm355, %v344, %v346
        %v359 = vsel %vm355, %v346, %v348
        %v360 = vsel %vm355, %v348, %v350
        %v361 = vsel %vm355, %v350, %v352
        %v362 = vsel %vm355, %v352, %v354
        %370 = vst [vmem:[#allocation2 + $0xe0] sm:$0xff] %v356
        %371 = vst [vmem:[#allocation2 + $0xe8] sm:$0xff] %v357
        %372 = vst [vmem:[#allocation2 + $0xf0] sm:$0xff] %v358
        %373 = vst [vmem:[#allocation2 + $0xf8] sm:$0xff] %v359
        %374 = vst [vmem:[#allocation2 + $0x100] sm:$0xff] %v360
        %375 = vst [vmem:[#allocation2 + $0x108] sm:$0xff] %v361
        %376 = vst [vmem:[#allocation2 + $0x110] sm:$0xff] %v362
        %377 = vrot.lane.b32.xlu0 %v201, 116
        %v378 = vpop.permute.xlu0 %377
        %379 = vrot.lane.b32.xlu0 %v202, 116
        %v380 = vpop.permute.xlu0 %379
        %381 = vrot.lane.b32.xlu0 %v203, 116
        %v382 = vpop.permute.xlu0 %381
        %383 = vrot.lane.b32.xlu0 %v204, 116
        %v384 = vpop.permute.xlu0 %383
        %385 = vrot.lane.b32.xlu0 %v205, 116
        %v386 = vpop.permute.xlu0 %385
        %387 = vrot.lane.b32.xlu0 %v206, 116
        %v388 = vpop.permute.xlu0 %387
        %389 = vrot.lane.b32.xlu0 %v207, 116
        %v390 = vpop.permute.xlu0 %389
        %391 = vrot.lane.b32.xlu0 %v208, 116
        %v392 = vpop.permute.xlu0 %391
        %vm393 = vcmask 949248
        %v394 = vsel %vm393, %v378, %v380
        %v395 = vsel %vm393, %v380, %v382
        %v396 = vsel %vm393, %v382, %v384
        %v397 = vsel %vm393, %v384, %v386
        %v398 = vsel %vm393, %v386, %v388
        %v399 = vsel %vm393, %v388, %v390
        %v400 = vsel %vm393, %v390, %v392
        %408 = vst [vmem:[#allocation2 + $0x118] sm:$0xff] %v394
        %409 = vst [vmem:[#allocation2 + $0x120] sm:$0xff] %v395
        %410 = vst [vmem:[#allocation2 + $0x128] sm:$0xff] %v396
        %411 = vst [vmem:[#allocation2 + $0x130] sm:$0xff] %v397
        %412 = vst [vmem:[#allocation2 + $0x138] sm:$0xff] %v398
        %413 = vst [vmem:[#allocation2 + $0x140] sm:$0xff] %v399
        %414 = vst [vmem:[#allocation2 + $0x148] sm:$0xff] %v400
        %415 = vrot.lane.b32.xlu0 %v201, 108
        %v416 = vpop.permute.xlu0 %415
        %417 = vrot.lane.b32.xlu0 %v202, 108
        %v418 = vpop.permute.xlu0 %417
        %419 = vrot.lane.b32.xlu0 %v203, 108
        %v420 = vpop.permute.xlu0 %419
        %421 = vrot.lane.b32.xlu0 %v204, 108
        %v422 = vpop.permute.xlu0 %421
        %423 = vrot.lane.b32.xlu0 %v205, 108
        %v424 = vpop.permute.xlu0 %423
        %425 = vrot.lane.b32.xlu0 %v206, 108
        %v426 = vpop.permute.xlu0 %425
        %427 = vrot.lane.b32.xlu0 %v207, 108
        %v428 = vpop.permute.xlu0 %427
        %429 = vrot.lane.b32.xlu0 %v208, 108
        %v430 = vpop.permute.xlu0 %429
        %vm431 = vcmask 883712
        %v432 = vsel %vm431, %v416, %v418
        %v433 = vsel %vm431, %v418, %v420
        %v434 = vsel %vm431, %v420, %v422
        %v435 = vsel %vm431, %v422, %v424
        %v436 = vsel %vm431, %v424, %v426
        %v437 = vsel %vm431, %v426, %v428
        %v438 = vsel %vm431, %v428, %v430
        %446 = vst [vmem:[#allocation2 + $0x150] sm:$0xff] %v432
        %447 = vst [vmem:[#allocation2 + $0x158] sm:$0xff] %v433
        %448 = vst [vmem:[#allocation2 + $0x160] sm:$0xff] %v434
        %449 = vst [vmem:[#allocation2 + $0x168] sm:$0xff] %v435
        %450 = vst [vmem:[#allocation2 + $0x170] sm:$0xff] %v436
        %451 = vst [vmem:[#allocation2 + $0x178] sm:$0xff] %v437
        %452 = vst [vmem:[#allocation2 + $0x180] sm:$0xff] %v438
        %453 = vrot.lane.b32.xlu0 %v201, 107
        %v454 = vpop.permute.xlu0 %453
        %455 = vrot.lane.b32.xlu0 %v202, 107
        %v456 = vpop.permute.xlu0 %455
        %457 = vrot.lane.b32.xlu0 %v203, 107
        %v458 = vpop.permute.xlu0 %457
        %459 = vrot.lane.b32.xlu0 %v204, 107
        %v460 = vpop.permute.xlu0 %459
        %461 = vrot.lane.b32.xlu0 %v205, 107
        %v462 = vpop.permute.xlu0 %461
        %463 = vrot.lane.b32.xlu0 %v206, 107
        %v464 = vpop.permute.xlu0 %463
        %465 = vrot.lane.b32.xlu0 %v207, 107
        %v466 = vpop.permute.xlu0 %465
        %467 = vrot.lane.b32.xlu0 %v208, 107
        %v468 = vpop.permute.xlu0 %467
        %vm469 = vcmask 875520
        %v470 = vsel %vm469, %v454, %v456
        %v471 = vsel %vm469, %v456, %v458
        %v472 = vsel %vm469, %v458, %v460
        %v473 = vsel %vm469, %v460, %v462
        %v474 = vsel %vm469, %v462, %v464
        %v475 = vsel %vm469, %v464, %v466
        %v476 = vsel %vm469, %v466, %v468
        %484 = vst [vmem:[#allocation2 + $0x188] sm:$0xff] %v470
        %485 = vst [vmem:[#allocation2 + $0x190] sm:$0xff] %v471
        %486 = vst [vmem:[#allocation2 + $0x198] sm:$0xff] %v472
        %487 = vst [vmem:[#allocation2 + $0x1a0] sm:$0xff] %v473
        %488 = vst [vmem:[#allocation2 + $0x1a8] sm:$0xff] %v474
        %489 = vst [vmem:[#allocation2 + $0x1b0] sm:$0xff] %v475
        %490 = vst [vmem:[#allocation2 + $0x1b8] sm:$0xff] %v476
        %491 = vrot.lane.b32.xlu0 %v201, 106
        %v492 = vpop.permute.xlu0 %491
        %493 = vrot.lane.b32.xlu0 %v202, 106
        %v494 = vpop.permute.xlu0 %493
        %495 = vrot.lane.b32.xlu0 %v203, 106
        %v496 = vpop.permute.xlu0 %495
        %497 = vrot.lane.b32.xlu0 %v204, 106
        %v498 = vpop.permute.xlu0 %497
        %499 = vrot.lane.b32.xlu0 %v205, 106
        %v500 = vpop.permute.xlu0 %499
        %501 = vrot.lane.b32.xlu0 %v206, 106
        %v502 = vpop.permute.xlu0 %501
        %503 = vrot.lane.b32.xlu0 %v207, 106
        %v504 = vpop.permute.xlu0 %503
        %505 = vrot.lane.b32.xlu0 %v208, 106
        %v506 = vpop.permute.xlu0 %505
        %vm507 = vcmask 867328
        %v508 = vsel %vm507, %v492, %v494
        %v509 = vsel %vm507, %v494, %v496
        %v510 = vsel %vm507, %v496, %v498
        %v511 = vsel %vm507, %v498, %v500
        %v512 = vsel %vm507, %v500, %v502
        %v513 = vsel %vm507, %v502, %v504
        %v514 = vsel %vm507, %v504, %v506
        %522 = vst [vmem:[#allocation2 + $0x1c0] sm:$0xff] %v508
        %523 = vst [vmem:[#allocation2 + $0x1c8] sm:$0xff] %v509
        %524 = vst [vmem:[#allocation2 + $0x1d0] sm:$0xff] %v510
        %525 = vst [vmem:[#allocation2 + $0x1d8] sm:$0xff] %v511
        %526 = vst [vmem:[#allocation2 + $0x1e0] sm:$0xff] %v512
        %527 = vst [vmem:[#allocation2 + $0x1e8] sm:$0xff] %v513
        %528 = vst [vmem:[#allocation2 + $0x1f0] sm:$0xff] %v514
        %529 = vrot.lane.b32.xlu0 %v201, 28
        %v530 = vpop.permute.xlu0 %529
        %531 = vrot.lane.b32.xlu0 %v202, 28
        %v532 = vpop.permute.xlu0 %531
        %533 = vrot.lane.b32.xlu0 %v203, 28
        %v534 = vpop.permute.xlu0 %533
        %535 = vrot.lane.b32.xlu0 %v204, 28
        %v536 = vpop.permute.xlu0 %535
        %537 = vrot.lane.b32.xlu0 %v205, 28
        %v538 = vpop.permute.xlu0 %537
        %539 = vrot.lane.b32.xlu0 %v206, 28
        %v540 = vpop.permute.xlu0 %539
        %541 = vrot.lane.b32.xlu0 %v207, 28
        %v542 = vpop.permute.xlu0 %541
        %543 = vrot.lane.b32.xlu0 %v208, 28
        %v544 = vpop.permute.xlu0 %543
        %vm545 = vcmask 228352
        %v546 = vsel %vm545, %v530, %v532
        %v547 = vsel %vm545, %v532, %v534
        %v548 = vsel %vm545, %v534, %v536
        %v549 = vsel %vm545, %v536, %v538
        %v550 = vsel %vm545, %v538, %v540
        %v551 = vsel %vm545, %v540, %v542
        %v552 = vsel %vm545, %v542, %v544
        %560 = vst [vmem:[#allocation2 + $0x1f8] sm:$0xff] %v546
        %561 = vst [vmem:[#allocation2 + $0x200] sm:$0xff] %v547
        %562 = vst [vmem:[#allocation2 + $0x208] sm:$0xff] %v548
        %563 = vst [vmem:[#allocation2 + $0x210] sm:$0xff] %v549
        %564 = vst [vmem:[#allocation2 + $0x218] sm:$0xff] %v550
        %565 = vst [vmem:[#allocation2 + $0x220] sm:$0xff] %v551
        %566 = vst [vmem:[#allocation2 + $0x228] sm:$0xff] %v552
        %567 = vrot.lane.b32.xlu0 %v201, 27
        %v568 = vpop.permute.xlu0 %567
        %569 = vrot.lane.b32.xlu0 %v202, 27
        %v570 = vpop.permute.xlu0 %569
        %571 = vrot.lane.b32.xlu0 %v203, 27
        %v572 = vpop.permute.xlu0 %571
        %573 = vrot.lane.b32.xlu0 %v204, 27
        %v574 = vpop.permute.xlu0 %573
        %575 = vrot.lane.b32.xlu0 %v205, 27
        %v576 = vpop.permute.xlu0 %575
        %577 = vrot.lane.b32.xlu0 %v206, 27
        %v578 = vpop.permute.xlu0 %577
        %579 = vrot.lane.b32.xlu0 %v207, 27
        %v580 = vpop.permute.xlu0 %579
        %581 = vrot.lane.b32.xlu0 %v208, 27
        %v582 = vpop.permute.xlu0 %581
        %vm583 = vcmask 220160
        %v584 = vsel %vm583, %v568, %v570
        %v585 = vsel %vm583, %v570, %v572
        %v586 = vsel %vm583, %v572, %v574
        %v587 = vsel %vm583, %v574, %v576
        %v588 = vsel %vm583, %v576, %v578
        %v589 = vsel %vm583, %v578, %v580
        %v590 = vsel %vm583, %v580, %v582
        %598 = vst [vmem:[#allocation2 + $0x230] sm:$0xff] %v584
        %599 = vst [vmem:[#allocation2 + $0x238] sm:$0xff] %v585
        %600 = vst [vmem:[#allocation2 + $0x240] sm:$0xff] %v586
        %601 = vst [vmem:[#allocation2 + $0x248] sm:$0xff] %v587
        %602 = vst [vmem:[#allocation2 + $0x250] sm:$0xff] %v588
        %603 = vst [vmem:[#allocation2 + $0x258] sm:$0xff] %v589
        %604 = vst [vmem:[#allocation2 + $0x260] sm:$0xff] %v590
        %605 = vrot.lane.b32.xlu0 %v201, 26
        %v606 = vpop.permute.xlu0 %605
        %607 = vrot.lane.b32.xlu0 %v202, 26
        %v608 = vpop.permute.xlu0 %607
        %609 = vrot.lane.b32.xlu0 %v203, 26
        %v610 = vpop.permute.xlu0 %609
        %611 = vrot.lane.b32.xlu0 %v204, 26
        %v612 = vpop.permute.xlu0 %611
        %613 = vrot.lane.b32.xlu0 %v205, 26
        %v614 = vpop.permute.xlu0 %613
        %615 = vrot.lane.b32.xlu0 %v206, 26
        %v616 = vpop.permute.xlu0 %615
        %617 = vrot.lane.b32.xlu0 %v207, 26
        %v618 = vpop.permute.xlu0 %617
        %619 = vrot.lane.b32.xlu0 %v208, 26
        %v620 = vpop.permute.xlu0 %619
        %vm621 = vcmask 211968
        %v622 = vsel %vm621, %v606, %v608
        %v623 = vsel %vm621, %v608, %v610
        %v624 = vsel %vm621, %v610, %v612
        %v625 = vsel %vm621, %v612, %v614
        %v626 = vsel %vm621, %v614, %v616
        %v627 = vsel %vm621, %v616, %v618
        %v628 = vsel %vm621, %v618, %v620
        %636 = vst [vmem:[#allocation2 + $0x268] sm:$0xff] %v622
        %637 = vst [vmem:[#allocation2 + $0x270] sm:$0xff] %v623
        %638 = vst [vmem:[#allocation2 + $0x278] sm:$0xff] %v624
        %639 = vst [vmem:[#allocation2 + $0x280] sm:$0xff] %v625
        %640 = vst [vmem:[#allocation2 + $0x288] sm:$0xff] %v626
        %641 = vst [vmem:[#allocation2 + $0x290] sm:$0xff] %v627
        %642 = vst [vmem:[#allocation2 + $0x298] sm:$0xff] %v628
        %643 = vrot.lane.b32.xlu0 %v201, 18
        %v644 = vpop.permute.xlu0 %643
        %645 = vrot.lane.b32.xlu0 %v202, 18
        %v646 = vpop.permute.xlu0 %645
        %647 = vrot.lane.b32.xlu0 %v203, 18
        %v648 = vpop.permute.xlu0 %647
        %649 = vrot.lane.b32.xlu0 %v204, 18
        %v650 = vpop.permute.xlu0 %649
        %651 = vrot.lane.b32.xlu0 %v205, 18
        %v652 = vpop.permute.xlu0 %651
        %653 = vrot.lane.b32.xlu0 %v206, 18
        %v654 = vpop.permute.xlu0 %653
        %655 = vrot.lane.b32.xlu0 %v207, 18
        %v656 = vpop.permute.xlu0 %655
        %657 = vrot.lane.b32.xlu0 %v208, 18
        %v658 = vpop.permute.xlu0 %657
        %vm659 = vcmask 146432
        %v660 = vsel %vm659, %v644, %v646
        %v661 = vsel %vm659, %v646, %v648
        %v662 = vsel %vm659, %v648, %v650
        %v663 = vsel %vm659, %v650, %v652
        %v664 = vsel %vm659, %v652, %v654
        %v665 = vsel %vm659, %v654, %v656
        %v666 = vsel %vm659, %v656, %v658
        %674 = vst [vmem:[#allocation2 + $0x2a0] sm:$0xff] %v660
        %675 = vst [vmem:[#allocation2 + $0x2a8] sm:$0xff] %v661
        %676 = vst [vmem:[#allocation2 + $0x2b0] sm:$0xff] %v662
        %677 = vst [vmem:[#allocation2 + $0x2b8] sm:$0xff] %v663
        %678 = vst [vmem:[#allocation2 + $0x2c0] sm:$0xff] %v664
        %679 = vst [vmem:[#allocation2 + $0x2c8] sm:$0xff] %v665
        %680 = vst [vmem:[#allocation2 + $0x2d0] sm:$0xff] %v666
        %681 = vrot.lane.b32.xlu0 %v201, 17
        %v682 = vpop.permute.xlu0 %681
        %683 = vrot.lane.b32.xlu0 %v202, 17
        %v684 = vpop.permute.xlu0 %683
        %685 = vrot.lane.b32.xlu0 %v203, 17
        %v686 = vpop.permute.xlu0 %685
        %687 = vrot.lane.b32.xlu0 %v204, 17
        %v688 = vpop.permute.xlu0 %687
        %689 = vrot.lane.b32.xlu0 %v205, 17
        %v690 = vpop.permute.xlu0 %689
        %691 = vrot.lane.b32.xlu0 %v206, 17
        %v692 = vpop.permute.xlu0 %691
        %693 = vrot.lane.b32.xlu0 %v207, 17
        %v694 = vpop.permute.xlu0 %693
        %695 = vrot.lane.b32.xlu0 %v208, 17
        %v696 = vpop.permute.xlu0 %695
        %vm697 = vcmask 138240
        %v698 = vsel %vm697, %v682, %v684
        %v699 = vsel %vm697, %v684, %v686
        %v700 = vsel %vm697, %v686, %v688
        %v701 = vsel %vm697, %v688, %v690
        %v702 = vsel %vm697, %v690, %v692
        %v703 = vsel %vm697, %v692, %v694
        %v704 = vsel %vm697, %v694, %v696
        %712 = vst [vmem:[#allocation2 + $0x2d8] sm:$0xff] %v698
        %713 = vst [vmem:[#allocation2 + $0x2e0] sm:$0xff] %v699
        %714 = vst [vmem:[#allocation2 + $0x2e8] sm:$0xff] %v700
        %715 = vst [vmem:[#allocation2 + $0x2f0] sm:$0xff] %v701
        %716 = vst [vmem:[#allocation2 + $0x2f8] sm:$0xff] %v702
        %717 = vst [vmem:[#allocation2 + $0x300] sm:$0xff] %v703
        %718 = vst [vmem:[#allocation2 + $0x308] sm:$0xff] %v704
        %719 = vrot.lane.b32.xlu0 %v201, 16
        %v720 = vpop.permute.xlu0 %719
        %721 = vrot.lane.b32.xlu0 %v202, 16
        %v722 = vpop.permute.xlu0 %721
        %723 = vrot.lane.b32.xlu0 %v203, 16
        %v724 = vpop.permute.xlu0 %723
        %725 = vrot.lane.b32.xlu0 %v204, 16
        %v726 = vpop.permute.xlu0 %725
        %727 = vrot.lane.b32.xlu0 %v205, 16
        %v728 = vpop.permute.xlu0 %727
        %729 = vrot.lane.b32.xlu0 %v206, 16
        %v730 = vpop.permute.xlu0 %729
        %731 = vrot.lane.b32.xlu0 %v207, 16
        %v732 = vpop.permute.xlu0 %731
        %733 = vrot.lane.b32.xlu0 %v208, 16
        %v734 = vpop.permute.xlu0 %733
        %vm735 = vcmask 130048
        %v736 = vsel %vm735, %v720, %v722
        %v737 = vsel %vm735, %v722, %v724
        %v738 = vsel %vm735, %v724, %v726
        %v739 = vsel %vm735, %v726, %v728
        %v740 = vsel %vm735, %v728, %v730
        %v741 = vsel %vm735, %v730, %v732
        %v742 = vsel %vm735, %v732, %v734
        %750 = vst [vmem:[#allocation2 + $0x310] sm:$0xff] %v736
        %751 = vst [vmem:[#allocation2 + $0x318] sm:$0xff] %v737
        %752 = vst [vmem:[#allocation2 + $0x320] sm:$0xff] %v738
        %753 = vst [vmem:[#allocation2 + $0x328] sm:$0xff] %v739
        %754 = vst [vmem:[#allocation2 + $0x330] sm:$0xff] %v740
        %755 = vst [vmem:[#allocation2 + $0x338] sm:$0xff] %v741
        %756 = vst [vmem:[#allocation2 + $0x340] sm:$0xff] %v742
        %757 = vrot.lane.b32.xlu0 %v201, 8
        %v758 = vpop.permute.xlu0 %757
        %759 = vrot.lane.b32.xlu0 %v202, 8
        %v760 = vpop.permute.xlu0 %759
        %761 = vrot.lane.b32.xlu0 %v203, 8
        %v762 = vpop.permute.xlu0 %761
        %763 = vrot.lane.b32.xlu0 %v204, 8
        %v764 = vpop.permute.xlu0 %763
        %765 = vrot.lane.b32.xlu0 %v205, 8
        %v766 = vpop.permute.xlu0 %765
        %767 = vrot.lane.b32.xlu0 %v206, 8
        %v768 = vpop.permute.xlu0 %767
        %769 = vrot.lane.b32.xlu0 %v207, 8
        %v770 = vpop.permute.xlu0 %769
        %771 = vrot.lane.b32.xlu0 %v208, 8
        %v772 = vpop.permute.xlu0 %771
        %vm773 = vcmask 64512
        %v774 = vsel %vm773, %v758, %v760
        %v775 = vsel %vm773, %v760, %v762
        %v776 = vsel %vm773, %v762, %v764
        %v777 = vsel %vm773, %v764, %v766
        %v778 = vsel %vm773, %v766, %v768
        %v779 = vsel %vm773, %v768, %v770
        %v780 = vsel %vm773, %v770, %v772
        %788 = vst [vmem:[#allocation2 + $0x348] sm:$0xff] %v774
        %789 = vst [vmem:[#allocation2 + $0x350] sm:$0xff] %v775
        %790 = vst [vmem:[#allocation2 + $0x358] sm:$0xff] %v776
        %791 = vst [vmem:[#allocation2 + $0x360] sm:$0xff] %v777
        %792 = vst [vmem:[#allocation2 + $0x368] sm:$0xff] %v778
        %793 = vst [vmem:[#allocation2 + $0x370] sm:$0xff] %v779
        %794 = vst [vmem:[#allocation2 + $0x378] sm:$0xff] %v780
        %795 = vrot.lane.b32.xlu0 %v201, 7
        %v796 = vpop.permute.xlu0 %795
        %797 = vrot.lane.b32.xlu0 %v202, 7
        %v798 = vpop.permute.xlu0 %797
        %799 = vrot.lane.b32.xlu0 %v203, 7
        %v800 = vpop.permute.xlu0 %799
        %801 = vrot.lane.b32.xlu0 %v204, 7
        %v802 = vpop.permute.xlu0 %801
        %803 = vrot.lane.b32.xlu0 %v205, 7
        %v804 = vpop.permute.xlu0 %803
        %805 = vrot.lane.b32.xlu0 %v206, 7
        %v806 = vpop.permute.xlu0 %805
        %807 = vrot.lane.b32.xlu0 %v207, 7
        %v808 = vpop.permute.xlu0 %807
        %809 = vrot.lane.b32.xlu0 %v208, 7
        %v810 = vpop.permute.xlu0 %809
        %vm811 = vcmask 56320
        %v812 = vsel %vm811, %v796, %v798
        %v813 = vsel %vm811, %v798, %v800
        %v814 = vsel %vm811, %v800, %v802
        %v815 = vsel %vm811, %v802, %v804
        %v816 = vsel %vm811, %v804, %v806
        %v817 = vsel %vm811, %v806, %v808
        %v818 = vsel %vm811, %v808, %v810
        %826 = vst [vmem:[#allocation2 + $0x380] sm:$0xff] %v812
        %827 = vst [vmem:[#allocation2 + $0x388] sm:$0xff] %v813
        %828 = vst [vmem:[#allocation2 + $0x390] sm:$0xff] %v814
        %829 = vst [vmem:[#allocation2 + $0x398] sm:$0xff] %v815
        %830 = vst [vmem:[#allocation2 + $0x3a0] sm:$0xff] %v816
        %831 = vst [vmem:[#allocation2 + $0x3a8] sm:$0xff] %v817
        %832 = vst [vmem:[#allocation2 + $0x3b0] sm:$0xff] %v818
        %833 = vrot.lane.b32.xlu0 %v201, 6
        %v834 = vpop.permute.xlu0 %833
        %835 = vrot.lane.b32.xlu0 %v202, 6
        %v836 = vpop.permute.xlu0 %835
        %837 = vrot.lane.b32.xlu0 %v203, 6
        %v838 = vpop.permute.xlu0 %837
        %839 = vrot.lane.b32.xlu0 %v204, 6
        %v840 = vpop.permute.xlu0 %839
        %841 = vrot.lane.b32.xlu0 %v205, 6
        %v842 = vpop.permute.xlu0 %841
        %843 = vrot.lane.b32.xlu0 %v206, 6
        %v844 = vpop.permute.xlu0 %843
        %845 = vrot.lane.b32.xlu0 %v207, 6
        %v846 = vpop.permute.xlu0 %845
        %847 = vrot.lane.b32.xlu0 %v208, 6
        %v848 = vpop.permute.xlu0 %847
        %vm849 = vcmask 48128
        %v850 = vsel %vm849, %v834, %v836
        %v851 = vsel %vm849, %v836, %v838
        %v852 = vsel %vm849, %v838, %v840
        %v853 = vsel %vm849, %v840, %v842
        %v854 = vsel %vm849, %v842, %v844
        %v855 = vsel %vm849, %v844, %v846
        %v856 = vsel %vm849, %v846, %v848
        %864 = vst [vmem:[#allocation2 + $0x3b8] sm:$0xff] %v850
        %865 = vst [vmem:[#allocation2 + $0x3c0] sm:$0xff] %v851
        %866 = vst [vmem:[#allocation2 + $0x3c8] sm:$0xff] %v852
        %867 = vst [vmem:[#allocation2 + $0x3d0] sm:$0xff] %v853
        %868 = vst [vmem:[#allocation2 + $0x3d8] sm:$0xff] %v854
        %869 = vst [vmem:[#allocation2 + $0x3e0] sm:$0xff] %v855
        %870 = vst [vmem:[#allocation2 + $0x3e8] sm:$0xff] %v856
        %872 = vrot.lane.b32.xlu0 %v202, 56
        %v873 = vpop.permute.xlu0 %872
        %874 = vrot.lane.b32.xlu0 %v203, 56
        %v875 = vpop.permute.xlu0 %874
        %876 = vrot.lane.b32.xlu0 %v204, 56
        %v877 = vpop.permute.xlu0 %876
        %878 = vrot.lane.b32.xlu0 %v205, 56
        %v879 = vpop.permute.xlu0 %878
        %880 = vrot.lane.b32.xlu0 %v206, 56
        %v881 = vpop.permute.xlu0 %880
        %882 = vrot.lane.b32.xlu0 %v207, 56
        %v883 = vpop.permute.xlu0 %882
        %884 = vrot.lane.b32.xlu0 %v208, 56
        %v885 = vpop.permute.xlu0 %884
        %886 = vrot.lane.b32.xlu0 %v209, 56
        %v887 = vpop.permute.xlu0 %886
        %vm888 = vcmask 457728
        %v889 = vsel %vm888, %v873, %v875
        %v890 = vsel %vm888, %v875, %v877
        %v891 = vsel %vm888, %v877, %v879
        %v892 = vsel %vm888, %v879, %v881
        %v893 = vsel %vm888, %v881, %v883
        %v894 = vsel %vm888, %v883, %v885
        %v895 = vsel %vm888, %v885, %v887
        %903 = vst [vmem:[#allocation2 + $0x3f0] sm:$0xff] %v889
        %904 = vst [vmem:[#allocation2 + $0x3f8] sm:$0xff] %v890
        %905 = vst [vmem:[#allocation2 + $0x400] sm:$0xff] %v891
        %906 = vst [vmem:[#allocation2 + $0x408] sm:$0xff] %v892
        %907 = vst [vmem:[#allocation2 + $0x410] sm:$0xff] %v893
        %908 = vst [vmem:[#allocation2 + $0x418] sm:$0xff] %v894
        %909 = vst [vmem:[#allocation2 + $0x420] sm:$0xff] %v895
        %910 = vrot.lane.b32.xlu0 %v202, 55
        %v911 = vpop.permute.xlu0 %910
        %912 = vrot.lane.b32.xlu0 %v203, 55
        %v913 = vpop.permute.xlu0 %912
        %914 = vrot.lane.b32.xlu0 %v204, 55
        %v915 = vpop.permute.xlu0 %914
        %916 = vrot.lane.b32.xlu0 %v205, 55
        %v917 = vpop.permute.xlu0 %916
        %918 = vrot.lane.b32.xlu0 %v206, 55
        %v919 = vpop.permute.xlu0 %918
        %920 = vrot.lane.b32.xlu0 %v207, 55
        %v921 = vpop.permute.xlu0 %920
        %922 = vrot.lane.b32.xlu0 %v208, 55
        %v923 = vpop.permute.xlu0 %922
        %924 = vrot.lane.b32.xlu0 %v209, 55
        %v925 = vpop.permute.xlu0 %924
        %vm926 = vcmask 449536
        %v927 = vsel %vm926, %v911, %v913
        %v928 = vsel %vm926, %v913, %v915
        %v929 = vsel %vm926, %v915, %v917
        %v930 = vsel %vm926, %v917, %v919
        %v931 = vsel %vm926, %v919, %v921
        %v932 = vsel %vm926, %v921, %v923
        %v933 = vsel %vm926, %v923, %v925
        %941 = vst [vmem:[#allocation2 + $0x428] sm:$0xff] %v927
        %942 = vst [vmem:[#allocation2 + $0x430] sm:$0xff] %v928
        %943 = vst [vmem:[#allocation2 + $0x438] sm:$0xff] %v929
        %944 = vst [vmem:[#allocation2 + $0x440] sm:$0xff] %v930
        %945 = vst [vmem:[#allocation2 + $0x448] sm:$0xff] %v931
        %946 = vst [vmem:[#allocation2 + $0x450] sm:$0xff] %v932
        %947 = vst [vmem:[#allocation2 + $0x458] sm:$0xff] %v933
        %948 = vrot.lane.b32.xlu0 %v202, 54
        %v949 = vpop.permute.xlu0 %948
        %950 = vrot.lane.b32.xlu0 %v203, 54
        %v951 = vpop.permute.xlu0 %950
        %952 = vrot.lane.b32.xlu0 %v204, 54
        %v953 = vpop.permute.xlu0 %952
        %954 = vrot.lane.b32.xlu0 %v205, 54
        %v955 = vpop.permute.xlu0 %954
        %956 = vrot.lane.b32.xlu0 %v206, 54
        %v957 = vpop.permute.xlu0 %956
        %958 = vrot.lane.b32.xlu0 %v207, 54
        %v959 = vpop.permute.xlu0 %958
        %960 = vrot.lane.b32.xlu0 %v208, 54
        %v961 = vpop.permute.xlu0 %960
        %962 = vrot.lane.b32.xlu0 %v209, 54
        %v963 = vpop.permute.xlu0 %962
        %vm964 = vcmask 441344
        %v965 = vsel %vm964, %v949, %v951
        %v966 = vsel %vm964, %v951, %v953
        %v967 = vsel %vm964, %v953, %v955
        %v968 = vsel %vm964, %v955, %v957
        %v969 = vsel %vm964, %v957, %v959
        %v970 = vsel %vm964, %v959, %v961
        %v971 = vsel %vm964, %v961, %v963
        %979 = vst [vmem:[#allocation2 + $0x460] sm:$0xff] %v965
        %980 = vst [vmem:[#allocation2 + $0x468] sm:$0xff] %v966
        %981 = vst [vmem:[#allocation2 + $0x470] sm:$0xff] %v967
        %982 = vst [vmem:[#allocation2 + $0x478] sm:$0xff] %v968
        %983 = vst [vmem:[#allocation2 + $0x480] sm:$0xff] %v969
        %984 = vst [vmem:[#allocation2 + $0x488] sm:$0xff] %v970
        %985 = vst [vmem:[#allocation2 + $0x490] sm:$0xff] %v971
        %986 = vrot.lane.b32.xlu0 %v202, 46
        %v987 = vpop.permute.xlu0 %986
        %988 = vrot.lane.b32.xlu0 %v203, 46
        %v989 = vpop.permute.xlu0 %988
        %990 = vrot.lane.b32.xlu0 %v204, 46
        %v991 = vpop.permute.xlu0 %990
        %992 = vrot.lane.b32.xlu0 %v205, 46
        %v993 = vpop.permute.xlu0 %992
        %994 = vrot.lane.b32.xlu0 %v206, 46
        %v995 = vpop.permute.xlu0 %994
        %996 = vrot.lane.b32.xlu0 %v207, 46
        %v997 = vpop.permute.xlu0 %996
        %998 = vrot.lane.b32.xlu0 %v208, 46
        %v999 = vpop.permute.xlu0 %998
        %1000 = vrot.lane.b32.xlu0 %v209, 46
        %v1001 = vpop.permute.xlu0 %1000
        %vm1002 = vcmask 375808
        %v1003 = vsel %vm1002, %v987, %v989
        %v1004 = vsel %vm1002, %v989, %v991
        %v1005 = vsel %vm1002, %v991, %v993
        %v1006 = vsel %vm1002, %v993, %v995
        %v1007 = vsel %vm1002, %v995, %v997
        %v1008 = vsel %vm1002, %v997, %v999
        %v1009 = vsel %vm1002, %v999, %v1001
        %1017 = vst [vmem:[#allocation2 + $0x498] sm:$0xff] %v1003
        %1018 = vst [vmem:[#allocation2 + $0x4a0] sm:$0xff] %v1004
        %1019 = vst [vmem:[#allocation2 + $0x4a8] sm:$0xff] %v1005
        %1020 = vst [vmem:[#allocation2 + $0x4b0] sm:$0xff] %v1006
        %1021 = vst [vmem:[#allocation2 + $0x4b8] sm:$0xff] %v1007
        %1022 = vst [vmem:[#allocation2 + $0x4c0] sm:$0xff] %v1008
        %1023 = vst [vmem:[#allocation2 + $0x4c8] sm:$0xff] %v1009
        %1024 = vrot.lane.b32.xlu0 %v202, 45
        %v1025 = vpop.permute.xlu0 %1024
        %1026 = vrot.lane.b32.xlu0 %v203, 45
        %v1027 = vpop.permute.xlu0 %1026
        %1028 = vrot.lane.b32.xlu0 %v204, 45
        %v1029 = vpop.permute.xlu0 %1028
        %1030 = vrot.lane.b32.xlu0 %v205, 45
        %v1031 = vpop.permute.xlu0 %1030
        %1032 = vrot.lane.b32.xlu0 %v206, 45
        %v1033 = vpop.permute.xlu0 %1032
        %1034 = vrot.lane.b32.xlu0 %v207, 45
        %v1035 = vpop.permute.xlu0 %1034
        %1036 = vrot.lane.b32.xlu0 %v208, 45
        %v1037 = vpop.permute.xlu0 %1036
        %1038 = vrot.lane.b32.xlu0 %v209, 45
        %v1039 = vpop.permute.xlu0 %1038
        %vm1040 = vcmask 367616
        %v1041 = vsel %vm1040, %v1025, %v1027
        %v1042 = vsel %vm1040, %v1027, %v1029
        %v1043 = vsel %vm1040, %v1029, %v1031
        %v1044 = vsel %vm1040, %v1031, %v1033
        %v1045 = vsel %vm1040, %v1033, %v1035
        %v1046 = vsel %vm1040, %v1035, %v1037
        %v1047 = vsel %vm1040, %v1037, %v1039
        %1055 = vst [vmem:[#allocation2 + $0x4d0] sm:$0xff] %v1041
        %1056 = vst [vmem:[#allocation2 + $0x4d8] sm:$0xff] %v1042
        %1057 = vst [vmem:[#allocation2 + $0x4e0] sm:$0xff] %v1043
        %1058 = vst [vmem:[#allocation2 + $0x4e8] sm:$0xff] %v1044
        %1059 = vst [vmem:[#allocation2 + $0x4f0] sm:$0xff] %v1045
        %1060 = vst [vmem:[#allocation2 + $0x4f8] sm:$0xff] %v1046
        %1061 = vst [vmem:[#allocation2 + $0x500] sm:$0xff] %v1047
        %1062 = vrot.lane.b32.xlu0 %v202, 44
        %v1063 = vpop.permute.xlu0 %1062
        %1064 = vrot.lane.b32.xlu0 %v203, 44
        %v1065 = vpop.permute.xlu0 %1064
        %1066 = vrot.lane.b32.xlu0 %v204, 44
        %v1067 = vpop.permute.xlu0 %1066
        %1068 = vrot.lane.b32.xlu0 %v205, 44
        %v1069 = vpop.permute.xlu0 %1068
        %1070 = vrot.lane.b32.xlu0 %v206, 44
        %v1071 = vpop.permute.xlu0 %1070
        %1072 = vrot.lane.b32.xlu0 %v207, 44
        %v1073 = vpop.permute.xlu0 %1072
        %1074 = vrot.lane.b32.xlu0 %v208, 44
        %v1075 = vpop.permute.xlu0 %1074
        %1076 = vrot.lane.b32.xlu0 %v209, 44
        %v1077 = vpop.permute.xlu0 %1076
        %vm1078 = vcmask 359424
        %v1079 = vsel %vm1078, %v1063, %v1065
        %v1080 = vsel %vm1078, %v1065, %v1067
        %v1081 = vsel %vm1078, %v1067, %v1069
        %v1082 = vsel %vm1078, %v1069, %v1071
        %v1083 = vsel %vm1078, %v1071, %v1073
        %v1084 = vsel %vm1078, %v1073, %v1075
        %v1085 = vsel %vm1078, %v1075, %v1077
        %1093 = vst [vmem:[#allocation2 + $0x508] sm:$0xff] %v1079
        %1094 = vst [vmem:[#allocation2 + $0x510] sm:$0xff] %v1080
        %1095 = vst [vmem:[#allocation2 + $0x518] sm:$0xff] %v1081
        %1096 = vst [vmem:[#allocation2 + $0x520] sm:$0xff] %v1082
        %1097 = vst [vmem:[#allocation2 + $0x528] sm:$0xff] %v1083
        %1098 = vst [vmem:[#allocation2 + $0x530] sm:$0xff] %v1084
        %1099 = vst [vmem:[#allocation2 + $0x538] sm:$0xff] %v1085
        %1100 = vrot.lane.b32.xlu0 %v202, 36
        %v1101 = vpop.permute.xlu0 %1100
        %1102 = vrot.lane.b32.xlu0 %v203, 36
        %v1103 = vpop.permute.xlu0 %1102
        %1104 = vrot.lane.b32.xlu0 %v204, 36
        %v1105 = vpop.permute.xlu0 %1104
        %1106 = vrot.lane.b32.xlu0 %v205, 36
        %v1107 = vpop.permute.xlu0 %1106
        %1108 = vrot.lane.b32.xlu0 %v206, 36
        %v1109 = vpop.permute.xlu0 %1108
        %1110 = vrot.lane.b32.xlu0 %v207, 36
        %v1111 = vpop.permute.xlu0 %1110
        %1112 = vrot.lane.b32.xlu0 %v208, 36
        %v1113 = vpop.permute.xlu0 %1112
        %1114 = vrot.lane.b32.xlu0 %v209, 36
        %v1115 = vpop.permute.xlu0 %1114
        %vm1116 = vcmask 293888
        %v1117 = vsel %vm1116, %v1101, %v1103
        %v1118 = vsel %vm1116, %v1103, %v1105
        %v1119 = vsel %vm1116, %v1105, %v1107
        %v1120 = vsel %vm1116, %v1107, %v1109
        %v1121 = vsel %vm1116, %v1109, %v1111
        %v1122 = vsel %vm1116, %v1111, %v1113
        %v1123 = vsel %vm1116, %v1113, %v1115
        %1131 = vst [vmem:[#allocation2 + $0x540] sm:$0xff] %v1117
        %1132 = vst [vmem:[#allocation2 + $0x548] sm:$0xff] %v1118
        %1133 = vst [vmem:[#allocation2 + $0x550] sm:$0xff] %v1119
        %1134 = vst [vmem:[#allocation2 + $0x558] sm:$0xff] %v1120
        %1135 = vst [vmem:[#allocation2 + $0x560] sm:$0xff] %v1121
        %1136 = vst [vmem:[#allocation2 + $0x568] sm:$0xff] %v1122
        %1137 = vst [vmem:[#allocation2 + $0x570] sm:$0xff] %v1123
        %1138 = vrot.lane.b32.xlu0 %v202, 35
        %v1139 = vpop.permute.xlu0 %1138
        %1140 = vrot.lane.b32.xlu0 %v203, 35
        %v1141 = vpop.permute.xlu0 %1140
        %1142 = vrot.lane.b32.xlu0 %v204, 35
        %v1143 = vpop.permute.xlu0 %1142
        %1144 = vrot.lane.b32.xlu0 %v205, 35
        %v1145 = vpop.permute.xlu0 %1144
        %1146 = vrot.lane.b32.xlu0 %v206, 35
        %v1147 = vpop.permute.xlu0 %1146
        %1148 = vrot.lane.b32.xlu0 %v207, 35
        %v1149 = vpop.permute.xlu0 %1148
        %1150 = vrot.lane.b32.xlu0 %v208, 35
        %v1151 = vpop.permute.xlu0 %1150
        %1152 = vrot.lane.b32.xlu0 %v209, 35
        %v1153 = vpop.permute.xlu0 %1152
        %vm1154 = vcmask 285696
        %v1155 = vsel %vm1154, %v1139, %v1141
        %v1156 = vsel %vm1154, %v1141, %v1143
        %v1157 = vsel %vm1154, %v1143, %v1145
        %v1158 = vsel %vm1154, %v1145, %v1147
        %v1159 = vsel %vm1154, %v1147, %v1149
        %v1160 = vsel %vm1154, %v1149, %v1151
        %v1161 = vsel %vm1154, %v1151, %v1153
        %1169 = vst [vmem:[#allocation2 + $0x578] sm:$0xff] %v1155
        %1170 = vst [vmem:[#allocation2 + $0x580] sm:$0xff] %v1156
        %1171 = vst [vmem:[#allocation2 + $0x588] sm:$0xff] %v1157
        %1172 = vst [vmem:[#allocation2 + $0x590] sm:$0xff] %v1158
        %1173 = vst [vmem:[#allocation2 + $0x598] sm:$0xff] %v1159
        %1174 = vst [vmem:[#allocation2 + $0x5a0] sm:$0xff] %v1160
        %1175 = vst [vmem:[#allocation2 + $0x5a8] sm:$0xff] %v1161
        %1176 = vrot.lane.b32.xlu0 %v202, 34
        %v1177 = vpop.permute.xlu0 %1176
        %1178 = vrot.lane.b32.xlu0 %v203, 34
        %v1179 = vpop.permute.xlu0 %1178
        %1180 = vrot.lane.b32.xlu0 %v204, 34
        %v1181 = vpop.permute.xlu0 %1180
        %1182 = vrot.lane.b32.xlu0 %v205, 34
        %v1183 = vpop.permute.xlu0 %1182
        %1184 = vrot.lane.b32.xlu0 %v206, 34
        %v1185 = vpop.permute.xlu0 %1184
        %1186 = vrot.lane.b32.xlu0 %v207, 34
        %v1187 = vpop.permute.xlu0 %1186
        %1188 = vrot.lane.b32.xlu0 %v208, 34
        %v1189 = vpop.permute.xlu0 %1188
        %1190 = vrot.lane.b32.xlu0 %v209, 34
        %v1191 = vpop.permute.xlu0 %1190
        %vm1192 = vcmask 277504
        %v1193 = vsel %vm1192, %v1177, %v1179
        %v1194 = vsel %vm1192, %v1179, %v1181
        %v1195 = vsel %vm1192, %v1181, %v1183
        %v1196 = vsel %vm1192, %v1183, %v1185
        %v1197 = vsel %vm1192, %v1185, %v1187
        %v1198 = vsel %vm1192, %v1187, %v1189
        %v1199 = vsel %vm1192, %v1189, %v1191
        %1207 = vst [vmem:[#allocation2 + $0x5b0] sm:$0xff] %v1193
        %1208 = vst [vmem:[#allocation2 + $0x5b8] sm:$0xff] %v1194
        %1209 = vst [vmem:[#allocation2 + $0x5c0] sm:$0xff] %v1195
        %1210 = vst [vmem:[#allocation2 + $0x5c8] sm:$0xff] %v1196
        %1211 = vst [vmem:[#allocation2 + $0x5d0] sm:$0xff] %v1197
        %1212 = vst [vmem:[#allocation2 + $0x5d8] sm:$0xff] %v1198
        %1213 = vst [vmem:[#allocation2 + $0x5e0] sm:$0xff] %v1199
        %v1214 = vld [vmem:[#allocation3] sm:$0xff]
        %v1215 = vld [vmem:[#allocation3 + $0x8] sm:$0xff]
        %v1216 = vld [vmem:[#allocation3 + $0x10] sm:$0xff]
        %v1217 = vld [vmem:[#allocation3 + $0x18] sm:$0xff]
        %v1218 = vld [vmem:[#allocation3 + $0x20] sm:$0xff]
        %v1219 = vld [vmem:[#allocation3 + $0x28] sm:$0xff]
        %v1220 = vld [vmem:[#allocation3 + $0x30] sm:$0xff]
        %v1221 = vld [vmem:[#allocation3 + $0x38] sm:$0xff]
        %v1222 = vld [vmem:[#allocation2] sm:$0xff]
        %v1223 = vld [vmem:[#allocation2 + $0x8] sm:$0xff]
        %v1224 = vld [vmem:[#allocation2 + $0x10] sm:$0xff]
        %v1225 = vld [vmem:[#allocation2 + $0x18] sm:$0xff]
        %v1226 = vld [vmem:[#allocation2 + $0x20] sm:$0xff]
        %v1227 = vld [vmem:[#allocation2 + $0x28] sm:$0xff]
        %v1228 = vld [vmem:[#allocation2 + $0x30] sm:$0xff]
        %v1229 = vld [vmem:[#allocation2 + $0x38] sm:$0xff]
        %v1230 = vld [vmem:[#allocation2 + $0x40] sm:$0xff]
        %v1231 = vld [vmem:[#allocation2 + $0x48] sm:$0xff]
        %v1232 = vld [vmem:[#allocation2 + $0x50] sm:$0xff]
        %v1233 = vld [vmem:[#allocation2 + $0x58] sm:$0xff]
        %v1234 = vld [vmem:[#allocation2 + $0x60] sm:$0xff]
        %v1235 = vld [vmem:[#allocation2 + $0x68] sm:$0xff]
        %v1236 = vld [vmem:[#allocation2 + $0x70] sm:$0xff]
        %v1237 = vld [vmem:[#allocation2 + $0x78] sm:$0xff]
        %v1238 = vld [vmem:[#allocation2 + $0x80] sm:$0xff]
        %v1239 = vld [vmem:[#allocation2 + $0x88] sm:$0xff]
        %v1240 = vld [vmem:[#allocation2 + $0x90] sm:$0xff]
        %v1241 = vld [vmem:[#allocation2 + $0x98] sm:$0xff]
        %v1242 = vld [vmem:[#allocation2 + $0xa0] sm:$0xff]
        %v1243 = vld [vmem:[#allocation2 + $0xa8] sm:$0xff]
        %v1244 = vld [vmem:[#allocation2 + $0xb0] sm:$0xff]
        %v1245 = vld [vmem:[#allocation2 + $0xb8] sm:$0xff]
        %v1246 = vld [vmem:[#allocation2 + $0xc0] sm:$0xff]
        %v1247 = vld [vmem:[#allocation2 + $0xc8] sm:$0xff]
        %v1248 = vld [vmem:[#allocation2 + $0xd0] sm:$0xff]
        %v1249 = vld [vmem:[#allocation2 + $0xd8] sm:$0xff]
        %v1250 = vld [vmem:[#allocation2 + $0xe0] sm:$0xff]
        %v1251 = vld [vmem:[#allocation2 + $0xe8] sm:$0xff]
        %v1252 = vld [vmem:[#allocation2 + $0xf0] sm:$0xff]
        %v1253 = vld [vmem:[#allocation2 + $0xf8] sm:$0xff]
        %v1254 = vld [vmem:[#allocation2 + $0x100] sm:$0xff]
        %v1255 = vld [vmem:[#allocation2 + $0x108] sm:$0xff]
        %v1256 = vld [vmem:[#allocation2 + $0x110] sm:$0xff]
        %v1257 = vld [vmem:[#allocation2 + $0x118] sm:$0xff]
        %v1258 = vld [vmem:[#allocation2 + $0x120] sm:$0xff]
        %v1259 = vld [vmem:[#allocation2 + $0x128] sm:$0xff]
        %v1260 = vld [vmem:[#allocation2 + $0x130] sm:$0xff]
        %v1261 = vld [vmem:[#allocation2 + $0x138] sm:$0xff]
        %v1262 = vld [vmem:[#allocation2 + $0x140] sm:$0xff]
        %v1263 = vld [vmem:[#allocation2 + $0x148] sm:$0xff]
        %v1264 = vld [vmem:[#allocation2 + $0x150] sm:$0xff]
        %v1265 = vld [vmem:[#allocation2 + $0x158] sm:$0xff]
        %v1266 = vld [vmem:[#allocation2 + $0x160] sm:$0xff]
        %v1267 = vld [vmem:[#allocation2 + $0x168] sm:$0xff]
        %v1268 = vld [vmem:[#allocation2 + $0x170] sm:$0xff]
        %v1269 = vld [vmem:[#allocation2 + $0x178] sm:$0xff]
        %v1270 = vld [vmem:[#allocation2 + $0x180] sm:$0xff]
        %v1271 = vld [vmem:[#allocation2 + $0x188] sm:$0xff]
        %v1272 = vld [vmem:[#allocation2 + $0x190] sm:$0xff]
        %v1273 = vld [vmem:[#allocation2 + $0x198] sm:$0xff]
        %v1274 = vld [vmem:[#allocation2 + $0x1a0] sm:$0xff]
        %v1275 = vld [vmem:[#allocation2 + $0x1a8] sm:$0xff]
        %v1276 = vld [vmem:[#allocation2 + $0x1b0] sm:$0xff]
        %v1277 = vld [vmem:[#allocation2 + $0x1b8] sm:$0xff]
        %v1278 = vld [vmem:[#allocation2 + $0x1c0] sm:$0xff]
        %v1279 = vld [vmem:[#allocation2 + $0x1c8] sm:$0xff]
        %v1280 = vld [vmem:[#allocation2 + $0x1d0] sm:$0xff]
        %v1281 = vld [vmem:[#allocation2 + $0x1d8] sm:$0xff]
        %v1282 = vld [vmem:[#allocation2 + $0x1e0] sm:$0xff]
        %v1283 = vld [vmem:[#allocation2 + $0x1e8] sm:$0xff]
        %v1284 = vld [vmem:[#allocation2 + $0x1f0] sm:$0xff]
        %v1285 = vld [vmem:[#allocation2 + $0x1f8] sm:$0xff]
        %v1286 = vld [vmem:[#allocation2 + $0x200] sm:$0xff]
        %v1287 = vld [vmem:[#allocation2 + $0x208] sm:$0xff]
        %v1288 = vld [vmem:[#allocation2 + $0x210] sm:$0xff]
        %v1289 = vld [vmem:[#allocation2 + $0x218] sm:$0xff]
        %v1290 = vld [vmem:[#allocation2 + $0x220] sm:$0xff]
        %v1291 = vld [vmem:[#allocation2 + $0x228] sm:$0xff]
        %v1292 = vld [vmem:[#allocation2 + $0x230] sm:$0xff]
        %v1293 = vld [vmem:[#allocation2 + $0x238] sm:$0xff]
        %v1294 = vld [vmem:[#allocation2 + $0x240] sm:$0xff]
        %v1295 = vld [vmem:[#allocation2 + $0x248] sm:$0xff]
        %v1296 = vld [vmem:[#allocation2 + $0x250] sm:$0xff]
        %v1297 = vld [vmem:[#allocation2 + $0x258] sm:$0xff]
        %v1298 = vld [vmem:[#allocation2 + $0x260] sm:$0xff]
        %v1299 = vld [vmem:[#allocation2 + $0x268] sm:$0xff]
        %v1300 = vld [vmem:[#allocation2 + $0x270] sm:$0xff]
        %v1301 = vld [vmem:[#allocation2 + $0x278] sm:$0xff]
        %v1302 = vld [vmem:[#allocation2 + $0x280] sm:$0xff]
        %v1303 = vld [vmem:[#allocation2 + $0x288] sm:$0xff]
        %v1304 = vld [vmem:[#allocation2 + $0x290] sm:$0xff]
        %v1305 = vld [vmem:[#allocation2 + $0x298] sm:$0xff]
        %v1306 = vld [vmem:[#allocation2 + $0x2a0] sm:$0xff]
        %v1307 = vld [vmem:[#allocation2 + $0x2a8] sm:$0xff]
        %v1308 = vld [vmem:[#allocation2 + $0x2b0] sm:$0xff]
        %v1309 = vld [vmem:[#allocation2 + $0x2b8] sm:$0xff]
        %v1310 = vld [vmem:[#allocation2 + $0x2c0] sm:$0xff]
        %v1311 = vld [vmem:[#allocation2 + $0x2c8] sm:$0xff]
        %v1312 = vld [vmem:[#allocation2 + $0x2d0] sm:$0xff]
        %v1313 = vld [vmem:[#allocation2 + $0x2d8] sm:$0xff]
        %v1314 = vld [vmem:[#allocation2 + $0x2e0] sm:$0xff]
        %v1315 = vld [vmem:[#allocation2 + $0x2e8] sm:$0xff]
        %v1316 = vld [vmem:[#allocation2 + $0x2f0] sm:$0xff]
        %v1317 = vld [vmem:[#allocation2 + $0x2f8] sm:$0xff]
        %v1318 = vld [vmem:[#allocation2 + $0x300] sm:$0xff]
        %v1319 = vld [vmem:[#allocation2 + $0x308] sm:$0xff]
        %v1320 = vld [vmem:[#allocation2 + $0x310] sm:$0xff]
        %v1321 = vld [vmem:[#allocation2 + $0x318] sm:$0xff]
        %v1322 = vld [vmem:[#allocation2 + $0x320] sm:$0xff]
        %v1323 = vld [vmem:[#allocation2 + $0x328] sm:$0xff]
        %v1324 = vld [vmem:[#allocation2 + $0x330] sm:$0xff]
        %v1325 = vld [vmem:[#allocation2 + $0x338] sm:$0xff]
        %v1326 = vld [vmem:[#allocation2 + $0x340] sm:$0xff]
        %v1327 = vld [vmem:[#allocation2 + $0x348] sm:$0xff]
        %v1328 = vld [vmem:[#allocation2 + $0x350] sm:$0xff]
        %v1329 = vld [vmem:[#allocation2 + $0x358] sm:$0xff]
        %v1330 = vld [vmem:[#allocation2 + $0x360] sm:$0xff]
        %v1331 = vld [vmem:[#allocation2 + $0x368] sm:$0xff]
        %v1332 = vld [vmem:[#allocation2 + $0x370] sm:$0xff]
        %v1333 = vld [vmem:[#allocation2 + $0x378] sm:$0xff]
        %v1334 = vld [vmem:[#allocation2 + $0x380] sm:$0xff]
        %v1335 = vld [vmem:[#allocation2 + $0x388] sm:$0xff]
        %v1336 = vld [vmem:[#allocation2 + $0x390] sm:$0xff]
        %v1337 = vld [vmem:[#allocation2 + $0x398] sm:$0xff]
        %v1338 = vld [vmem:[#allocation2 + $0x3a0] sm:$0xff]
        %v1339 = vld [vmem:[#allocation2 + $0x3a8] sm:$0xff]
        %v1340 = vld [vmem:[#allocation2 + $0x3b0] sm:$0xff]
        %v1341 = vld [vmem:[#allocation2 + $0x3b8] sm:$0xff]
        %v1342 = vld [vmem:[#allocation2 + $0x3c0] sm:$0xff]
        %v1343 = vld [vmem:[#allocation2 + $0x3c8] sm:$0xff]
        %v1344 = vld [vmem:[#allocation2 + $0x3d0] sm:$0xff]
        %v1345 = vld [vmem:[#allocation2 + $0x3d8] sm:$0xff]
        %v1346 = vld [vmem:[#allocation2 + $0x3e0] sm:$0xff]
        %v1347 = vld [vmem:[#allocation2 + $0x3e8] sm:$0xff]
        %v1349 = vsel %vm735, %v1215, 0
        %v1352 = vsel %vm735, %v1217, 0
        %v1355 = vsel %vm735, %v1219, 0
        %v1358 = vsel %vm735, %v1221, 0
        %v1360 = vand.u32 %v1328, 4294901760
        %1361 = vmatprep.subr.mxu0 %v1360
        %v1362 = vand.u32 %v1327, 4294901760
        %1363 = vmatpush1.msra.mxu0 %v1362
        %v1364 = vand.u32 %v1321, 4294901760
        %1365 = vmatprep.subr.mxu0 %v1364
        %v1366 = vand.u32 %v1320, 4294901760
        %1367 = vmatpush1.msra.mxu0 %v1366
        %v1368 = vand.u32 %v1314, 4294901760
        %1369 = vmatprep.subr.mxu0 %v1368
        %v1370 = vand.u32 %v1313, 4294901760
        %1371 = vmatpush1.msra.mxu0 %v1370
        %v1372 = vand.u32 %v1307, 4294901760
        %1373 = vmatprep.subr.mxu0 %v1372
        %v1374 = vand.u32 %v1306, 4294901760
        %1375 = vmatpush1.msra.mxu0 %v1374
        %v1376 = vand.u32 %v1300, 4294901760
        %1377 = vmatprep.subr.mxu0 %v1376
        %v1378 = vand.u32 %v1299, 4294901760
        %1379 = vmatpush1.msra.mxu0 %v1378
        %v1380 = vand.u32 %v1293, 4294901760
        %1381 = vmatprep.subr.mxu0 %v1380
        %v1382 = vand.u32 %v1292, 4294901760
        %1383 = vmatpush1.msra.mxu0 %v1382
        %v1384 = vand.u32 %v1286, 4294901760
        %1385 = vmatprep.subr.mxu0 %v1384
        %v1386 = vand.u32 %v1285, 4294901760
        %1387 = vmatpush1.msra.mxu0 %v1386
        %v1388 = vand.u32 %v1279, 4294901760
        %1389 = vmatprep.subr.mxu0 %v1388
        %v1390 = vand.u32 %v1278, 4294901760
        %1391 = vmatpush1.msra.mxu0 %v1390
        %v1392 = vand.u32 %v1272, 4294901760
        %1393 = vmatprep.subr.mxu0 %v1392
        %v1394 = vand.u32 %v1271, 4294901760
        %1395 = vmatpush1.msra.mxu0 %v1394
        %v1396 = vand.u32 %v1265, 4294901760
        %1397 = vmatprep.subr.mxu0 %v1396
        %v1398 = vand.u32 %v1264, 4294901760
        %1399 = vmatpush1.msra.mxu0 %v1398
        %v1400 = vand.u32 %v1258, 4294901760
        %1401 = vmatprep.subr.mxu0 %v1400
        %v1402 = vand.u32 %v1257, 4294901760
        %1403 = vmatpush1.msra.mxu0 %v1402
        %v1404 = vand.u32 %v1251, 4294901760
        %1405 = vmatprep.subr.mxu0 %v1404
        %v1406 = vand.u32 %v1250, 4294901760
        %1407 = vmatpush1.msra.mxu0 %v1406
        %v1408 = vand.u32 %v1244, 4294901760
        %1409 = vmatprep.subr.mxu0 %v1408
        %v1410 = vand.u32 %v1243, 4294901760
        %1411 = vmatpush1.msra.mxu0 %v1410
        %v1412 = vand.u32 %v1237, 4294901760
        %1413 = vmatprep.subr.mxu0 %v1412
        %v1414 = vand.u32 %v1236, 4294901760
        %1415 = vmatpush1.msra.mxu0 %v1414
        %v1416 = vand.u32 %v1230, 4294901760
        %1417 = vmatprep.subr.mxu0 %v1416
        %v1418 = vand.u32 %v1229, 4294901760
        %1419 = vmatpush1.msra.mxu0 %v1418
        %v1420 = vand.u32 %v1223, 4294901760
        %1421 = vmatprep.subr.mxu0 %v1420
        %v1422 = vand.u32 %v1222, 4294901760
        %1423 = vmatpush1.msra.mxu0 %v1422
        %1424 = vmatprep.subr.mxu0 0.0
        %1425 = vmatpush2.msra.mxu0 0.0
        %1426 = vmatprep.subr.mxu0 0.0
        %1427 = vmatpush2.msra.mxu0 0.0
        %1428 = vmatprep.subr.mxu0 0.0
        %1429 = vmatpush2.msra.mxu0 0.0
        %1430 = vmatprep.subr.mxu0 0.0
        %1431 = vmatpush2.msra.mxu0 0.0
        %1432 = vmatprep.subr.mxu0 0.0
        %1433 = vmatpush2.msra.mxu0 0.0
        %1434 = vmatprep.subr.mxu0 0.0
        %1435 = vmatpush2.msra.mxu0 0.0
        %1436 = vmatprep.subr.mxu0 0.0
        %1437 = vmatpush2.msra.mxu0 0.0
        %1438 = vmatprep.subr.mxu0 0.0
        %1439 = vmatpush2.msra.mxu0 0.0
        %1440 = vmatprep.subr.mxu0 0.0
        %1441 = vmatpush2.msra.mxu0 0.0
        %1442 = vmatprep.subr.mxu0 0.0
        %1443 = vmatpush2.msra.mxu0 0.0
        %1444 = vmatprep.subr.mxu0 0.0
        %1445 = vmatpush2.msra.mxu0 0.0
        %1446 = vmatprep.subr.mxu0 0.0
        %1447 = vmatpush2.msra.mxu0 0.0
        %1448 = vmatprep.subr.mxu0 0.0
        %1449 = vmatpush2.msra.mxu0 0.0
        %1450 = vmatprep.subr.mxu0 0.0
        %1451 = vmatpush2.msra.mxu0 0.0
        %v1452 = vand.u32 %v1342, 4294901760
        %1453 = vmatprep.subr.mxu0 %v1452
        %v1454 = vand.u32 %v1341, 4294901760
        %1455 = vmatpush2.msra.mxu0 %v1454
        %v1456 = vand.u32 %v1335, 4294901760
        %1457 = vmatprep.subr.mxu0 %v1456
        %v1458 = vand.u32 %v1334, 4294901760
        %1459 = vmatpush2.msra.mxu0 %v1458
        %v1460 = vand.u32 %v1349, 4294901760
        %v1461 = vsub.f32 %v1349, %v1460
        %v1462 = vand.u32 %v1461, 4294901760
        %v1463 = vsub.f32 %v1461, %v1462
        %v1464 = vand.u32 %v1463, 4294901760
        %1465 = vmatprep.mubr.f32.mxu0 %v1464
        %v1466 = vand.u32 %v1214, 4294901760
        %v1467 = vsub.f32 %v1214, %v1466
        %v1468 = vand.u32 %v1467, 4294901760
        %v1469 = vsub.f32 %v1467, %v1468
        %v1470 = vand.u32 %v1469, 4294901760
        %1471 = vmatmul.mubr.f32.gmra.mxu0 %v1470
        %v1472 = vpop.f32.mrf.mxu0
        %v1473 = vadd.f32 0.0, %v1472
        %v1474 = vpop.f32.mrf.mxu0
        %v1475 = vadd.f32 0.0, %v1474
        %v1476 = vand.u32 %v1352, 4294901760
        %v1477 = vsub.f32 %v1352, %v1476
        %v1478 = vand.u32 %v1477, 4294901760
        %v1479 = vsub.f32 %v1477, %v1478
        %v1480 = vand.u32 %v1479, 4294901760
        %1481 = vmatprep.mubr.f32.mxu0 %v1480
        %v1482 = vand.u32 %v1216, 4294901760
        %v1483 = vsub.f32 %v1216, %v1482
        %v1484 = vand.u32 %v1483, 4294901760
        %v1485 = vsub.f32 %v1483, %v1484
        %v1486 = vand.u32 %v1485, 4294901760
        %1487 = vmatmul.mubr.f32.gmra.mxu0 %v1486
        %v1488 = vpop.f32.mrf.mxu0
        %v1489 = vadd.f32 0.0, %v1488
        %v1490 = vpop.f32.mrf.mxu0
        %v1491 = vadd.f32 0.0, %v1490
        %v1492 = vand.u32 %v1355, 4294901760
        %v1493 = vsub.f32 %v1355, %v1492
        %v1494 = vand.u32 %v1493, 4294901760
        %v1495 = vsub.f32 %v1493, %v1494
        %v1496 = vand.u32 %v1495, 4294901760
        %1497 = vmatprep.mubr.f32.mxu0 %v1496
        %v1498 = vand.u32 %v1218, 4294901760
        %v1499 = vsub.f32 %v1218, %v1498
        %v1500 = vand.u32 %v1499, 4294901760
        %v1501 = vsub.f32 %v1499, %v1500
        %v1502 = vand.u32 %v1501, 4294901760
        %1503 = vmatmul.mubr.f32.gmra.mxu0 %v1502
        %v1504 = vpop.f32.mrf.mxu0
        %v1505 = vadd.f32 0.0, %v1504
        %v1506 = vpop.f32.mrf.mxu0
        %v1507 = vadd.f32 0.0, %v1506
        %v1508 = vand.u32 %v1358, 4294901760
        %v1509 = vsub.f32 %v1358, %v1508
        %v1510 = vand.u32 %v1509, 4294901760
        %v1511 = vsub.f32 %v1509, %v1510
        %v1512 = vand.u32 %v1511, 4294901760
        %1513 = vmatprep.mubr.f32.mxu0 %v1512
        %v1514 = vand.u32 %v1220, 4294901760
        %v1515 = vsub.f32 %v1220, %v1514
        %v1516 = vand.u32 %v1515, 4294901760
        %v1517 = vsub.f32 %v1515, %v1516
        %v1518 = vand.u32 %v1517, 4294901760
        %1519 = vmatmul.mubr.f32.gmra.mxu0 %v1518
        %v1520 = vpop.f32.mrf.mxu0
        %v1521 = vadd.f32 0.0, %v1520
        %v1522 = vpop.f32.mrf.mxu0
        %v1523 = vadd.f32 0.0, %v1522
        %1524 = vdwg.mxu0
        %v1525 = vand.u32 %v1328, 4294901760
        %v1526 = vsub.f32 %v1328, %v1525
        %v1527 = vand.u32 %v1526, 4294901760
        %v1528 = vsub.f32 %v1526, %v1527
        %v1529 = vand.u32 %v1528, 4294901760
        %1530 = vmatprep.subr.mxu0 %v1529
        %v1531 = vand.u32 %v1327, 4294901760
        %v1532 = vsub.f32 %v1327, %v1531
        %v1533 = vand.u32 %v1532, 4294901760
        %v1534 = vsub.f32 %v1532, %v1533
        %v1535 = vand.u32 %v1534, 4294901760
        %1536 = vmatpush1.msra.mxu0 %v1535
        %v1537 = vand.u32 %v1321, 4294901760
        %v1538 = vsub.f32 %v1321, %v1537
        %v1539 = vand.u32 %v1538, 4294901760
        %v1540 = vsub.f32 %v1538, %v1539
        %v1541 = vand.u32 %v1540, 4294901760
        %1542 = vmatprep.subr.mxu0 %v1541
        %v1543 = vand.u32 %v1320, 4294901760
        %v1544 = vsub.f32 %v1320, %v1543
        %v1545 = vand.u32 %v1544, 4294901760
        %v1546 = vsub.f32 %v1544, %v1545
        %v1547 = vand.u32 %v1546, 4294901760
        %1548 = vmatpush1.msra.mxu0 %v1547
        %v1549 = vand.u32 %v1314, 4294901760
        %v1550 = vsub.f32 %v1314, %v1549
        %v1551 = vand.u32 %v1550, 4294901760
        %v1552 = vsub.f32 %v1550, %v1551
        %v1553 = vand.u32 %v1552, 4294901760
        %1554 = vmatprep.subr.mxu0 %v1553
        %v1555 = vand.u32 %v1313, 4294901760
        %v1556 = vsub.f32 %v1313, %v1555
        %v1557 = vand.u32 %v1556, 4294901760
        %v1558 = vsub.f32 %v1556, %v1557
        %v1559 = vand.u32 %v1558, 4294901760
        %1560 = vmatpush1.msra.mxu0 %v1559
        %v1561 = vand.u32 %v1307, 4294901760
        %v1562 = vsub.f32 %v1307, %v1561
        %v1563 = vand.u32 %v1562, 4294901760
        %v1564 = vsub.f32 %v1562, %v1563
        %v1565 = vand.u32 %v1564, 4294901760
        %1566 = vmatprep.subr.mxu0 %v1565
        %v1567 = vand.u32 %v1306, 4294901760
        %v1568 = vsub.f32 %v1306, %v1567
        %v1569 = vand.u32 %v1568, 4294901760
        %v1570 = vsub.f32 %v1568, %v1569
        %v1571 = vand.u32 %v1570, 4294901760
        %1572 = vmatpush1.msra.mxu0 %v1571
        %v1573 = vand.u32 %v1300, 4294901760
        %v1574 = vsub.f32 %v1300, %v1573
        %v1575 = vand.u32 %v1574, 4294901760
        %v1576 = vsub.f32 %v1574, %v1575
        %v1577 = vand.u32 %v1576, 4294901760
        %1578 = vmatprep.subr.mxu0 %v1577
        %v1579 = vand.u32 %v1299, 4294901760
        %v1580 = vsub.f32 %v1299, %v1579
        %v1581 = vand.u32 %v1580, 4294901760
        %v1582 = vsub.f32 %v1580, %v1581
        %v1583 = vand.u32 %v1582, 4294901760
        %1584 = vmatpush1.msra.mxu0 %v1583
        %v1585 = vand.u32 %v1293, 4294901760
        %v1586 = vsub.f32 %v1293, %v1585
        %v1587 = vand.u32 %v1586, 4294901760
        %v1588 = vsub.f32 %v1586, %v1587
        %v1589 = vand.u32 %v1588, 4294901760
        %1590 = vmatprep.subr.mxu0 %v1589
        %v1591 = vand.u32 %v1292, 4294901760
        %v1592 = vsub.f32 %v1292, %v1591
        %v1593 = vand.u32 %v1592, 4294901760
        %v1594 = vsub.f32 %v1592, %v1593
        %v1595 = vand.u32 %v1594, 4294901760
        %1596 = vmatpush1.msra.mxu0 %v1595
        %v1597 = vand.u32 %v1286, 4294901760
        %v1598 = vsub.f32 %v1286, %v1597
        %v1599 = vand.u32 %v1598, 4294901760
        %v1600 = vsub.f32 %v1598, %v1599
        %v1601 = vand.u32 %v1600, 4294901760
        %1602 = vmatprep.subr.mxu0 %v1601
        %v1603 = vand.u32 %v1285, 4294901760
        %v1604 = vsub.f32 %v1285, %v1603
        %v1605 = vand.u32 %v1604, 4294901760
        %v1606 = vsub.f32 %v1604, %v1605
        %v1607 = vand.u32 %v1606, 4294901760
        %1608 = vmatpush1.msra.mxu0 %v1607
        %v1609 = vand.u32 %v1279, 4294901760
        %v1610 = vsub.f32 %v1279, %v1609
        %v1611 = vand.u32 %v1610, 4294901760
        %v1612 = vsub.f32 %v1610, %v1611
        %v1613 = vand.u32 %v1612, 4294901760
        %1614 = vmatprep.subr.mxu0 %v1613
        %v1615 = vand.u32 %v1278, 4294901760
        %v1616 = vsub.f32 %v1278, %v1615
        %v1617 = vand.u32 %v1616, 4294901760
        %v1618 = vsub.f32 %v1616, %v1617
        %v1619 = vand.u32 %v1618, 4294901760
        %1620 = vmatpush1.msra.mxu0 %v1619
        %v1621 = vand.u32 %v1272, 4294901760
        %v1622 = vsub.f32 %v1272, %v1621
        %v1623 = vand.u32 %v1622, 4294901760
        %v1624 = vsub.f32 %v1622, %v1623
        %v1625 = vand.u32 %v1624, 4294901760
        %1626 = vmatprep.subr.mxu0 %v1625
        %v1627 = vand.u32 %v1271, 4294901760
        %v1628 = vsub.f32 %v1271, %v1627
        %v1629 = vand.u32 %v1628, 4294901760
        %v1630 = vsub.f32 %v1628, %v1629
        %v1631 = vand.u32 %v1630, 4294901760
        %1632 = vmatpush1.msra.mxu0 %v1631
        %v1633 = vand.u32 %v1265, 4294901760
        %v1634 = vsub.f32 %v1265, %v1633
        %v1635 = vand.u32 %v1634, 4294901760
        %v1636 = vsub.f32 %v1634, %v1635
        %v1637 = vand.u32 %v1636, 4294901760
        %1638 = vmatprep.subr.mxu0 %v1637
        %v1639 = vand.u32 %v1264, 4294901760
        %v1640 = vsub.f32 %v1264, %v1639
        %v1641 = vand.u32 %v1640, 4294901760
        %v1642 = vsub.f32 %v1640, %v1641
        %v1643 = vand.u32 %v1642, 4294901760
        %1644 = vmatpush1.msra.mxu0 %v1643
        %v1645 = vand.u32 %v1258, 4294901760
        %v1646 = vsub.f32 %v1258, %v1645
        %v1647 = vand.u32 %v1646, 4294901760
        %v1648 = vsub.f32 %v1646, %v1647
        %v1649 = vand.u32 %v1648, 4294901760
        %1650 = vmatprep.subr.mxu0 %v1649
        %v1651 = vand.u32 %v1257, 4294901760
        %v1652 = vsub.f32 %v1257, %v1651
        %v1653 = vand.u32 %v1652, 4294901760
        %v1654 = vsub.f32 %v1652, %v1653
        %v1655 = vand.u32 %v1654, 4294901760
        %1656 = vmatpush1.msra.mxu0 %v1655
        %v1657 = vand.u32 %v1251, 4294901760
        %v1658 = vsub.f32 %v1251, %v1657
        %v1659 = vand.u32 %v1658, 4294901760
        %v1660 = vsub.f32 %v1658, %v1659
        %v1661 = vand.u32 %v1660, 4294901760
        %1662 = vmatprep.subr.mxu0 %v1661
        %v1663 = vand.u32 %v1250, 4294901760
        %v1664 = vsub.f32 %v1250, %v1663
        %v1665 = vand.u32 %v1664, 4294901760
        %v1666 = vsub.f32 %v1664, %v1665
        %v1667 = vand.u32 %v1666, 4294901760
        %1668 = vmatpush1.msra.mxu0 %v1667
        %v1669 = vand.u32 %v1244, 4294901760
        %v1670 = vsub.f32 %v1244, %v1669
        %v1671 = vand.u32 %v1670, 4294901760
        %v1672 = vsub.f32 %v1670, %v1671
        %v1673 = vand.u32 %v1672, 4294901760
        %1674 = vmatprep.subr.mxu0 %v1673
        %v1675 = vand.u32 %v1243, 4294901760
        %v1676 = vsub.f32 %v1243, %v1675
        %v1677 = vand.u32 %v1676, 4294901760
        %v1678 = vsub.f32 %v1676, %v1677
        %v1679 = vand.u32 %v1678, 4294901760
        %1680 = vmatpush1.msra.mxu0 %v1679
        %v1681 = vand.u32 %v1237, 4294901760
        %v1682 = vsub.f32 %v1237, %v1681
        %v1683 = vand.u32 %v1682, 4294901760
        %v1684 = vsub.f32 %v1682, %v1683
        %v1685 = vand.u32 %v1684, 4294901760
        %1686 = vmatprep.subr.mxu0 %v1685
        %v1687 = vand.u32 %v1236, 4294901760
        %v1688 = vsub.f32 %v1236, %v1687
        %v1689 = vand.u32 %v1688, 4294901760
        %v1690 = vsub.f32 %v1688, %v1689
        %v1691 = vand.u32 %v1690, 4294901760
        %1692 = vmatpush1.msra.mxu0 %v1691
        %v1693 = vand.u32 %v1230, 4294901760
        %v1694 = vsub.f32 %v1230, %v1693
        %v1695 = vand.u32 %v1694, 4294901760
        %v1696 = vsub.f32 %v1694, %v1695
        %v1697 = vand.u32 %v1696, 4294901760
        %1698 = vmatprep.subr.mxu0 %v1697
        %v1699 = vand.u32 %v1229, 4294901760
        %v1700 = vsub.f32 %v1229, %v1699
        %v1701 = vand.u32 %v1700, 4294901760
        %v1702 = vsub.f32 %v1700, %v1701
        %v1703 = vand.u32 %v1702, 4294901760
        %1704 = vmatpush1.msra.mxu0 %v1703
        %v1705 = vand.u32 %v1223, 4294901760
        %v1706 = vsub.f32 %v1223, %v1705
        %v1707 = vand.u32 %v1706, 4294901760
        %v1708 = vsub.f32 %v1706, %v1707
        %v1709 = vand.u32 %v1708, 4294901760
        %1710 = vmatprep.subr.mxu0 %v1709
        %v1711 = vand.u32 %v1222, 4294901760
        %v1712 = vsub.f32 %v1222, %v1711
        %v1713 = vand.u32 %v1712, 4294901760
        %v1714 = vsub.f32 %v1712, %v1713
        %v1715 = vand.u32 %v1714, 4294901760
        %1716 = vmatpush1.msra.mxu0 %v1715
        %1717 = vmatprep.subr.mxu0 0.0
        %1718 = vmatpush2.msra.mxu0 0.0
        %1719 = vmatprep.subr.mxu0 0.0
        %1720 = vmatpush2.msra.mxu0 0.0
        %1721 = vmatprep.subr.mxu0 0.0
        %1722 = vmatpush2.msra.mxu0 0.0
        %1723 = vmatprep.subr.mxu0 0.0
        %1724 = vmatpush2.msra.mxu0 0.0
        %1725 = vmatprep.subr.mxu0 0.0
        %1726 = vmatpush2.msra.mxu0 0.0
        %1727 = vmatprep.subr.mxu0 0.0
        %1728 = vmatpush2.msra.mxu0 0.0
        %1729 = vmatprep.subr.mxu0 0.0
        %1730 = vmatpush2.msra.mxu0 0.0
        %1731 = vmatprep.subr.mxu0 0.0
        %1732 = vmatpush2.msra.mxu0 0.0
        %1733 = vmatprep.subr.mxu0 0.0
        %1734 = vmatpush2.msra.mxu0 0.0
        %1735 = vmatprep.subr.mxu0 0.0
        %1736 = vmatpush2.msra.mxu0 0.0
        %1737 = vmatprep.subr.mxu0 0.0
        %1738 = vmatpush2.msra.mxu0 0.0
        %1739 = vmatprep.subr.mxu0 0.0
        %1740 = vmatpush2.msra.mxu0 0.0
        %1741 = vmatprep.subr.mxu0 0.0
        %1742 = vmatpush2.msra.mxu0 0.0
        %1743 = vmatprep.subr.mxu0 0.0
        %1744 = vmatpush2.msra.mxu0 0.0
        %v1745 = vand.u32 %v1342, 4294901760
        %v1746 = vsub.f32 %v1342, %v1745
        %v1747 = vand.u32 %v1746, 4294901760
        %v1748 = vsub.f32 %v1746, %v1747
        %v1749 = vand.u32 %v1748, 4294901760
        %1750 = vmatprep.subr.mxu0 %v1749
        %v1751 = vand.u32 %v1341, 4294901760
        %v1752 = vsub.f32 %v1341, %v1751
        %v1753 = vand.u32 %v1752, 4294901760
        %v1754 = vsub.f32 %v1752, %v1753
        %v1755 = vand.u32 %v1754, 4294901760
        %1756 = vmatpush2.msra.mxu0 %v1755
        %v1757 = vand.u32 %v1335, 4294901760
        %v1758 = vsub.f32 %v1335, %v1757
        %v1759 = vand.u32 %v1758, 4294901760
        %v1760 = vsub.f32 %v1758, %v1759
        %v1761 = vand.u32 %v1760, 4294901760
        %1762 = vmatprep.subr.mxu0 %v1761
        %v1763 = vand.u32 %v1334, 4294901760
        %v1764 = vsub.f32 %v1334, %v1763
        %v1765 = vand.u32 %v1764, 4294901760
        %v1766 = vsub.f32 %v1764, %v1765
        %v1767 = vand.u32 %v1766, 4294901760
        %1768 = vmatpush2.msra.mxu0 %v1767
        %v1769 = vand.u32 %v1349, 4294901760
        %1770 = vmatprep.mubr.f32.mxu0 %v1769
        %v1771 = vand.u32 %v1214, 4294901760
        %1772 = vmatmul.mubr.f32.gmra.mxu0 %v1771
        %v1773 = vpop.f32.mrf.mxu0
        %v1774 = vadd.f32 %v1473, %v1773
        %v1775 = vpop.f32.mrf.mxu0
        %v1776 = vadd.f32 %v1475, %v1775
        %v1777 = vand.u32 %v1352, 4294901760
        %1778 = vmatprep.mubr.f32.mxu0 %v1777
        %v1779 = vand.u32 %v1216, 4294901760
        %1780 = vmatmul.mubr.f32.gmra.mxu0 %v1779
        %v1781 = vpop.f32.mrf.mxu0
        %v1782 = vadd.f32 %v1489, %v1781
        %v1783 = vpop.f32.mrf.mxu0
        %v1784 = vadd.f32 %v1491, %v1783
        %v1785 = vand.u32 %v1355, 4294901760
        %1786 = vmatprep.mubr.f32.mxu0 %v1785
        %v1787 = vand.u32 %v1218, 4294901760
        %1788 = vmatmul.mubr.f32.gmra.mxu0 %v1787
        %v1789 = vpop.f32.mrf.mxu0
        %v1790 = vadd.f32 %v1505, %v1789
        %v1791 = vpop.f32.mrf.mxu0
        %v1792 = vadd.f32 %v1507, %v1791
        %v1793 = vand.u32 %v1358, 4294901760
        %1794 = vmatprep.mubr.f32.mxu0 %v1793
        %v1795 = vand.u32 %v1220, 4294901760
        %1796 = vmatmul.mubr.f32.gmra.mxu0 %v1795
        %v1797 = vpop.f32.mrf.mxu0
        %v1798 = vadd.f32 %v1521, %v1797
        %v1799 = vpop.f32.mrf.mxu0
        %v1800 = vadd.f32 %v1523, %v1799
        %1801 = vdwg.mxu0
        %v1802 = vand.u32 %v1328, 4294901760
        %v1803 = vsub.f32 %v1328, %v1802
        %1804 = vmatprep.subr.mxu0 %v1803
        %v1805 = vand.u32 %v1327, 4294901760
        %v1806 = vsub.f32 %v1327, %v1805
        %1807 = vmatpush1.msra.mxu0 %v1806
        %v1808 = vand.u32 %v1321, 4294901760
        %v1809 = vsub.f32 %v1321, %v1808
        %1810 = vmatprep.subr.mxu0 %v1809
        %v1811 = vand.u32 %v1320, 4294901760
        %v1812 = vsub.f32 %v1320, %v1811
        %1813 = vmatpush1.msra.mxu0 %v1812
        %v1814 = vand.u32 %v1314, 4294901760
        %v1815 = vsub.f32 %v1314, %v1814
        %1816 = vmatprep.subr.mxu0 %v1815
        %v1817 = vand.u32 %v1313, 4294901760
        %v1818 = vsub.f32 %v1313, %v1817
        %1819 = vmatpush1.msra.mxu0 %v1818
        %v1820 = vand.u32 %v1307, 4294901760
        %v1821 = vsub.f32 %v1307, %v1820
        %1822 = vmatprep.subr.mxu0 %v1821
        %v1823 = vand.u32 %v1306, 4294901760
        %v1824 = vsub.f32 %v1306, %v1823
        %1825 = vmatpush1.msra.mxu0 %v1824
        %v1826 = vand.u32 %v1300, 4294901760
        %v1827 = vsub.f32 %v1300, %v1826
        %1828 = vmatprep.subr.mxu0 %v1827
        %v1829 = vand.u32 %v1299, 4294901760
        %v1830 = vsub.f32 %v1299, %v1829
        %1831 = vmatpush1.msra.mxu0 %v1830
        %v1832 = vand.u32 %v1293, 4294901760
        %v1833 = vsub.f32 %v1293, %v1832
        %1834 = vmatprep.subr.mxu0 %v1833
        %v1835 = vand.u32 %v1292, 4294901760
        %v1836 = vsub.f32 %v1292, %v1835
        %1837 = vmatpush1.msra.mxu0 %v1836
        %v1838 = vand.u32 %v1286, 4294901760
        %v1839 = vsub.f32 %v1286, %v1838
        %1840 = vmatprep.subr.mxu0 %v1839
        %v1841 = vand.u32 %v1285, 4294901760
        %v1842 = vsub.f32 %v1285, %v1841
        %1843 = vmatpush1.msra.mxu0 %v1842
        %v1844 = vand.u32 %v1279, 4294901760
        %v1845 = vsub.f32 %v1279, %v1844
        %1846 = vmatprep.subr.mxu0 %v1845
        %v1847 = vand.u32 %v1278, 4294901760
        %v1848 = vsub.f32 %v1278, %v1847
        %1849 = vmatpush1.msra.mxu0 %v1848
        %v1850 = vand.u32 %v1272, 4294901760
        %v1851 = vsub.f32 %v1272, %v1850
        %1852 = vmatprep.subr.mxu0 %v1851
        %v1853 = vand.u32 %v1271, 4294901760
        %v1854 = vsub.f32 %v1271, %v1853
        %1855 = vmatpush1.msra.mxu0 %v1854
        %v1856 = vand.u32 %v1265, 4294901760
        %v1857 = vsub.f32 %v1265, %v1856
        %1858 = vmatprep.subr.mxu0 %v1857
        %v1859 = vand.u32 %v1264, 4294901760
        %v1860 = vsub.f32 %v1264, %v1859
        %1861 = vmatpush1.msra.mxu0 %v1860
        %v1862 = vand.u32 %v1258, 4294901760
        %v1863 = vsub.f32 %v1258, %v1862
        %1864 = vmatprep.subr.mxu0 %v1863
        %v1865 = vand.u32 %v1257, 4294901760
        %v1866 = vsub.f32 %v1257, %v1865
        %1867 = vmatpush1.msra.mxu0 %v1866
        %v1868 = vand.u32 %v1251, 4294901760
        %v1869 = vsub.f32 %v1251, %v1868
        %1870 = vmatprep.subr.mxu0 %v1869
        %v1871 = vand.u32 %v1250, 4294901760
        %v1872 = vsub.f32 %v1250, %v1871
        %1873 = vmatpush1.msra.mxu0 %v1872
        %v1874 = vand.u32 %v1244, 4294901760
        %v1875 = vsub.f32 %v1244, %v1874
        %1876 = vmatprep.subr.mxu0 %v1875
        %v1877 = vand.u32 %v1243, 4294901760
        %v1878 = vsub.f32 %v1243, %v1877
        %1879 = vmatpush1.msra.mxu0 %v1878
        %v1880 = vand.u32 %v1237, 4294901760
        %v1881 = vsub.f32 %v1237, %v1880
        %1882 = vmatprep.subr.mxu0 %v1881
        %v1883 = vand.u32 %v1236, 4294901760
        %v1884 = vsub.f32 %v1236, %v1883
        %1885 = vmatpush1.msra.mxu0 %v1884
        %v1886 = vand.u32 %v1230, 4294901760
        %v1887 = vsub.f32 %v1230, %v1886
        %1888 = vmatprep.subr.mxu0 %v1887
        %v1889 = vand.u32 %v1229, 4294901760
        %v1890 = vsub.f32 %v1229, %v1889
        %1891 = vmatpush1.msra.mxu0 %v1890
        %v1892 = vand.u32 %v1223, 4294901760
        %v1893 = vsub.f32 %v1223, %v1892
        %1894 = vmatprep.subr.mxu0 %v1893
        %v1895 = vand.u32 %v1222, 4294901760
        %v1896 = vsub.f32 %v1222, %v1895
        %1897 = vmatpush1.msra.mxu0 %v1896
        %1898 = vmatprep.subr.mxu0 0.0
        %1899 = vmatpush2.msra.mxu0 0.0
        %1900 = vmatprep.subr.mxu0 0.0
        %1901 = vmatpush2.msra.mxu0 0.0
        %1902 = vmatprep.subr.mxu0 0.0
        %1903 = vmatpush2.msra.mxu0 0.0
        %1904 = vmatprep.subr.mxu0 0.0
        %1905 = vmatpush2.msra.mxu0 0.0
        %1906 = vmatprep.subr.mxu0 0.0
        %1907 = vmatpush2.msra.mxu0 0.0
        %1908 = vmatprep.subr.mxu0 0.0
        %1909 = vmatpush2.msra.mxu0 0.0
        %1910 = vmatprep.subr.mxu0 0.0
        %1911 = vmatpush2.msra.mxu0 0.0
        %1912 = vmatprep.subr.mxu0 0.0
        %1913 = vmatpush2.msra.mxu0 0.0
        %1914 = vmatprep.subr.mxu0 0.0
        %1915 = vmatpush2.msra.mxu0 0.0
        %1916 = vmatprep.subr.mxu0 0.0
        %1917 = vmatpush2.msra.mxu0 0.0
        %1918 = vmatprep.subr.mxu0 0.0
        %1919 = vmatpush2.msra.mxu0 0.0
        %1920 = vmatprep.subr.mxu0 0.0
        %1921 = vmatpush2.msra.mxu0 0.0
        %1922 = vmatprep.subr.mxu0 0.0
        %1923 = vmatpush2.msra.mxu0 0.0
        %1924 = vmatprep.subr.mxu0 0.0
        %1925 = vmatpush2.msra.mxu0 0.0
        %v1926 = vand.u32 %v1342, 4294901760
        %v1927 = vsub.f32 %v1342, %v1926
        %1928 = vmatprep.subr.mxu0 %v1927
        %v1929 = vand.u32 %v1341, 4294901760
        %v1930 = vsub.f32 %v1341, %v1929
        %1931 = vmatpush2.msra.mxu0 %v1930
        %v1932 = vand.u32 %v1335, 4294901760
        %v1933 = vsub.f32 %v1335, %v1932
        %1934 = vmatprep.subr.mxu0 %v1933
        %v1935 = vand.u32 %v1334, 4294901760
        %v1936 = vsub.f32 %v1334, %v1935
        %1937 = vmatpush2.msra.mxu0 %v1936
        %v1938 = vand.u32 %v1349, 4294901760
        %v1939 = vsub.f32 %v1349, %v1938
        %1940 = vmatprep.mubr.f32.mxu0 %v1939
        %v1941 = vand.u32 %v1214, 4294901760
        %v1942 = vsub.f32 %v1214, %v1941
        %1943 = vmatmul.mubr.f32.gmra.mxu0 %v1942
        %v1944 = vpop.f32.mrf.mxu0
        %v1945 = vadd.f32 %v1774, %v1944
        %v1946 = vpop.f32.mrf.mxu0
        %v1947 = vadd.f32 %v1776, %v1946
        %v1948 = vand.u32 %v1352, 4294901760
        %v1949 = vsub.f32 %v1352, %v1948
        %1950 = vmatprep.mubr.f32.mxu0 %v1949
        %v1951 = vand.u32 %v1216, 4294901760
        %v1952 = vsub.f32 %v1216, %v1951
        %1953 = vmatmul.mubr.f32.gmra.mxu0 %v1952
        %v1954 = vpop.f32.mrf.mxu0
        %v1955 = vadd.f32 %v1782, %v1954
        %v1956 = vpop.f32.mrf.mxu0
        %v1957 = vadd.f32 %v1784, %v1956
        %v1958 = vand.u32 %v1355, 4294901760
        %v1959 = vsub.f32 %v1355, %v1958
        %1960 = vmatprep.mubr.f32.mxu0 %v1959
        %v1961 = vand.u32 %v1218, 4294901760
        %v1962 = vsub.f32 %v1218, %v1961
        %1963 = vmatmul.mubr.f32.gmra.mxu0 %v1962
        %v1964 = vpop.f32.mrf.mxu0
        %v1965 = vadd.f32 %v1790, %v1964
        %v1966 = vpop.f32.mrf.mxu0
        %v1967 = vadd.f32 %v1792, %v1966
        %v1968 = vand.u32 %v1358, 4294901760
        %v1969 = vsub.f32 %v1358, %v1968
        %1970 = vmatprep.mubr.f32.mxu0 %v1969
        %v1971 = vand.u32 %v1220, 4294901760
        %v1972 = vsub.f32 %v1220, %v1971
        %1973 = vmatmul.mubr.f32.gmra.mxu0 %v1972
        %v1974 = vpop.f32.mrf.mxu0
        %v1975 = vadd.f32 %v1798, %v1974
        %v1976 = vpop.f32.mrf.mxu0
        %v1977 = vadd.f32 %v1800, %v1976
        %1978 = vdwg.mxu0
        %v1979 = vand.u32 %v1328, 4294901760
        %1980 = vmatprep.subr.mxu0 %v1979
        %v1981 = vand.u32 %v1327, 4294901760
        %1982 = vmatpush1.msra.mxu0 %v1981
        %v1983 = vand.u32 %v1321, 4294901760
        %1984 = vmatprep.subr.mxu0 %v1983
        %v1985 = vand.u32 %v1320, 4294901760
        %1986 = vmatpush1.msra.mxu0 %v1985
        %v1987 = vand.u32 %v1314, 4294901760
        %1988 = vmatprep.subr.mxu0 %v1987
        %v1989 = vand.u32 %v1313, 4294901760
        %1990 = vmatpush1.msra.mxu0 %v1989
        %v1991 = vand.u32 %v1307, 4294901760
        %1992 = vmatprep.subr.mxu0 %v1991
        %v1993 = vand.u32 %v1306, 4294901760
        %1994 = vmatpush1.msra.mxu0 %v1993
        %v1995 = vand.u32 %v1300, 4294901760
        %1996 = vmatprep.subr.mxu0 %v1995
        %v1997 = vand.u32 %v1299, 4294901760
        %1998 = vmatpush1.msra.mxu0 %v1997
        %v1999 = vand.u32 %v1293, 4294901760
        %2000 = vmatprep.subr.mxu0 %v1999
        %v2001 = vand.u32 %v1292, 4294901760
        %2002 = vmatpush1.msra.mxu0 %v2001
        %v2003 = vand.u32 %v1286, 4294901760
        %2004 = vmatprep.subr.mxu0 %v2003
        %v2005 = vand.u32 %v1285, 4294901760
        %2006 = vmatpush1.msra.mxu0 %v2005
        %v2007 = vand.u32 %v1279, 4294901760
        %2008 = vmatprep.subr.mxu0 %v2007
        %v2009 = vand.u32 %v1278, 4294901760
        %2010 = vmatpush1.msra.mxu0 %v2009
        %v2011 = vand.u32 %v1272, 4294901760
        %2012 = vmatprep.subr.mxu0 %v2011
        %v2013 = vand.u32 %v1271, 4294901760
        %2014 = vmatpush1.msra.mxu0 %v2013
        %v2015 = vand.u32 %v1265, 4294901760
        %2016 = vmatprep.subr.mxu0 %v2015
        %v2017 = vand.u32 %v1264, 4294901760
        %2018 = vmatpush1.msra.mxu0 %v2017
        %v2019 = vand.u32 %v1258, 4294901760
        %2020 = vmatprep.subr.mxu0 %v2019
        %v2021 = vand.u32 %v1257, 4294901760
        %2022 = vmatpush1.msra.mxu0 %v2021
        %v2023 = vand.u32 %v1251, 4294901760
        %2024 = vmatprep.subr.mxu0 %v2023
        %v2025 = vand.u32 %v1250, 4294901760
        %2026 = vmatpush1.msra.mxu0 %v2025
        %v2027 = vand.u32 %v1244, 4294901760
        %2028 = vmatprep.subr.mxu0 %v2027
        %v2029 = vand.u32 %v1243, 4294901760
        %2030 = vmatpush1.msra.mxu0 %v2029
        %v2031 = vand.u32 %v1237, 4294901760
        %2032 = vmatprep.subr.mxu0 %v2031
        %v2033 = vand.u32 %v1236, 4294901760
        %2034 = vmatpush1.msra.mxu0 %v2033
        %v2035 = vand.u32 %v1230, 4294901760
        %2036 = vmatprep.subr.mxu0 %v2035
        %v2037 = vand.u32 %v1229, 4294901760
        %2038 = vmatpush1.msra.mxu0 %v2037
        %v2039 = vand.u32 %v1223, 4294901760
        %2040 = vmatprep.subr.mxu0 %v2039
        %v2041 = vand.u32 %v1222, 4294901760
        %2042 = vmatpush1.msra.mxu0 %v2041
        %2043 = vmatprep.subr.mxu0 0.0
        %2044 = vmatpush2.msra.mxu0 0.0
        %2045 = vmatprep.subr.mxu0 0.0
        %2046 = vmatpush2.msra.mxu0 0.0
        %2047 = vmatprep.subr.mxu0 0.0
        %2048 = vmatpush2.msra.mxu0 0.0
        %2049 = vmatprep.subr.mxu0 0.0
        %2050 = vmatpush2.msra.mxu0 0.0
        %2051 = vmatprep.subr.mxu0 0.0
        %2052 = vmatpush2.msra.mxu0 0.0
        %2053 = vmatprep.subr.mxu0 0.0
        %2054 = vmatpush2.msra.mxu0 0.0
        %2055 = vmatprep.subr.mxu0 0.0
        %2056 = vmatpush2.msra.mxu0 0.0
        %2057 = vmatprep.subr.mxu0 0.0
        %2058 = vmatpush2.msra.mxu0 0.0
        %2059 = vmatprep.subr.mxu0 0.0
        %2060 = vmatpush2.msra.mxu0 0.0
        %2061 = vmatprep.subr.mxu0 0.0
        %2062 = vmatpush2.msra.mxu0 0.0
        %2063 = vmatprep.subr.mxu0 0.0
        %2064 = vmatpush2.msra.mxu0 0.0
        %2065 = vmatprep.subr.mxu0 0.0
        %2066 = vmatpush2.msra.mxu0 0.0
        %2067 = vmatprep.subr.mxu0 0.0
        %2068 = vmatpush2.msra.mxu0 0.0
        %2069 = vmatprep.subr.mxu0 0.0
        %2070 = vmatpush2.msra.mxu0 0.0
        %v2071 = vand.u32 %v1342, 4294901760
        %2072 = vmatprep.subr.mxu0 %v2071
        %v2073 = vand.u32 %v1341, 4294901760
        %2074 = vmatpush2.msra.mxu0 %v2073
        %v2075 = vand.u32 %v1335, 4294901760
        %2076 = vmatprep.subr.mxu0 %v2075
        %v2077 = vand.u32 %v1334, 4294901760
        %2078 = vmatpush2.msra.mxu0 %v2077
        %v2079 = vand.u32 %v1349, 4294901760
        %v2080 = vsub.f32 %v1349, %v2079
        %v2081 = vand.u32 %v2080, 4294901760
        %2082 = vmatprep.mubr.f32.mxu0 %v2081
        %v2083 = vand.u32 %v1214, 4294901760
        %v2084 = vsub.f32 %v1214, %v2083
        %v2085 = vand.u32 %v2084, 4294901760
        %2086 = vmatmul.mubr.f32.gmra.mxu0 %v2085
        %v2087 = vpop.f32.mrf.mxu0
        %v2088 = vadd.f32 %v1945, %v2087
        %v2089 = vpop.f32.mrf.mxu0
        %v2090 = vadd.f32 %v1947, %v2089
        %v2091 = vand.u32 %v1352, 4294901760
        %v2092 = vsub.f32 %v1352, %v2091
        %v2093 = vand.u32 %v2092, 4294901760
        %2094 = vmatprep.mubr.f32.mxu0 %v2093
        %v2095 = vand.u32 %v1216, 4294901760
        %v2096 = vsub.f32 %v1216, %v2095
        %v2097 = vand.u32 %v2096, 4294901760
        %2098 = vmatmul.mubr.f32.gmra.mxu0 %v2097
        %v2099 = vpop.f32.mrf.mxu0
        %v2100 = vadd.f32 %v1955, %v2099
        %v2101 = vpop.f32.mrf.mxu0
        %v2102 = vadd.f32 %v1957, %v2101
        %v2103 = vand.u32 %v1355, 4294901760
        %v2104 = vsub.f32 %v1355, %v2103
        %v2105 = vand.u32 %v2104, 4294901760
        %2106 = vmatprep.mubr.f32.mxu0 %v2105
        %v2107 = vand.u32 %v1218, 4294901760
        %v2108 = vsub.f32 %v1218, %v2107
        %v2109 = vand.u32 %v2108, 4294901760
        %2110 = vmatmul.mubr.f32.gmra.mxu0 %v2109
        %v2111 = vpop.f32.mrf.mxu0
        %v2112 = vadd.f32 %v1965, %v2111
        %v2113 = vpop.f32.mrf.mxu0
        %v2114 = vadd.f32 %v1967, %v2113
        %v2115 = vand.u32 %v1358, 4294901760
        %v2116 = vsub.f32 %v1358, %v2115
        %v2117 = vand.u32 %v2116, 4294901760
        %2118 = vmatprep.mubr.f32.mxu0 %v2117
        %v2119 = vand.u32 %v1220, 4294901760
        %v2120 = vsub.f32 %v1220, %v2119
        %v2121 = vand.u32 %v2120, 4294901760
        %2122 = vmatmul.mubr.f32.gmra.mxu0 %v2121
        %v2123 = vpop.f32.mrf.mxu0
        %v2124 = vadd.f32 %v1975, %v2123
        %v2125 = vpop.f32.mrf.mxu0
        %v2126 = vadd.f32 %v1977, %v2125
        %2127 = vdwg.mxu0
        %v2128 = vand.u32 %v1328, 4294901760
        %v2129 = vsub.f32 %v1328, %v2128
        %v2130 = vand.u32 %v2129, 4294901760
        %2131 = vmatprep.subr.mxu0 %v2130
        %v2132 = vand.u32 %v1327, 4294901760
        %v2133 = vsub.f32 %v1327, %v2132
        %v2134 = vand.u32 %v2133, 4294901760
        %2135 = vmatpush1.msra.mxu0 %v2134
        %v2136 = vand.u32 %v1321, 4294901760
        %v2137 = vsub.f32 %v1321, %v2136
        %v2138 = vand.u32 %v2137, 4294901760
        %2139 = vmatprep.subr.mxu0 %v2138
        %v2140 = vand.u32 %v1320, 4294901760
        %v2141 = vsub.f32 %v1320, %v2140
        %v2142 = vand.u32 %v2141, 4294901760
        %2143 = vmatpush1.msra.mxu0 %v2142
        %v2144 = vand.u32 %v1314, 4294901760
        %v2145 = vsub.f32 %v1314, %v2144
        %v2146 = vand.u32 %v2145, 4294901760
        %2147 = vmatprep.subr.mxu0 %v2146
        %v2148 = vand.u32 %v1313, 4294901760
        %v2149 = vsub.f32 %v1313, %v2148
        %v2150 = vand.u32 %v2149, 4294901760
        %2151 = vmatpush1.msra.mxu0 %v2150
        %v2152 = vand.u32 %v1307, 4294901760
        %v2153 = vsub.f32 %v1307, %v2152
        %v2154 = vand.u32 %v2153, 4294901760
        %2155 = vmatprep.subr.mxu0 %v2154
        %v2156 = vand.u32 %v1306, 4294901760
        %v2157 = vsub.f32 %v1306, %v2156
        %v2158 = vand.u32 %v2157, 4294901760
        %2159 = vmatpush1.msra.mxu0 %v2158
        %v2160 = vand.u32 %v1300, 4294901760
        %v2161 = vsub.f32 %v1300, %v2160
        %v2162 = vand.u32 %v2161, 4294901760
        %2163 = vmatprep.subr.mxu0 %v2162
        %v2164 = vand.u32 %v1299, 4294901760
        %v2165 = vsub.f32 %v1299, %v2164
        %v2166 = vand.u32 %v2165, 4294901760
        %2167 = vmatpush1.msra.mxu0 %v2166
        %v2168 = vand.u32 %v1293, 4294901760
        %v2169 = vsub.f32 %v1293, %v2168
        %v2170 = vand.u32 %v2169, 4294901760
        %2171 = vmatprep.subr.mxu0 %v2170
        %v2172 = vand.u32 %v1292, 4294901760
        %v2173 = vsub.f32 %v1292, %v2172
        %v2174 = vand.u32 %v2173, 4294901760
        %2175 = vmatpush1.msra.mxu0 %v2174
        %v2176 = vand.u32 %v1286, 4294901760
        %v2177 = vsub.f32 %v1286, %v2176
        %v2178 = vand.u32 %v2177, 4294901760
        %2179 = vmatprep.subr.mxu0 %v2178
        %v2180 = vand.u32 %v1285, 4294901760
        %v2181 = vsub.f32 %v1285, %v2180
        %v2182 = vand.u32 %v2181, 4294901760
        %2183 = vmatpush1.msra.mxu0 %v2182
        %v2184 = vand.u32 %v1279, 4294901760
        %v2185 = vsub.f32 %v1279, %v2184
        %v2186 = vand.u32 %v2185, 4294901760
        %2187 = vmatprep.subr.mxu0 %v2186
        %v2188 = vand.u32 %v1278, 4294901760
        %v2189 = vsub.f32 %v1278, %v2188
        %v2190 = vand.u32 %v2189, 4294901760
        %2191 = vmatpush1.msra.mxu0 %v2190
        %v2192 = vand.u32 %v1272, 4294901760
        %v2193 = vsub.f32 %v1272, %v2192
        %v2194 = vand.u32 %v2193, 4294901760
        %2195 = vmatprep.subr.mxu0 %v2194
        %v2196 = vand.u32 %v1271, 4294901760
        %v2197 = vsub.f32 %v1271, %v2196
        %v2198 = vand.u32 %v2197, 4294901760
        %2199 = vmatpush1.msra.mxu0 %v2198
        %v2200 = vand.u32 %v1265, 4294901760
        %v2201 = vsub.f32 %v1265, %v2200
        %v2202 = vand.u32 %v2201, 4294901760
        %2203 = vmatprep.subr.mxu0 %v2202
        %v2204 = vand.u32 %v1264, 4294901760
        %v2205 = vsub.f32 %v1264, %v2204
        %v2206 = vand.u32 %v2205, 4294901760
        %2207 = vmatpush1.msra.mxu0 %v2206
        %v2208 = vand.u32 %v1258, 4294901760
        %v2209 = vsub.f32 %v1258, %v2208
        %v2210 = vand.u32 %v2209, 4294901760
        %2211 = vmatprep.subr.mxu0 %v2210
        %v2212 = vand.u32 %v1257, 4294901760
        %v2213 = vsub.f32 %v1257, %v2212
        %v2214 = vand.u32 %v2213, 4294901760
        %2215 = vmatpush1.msra.mxu0 %v2214
        %v2216 = vand.u32 %v1251, 4294901760
        %v2217 = vsub.f32 %v1251, %v2216
        %v2218 = vand.u32 %v2217, 4294901760
        %2219 = vmatprep.subr.mxu0 %v2218
        %v2220 = vand.u32 %v1250, 4294901760
        %v2221 = vsub.f32 %v1250, %v2220
        %v2222 = vand.u32 %v2221, 4294901760
        %2223 = vmatpush1.msra.mxu0 %v2222
        %v2224 = vand.u32 %v1244, 4294901760
        %v2225 = vsub.f32 %v1244, %v2224
        %v2226 = vand.u32 %v2225, 4294901760
        %2227 = vmatprep.subr.mxu0 %v2226
        %v2228 = vand.u32 %v1243, 4294901760
        %v2229 = vsub.f32 %v1243, %v2228
        %v2230 = vand.u32 %v2229, 4294901760
        %2231 = vmatpush1.msra.mxu0 %v2230
        %v2232 = vand.u32 %v1237, 4294901760
        %v2233 = vsub.f32 %v1237, %v2232
        %v2234 = vand.u32 %v2233, 4294901760
        %2235 = vmatprep.subr.mxu0 %v2234
        %v2236 = vand.u32 %v1236, 4294901760
        %v2237 = vsub.f32 %v1236, %v2236
        %v2238 = vand.u32 %v2237, 4294901760
        %2239 = vmatpush1.msra.mxu0 %v2238
        %v2240 = vand.u32 %v1230, 4294901760
        %v2241 = vsub.f32 %v1230, %v2240
        %v2242 = vand.u32 %v2241, 4294901760
        %2243 = vmatprep.subr.mxu0 %v2242
        %v2244 = vand.u32 %v1229, 4294901760
        %v2245 = vsub.f32 %v1229, %v2244
        %v2246 = vand.u32 %v2245, 4294901760
        %2247 = vmatpush1.msra.mxu0 %v2246
        %v2248 = vand.u32 %v1223, 4294901760
        %v2249 = vsub.f32 %v1223, %v2248
        %v2250 = vand.u32 %v2249, 4294901760
        %2251 = vmatprep.subr.mxu0 %v2250
        %v2252 = vand.u32 %v1222, 4294901760
        %v2253 = vsub.f32 %v1222, %v2252
        %v2254 = vand.u32 %v2253, 4294901760
        %2255 = vmatpush1.msra.mxu0 %v2254
        %2256 = vmatprep.subr.mxu0 0.0
        %2257 = vmatpush2.msra.mxu0 0.0
        %2258 = vmatprep.subr.mxu0 0.0
        %2259 = vmatpush2.msra.mxu0 0.0
        %2260 = vmatprep.subr.mxu0 0.0
        %2261 = vmatpush2.msra.mxu0 0.0
        %2262 = vmatprep.subr.mxu0 0.0
        %2263 = vmatpush2.msra.mxu0 0.0
        %2264 = vmatprep.subr.mxu0 0.0
        %2265 = vmatpush2.msra.mxu0 0.0
        %2266 = vmatprep.subr.mxu0 0.0
        %2267 = vmatpush2.msra.mxu0 0.0
        %2268 = vmatprep.subr.mxu0 0.0
        %2269 = vmatpush2.msra.mxu0 0.0
        %2270 = vmatprep.subr.mxu0 0.0
        %2271 = vmatpush2.msra.mxu0 0.0
        %2272 = vmatprep.subr.mxu0 0.0
        %2273 = vmatpush2.msra.mxu0 0.0
        %2274 = vmatprep.subr.mxu0 0.0
        %2275 = vmatpush2.msra.mxu0 0.0
        %2276 = vmatprep.subr.mxu0 0.0
        %2277 = vmatpush2.msra.mxu0 0.0
        %2278 = vmatprep.subr.mxu0 0.0
        %2279 = vmatpush2.msra.mxu0 0.0
        %2280 = vmatprep.subr.mxu0 0.0
        %2281 = vmatpush2.msra.mxu0 0.0
        %2282 = vmatprep.subr.mxu0 0.0
        %2283 = vmatpush2.msra.mxu0 0.0
        %v2284 = vand.u32 %v1342, 4294901760
        %v2285 = vsub.f32 %v1342, %v2284
        %v2286 = vand.u32 %v2285, 4294901760
        %2287 = vmatprep.subr.mxu0 %v2286
        %v2288 = vand.u32 %v1341, 4294901760
        %v2289 = vsub.f32 %v1341, %v2288
        %v2290 = vand.u32 %v2289, 4294901760
        %2291 = vmatpush2.msra.mxu0 %v2290
        %v2292 = vand.u32 %v1335, 4294901760
        %v2293 = vsub.f32 %v1335, %v2292
        %v2294 = vand.u32 %v2293, 4294901760
        %2295 = vmatprep.subr.mxu0 %v2294
        %v2296 = vand.u32 %v1334, 4294901760
        %v2297 = vsub.f32 %v1334, %v2296
        %v2298 = vand.u32 %v2297, 4294901760
        %2299 = vmatpush2.msra.mxu0 %v2298
        %v2300 = vand.u32 %v1349, 4294901760
        %2301 = vmatprep.mubr.f32.mxu0 %v2300
        %v2302 = vand.u32 %v1214, 4294901760
        %2303 = vmatmul.mubr.f32.gmra.mxu0 %v2302
        %v2304 = vpop.f32.mrf.mxu0
        %v2305 = vadd.f32 %v2088, %v2304
        %v2306 = vpop.f32.mrf.mxu0
        %v2307 = vadd.f32 %v2090, %v2306
        %v2308 = vand.u32 %v1352, 4294901760
        %2309 = vmatprep.mubr.f32.mxu0 %v2308
        %v2310 = vand.u32 %v1216, 4294901760
        %2311 = vmatmul.mubr.f32.gmra.mxu0 %v2310
        %v2312 = vpop.f32.mrf.mxu0
        %v2313 = vadd.f32 %v2100, %v2312
        %v2314 = vpop.f32.mrf.mxu0
        %v2315 = vadd.f32 %v2102, %v2314
        %v2316 = vand.u32 %v1355, 4294901760
        %2317 = vmatprep.mubr.f32.mxu0 %v2316
        %v2318 = vand.u32 %v1218, 4294901760
        %2319 = vmatmul.mubr.f32.gmra.mxu0 %v2318
        %v2320 = vpop.f32.mrf.mxu0
        %v2321 = vadd.f32 %v2112, %v2320
        %v2322 = vpop.f32.mrf.mxu0
        %v2323 = vadd.f32 %v2114, %v2322
        %v2324 = vand.u32 %v1358, 4294901760
        %2325 = vmatprep.mubr.f32.mxu0 %v2324
        %v2326 = vand.u32 %v1220, 4294901760
        %2327 = vmatmul.mubr.f32.gmra.mxu0 %v2326
        %v2328 = vpop.f32.mrf.mxu0
        %v2329 = vadd.f32 %v2124, %v2328
        %v2330 = vpop.f32.mrf.mxu0
        %v2331 = vadd.f32 %v2126, %v2330
        %2332 = vdwg.mxu0
        %v2333 = vand.u32 %v1328, 4294901760
        %2334 = vmatprep.subr.mxu0 %v2333
        %v2335 = vand.u32 %v1327, 4294901760
        %2336 = vmatpush1.msra.mxu0 %v2335
        %v2337 = vand.u32 %v1321, 4294901760
        %2338 = vmatprep.subr.mxu0 %v2337
        %v2339 = vand.u32 %v1320, 4294901760
        %2340 = vmatpush1.msra.mxu0 %v2339
        %v2341 = vand.u32 %v1314, 4294901760
        %2342 = vmatprep.subr.mxu0 %v2341
        %v2343 = vand.u32 %v1313, 4294901760
        %2344 = vmatpush1.msra.mxu0 %v2343
        %v2345 = vand.u32 %v1307, 4294901760
        %2346 = vmatprep.subr.mxu0 %v2345
        %v2347 = vand.u32 %v1306, 4294901760
        %2348 = vmatpush1.msra.mxu0 %v2347
        %v2349 = vand.u32 %v1300, 4294901760
        %2350 = vmatprep.subr.mxu0 %v2349
        %v2351 = vand.u32 %v1299, 4294901760
        %2352 = vmatpush1.msra.mxu0 %v2351
        %v2353 = vand.u32 %v1293, 4294901760
        %2354 = vmatprep.subr.mxu0 %v2353
        %v2355 = vand.u32 %v1292, 4294901760
        %2356 = vmatpush1.msra.mxu0 %v2355
        %v2357 = vand.u32 %v1286, 4294901760
        %2358 = vmatprep.subr.mxu0 %v2357
        %v2359 = vand.u32 %v1285, 4294901760
        %2360 = vmatpush1.msra.mxu0 %v2359
        %v2361 = vand.u32 %v1279, 4294901760
        %2362 = vmatprep.subr.mxu0 %v2361
        %v2363 = vand.u32 %v1278, 4294901760
        %2364 = vmatpush1.msra.mxu0 %v2363
        %v2365 = vand.u32 %v1272, 4294901760
        %2366 = vmatprep.subr.mxu0 %v2365
        %v2367 = vand.u32 %v1271, 4294901760
        %2368 = vmatpush1.msra.mxu0 %v2367
        %v2369 = vand.u32 %v1265, 4294901760
        %2370 = vmatprep.subr.mxu0 %v2369
        %v2371 = vand.u32 %v1264, 4294901760
        %2372 = vmatpush1.msra.mxu0 %v2371
        %v2373 = vand.u32 %v1258, 4294901760
        %2374 = vmatprep.subr.mxu0 %v2373
        %v2375 = vand.u32 %v1257, 4294901760
        %2376 = vmatpush1.msra.mxu0 %v2375
        %v2377 = vand.u32 %v1251, 4294901760
        %2378 = vmatprep.subr.mxu0 %v2377
        %v2379 = vand.u32 %v1250, 4294901760
        %2380 = vmatpush1.msra.mxu0 %v2379
        %v2381 = vand.u32 %v1244, 4294901760
        %2382 = vmatprep.subr.mxu0 %v2381
        %v2383 = vand.u32 %v1243, 4294901760
        %2384 = vmatpush1.msra.mxu0 %v2383
        %v2385 = vand.u32 %v1237, 4294901760
        %2386 = vmatprep.subr.mxu0 %v2385
        %v2387 = vand.u32 %v1236, 4294901760
        %2388 = vmatpush1.msra.mxu0 %v2387
        %v2389 = vand.u32 %v1230, 4294901760
        %2390 = vmatprep.subr.mxu0 %v2389
        %v2391 = vand.u32 %v1229, 4294901760
        %2392 = vmatpush1.msra.mxu0 %v2391
        %v2393 = vand.u32 %v1223, 4294901760
        %2394 = vmatprep.subr.mxu0 %v2393
        %v2395 = vand.u32 %v1222, 4294901760
        %2396 = vmatpush1.msra.mxu0 %v2395
        %2397 = vmatprep.subr.mxu0 0.0
        %2398 = vmatpush2.msra.mxu0 0.0
        %2399 = vmatprep.subr.mxu0 0.0
        %2400 = vmatpush2.msra.mxu0 0.0
        %2401 = vmatprep.subr.mxu0 0.0
        %2402 = vmatpush2.msra.mxu0 0.0
        %2403 = vmatprep.subr.mxu0 0.0
        %2404 = vmatpush2.msra.mxu0 0.0
        %2405 = vmatprep.subr.mxu0 0.0
        %2406 = vmatpush2.msra.mxu0 0.0
        %2407 = vmatprep.subr.mxu0 0.0
        %2408 = vmatpush2.msra.mxu0 0.0
        %2409 = vmatprep.subr.mxu0 0.0
        %2410 = vmatpush2.msra.mxu0 0.0
        %2411 = vmatprep.subr.mxu0 0.0
        %2412 = vmatpush2.msra.mxu0 0.0
        %2413 = vmatprep.subr.mxu0 0.0
        %2414 = vmatpush2.msra.mxu0 0.0
        %2415 = vmatprep.subr.mxu0 0.0
        %2416 = vmatpush2.msra.mxu0 0.0
        %2417 = vmatprep.subr.mxu0 0.0
        %2418 = vmatpush2.msra.mxu0 0.0
        %2419 = vmatprep.subr.mxu0 0.0
        %2420 = vmatpush2.msra.mxu0 0.0
        %2421 = vmatprep.subr.mxu0 0.0
        %2422 = vmatpush2.msra.mxu0 0.0
        %2423 = vmatprep.subr.mxu0 0.0
        %2424 = vmatpush2.msra.mxu0 0.0
        %v2425 = vand.u32 %v1342, 4294901760
        %2426 = vmatprep.subr.mxu0 %v2425
        %v2427 = vand.u32 %v1341, 4294901760
        %2428 = vmatpush2.msra.mxu0 %v2427
        %v2429 = vand.u32 %v1335, 4294901760
        %2430 = vmatprep.subr.mxu0 %v2429
        %v2431 = vand.u32 %v1334, 4294901760
        %2432 = vmatpush2.msra.mxu0 %v2431
        %v2433 = vand.u32 %v1349, 4294901760
        %2434 = vmatprep.mubr.f32.mxu0 %v2433
        %v2435 = vand.u32 %v1214, 4294901760
        %2436 = vmatmul.mubr.f32.gmra.mxu0 %v2435
        %v2437 = vpop.f32.mrf.mxu0
        %v2438 = vadd.f32 %v2305, %v2437
        %v2439 = vpop.f32.mrf.mxu0
        %v2440 = vadd.f32 %v2307, %v2439
        %v2441 = vand.u32 %v1352, 4294901760
        %2442 = vmatprep.mubr.f32.mxu0 %v2441
        %v2443 = vand.u32 %v1216, 4294901760
        %2444 = vmatmul.mubr.f32.gmra.mxu0 %v2443
        %v2445 = vpop.f32.mrf.mxu0
        %v2446 = vadd.f32 %v2313, %v2445
        %v2447 = vpop.f32.mrf.mxu0
        %v2448 = vadd.f32 %v2315, %v2447
        %v2449 = vand.u32 %v1355, 4294901760
        %2450 = vmatprep.mubr.f32.mxu0 %v2449
        %v2451 = vand.u32 %v1218, 4294901760
        %2452 = vmatmul.mubr.f32.gmra.mxu0 %v2451
        %v2453 = vpop.f32.mrf.mxu0
        %v2454 = vadd.f32 %v2321, %v2453
        %v2455 = vpop.f32.mrf.mxu0
        %v2456 = vadd.f32 %v2323, %v2455
        %v2457 = vand.u32 %v1358, 4294901760
        %2458 = vmatprep.mubr.f32.mxu0 %v2457
        %v2459 = vand.u32 %v1220, 4294901760
        %2460 = vmatmul.mubr.f32.gmra.mxu0 %v2459
        %v2461 = vpop.f32.mrf.mxu0
        %v2462 = vadd.f32 %v2329, %v2461
        %v2463 = vpop.f32.mrf.mxu0
        %v2464 = vadd.f32 %v2331, %v2463
        %2465 = vdwg.mxu0
        %v2466 = vand.u32 %v1330, 4294901760
        %2467 = vmatprep.subr.mxu0 %v2466
        %v2468 = vand.u32 %v1329, 4294901760
        %2469 = vmatpush1.msra.mxu0 %v2468
        %v2470 = vand.u32 %v1323, 4294901760
        %2471 = vmatprep.subr.mxu0 %v2470
        %v2472 = vand.u32 %v1322, 4294901760
        %2473 = vmatpush1.msra.mxu0 %v2472
        %v2474 = vand.u32 %v1316, 4294901760
        %2475 = vmatprep.subr.mxu0 %v2474
        %v2476 = vand.u32 %v1315, 4294901760
        %2477 = vmatpush1.msra.mxu0 %v2476
        %v2478 = vand.u32 %v1309, 4294901760
        %2479 = vmatprep.subr.mxu0 %v2478
        %v2480 = vand.u32 %v1308, 4294901760
        %2481 = vmatpush1.msra.mxu0 %v2480
        %v2482 = vand.u32 %v1302, 4294901760
        %2483 = vmatprep.subr.mxu0 %v2482
        %v2484 = vand.u32 %v1301, 4294901760
        %2485 = vmatpush1.msra.mxu0 %v2484
        %v2486 = vand.u32 %v1295, 4294901760
        %2487 = vmatprep.subr.mxu0 %v2486
        %v2488 = vand.u32 %v1294, 4294901760
        %2489 = vmatpush1.msra.mxu0 %v2488
        %v2490 = vand.u32 %v1288, 4294901760
        %2491 = vmatprep.subr.mxu0 %v2490
        %v2492 = vand.u32 %v1287, 4294901760
        %2493 = vmatpush1.msra.mxu0 %v2492
        %v2494 = vand.u32 %v1281, 4294901760
        %2495 = vmatprep.subr.mxu0 %v2494
        %v2496 = vand.u32 %v1280, 4294901760
        %2497 = vmatpush1.msra.mxu0 %v2496
        %v2498 = vand.u32 %v1274, 4294901760
        %2499 = vmatprep.subr.mxu0 %v2498
        %v2500 = vand.u32 %v1273, 4294901760
        %2501 = vmatpush1.msra.mxu0 %v2500
        %v2502 = vand.u32 %v1267, 4294901760
        %2503 = vmatprep.subr.mxu0 %v2502
        %v2504 = vand.u32 %v1266, 4294901760
        %2505 = vmatpush1.msra.mxu0 %v2504
        %v2506 = vand.u32 %v1260, 4294901760
        %2507 = vmatprep.subr.mxu0 %v2506
        %v2508 = vand.u32 %v1259, 4294901760
        %2509 = vmatpush1.msra.mxu0 %v2508
        %v2510 = vand.u32 %v1253, 4294901760
        %2511 = vmatprep.subr.mxu0 %v2510
        %v2512 = vand.u32 %v1252, 4294901760
        %2513 = vmatpush1.msra.mxu0 %v2512
        %v2514 = vand.u32 %v1246, 4294901760
        %2515 = vmatprep.subr.mxu0 %v2514
        %v2516 = vand.u32 %v1245, 4294901760
        %2517 = vmatpush1.msra.mxu0 %v2516
        %v2518 = vand.u32 %v1239, 4294901760
        %2519 = vmatprep.subr.mxu0 %v2518
        %v2520 = vand.u32 %v1238, 4294901760
        %2521 = vmatpush1.msra.mxu0 %v2520
        %v2522 = vand.u32 %v1232, 4294901760
        %2523 = vmatprep.subr.mxu0 %v2522
        %v2524 = vand.u32 %v1231, 4294901760
        %2525 = vmatpush1.msra.mxu0 %v2524
        %v2526 = vand.u32 %v1225, 4294901760
        %2527 = vmatprep.subr.mxu0 %v2526
        %v2528 = vand.u32 %v1224, 4294901760
        %2529 = vmatpush1.msra.mxu0 %v2528
        %2530 = vmatprep.subr.mxu0 0.0
        %2531 = vmatpush2.msra.mxu0 0.0
        %2532 = vmatprep.subr.mxu0 0.0
        %2533 = vmatpush2.msra.mxu0 0.0
        %2534 = vmatprep.subr.mxu0 0.0
        %2535 = vmatpush2.msra.mxu0 0.0
        %2536 = vmatprep.subr.mxu0 0.0
        %2537 = vmatpush2.msra.mxu0 0.0
        %2538 = vmatprep.subr.mxu0 0.0
        %2539 = vmatpush2.msra.mxu0 0.0
        %2540 = vmatprep.subr.mxu0 0.0
        %2541 = vmatpush2.msra.mxu0 0.0
        %2542 = vmatprep.subr.mxu0 0.0
        %2543 = vmatpush2.msra.mxu0 0.0
        %2544 = vmatprep.subr.mxu0 0.0
        %2545 = vmatpush2.msra.mxu0 0.0
        %2546 = vmatprep.subr.mxu0 0.0
        %2547 = vmatpush2.msra.mxu0 0.0
        %2548 = vmatprep.subr.mxu0 0.0
        %2549 = vmatpush2.msra.mxu0 0.0
        %2550 = vmatprep.subr.mxu0 0.0
        %2551 = vmatpush2.msra.mxu0 0.0
        %2552 = vmatprep.subr.mxu0 0.0
        %2553 = vmatpush2.msra.mxu0 0.0
        %2554 = vmatprep.subr.mxu0 0.0
        %2555 = vmatpush2.msra.mxu0 0.0
        %2556 = vmatprep.subr.mxu0 0.0
        %2557 = vmatpush2.msra.mxu0 0.0
        %v2558 = vand.u32 %v1344, 4294901760
        %2559 = vmatprep.subr.mxu0 %v2558
        %v2560 = vand.u32 %v1343, 4294901760
        %2561 = vmatpush2.msra.mxu0 %v2560
        %v2562 = vand.u32 %v1337, 4294901760
        %2563 = vmatprep.subr.mxu0 %v2562
        %v2564 = vand.u32 %v1336, 4294901760
        %2565 = vmatpush2.msra.mxu0 %v2564
        %v2566 = vand.u32 %v1349, 4294901760
        %v2567 = vsub.f32 %v1349, %v2566
        %v2568 = vand.u32 %v2567, 4294901760
        %v2569 = vsub.f32 %v2567, %v2568
        %v2570 = vand.u32 %v2569, 4294901760
        %2571 = vmatprep.mubr.f32.mxu0 %v2570
        %v2572 = vand.u32 %v1214, 4294901760
        %v2573 = vsub.f32 %v1214, %v2572
        %v2574 = vand.u32 %v2573, 4294901760
        %v2575 = vsub.f32 %v2573, %v2574
        %v2576 = vand.u32 %v2575, 4294901760
        %2577 = vmatmul.mubr.f32.gmra.mxu0 %v2576
        %v2578 = vpop.f32.mrf.mxu0
        %v2579 = vadd.f32 0.0, %v2578
        %v2580 = vpop.f32.mrf.mxu0
        %v2581 = vadd.f32 0.0, %v2580
        %v2582 = vand.u32 %v1352, 4294901760
        %v2583 = vsub.f32 %v1352, %v2582
        %v2584 = vand.u32 %v2583, 4294901760
        %v2585 = vsub.f32 %v2583, %v2584
        %v2586 = vand.u32 %v2585, 4294901760
        %2587 = vmatprep.mubr.f32.mxu0 %v2586
        %v2588 = vand.u32 %v1216, 4294901760
        %v2589 = vsub.f32 %v1216, %v2588
        %v2590 = vand.u32 %v2589, 4294901760
        %v2591 = vsub.f32 %v2589, %v2590
        %v2592 = vand.u32 %v2591, 4294901760
        %2593 = vmatmul.mubr.f32.gmra.mxu0 %v2592
        %v2594 = vpop.f32.mrf.mxu0
        %v2595 = vadd.f32 0.0, %v2594
        %v2596 = vpop.f32.mrf.mxu0
        %v2597 = vadd.f32 0.0, %v2596
        %v2598 = vand.u32 %v1355, 4294901760
        %v2599 = vsub.f32 %v1355, %v2598
        %v2600 = vand.u32 %v2599, 4294901760
        %v2601 = vsub.f32 %v2599, %v2600
        %v2602 = vand.u32 %v2601, 4294901760
        %2603 = vmatprep.mubr.f32.mxu0 %v2602
        %v2604 = vand.u32 %v1218, 4294901760
        %v2605 = vsub.f32 %v1218, %v2604
        %v2606 = vand.u32 %v2605, 4294901760
        %v2607 = vsub.f32 %v2605, %v2606
        %v2608 = vand.u32 %v2607, 4294901760
        %2609 = vmatmul.mubr.f32.gmra.mxu0 %v2608
        %v2610 = vpop.f32.mrf.mxu0
        %v2611 = vadd.f32 0.0, %v2610
        %v2612 = vpop.f32.mrf.mxu0
        %v2613 = vadd.f32 0.0, %v2612
        %v2614 = vand.u32 %v1358, 4294901760
        %v2615 = vsub.f32 %v1358, %v2614
        %v2616 = vand.u32 %v2615, 4294901760
        %v2617 = vsub.f32 %v2615, %v2616
        %v2618 = vand.u32 %v2617, 4294901760
        %2619 = vmatprep.mubr.f32.mxu0 %v2618
        %v2620 = vand.u32 %v1220, 4294901760
        %v2621 = vsub.f32 %v1220, %v2620
        %v2622 = vand.u32 %v2621, 4294901760
        %v2623 = vsub.f32 %v2621, %v2622
        %v2624 = vand.u32 %v2623, 4294901760
        %2625 = vmatmul.mubr.f32.gmra.mxu0 %v2624
        %v2626 = vpop.f32.mrf.mxu0
        %v2627 = vadd.f32 0.0, %v2626
        %v2628 = vpop.f32.mrf.mxu0
        %v2629 = vadd.f32 0.0, %v2628
        %2630 = vdwg.mxu0
        %v2631 = vand.u32 %v1330, 4294901760
        %v2632 = vsub.f32 %v1330, %v2631
        %v2633 = vand.u32 %v2632, 4294901760
        %v2634 = vsub.f32 %v2632, %v2633
        %v2635 = vand.u32 %v2634, 4294901760
        %2636 = vmatprep.subr.mxu0 %v2635
        %v2637 = vand.u32 %v1329, 4294901760
        %v2638 = vsub.f32 %v1329, %v2637
        %v2639 = vand.u32 %v2638, 4294901760
        %v2640 = vsub.f32 %v2638, %v2639
        %v2641 = vand.u32 %v2640, 4294901760
        %2642 = vmatpush1.msra.mxu0 %v2641
        %v2643 = vand.u32 %v1323, 4294901760
        %v2644 = vsub.f32 %v1323, %v2643
        %v2645 = vand.u32 %v2644, 4294901760
        %v2646 = vsub.f32 %v2644, %v2645
        %v2647 = vand.u32 %v2646, 4294901760
        %2648 = vmatprep.subr.mxu0 %v2647
        %v2649 = vand.u32 %v1322, 4294901760
        %v2650 = vsub.f32 %v1322, %v2649
        %v2651 = vand.u32 %v2650, 4294901760
        %v2652 = vsub.f32 %v2650, %v2651
        %v2653 = vand.u32 %v2652, 4294901760
        %2654 = vmatpush1.msra.mxu0 %v2653
        %v2655 = vand.u32 %v1316, 4294901760
        %v2656 = vsub.f32 %v1316, %v2655
        %v2657 = vand.u32 %v2656, 4294901760
        %v2658 = vsub.f32 %v2656, %v2657
        %v2659 = vand.u32 %v2658, 4294901760
        %2660 = vmatprep.subr.mxu0 %v2659
        %v2661 = vand.u32 %v1315, 4294901760
        %v2662 = vsub.f32 %v1315, %v2661
        %v2663 = vand.u32 %v2662, 4294901760
        %v2664 = vsub.f32 %v2662, %v2663
        %v2665 = vand.u32 %v2664, 4294901760
        %2666 = vmatpush1.msra.mxu0 %v2665
        %v2667 = vand.u32 %v1309, 4294901760
        %v2668 = vsub.f32 %v1309, %v2667
        %v2669 = vand.u32 %v2668, 4294901760
        %v2670 = vsub.f32 %v2668, %v2669
        %v2671 = vand.u32 %v2670, 4294901760
        %2672 = vmatprep.subr.mxu0 %v2671
        %v2673 = vand.u32 %v1308, 4294901760
        %v2674 = vsub.f32 %v1308, %v2673
        %v2675 = vand.u32 %v2674, 4294901760
        %v2676 = vsub.f32 %v2674, %v2675
        %v2677 = vand.u32 %v2676, 4294901760
        %2678 = vmatpush1.msra.mxu0 %v2677
        %v2679 = vand.u32 %v1302, 4294901760
        %v2680 = vsub.f32 %v1302, %v2679
        %v2681 = vand.u32 %v2680, 4294901760
        %v2682 = vsub.f32 %v2680, %v2681
        %v2683 = vand.u32 %v2682, 4294901760
        %2684 = vmatprep.subr.mxu0 %v2683
        %v2685 = vand.u32 %v1301, 4294901760
        %v2686 = vsub.f32 %v1301, %v2685
        %v2687 = vand.u32 %v2686, 4294901760
        %v2688 = vsub.f32 %v2686, %v2687
        %v2689 = vand.u32 %v2688, 4294901760
        %2690 = vmatpush1.msra.mxu0 %v2689
        %v2691 = vand.u32 %v1295, 4294901760
        %v2692 = vsub.f32 %v1295, %v2691
        %v2693 = vand.u32 %v2692, 4294901760
        %v2694 = vsub.f32 %v2692, %v2693
        %v2695 = vand.u32 %v2694, 4294901760
        %2696 = vmatprep.subr.mxu0 %v2695
        %v2697 = vand.u32 %v1294, 4294901760
        %v2698 = vsub.f32 %v1294, %v2697
        %v2699 = vand.u32 %v2698, 4294901760
        %v2700 = vsub.f32 %v2698, %v2699
        %v2701 = vand.u32 %v2700, 4294901760
        %2702 = vmatpush1.msra.mxu0 %v2701
        %v2703 = vand.u32 %v1288, 4294901760
        %v2704 = vsub.f32 %v1288, %v2703
        %v2705 = vand.u32 %v2704, 4294901760
        %v2706 = vsub.f32 %v2704, %v2705
        %v2707 = vand.u32 %v2706, 4294901760
        %2708 = vmatprep.subr.mxu0 %v2707
        %v2709 = vand.u32 %v1287, 4294901760
        %v2710 = vsub.f32 %v1287, %v2709
        %v2711 = vand.u32 %v2710, 4294901760
        %v2712 = vsub.f32 %v2710, %v2711
        %v2713 = vand.u32 %v2712, 4294901760
        %2714 = vmatpush1.msra.mxu0 %v2713
        %v2715 = vand.u32 %v1281, 4294901760
        %v2716 = vsub.f32 %v1281, %v2715
        %v2717 = vand.u32 %v2716, 4294901760
        %v2718 = vsub.f32 %v2716, %v2717
        %v2719 = vand.u32 %v2718, 4294901760
        %2720 = vmatprep.subr.mxu0 %v2719
        %v2721 = vand.u32 %v1280, 4294901760
        %v2722 = vsub.f32 %v1280, %v2721
        %v2723 = vand.u32 %v2722, 4294901760
        %v2724 = vsub.f32 %v2722, %v2723
        %v2725 = vand.u32 %v2724, 4294901760
        %2726 = vmatpush1.msra.mxu0 %v2725
        %v2727 = vand.u32 %v1274, 4294901760
        %v2728 = vsub.f32 %v1274, %v2727
        %v2729 = vand.u32 %v2728, 4294901760
        %v2730 = vsub.f32 %v2728, %v2729
        %v2731 = vand.u32 %v2730, 4294901760
        %2732 = vmatprep.subr.mxu0 %v2731
        %v2733 = vand.u32 %v1273, 4294901760
        %v2734 = vsub.f32 %v1273, %v2733
        %v2735 = vand.u32 %v2734, 4294901760
        %v2736 = vsub.f32 %v2734, %v2735
        %v2737 = vand.u32 %v2736, 4294901760
        %2738 = vmatpush1.msra.mxu0 %v2737
        %v2739 = vand.u32 %v1267, 4294901760
        %v2740 = vsub.f32 %v1267, %v2739
        %v2741 = vand.u32 %v2740, 4294901760
        %v2742 = vsub.f32 %v2740, %v2741
        %v2743 = vand.u32 %v2742, 4294901760
        %2744 = vmatprep.subr.mxu0 %v2743
        %v2745 = vand.u32 %v1266, 4294901760
        %v2746 = vsub.f32 %v1266, %v2745
        %v2747 = vand.u32 %v2746, 4294901760
        %v2748 = vsub.f32 %v2746, %v2747
        %v2749 = vand.u32 %v2748, 4294901760
        %2750 = vmatpush1.msra.mxu0 %v2749
        %v2751 = vand.u32 %v1260, 4294901760
        %v2752 = vsub.f32 %v1260, %v2751
        %v2753 = vand.u32 %v2752, 4294901760
        %v2754 = vsub.f32 %v2752, %v2753
        %v2755 = vand.u32 %v2754, 4294901760
        %2756 = vmatprep.subr.mxu0 %v2755
        %v2757 = vand.u32 %v1259, 4294901760
        %v2758 = vsub.f32 %v1259, %v2757
        %v2759 = vand.u32 %v2758, 4294901760
        %v2760 = vsub.f32 %v2758, %v2759
        %v2761 = vand.u32 %v2760, 4294901760
        %2762 = vmatpush1.msra.mxu0 %v2761
        %v2763 = vand.u32 %v1253, 4294901760
        %v2764 = vsub.f32 %v1253, %v2763
        %v2765 = vand.u32 %v2764, 4294901760
        %v2766 = vsub.f32 %v2764, %v2765
        %v2767 = vand.u32 %v2766, 4294901760
        %2768 = vmatprep.subr.mxu0 %v2767
        %v2769 = vand.u32 %v1252, 4294901760
        %v2770 = vsub.f32 %v1252, %v2769
        %v2771 = vand.u32 %v2770, 4294901760
        %v2772 = vsub.f32 %v2770, %v2771
        %v2773 = vand.u32 %v2772, 4294901760
        %2774 = vmatpush1.msra.mxu0 %v2773
        %v2775 = vand.u32 %v1246, 4294901760
        %v2776 = vsub.f32 %v1246, %v2775
        %v2777 = vand.u32 %v2776, 4294901760
        %v2778 = vsub.f32 %v2776, %v2777
        %v2779 = vand.u32 %v2778, 4294901760
        %2780 = vmatprep.subr.mxu0 %v2779
        %v2781 = vand.u32 %v1245, 4294901760
        %v2782 = vsub.f32 %v1245, %v2781
        %v2783 = vand.u32 %v2782, 4294901760
        %v2784 = vsub.f32 %v2782, %v2783
        %v2785 = vand.u32 %v2784, 4294901760
        %2786 = vmatpush1.msra.mxu0 %v2785
        %v2787 = vand.u32 %v1239, 4294901760
        %v2788 = vsub.f32 %v1239, %v2787
        %v2789 = vand.u32 %v2788, 4294901760
        %v2790 = vsub.f32 %v2788, %v2789
        %v2791 = vand.u32 %v2790, 4294901760
        %2792 = vmatprep.subr.mxu0 %v2791
        %v2793 = vand.u32 %v1238, 4294901760
        %v2794 = vsub.f32 %v1238, %v2793
        %v2795 = vand.u32 %v2794, 4294901760
        %v2796 = vsub.f32 %v2794, %v2795
        %v2797 = vand.u32 %v2796, 4294901760
        %2798 = vmatpush1.msra.mxu0 %v2797
        %v2799 = vand.u32 %v1232, 4294901760
        %v2800 = vsub.f32 %v1232, %v2799
        %v2801 = vand.u32 %v2800, 4294901760
        %v2802 = vsub.f32 %v2800, %v2801
        %v2803 = vand.u32 %v2802, 4294901760
        %2804 = vmatprep.subr.mxu0 %v2803
        %v2805 = vand.u32 %v1231, 4294901760
        %v2806 = vsub.f32 %v1231, %v2805
        %v2807 = vand.u32 %v2806, 4294901760
        %v2808 = vsub.f32 %v2806, %v2807
        %v2809 = vand.u32 %v2808, 4294901760
        %2810 = vmatpush1.msra.mxu0 %v2809
        %v2811 = vand.u32 %v1225, 4294901760
        %v2812 = vsub.f32 %v1225, %v2811
        %v2813 = vand.u32 %v2812, 4294901760
        %v2814 = vsub.f32 %v2812, %v2813
        %v2815 = vand.u32 %v2814, 4294901760
        %2816 = vmatprep.subr.mxu0 %v2815
        %v2817 = vand.u32 %v1224, 4294901760
        %v2818 = vsub.f32 %v1224, %v2817
        %v2819 = vand.u32 %v2818, 4294901760
        %v2820 = vsub.f32 %v2818, %v2819
        %v2821 = vand.u32 %v2820, 4294901760
        %2822 = vmatpush1.msra.mxu0 %v2821
        %2823 = vmatprep.subr.mxu0 0.0
        %2824 = vmatpush2.msra.mxu0 0.0
        %2825 = vmatprep.subr.mxu0 0.0
        %2826 = vmatpush2.msra.mxu0 0.0
        %2827 = vmatprep.subr.mxu0 0.0
        %2828 = vmatpush2.msra.mxu0 0.0
        %2829 = vmatprep.subr.mxu0 0.0
        %2830 = vmatpush2.msra.mxu0 0.0
        %2831 = vmatprep.subr.mxu0 0.0
        %2832 = vmatpush2.msra.mxu0 0.0
        %2833 = vmatprep.subr.mxu0 0.0
        %2834 = vmatpush2.msra.mxu0 0.0
        %2835 = vmatprep.subr.mxu0 0.0
        %2836 = vmatpush2.msra.mxu0 0.0
        %2837 = vmatprep.subr.mxu0 0.0
        %2838 = vmatpush2.msra.mxu0 0.0
        %2839 = vmatprep.subr.mxu0 0.0
        %2840 = vmatpush2.msra.mxu0 0.0
        %2841 = vmatprep.subr.mxu0 0.0
        %2842 = vmatpush2.msra.mxu0 0.0
        %2843 = vmatprep.subr.mxu0 0.0
        %2844 = vmatpush2.msra.mxu0 0.0
        %2845 = vmatprep.subr.mxu0 0.0
        %2846 = vmatpush2.msra.mxu0 0.0
        %2847 = vmatprep.subr.mxu0 0.0
        %2848 = vmatpush2.msra.mxu0 0.0
        %2849 = vmatprep.subr.mxu0 0.0
        %2850 = vmatpush2.msra.mxu0 0.0
        %v2851 = vand.u32 %v1344, 4294901760
        %v2852 = vsub.f32 %v1344, %v2851
        %v2853 = vand.u32 %v2852, 4294901760
        %v2854 = vsub.f32 %v2852, %v2853
        %v2855 = vand.u32 %v2854, 4294901760
        %2856 = vmatprep.subr.mxu0 %v2855
        %v2857 = vand.u32 %v1343, 4294901760
        %v2858 = vsub.f32 %v1343, %v2857
        %v2859 = vand.u32 %v2858, 4294901760
        %v2860 = vsub.f32 %v2858, %v2859
        %v2861 = vand.u32 %v2860, 4294901760
        %2862 = vmatpush2.msra.mxu0 %v2861
        %v2863 = vand.u32 %v1337, 4294901760
        %v2864 = vsub.f32 %v1337, %v2863
        %v2865 = vand.u32 %v2864, 4294901760
        %v2866 = vsub.f32 %v2864, %v2865
        %v2867 = vand.u32 %v2866, 4294901760
        %2868 = vmatprep.subr.mxu0 %v2867
        %v2869 = vand.u32 %v1336, 4294901760
        %v2870 = vsub.f32 %v1336, %v2869
        %v2871 = vand.u32 %v2870, 4294901760
        %v2872 = vsub.f32 %v2870, %v2871
        %v2873 = vand.u32 %v2872, 4294901760
        %2874 = vmatpush2.msra.mxu0 %v2873
        %v2875 = vand.u32 %v1349, 4294901760
        %2876 = vmatprep.mubr.f32.mxu0 %v2875
        %v2877 = vand.u32 %v1214, 4294901760
        %2878 = vmatmul.mubr.f32.gmra.mxu0 %v2877
        %v2879 = vpop.f32.mrf.mxu0
        %v2880 = vadd.f32 %v2579, %v2879
        %v2881 = vpop.f32.mrf.mxu0
        %v2882 = vadd.f32 %v2581, %v2881
        %v2883 = vand.u32 %v1352, 4294901760
        %2884 = vmatprep.mubr.f32.mxu0 %v2883
        %v2885 = vand.u32 %v1216, 4294901760
        %2886 = vmatmul.mubr.f32.gmra.mxu0 %v2885
        %v2887 = vpop.f32.mrf.mxu0
        %v2888 = vadd.f32 %v2595, %v2887
        %v2889 = vpop.f32.mrf.mxu0
        %v2890 = vadd.f32 %v2597, %v2889
        %v2891 = vand.u32 %v1355, 4294901760
        %2892 = vmatprep.mubr.f32.mxu0 %v2891
        %v2893 = vand.u32 %v1218, 4294901760
        %2894 = vmatmul.mubr.f32.gmra.mxu0 %v2893
        %v2895 = vpop.f32.mrf.mxu0
        %v2896 = vadd.f32 %v2611, %v2895
        %v2897 = vpop.f32.mrf.mxu0
        %v2898 = vadd.f32 %v2613, %v2897
        %v2899 = vand.u32 %v1358, 4294901760
        %2900 = vmatprep.mubr.f32.mxu0 %v2899
        %v2901 = vand.u32 %v1220, 4294901760
        %2902 = vmatmul.mubr.f32.gmra.mxu0 %v2901
        %v2903 = vpop.f32.mrf.mxu0
        %v2904 = vadd.f32 %v2627, %v2903
        %v2905 = vpop.f32.mrf.mxu0
        %v2906 = vadd.f32 %v2629, %v2905
        %2907 = vdwg.mxu0
        %v2908 = vand.u32 %v1330, 4294901760
        %v2909 = vsub.f32 %v1330, %v2908
        %2910 = vmatprep.subr.mxu0 %v2909
        %v2911 = vand.u32 %v1329, 4294901760
        %v2912 = vsub.f32 %v1329, %v2911
        %2913 = vmatpush1.msra.mxu0 %v2912
        %v2914 = vand.u32 %v1323, 4294901760
        %v2915 = vsub.f32 %v1323, %v2914
        %2916 = vmatprep.subr.mxu0 %v2915
        %v2917 = vand.u32 %v1322, 4294901760
        %v2918 = vsub.f32 %v1322, %v2917
        %2919 = vmatpush1.msra.mxu0 %v2918
        %v2920 = vand.u32 %v1316, 4294901760
        %v2921 = vsub.f32 %v1316, %v2920
        %2922 = vmatprep.subr.mxu0 %v2921
        %v2923 = vand.u32 %v1315, 4294901760
        %v2924 = vsub.f32 %v1315, %v2923
        %2925 = vmatpush1.msra.mxu0 %v2924
        %v2926 = vand.u32 %v1309, 4294901760
        %v2927 = vsub.f32 %v1309, %v2926
        %2928 = vmatprep.subr.mxu0 %v2927
        %v2929 = vand.u32 %v1308, 4294901760
        %v2930 = vsub.f32 %v1308, %v2929
        %2931 = vmatpush1.msra.mxu0 %v2930
        %v2932 = vand.u32 %v1302, 4294901760
        %v2933 = vsub.f32 %v1302, %v2932
        %2934 = vmatprep.subr.mxu0 %v2933
        %v2935 = vand.u32 %v1301, 4294901760
        %v2936 = vsub.f32 %v1301, %v2935
        %2937 = vmatpush1.msra.mxu0 %v2936
        %v2938 = vand.u32 %v1295, 4294901760
        %v2939 = vsub.f32 %v1295, %v2938
        %2940 = vmatprep.subr.mxu0 %v2939
        %v2941 = vand.u32 %v1294, 4294901760
        %v2942 = vsub.f32 %v1294, %v2941
        %2943 = vmatpush1.msra.mxu0 %v2942
        %v2944 = vand.u32 %v1288, 4294901760
        %v2945 = vsub.f32 %v1288, %v2944
        %2946 = vmatprep.subr.mxu0 %v2945
        %v2947 = vand.u32 %v1287, 4294901760
        %v2948 = vsub.f32 %v1287, %v2947
        %2949 = vmatpush1.msra.mxu0 %v2948
        %v2950 = vand.u32 %v1281, 4294901760
        %v2951 = vsub.f32 %v1281, %v2950
        %2952 = vmatprep.subr.mxu0 %v2951
        %v2953 = vand.u32 %v1280, 4294901760
        %v2954 = vsub.f32 %v1280, %v2953
        %2955 = vmatpush1.msra.mxu0 %v2954
        %v2956 = vand.u32 %v1274, 4294901760
        %v2957 = vsub.f32 %v1274, %v2956
        %2958 = vmatprep.subr.mxu0 %v2957
        %v2959 = vand.u32 %v1273, 4294901760
        %v2960 = vsub.f32 %v1273, %v2959
        %2961 = vmatpush1.msra.mxu0 %v2960
        %v2962 = vand.u32 %v1267, 4294901760
        %v2963 = vsub.f32 %v1267, %v2962
        %2964 = vmatprep.subr.mxu0 %v2963
        %v2965 = vand.u32 %v1266, 4294901760
        %v2966 = vsub.f32 %v1266, %v2965
        %2967 = vmatpush1.msra.mxu0 %v2966
        %v2968 = vand.u32 %v1260, 4294901760
        %v2969 = vsub.f32 %v1260, %v2968
        %2970 = vmatprep.subr.mxu0 %v2969
        %v2971 = vand.u32 %v1259, 4294901760
        %v2972 = vsub.f32 %v1259, %v2971
        %2973 = vmatpush1.msra.mxu0 %v2972
        %v2974 = vand.u32 %v1253, 4294901760
        %v2975 = vsub.f32 %v1253, %v2974
        %2976 = vmatprep.subr.mxu0 %v2975
        %v2977 = vand.u32 %v1252, 4294901760
        %v2978 = vsub.f32 %v1252, %v2977
        %2979 = vmatpush1.msra.mxu0 %v2978
        %v2980 = vand.u32 %v1246, 4294901760
        %v2981 = vsub.f32 %v1246, %v2980
        %2982 = vmatprep.subr.mxu0 %v2981
        %v2983 = vand.u32 %v1245, 4294901760
        %v2984 = vsub.f32 %v1245, %v2983
        %2985 = vmatpush1.msra.mxu0 %v2984
        %v2986 = vand.u32 %v1239, 4294901760
        %v2987 = vsub.f32 %v1239, %v2986
        %2988 = vmatprep.subr.mxu0 %v2987
        %v2989 = vand.u32 %v1238, 4294901760
        %v2990 = vsub.f32 %v1238, %v2989
        %2991 = vmatpush1.msra.mxu0 %v2990
        %v2992 = vand.u32 %v1232, 4294901760
        %v2993 = vsub.f32 %v1232, %v2992
        %2994 = vmatprep.subr.mxu0 %v2993
        %v2995 = vand.u32 %v1231, 4294901760
        %v2996 = vsub.f32 %v1231, %v2995
        %2997 = vmatpush1.msra.mxu0 %v2996
        %v2998 = vand.u32 %v1225, 4294901760
        %v2999 = vsub.f32 %v1225, %v2998
        %3000 = vmatprep.subr.mxu0 %v2999
        %v3001 = vand.u32 %v1224, 4294901760
        %v3002 = vsub.f32 %v1224, %v3001
        %3003 = vmatpush1.msra.mxu0 %v3002
        %3004 = vmatprep.subr.mxu0 0.0
        %3005 = vmatpush2.msra.mxu0 0.0
        %3006 = vmatprep.subr.mxu0 0.0
        %3007 = vmatpush2.msra.mxu0 0.0
        %3008 = vmatprep.subr.mxu0 0.0
        %3009 = vmatpush2.msra.mxu0 0.0
        %3010 = vmatprep.subr.mxu0 0.0
        %3011 = vmatpush2.msra.mxu0 0.0
        %3012 = vmatprep.subr.mxu0 0.0
        %3013 = vmatpush2.msra.mxu0 0.0
        %3014 = vmatprep.subr.mxu0 0.0
        %3015 = vmatpush2.msra.mxu0 0.0
        %3016 = vmatprep.subr.mxu0 0.0
        %3017 = vmatpush2.msra.mxu0 0.0
        %3018 = vmatprep.subr.mxu0 0.0
        %3019 = vmatpush2.msra.mxu0 0.0
        %3020 = vmatprep.subr.mxu0 0.0
        %3021 = vmatpush2.msra.mxu0 0.0
        %3022 = vmatprep.subr.mxu0 0.0
        %3023 = vmatpush2.msra.mxu0 0.0
        %3024 = vmatprep.subr.mxu0 0.0
        %3025 = vmatpush2.msra.mxu0 0.0
        %3026 = vmatprep.subr.mxu0 0.0
        %3027 = vmatpush2.msra.mxu0 0.0
        %3028 = vmatprep.subr.mxu0 0.0
        %3029 = vmatpush2.msra.mxu0 0.0
        %3030 = vmatprep.subr.mxu0 0.0
        %3031 = vmatpush2.msra.mxu0 0.0
        %v3032 = vand.u32 %v1344, 4294901760
        %v3033 = vsub.f32 %v1344, %v3032
        %3034 = vmatprep.subr.mxu0 %v3033
        %v3035 = vand.u32 %v1343, 4294901760
        %v3036 = vsub.f32 %v1343, %v3035
        %3037 = vmatpush2.msra.mxu0 %v3036
        %v3038 = vand.u32 %v1337, 4294901760
        %v3039 = vsub.f32 %v1337, %v3038
        %3040 = vmatprep.subr.mxu0 %v3039
        %v3041 = vand.u32 %v1336, 4294901760
        %v3042 = vsub.f32 %v1336, %v3041
        %3043 = vmatpush2.msra.mxu0 %v3042
        %v3044 = vand.u32 %v1349, 4294901760
        %v3045 = vsub.f32 %v1349, %v3044
        %3046 = vmatprep.mubr.f32.mxu0 %v3045
        %v3047 = vand.u32 %v1214, 4294901760
        %v3048 = vsub.f32 %v1214, %v3047
        %3049 = vmatmul.mubr.f32.gmra.mxu0 %v3048
        %v3050 = vpop.f32.mrf.mxu0
        %v3051 = vadd.f32 %v2880, %v3050
        %v3052 = vpop.f32.mrf.mxu0
        %v3053 = vadd.f32 %v2882, %v3052
        %v3054 = vand.u32 %v1352, 4294901760
        %v3055 = vsub.f32 %v1352, %v3054
        %3056 = vmatprep.mubr.f32.mxu0 %v3055
        %v3057 = vand.u32 %v1216, 4294901760
        %v3058 = vsub.f32 %v1216, %v3057
        %3059 = vmatmul.mubr.f32.gmra.mxu0 %v3058
        %v3060 = vpop.f32.mrf.mxu0
        %v3061 = vadd.f32 %v2888, %v3060
        %v3062 = vpop.f32.mrf.mxu0
        %v3063 = vadd.f32 %v2890, %v3062
        %v3064 = vand.u32 %v1355, 4294901760
        %v3065 = vsub.f32 %v1355, %v3064
        %3066 = vmatprep.mubr.f32.mxu0 %v3065
        %v3067 = vand.u32 %v1218, 4294901760
        %v3068 = vsub.f32 %v1218, %v3067
        %3069 = vmatmul.mubr.f32.gmra.mxu0 %v3068
        %v3070 = vpop.f32.mrf.mxu0
        %v3071 = vadd.f32 %v2896, %v3070
        %v3072 = vpop.f32.mrf.mxu0
        %v3073 = vadd.f32 %v2898, %v3072
        %v3074 = vand.u32 %v1358, 4294901760
        %v3075 = vsub.f32 %v1358, %v3074
        %3076 = vmatprep.mubr.f32.mxu0 %v3075
        %v3077 = vand.u32 %v1220, 4294901760
        %v3078 = vsub.f32 %v1220, %v3077
        %3079 = vmatmul.mubr.f32.gmra.mxu0 %v3078
        %v3080 = vpop.f32.mrf.mxu0
        %v3081 = vadd.f32 %v2904, %v3080
        %v3082 = vpop.f32.mrf.mxu0
        %v3083 = vadd.f32 %v2906, %v3082
        %3084 = vdwg.mxu0
        %v3085 = vand.u32 %v1330, 4294901760
        %3086 = vmatprep.subr.mxu0 %v3085
        %v3087 = vand.u32 %v1329, 4294901760
        %3088 = vmatpush1.msra.mxu0 %v3087
        %v3089 = vand.u32 %v1323, 4294901760
        %3090 = vmatprep.subr.mxu0 %v3089
        %v3091 = vand.u32 %v1322, 4294901760
        %3092 = vmatpush1.msra.mxu0 %v3091
        %v3093 = vand.u32 %v1316, 4294901760
        %3094 = vmatprep.subr.mxu0 %v3093
        %v3095 = vand.u32 %v1315, 4294901760
        %3096 = vmatpush1.msra.mxu0 %v3095
        %v3097 = vand.u32 %v1309, 4294901760
        %3098 = vmatprep.subr.mxu0 %v3097
        %v3099 = vand.u32 %v1308, 4294901760
        %3100 = vmatpush1.msra.mxu0 %v3099
        %v3101 = vand.u32 %v1302, 4294901760
        %3102 = vmatprep.subr.mxu0 %v3101
        %v3103 = vand.u32 %v1301, 4294901760
        %3104 = vmatpush1.msra.mxu0 %v3103
        %v3105 = vand.u32 %v1295, 4294901760
        %3106 = vmatprep.subr.mxu0 %v3105
        %v3107 = vand.u32 %v1294, 4294901760
        %3108 = vmatpush1.msra.mxu0 %v3107
        %v3109 = vand.u32 %v1288, 4294901760
        %3110 = vmatprep.subr.mxu0 %v3109
        %v3111 = vand.u32 %v1287, 4294901760
        %3112 = vmatpush1.msra.mxu0 %v3111
        %v3113 = vand.u32 %v1281, 4294901760
        %3114 = vmatprep.subr.mxu0 %v3113
        %v3115 = vand.u32 %v1280, 4294901760
        %3116 = vmatpush1.msra.mxu0 %v3115
        %v3117 = vand.u32 %v1274, 4294901760
        %3118 = vmatprep.subr.mxu0 %v3117
        %v3119 = vand.u32 %v1273, 4294901760
        %3120 = vmatpush1.msra.mxu0 %v3119
        %v3121 = vand.u32 %v1267, 4294901760
        %3122 = vmatprep.subr.mxu0 %v3121
        %v3123 = vand.u32 %v1266, 4294901760
        %3124 = vmatpush1.msra.mxu0 %v3123
        %v3125 = vand.u32 %v1260, 4294901760
        %3126 = vmatprep.subr.mxu0 %v3125
        %v3127 = vand.u32 %v1259, 4294901760
        %3128 = vmatpush1.msra.mxu0 %v3127
        %v3129 = vand.u32 %v1253, 4294901760
        %3130 = vmatprep.subr.mxu0 %v3129
        %v3131 = vand.u32 %v1252, 4294901760
        %3132 = vmatpush1.msra.mxu0 %v3131
        %v3133 = vand.u32 %v1246, 4294901760
        %3134 = vmatprep.subr.mxu0 %v3133
        %v3135 = vand.u32 %v1245, 4294901760
        %3136 = vmatpush1.msra.mxu0 %v3135
        %v3137 = vand.u32 %v1239, 4294901760
        %3138 = vmatprep.subr.mxu0 %v3137
        %v3139 = vand.u32 %v1238, 4294901760
        %3140 = vmatpush1.msra.mxu0 %v3139
        %v3141 = vand.u32 %v1232, 4294901760
        %3142 = vmatprep.subr.mxu0 %v3141
        %v3143 = vand.u32 %v1231, 4294901760
        %3144 = vmatpush1.msra.mxu0 %v3143
        %v3145 = vand.u32 %v1225, 4294901760
        %3146 = vmatprep.subr.mxu0 %v3145
        %v3147 = vand.u32 %v1224, 4294901760
        %3148 = vmatpush1.msra.mxu0 %v3147
        %3149 = vmatprep.subr.mxu0 0.0
        %3150 = vmatpush2.msra.mxu0 0.0
        %3151 = vmatprep.subr.mxu0 0.0
        %3152 = vmatpush2.msra.mxu0 0.0
        %3153 = vmatprep.subr.mxu0 0.0
        %3154 = vmatpush2.msra.mxu0 0.0
        %3155 = vmatprep.subr.mxu0 0.0
        %3156 = vmatpush2.msra.mxu0 0.0
        %3157 = vmatprep.subr.mxu0 0.0
        %3158 = vmatpush2.msra.mxu0 0.0
        %3159 = vmatprep.subr.mxu0 0.0
        %3160 = vmatpush2.msra.mxu0 0.0
        %3161 = vmatprep.subr.mxu0 0.0
        %3162 = vmatpush2.msra.mxu0 0.0
        %3163 = vmatprep.subr.mxu0 0.0
        %3164 = vmatpush2.msra.mxu0 0.0
        %3165 = vmatprep.subr.mxu0 0.0
        %3166 = vmatpush2.msra.mxu0 0.0
        %3167 = vmatprep.subr.mxu0 0.0
        %3168 = vmatpush2.msra.mxu0 0.0
        %3169 = vmatprep.subr.mxu0 0.0
        %3170 = vmatpush2.msra.mxu0 0.0
        %3171 = vmatprep.subr.mxu0 0.0
        %3172 = vmatpush2.msra.mxu0 0.0
        %3173 = vmatprep.subr.mxu0 0.0
        %3174 = vmatpush2.msra.mxu0 0.0
        %3175 = vmatprep.subr.mxu0 0.0
        %3176 = vmatpush2.msra.mxu0 0.0
        %v3177 = vand.u32 %v1344, 4294901760
        %3178 = vmatprep.subr.mxu0 %v3177
        %v3179 = vand.u32 %v1343, 4294901760
        %3180 = vmatpush2.msra.mxu0 %v3179
        %v3181 = vand.u32 %v1337, 4294901760
        %3182 = vmatprep.subr.mxu0 %v3181
        %v3183 = vand.u32 %v1336, 4294901760
        %3184 = vmatpush2.msra.mxu0 %v3183
        %v3185 = vand.u32 %v1349, 4294901760
        %v3186 = vsub.f32 %v1349, %v3185
        %v3187 = vand.u32 %v3186, 4294901760
        %3188 = vmatprep.mubr.f32.mxu0 %v3187
        %v3189 = vand.u32 %v1214, 4294901760
        %v3190 = vsub.f32 %v1214, %v3189
        %v3191 = vand.u32 %v3190, 4294901760
        %3192 = vmatmul.mubr.f32.gmra.mxu0 %v3191
        %v3193 = vpop.f32.mrf.mxu0
        %v3194 = vadd.f32 %v3051, %v3193
        %v3195 = vpop.f32.mrf.mxu0
        %v3196 = vadd.f32 %v3053, %v3195
        %v3197 = vand.u32 %v1352, 4294901760
        %v3198 = vsub.f32 %v1352, %v3197
        %v3199 = vand.u32 %v3198, 4294901760
        %3200 = vmatprep.mubr.f32.mxu0 %v3199
        %v3201 = vand.u32 %v1216, 4294901760
        %v3202 = vsub.f32 %v1216, %v3201
        %v3203 = vand.u32 %v3202, 4294901760
        %3204 = vmatmul.mubr.f32.gmra.mxu0 %v3203
        %v3205 = vpop.f32.mrf.mxu0
        %v3206 = vadd.f32 %v3061, %v3205
        %v3207 = vpop.f32.mrf.mxu0
        %v3208 = vadd.f32 %v3063, %v3207
        %v3209 = vand.u32 %v1355, 4294901760
        %v3210 = vsub.f32 %v1355, %v3209
        %v3211 = vand.u32 %v3210, 4294901760
        %3212 = vmatprep.mubr.f32.mxu0 %v3211
        %v3213 = vand.u32 %v1218, 4294901760
        %v3214 = vsub.f32 %v1218, %v3213
        %v3215 = vand.u32 %v3214, 4294901760
        %3216 = vmatmul.mubr.f32.gmra.mxu0 %v3215
        %v3217 = vpop.f32.mrf.mxu0
        %v3218 = vadd.f32 %v3071, %v3217
        %v3219 = vpop.f32.mrf.mxu0
        %v3220 = vadd.f32 %v3073, %v3219
        %v3221 = vand.u32 %v1358, 4294901760
        %v3222 = vsub.f32 %v1358, %v3221
        %v3223 = vand.u32 %v3222, 4294901760
        %3224 = vmatprep.mubr.f32.mxu0 %v3223
        %v3225 = vand.u32 %v1220, 4294901760
        %v3226 = vsub.f32 %v1220, %v3225
        %v3227 = vand.u32 %v3226, 4294901760
        %3228 = vmatmul.mubr.f32.gmra.mxu0 %v3227
        %v3229 = vpop.f32.mrf.mxu0
        %v3230 = vadd.f32 %v3081, %v3229
        %v3231 = vpop.f32.mrf.mxu0
        %v3232 = vadd.f32 %v3083, %v3231
        %3233 = vdwg.mxu0
        %v3234 = vand.u32 %v1330, 4294901760
        %v3235 = vsub.f32 %v1330, %v3234
        %v3236 = vand.u32 %v3235, 4294901760
        %3237 = vmatprep.subr.mxu0 %v3236
        %v3238 = vand.u32 %v1329, 4294901760
        %v3239 = vsub.f32 %v1329, %v3238
        %v3240 = vand.u32 %v3239, 4294901760
        %3241 = vmatpush1.msra.mxu0 %v3240
        %v3242 = vand.u32 %v1323, 4294901760
        %v3243 = vsub.f32 %v1323, %v3242
        %v3244 = vand.u32 %v3243, 4294901760
        %3245 = vmatprep.subr.mxu0 %v3244
        %v3246 = vand.u32 %v1322, 4294901760
        %v3247 = vsub.f32 %v1322, %v3246
        %v3248 = vand.u32 %v3247, 4294901760
        %3249 = vmatpush1.msra.mxu0 %v3248
        %v3250 = vand.u32 %v1316, 4294901760
        %v3251 = vsub.f32 %v1316, %v3250
        %v3252 = vand.u32 %v3251, 4294901760
        %3253 = vmatprep.subr.mxu0 %v3252
        %v3254 = vand.u32 %v1315, 4294901760
        %v3255 = vsub.f32 %v1315, %v3254
        %v3256 = vand.u32 %v3255, 4294901760
        %3257 = vmatpush1.msra.mxu0 %v3256
        %v3258 = vand.u32 %v1309, 4294901760
        %v3259 = vsub.f32 %v1309, %v3258
        %v3260 = vand.u32 %v3259, 4294901760
        %3261 = vmatprep.subr.mxu0 %v3260
        %v3262 = vand.u32 %v1308, 4294901760
        %v3263 = vsub.f32 %v1308, %v3262
        %v3264 = vand.u32 %v3263, 4294901760
        %3265 = vmatpush1.msra.mxu0 %v3264
        %v3266 = vand.u32 %v1302, 4294901760
        %v3267 = vsub.f32 %v1302, %v3266
        %v3268 = vand.u32 %v3267, 4294901760
        %3269 = vmatprep.subr.mxu0 %v3268
        %v3270 = vand.u32 %v1301, 4294901760
        %v3271 = vsub.f32 %v1301, %v3270
        %v3272 = vand.u32 %v3271, 4294901760
        %3273 = vmatpush1.msra.mxu0 %v3272
        %v3274 = vand.u32 %v1295, 4294901760
        %v3275 = vsub.f32 %v1295, %v3274
        %v3276 = vand.u32 %v3275, 4294901760
        %3277 = vmatprep.subr.mxu0 %v3276
        %v3278 = vand.u32 %v1294, 4294901760
        %v3279 = vsub.f32 %v1294, %v3278
        %v3280 = vand.u32 %v3279, 4294901760
        %3281 = vmatpush1.msra.mxu0 %v3280
        %v3282 = vand.u32 %v1288, 4294901760
        %v3283 = vsub.f32 %v1288, %v3282
        %v3284 = vand.u32 %v3283, 4294901760
        %3285 = vmatprep.subr.mxu0 %v3284
        %v3286 = vand.u32 %v1287, 4294901760
        %v3287 = vsub.f32 %v1287, %v3286
        %v3288 = vand.u32 %v3287, 4294901760
        %3289 = vmatpush1.msra.mxu0 %v3288
        %v3290 = vand.u32 %v1281, 4294901760
        %v3291 = vsub.f32 %v1281, %v3290
        %v3292 = vand.u32 %v3291, 4294901760
        %3293 = vmatprep.subr.mxu0 %v3292
        %v3294 = vand.u32 %v1280, 4294901760
        %v3295 = vsub.f32 %v1280, %v3294
        %v3296 = vand.u32 %v3295, 4294901760
        %3297 = vmatpush1.msra.mxu0 %v3296
        %v3298 = vand.u32 %v1274, 4294901760
        %v3299 = vsub.f32 %v1274, %v3298
        %v3300 = vand.u32 %v3299, 4294901760
        %3301 = vmatprep.subr.mxu0 %v3300
        %v3302 = vand.u32 %v1273, 4294901760
        %v3303 = vsub.f32 %v1273, %v3302
        %v3304 = vand.u32 %v3303, 4294901760
        %3305 = vmatpush1.msra.mxu0 %v3304
        %v3306 = vand.u32 %v1267, 4294901760
        %v3307 = vsub.f32 %v1267, %v3306
        %v3308 = vand.u32 %v3307, 4294901760
        %3309 = vmatprep.subr.mxu0 %v3308
        %v3310 = vand.u32 %v1266, 4294901760
        %v3311 = vsub.f32 %v1266, %v3310
        %v3312 = vand.u32 %v3311, 4294901760
        %3313 = vmatpush1.msra.mxu0 %v3312
        %v3314 = vand.u32 %v1260, 4294901760
        %v3315 = vsub.f32 %v1260, %v3314
        %v3316 = vand.u32 %v3315, 4294901760
        %3317 = vmatprep.subr.mxu0 %v3316
        %v3318 = vand.u32 %v1259, 4294901760
        %v3319 = vsub.f32 %v1259, %v3318
        %v3320 = vand.u32 %v3319, 4294901760
        %3321 = vmatpush1.msra.mxu0 %v3320
        %v3322 = vand.u32 %v1253, 4294901760
        %v3323 = vsub.f32 %v1253, %v3322
        %v3324 = vand.u32 %v3323, 4294901760
        %3325 = vmatprep.subr.mxu0 %v3324
        %v3326 = vand.u32 %v1252, 4294901760
        %v3327 = vsub.f32 %v1252, %v3326
        %v3328 = vand.u32 %v3327, 4294901760
        %3329 = vmatpush1.msra.mxu0 %v3328
        %v3330 = vand.u32 %v1246, 4294901760
        %v3331 = vsub.f32 %v1246, %v3330
        %v3332 = vand.u32 %v3331, 4294901760
        %3333 = vmatprep.subr.mxu0 %v3332
        %v3334 = vand.u32 %v1245, 4294901760
        %v3335 = vsub.f32 %v1245, %v3334
        %v3336 = vand.u32 %v3335, 4294901760
        %3337 = vmatpush1.msra.mxu0 %v3336
        %v3338 = vand.u32 %v1239, 4294901760
        %v3339 = vsub.f32 %v1239, %v3338
        %v3340 = vand.u32 %v3339, 4294901760
        %3341 = vmatprep.subr.mxu0 %v3340
        %v3342 = vand.u32 %v1238, 4294901760
        %v3343 = vsub.f32 %v1238, %v3342
        %v3344 = vand.u32 %v3343, 4294901760
        %3345 = vmatpush1.msra.mxu0 %v3344
        %v3346 = vand.u32 %v1232, 4294901760
        %v3347 = vsub.f32 %v1232, %v3346
        %v3348 = vand.u32 %v3347, 4294901760
        %3349 = vmatprep.subr.mxu0 %v3348
        %v3350 = vand.u32 %v1231, 4294901760
        %v3351 = vsub.f32 %v1231, %v3350
        %v3352 = vand.u32 %v3351, 4294901760
        %3353 = vmatpush1.msra.mxu0 %v3352
        %v3354 = vand.u32 %v1225, 4294901760
        %v3355 = vsub.f32 %v1225, %v3354
        %v3356 = vand.u32 %v3355, 4294901760
        %3357 = vmatprep.subr.mxu0 %v3356
        %v3358 = vand.u32 %v1224, 4294901760
        %v3359 = vsub.f32 %v1224, %v3358
        %v3360 = vand.u32 %v3359, 4294901760
        %3361 = vmatpush1.msra.mxu0 %v3360
        %3362 = vmatprep.subr.mxu0 0.0
        %3363 = vmatpush2.msra.mxu0 0.0
        %3364 = vmatprep.subr.mxu0 0.0
        %3365 = vmatpush2.msra.mxu0 0.0
        %3366 = vmatprep.subr.mxu0 0.0
        %3367 = vmatpush2.msra.mxu0 0.0
        %3368 = vmatprep.subr.mxu0 0.0
        %3369 = vmatpush2.msra.mxu0 0.0
        %3370 = vmatprep.subr.mxu0 0.0
        %3371 = vmatpush2.msra.mxu0 0.0
        %3372 = vmatprep.subr.mxu0 0.0
        %3373 = vmatpush2.msra.mxu0 0.0
        %3374 = vmatprep.subr.mxu0 0.0
        %3375 = vmatpush2.msra.mxu0 0.0
        %3376 = vmatprep.subr.mxu0 0.0
        %3377 = vmatpush2.msra.mxu0 0.0
        %3378 = vmatprep.subr.mxu0 0.0
        %3379 = vmatpush2.msra.mxu0 0.0
        %3380 = vmatprep.subr.mxu0 0.0
        %3381 = vmatpush2.msra.mxu0 0.0
        %3382 = vmatprep.subr.mxu0 0.0
        %3383 = vmatpush2.msra.mxu0 0.0
        %3384 = vmatprep.subr.mxu0 0.0
        %3385 = vmatpush2.msra.mxu0 0.0
        %3386 = vmatprep.subr.mxu0 0.0
        %3387 = vmatpush2.msra.mxu0 0.0
        %3388 = vmatprep.subr.mxu0 0.0
        %3389 = vmatpush2.msra.mxu0 0.0
        %v3390 = vand.u32 %v1344, 4294901760
        %v3391 = vsub.f32 %v1344, %v3390
        %v3392 = vand.u32 %v3391, 4294901760
        %3393 = vmatprep.subr.mxu0 %v3392
        %v3394 = vand.u32 %v1343, 4294901760
        %v3395 = vsub.f32 %v1343, %v3394
        %v3396 = vand.u32 %v3395, 4294901760
        %3397 = vmatpush2.msra.mxu0 %v3396
        %v3398 = vand.u32 %v1337, 4294901760
        %v3399 = vsub.f32 %v1337, %v3398
        %v3400 = vand.u32 %v3399, 4294901760
        %3401 = vmatprep.subr.mxu0 %v3400
        %v3402 = vand.u32 %v1336, 4294901760
        %v3403 = vsub.f32 %v1336, %v3402
        %v3404 = vand.u32 %v3403, 4294901760
        %3405 = vmatpush2.msra.mxu0 %v3404
        %v3406 = vand.u32 %v1349, 4294901760
        %3407 = vmatprep.mubr.f32.mxu0 %v3406
        %v3408 = vand.u32 %v1214, 4294901760
        %3409 = vmatmul.mubr.f32.gmra.mxu0 %v3408
        %v3410 = vpop.f32.mrf.mxu0
        %v3411 = vadd.f32 %v3194, %v3410
        %v3412 = vpop.f32.mrf.mxu0
        %v3413 = vadd.f32 %v3196, %v3412
        %v3414 = vand.u32 %v1352, 4294901760
        %3415 = vmatprep.mubr.f32.mxu0 %v3414
        %v3416 = vand.u32 %v1216, 4294901760
        %3417 = vmatmul.mubr.f32.gmra.mxu0 %v3416
        %v3418 = vpop.f32.mrf.mxu0
        %v3419 = vadd.f32 %v3206, %v3418
        %v3420 = vpop.f32.mrf.mxu0
        %v3421 = vadd.f32 %v3208, %v3420
        %v3422 = vand.u32 %v1355, 4294901760
        %3423 = vmatprep.mubr.f32.mxu0 %v3422
        %v3424 = vand.u32 %v1218, 4294901760
        %3425 = vmatmul.mubr.f32.gmra.mxu0 %v3424
        %v3426 = vpop.f32.mrf.mxu0
        %v3427 = vadd.f32 %v3218, %v3426
        %v3428 = vpop.f32.mrf.mxu0
        %v3429 = vadd.f32 %v3220, %v3428
        %v3430 = vand.u32 %v1358, 4294901760
        %3431 = vmatprep.mubr.f32.mxu0 %v3430
        %v3432 = vand.u32 %v1220, 4294901760
        %3433 = vmatmul.mubr.f32.gmra.mxu0 %v3432
        %v3434 = vpop.f32.mrf.mxu0
        %v3435 = vadd.f32 %v3230, %v3434
        %v3436 = vpop.f32.mrf.mxu0
        %v3437 = vadd.f32 %v3232, %v3436
        %3438 = vdwg.mxu0
        %v3439 = vand.u32 %v1330, 4294901760
        %3440 = vmatprep.subr.mxu0 %v3439
        %v3441 = vand.u32 %v1329, 4294901760
        %3442 = vmatpush1.msra.mxu0 %v3441
        %v3443 = vand.u32 %v1323, 4294901760
        %3444 = vmatprep.subr.mxu0 %v3443
        %v3445 = vand.u32 %v1322, 4294901760
        %3446 = vmatpush1.msra.mxu0 %v3445
        %v3447 = vand.u32 %v1316, 4294901760
        %3448 = vmatprep.subr.mxu0 %v3447
        %v3449 = vand.u32 %v1315, 4294901760
        %3450 = vmatpush1.msra.mxu0 %v3449
        %v3451 = vand.u32 %v1309, 4294901760
        %3452 = vmatprep.subr.mxu0 %v3451
        %v3453 = vand.u32 %v1308, 4294901760
        %3454 = vmatpush1.msra.mxu0 %v3453
        %v3455 = vand.u32 %v1302, 4294901760
        %3456 = vmatprep.subr.mxu0 %v3455
        %v3457 = vand.u32 %v1301, 4294901760
        %3458 = vmatpush1.msra.mxu0 %v3457
        %v3459 = vand.u32 %v1295, 4294901760
        %3460 = vmatprep.subr.mxu0 %v3459
        %v3461 = vand.u32 %v1294, 4294901760
        %3462 = vmatpush1.msra.mxu0 %v3461
        %v3463 = vand.u32 %v1288, 4294901760
        %3464 = vmatprep.subr.mxu0 %v3463
        %v3465 = vand.u32 %v1287, 4294901760
        %3466 = vmatpush1.msra.mxu0 %v3465
        %v3467 = vand.u32 %v1281, 4294901760
        %3468 = vmatprep.subr.mxu0 %v3467
        %v3469 = vand.u32 %v1280, 4294901760
        %3470 = vmatpush1.msra.mxu0 %v3469
        %v3471 = vand.u32 %v1274, 4294901760
        %3472 = vmatprep.subr.mxu0 %v3471
        %v3473 = vand.u32 %v1273, 4294901760
        %3474 = vmatpush1.msra.mxu0 %v3473
        %v3475 = vand.u32 %v1267, 4294901760
        %3476 = vmatprep.subr.mxu0 %v3475
        %v3477 = vand.u32 %v1266, 4294901760
        %3478 = vmatpush1.msra.mxu0 %v3477
        %v3479 = vand.u32 %v1260, 4294901760
        %3480 = vmatprep.subr.mxu0 %v3479
        %v3481 = vand.u32 %v1259, 4294901760
        %3482 = vmatpush1.msra.mxu0 %v3481
        %v3483 = vand.u32 %v1253, 4294901760
        %3484 = vmatprep.subr.mxu0 %v3483
        %v3485 = vand.u32 %v1252, 4294901760
        %3486 = vmatpush1.msra.mxu0 %v3485
        %v3487 = vand.u32 %v1246, 4294901760
        %3488 = vmatprep.subr.mxu0 %v3487
        %v3489 = vand.u32 %v1245, 4294901760
        %3490 = vmatpush1.msra.mxu0 %v3489
        %v3491 = vand.u32 %v1239, 4294901760
        %3492 = vmatprep.subr.mxu0 %v3491
        %v3493 = vand.u32 %v1238, 4294901760
        %3494 = vmatpush1.msra.mxu0 %v3493
        %v3495 = vand.u32 %v1232, 4294901760
        %3496 = vmatprep.subr.mxu0 %v3495
        %v3497 = vand.u32 %v1231, 4294901760
        %3498 = vmatpush1.msra.mxu0 %v3497
        %v3499 = vand.u32 %v1225, 4294901760
        %3500 = vmatprep.subr.mxu0 %v3499
        %v3501 = vand.u32 %v1224, 4294901760
        %3502 = vmatpush1.msra.mxu0 %v3501
        %3503 = vmatprep.subr.mxu0 0.0
        %3504 = vmatpush2.msra.mxu0 0.0
        %3505 = vmatprep.subr.mxu0 0.0
        %3506 = vmatpush2.msra.mxu0 0.0
        %3507 = vmatprep.subr.mxu0 0.0
        %3508 = vmatpush2.msra.mxu0 0.0
        %3509 = vmatprep.subr.mxu0 0.0
        %3510 = vmatpush2.msra.mxu0 0.0
        %3511 = vmatprep.subr.mxu0 0.0
        %3512 = vmatpush2.msra.mxu0 0.0
        %3513 = vmatprep.subr.mxu0 0.0
        %3514 = vmatpush2.msra.mxu0 0.0
        %3515 = vmatprep.subr.mxu0 0.0
        %3516 = vmatpush2.msra.mxu0 0.0
        %3517 = vmatprep.subr.mxu0 0.0
        %3518 = vmatpush2.msra.mxu0 0.0
        %3519 = vmatprep.subr.mxu0 0.0
        %3520 = vmatpush2.msra.mxu0 0.0
        %3521 = vmatprep.subr.mxu0 0.0
        %3522 = vmatpush2.msra.mxu0 0.0
        %3523 = vmatprep.subr.mxu0 0.0
        %3524 = vmatpush2.msra.mxu0 0.0
        %3525 = vmatprep.subr.mxu0 0.0
        %3526 = vmatpush2.msra.mxu0 0.0
        %3527 = vmatprep.subr.mxu0 0.0
        %3528 = vmatpush2.msra.mxu0 0.0
        %3529 = vmatprep.subr.mxu0 0.0
        %3530 = vmatpush2.msra.mxu0 0.0
        %v3531 = vand.u32 %v1344, 4294901760
        %3532 = vmatprep.subr.mxu0 %v3531
        %v3533 = vand.u32 %v1343, 4294901760
        %3534 = vmatpush2.msra.mxu0 %v3533
        %v3535 = vand.u32 %v1337, 4294901760
        %3536 = vmatprep.subr.mxu0 %v3535
        %v3537 = vand.u32 %v1336, 4294901760
        %3538 = vmatpush2.msra.mxu0 %v3537
        %v3539 = vand.u32 %v1349, 4294901760
        %3540 = vmatprep.mubr.f32.mxu0 %v3539
        %v3541 = vand.u32 %v1214, 4294901760
        %3542 = vmatmul.mubr.f32.gmra.mxu0 %v3541
        %v3543 = vpop.f32.mrf.mxu0
        %v3544 = vadd.f32 %v3411, %v3543
        %v3545 = vpop.f32.mrf.mxu0
        %v3546 = vadd.f32 %v3413, %v3545
        %v3547 = vand.u32 %v1352, 4294901760
        %3548 = vmatprep.mubr.f32.mxu0 %v3547
        %v3549 = vand.u32 %v1216, 4294901760
        %3550 = vmatmul.mubr.f32.gmra.mxu0 %v3549
        %v3551 = vpop.f32.mrf.mxu0
        %v3552 = vadd.f32 %v3419, %v3551
        %v3553 = vpop.f32.mrf.mxu0
        %v3554 = vadd.f32 %v3421, %v3553
        %v3555 = vand.u32 %v1355, 4294901760
        %3556 = vmatprep.mubr.f32.mxu0 %v3555
        %v3557 = vand.u32 %v1218, 4294901760
        %3558 = vmatmul.mubr.f32.gmra.mxu0 %v3557
        %v3559 = vpop.f32.mrf.mxu0
        %v3560 = vadd.f32 %v3427, %v3559
        %v3561 = vpop.f32.mrf.mxu0
        %v3562 = vadd.f32 %v3429, %v3561
        %v3563 = vand.u32 %v1358, 4294901760
        %3564 = vmatprep.mubr.f32.mxu0 %v3563
        %v3565 = vand.u32 %v1220, 4294901760
        %3566 = vmatmul.mubr.f32.gmra.mxu0 %v3565
        %v3567 = vpop.f32.mrf.mxu0
        %v3568 = vadd.f32 %v3435, %v3567
        %v3569 = vpop.f32.mrf.mxu0
        %v3570 = vadd.f32 %v3437, %v3569
        %3571 = vdwg.mxu0
        %v3572 = vand.u32 %v1332, 4294901760
        %3573 = vmatprep.subr.mxu0 %v3572
        %v3574 = vand.u32 %v1331, 4294901760
        %3575 = vmatpush1.msra.mxu0 %v3574
        %v3576 = vand.u32 %v1325, 4294901760
        %3577 = vmatprep.subr.mxu0 %v3576
        %v3578 = vand.u32 %v1324, 4294901760
        %3579 = vmatpush1.msra.mxu0 %v3578
        %v3580 = vand.u32 %v1318, 4294901760
        %3581 = vmatprep.subr.mxu0 %v3580
        %v3582 = vand.u32 %v1317, 4294901760
        %3583 = vmatpush1.msra.mxu0 %v3582
        %v3584 = vand.u32 %v1311, 4294901760
        %3585 = vmatprep.subr.mxu0 %v3584
        %v3586 = vand.u32 %v1310, 4294901760
        %3587 = vmatpush1.msra.mxu0 %v3586
        %v3588 = vand.u32 %v1304, 4294901760
        %3589 = vmatprep.subr.mxu0 %v3588
        %v3590 = vand.u32 %v1303, 4294901760
        %3591 = vmatpush1.msra.mxu0 %v3590
        %v3592 = vand.u32 %v1297, 4294901760
        %3593 = vmatprep.subr.mxu0 %v3592
        %v3594 = vand.u32 %v1296, 4294901760
        %3595 = vmatpush1.msra.mxu0 %v3594
        %v3596 = vand.u32 %v1290, 4294901760
        %3597 = vmatprep.subr.mxu0 %v3596
        %v3598 = vand.u32 %v1289, 4294901760
        %3599 = vmatpush1.msra.mxu0 %v3598
        %v3600 = vand.u32 %v1283, 4294901760
        %3601 = vmatprep.subr.mxu0 %v3600
        %v3602 = vand.u32 %v1282, 4294901760
        %3603 = vmatpush1.msra.mxu0 %v3602
        %v3604 = vand.u32 %v1276, 4294901760
        %3605 = vmatprep.subr.mxu0 %v3604
        %v3606 = vand.u32 %v1275, 4294901760
        %3607 = vmatpush1.msra.mxu0 %v3606
        %v3608 = vand.u32 %v1269, 4294901760
        %3609 = vmatprep.subr.mxu0 %v3608
        %v3610 = vand.u32 %v1268, 4294901760
        %3611 = vmatpush1.msra.mxu0 %v3610
        %v3612 = vand.u32 %v1262, 4294901760
        %3613 = vmatprep.subr.mxu0 %v3612
        %v3614 = vand.u32 %v1261, 4294901760
        %3615 = vmatpush1.msra.mxu0 %v3614
        %v3616 = vand.u32 %v1255, 4294901760
        %3617 = vmatprep.subr.mxu0 %v3616
        %v3618 = vand.u32 %v1254, 4294901760
        %3619 = vmatpush1.msra.mxu0 %v3618
        %v3620 = vand.u32 %v1248, 4294901760
        %3621 = vmatprep.subr.mxu0 %v3620
        %v3622 = vand.u32 %v1247, 4294901760
        %3623 = vmatpush1.msra.mxu0 %v3622
        %v3624 = vand.u32 %v1241, 4294901760
        %3625 = vmatprep.subr.mxu0 %v3624
        %v3626 = vand.u32 %v1240, 4294901760
        %3627 = vmatpush1.msra.mxu0 %v3626
        %v3628 = vand.u32 %v1234, 4294901760
        %3629 = vmatprep.subr.mxu0 %v3628
        %v3630 = vand.u32 %v1233, 4294901760
        %3631 = vmatpush1.msra.mxu0 %v3630
        %v3632 = vand.u32 %v1227, 4294901760
        %3633 = vmatprep.subr.mxu0 %v3632
        %v3634 = vand.u32 %v1226, 4294901760
        %3635 = vmatpush1.msra.mxu0 %v3634
        %3636 = vmatprep.subr.mxu0 0.0
        %3637 = vmatpush2.msra.mxu0 0.0
        %3638 = vmatprep.subr.mxu0 0.0
        %3639 = vmatpush2.msra.mxu0 0.0
        %3640 = vmatprep.subr.mxu0 0.0
        %3641 = vmatpush2.msra.mxu0 0.0
        %3642 = vmatprep.subr.mxu0 0.0
        %3643 = vmatpush2.msra.mxu0 0.0
        %3644 = vmatprep.subr.mxu0 0.0
        %3645 = vmatpush2.msra.mxu0 0.0
        %3646 = vmatprep.subr.mxu0 0.0
        %3647 = vmatpush2.msra.mxu0 0.0
        %3648 = vmatprep.subr.mxu0 0.0
        %3649 = vmatpush2.msra.mxu0 0.0
        %3650 = vmatprep.subr.mxu0 0.0
        %3651 = vmatpush2.msra.mxu0 0.0
        %3652 = vmatprep.subr.mxu0 0.0
        %3653 = vmatpush2.msra.mxu0 0.0
        %3654 = vmatprep.subr.mxu0 0.0
        %3655 = vmatpush2.msra.mxu0 0.0
        %3656 = vmatprep.subr.mxu0 0.0
        %3657 = vmatpush2.msra.mxu0 0.0
        %3658 = vmatprep.subr.mxu0 0.0
        %3659 = vmatpush2.msra.mxu0 0.0
        %3660 = vmatprep.subr.mxu0 0.0
        %3661 = vmatpush2.msra.mxu0 0.0
        %3662 = vmatprep.subr.mxu0 0.0
        %3663 = vmatpush2.msra.mxu0 0.0
        %v3664 = vand.u32 %v1346, 4294901760
        %3665 = vmatprep.subr.mxu0 %v3664
        %v3666 = vand.u32 %v1345, 4294901760
        %3667 = vmatpush2.msra.mxu0 %v3666
        %v3668 = vand.u32 %v1339, 4294901760
        %3669 = vmatprep.subr.mxu0 %v3668
        %v3670 = vand.u32 %v1338, 4294901760
        %3671 = vmatpush2.msra.mxu0 %v3670
        %v3672 = vand.u32 %v1349, 4294901760
        %v3673 = vsub.f32 %v1349, %v3672
        %v3674 = vand.u32 %v3673, 4294901760
        %v3675 = vsub.f32 %v3673, %v3674
        %v3676 = vand.u32 %v3675, 4294901760
        %3677 = vmatprep.mubr.f32.mxu0 %v3676
        %v3678 = vand.u32 %v1214, 4294901760
        %v3679 = vsub.f32 %v1214, %v3678
        %v3680 = vand.u32 %v3679, 4294901760
        %v3681 = vsub.f32 %v3679, %v3680
        %v3682 = vand.u32 %v3681, 4294901760
        %3683 = vmatmul.mubr.f32.gmra.mxu0 %v3682
        %v3684 = vpop.f32.mrf.mxu0
        %v3685 = vadd.f32 0.0, %v3684
        %v3686 = vpop.f32.mrf.mxu0
        %v3687 = vadd.f32 0.0, %v3686
        %v3688 = vand.u32 %v1352, 4294901760
        %v3689 = vsub.f32 %v1352, %v3688
        %v3690 = vand.u32 %v3689, 4294901760
        %v3691 = vsub.f32 %v3689, %v3690
        %v3692 = vand.u32 %v3691, 4294901760
        %3693 = vmatprep.mubr.f32.mxu0 %v3692
        %v3694 = vand.u32 %v1216, 4294901760
        %v3695 = vsub.f32 %v1216, %v3694
        %v3696 = vand.u32 %v3695, 4294901760
        %v3697 = vsub.f32 %v3695, %v3696
        %v3698 = vand.u32 %v3697, 4294901760
        %3699 = vmatmul.mubr.f32.gmra.mxu0 %v3698
        %v3700 = vpop.f32.mrf.mxu0
        %v3701 = vadd.f32 0.0, %v3700
        %v3702 = vpop.f32.mrf.mxu0
        %v3703 = vadd.f32 0.0, %v3702
        %v3704 = vand.u32 %v1355, 4294901760
        %v3705 = vsub.f32 %v1355, %v3704
        %v3706 = vand.u32 %v3705, 4294901760
        %v3707 = vsub.f32 %v3705, %v3706
        %v3708 = vand.u32 %v3707, 4294901760
        %3709 = vmatprep.mubr.f32.mxu0 %v3708
        %v3710 = vand.u32 %v1218, 4294901760
        %v3711 = vsub.f32 %v1218, %v3710
        %v3712 = vand.u32 %v3711, 4294901760
        %v3713 = vsub.f32 %v3711, %v3712
        %v3714 = vand.u32 %v3713, 4294901760
        %3715 = vmatmul.mubr.f32.gmra.mxu0 %v3714
        %v3716 = vpop.f32.mrf.mxu0
        %v3717 = vadd.f32 0.0, %v3716
        %v3718 = vpop.f32.mrf.mxu0
        %v3719 = vadd.f32 0.0, %v3718
        %v3720 = vand.u32 %v1358, 4294901760
        %v3721 = vsub.f32 %v1358, %v3720
        %v3722 = vand.u32 %v3721, 4294901760
        %v3723 = vsub.f32 %v3721, %v3722
        %v3724 = vand.u32 %v3723, 4294901760
        %3725 = vmatprep.mubr.f32.mxu0 %v3724
        %v3726 = vand.u32 %v1220, 4294901760
        %v3727 = vsub.f32 %v1220, %v3726
        %v3728 = vand.u32 %v3727, 4294901760
        %v3729 = vsub.f32 %v3727, %v3728
        %v3730 = vand.u32 %v3729, 4294901760
        %3731 = vmatmul.mubr.f32.gmra.mxu0 %v3730
        %v3732 = vpop.f32.mrf.mxu0
        %v3733 = vadd.f32 0.0, %v3732
        %v3734 = vpop.f32.mrf.mxu0
        %v3735 = vadd.f32 0.0, %v3734
        %3736 = vdwg.mxu0
        %v3737 = vand.u32 %v1332, 4294901760
        %v3738 = vsub.f32 %v1332, %v3737
        %v3739 = vand.u32 %v3738, 4294901760
        %v3740 = vsub.f32 %v3738, %v3739
        %v3741 = vand.u32 %v3740, 4294901760
        %3742 = vmatprep.subr.mxu0 %v3741
        %v3743 = vand.u32 %v1331, 4294901760
        %v3744 = vsub.f32 %v1331, %v3743
        %v3745 = vand.u32 %v3744, 4294901760
        %v3746 = vsub.f32 %v3744, %v3745
        %v3747 = vand.u32 %v3746, 4294901760
        %3748 = vmatpush1.msra.mxu0 %v3747
        %v3749 = vand.u32 %v1325, 4294901760
        %v3750 = vsub.f32 %v1325, %v3749
        %v3751 = vand.u32 %v3750, 4294901760
        %v3752 = vsub.f32 %v3750, %v3751
        %v3753 = vand.u32 %v3752, 4294901760
        %3754 = vmatprep.subr.mxu0 %v3753
        %v3755 = vand.u32 %v1324, 4294901760
        %v3756 = vsub.f32 %v1324, %v3755
        %v3757 = vand.u32 %v3756, 4294901760
        %v3758 = vsub.f32 %v3756, %v3757
        %v3759 = vand.u32 %v3758, 4294901760
        %3760 = vmatpush1.msra.mxu0 %v3759
        %v3761 = vand.u32 %v1318, 4294901760
        %v3762 = vsub.f32 %v1318, %v3761
        %v3763 = vand.u32 %v3762, 4294901760
        %v3764 = vsub.f32 %v3762, %v3763
        %v3765 = vand.u32 %v3764, 4294901760
        %3766 = vmatprep.subr.mxu0 %v3765
        %v3767 = vand.u32 %v1317, 4294901760
        %v3768 = vsub.f32 %v1317, %v3767
        %v3769 = vand.u32 %v3768, 4294901760
        %v3770 = vsub.f32 %v3768, %v3769
        %v3771 = vand.u32 %v3770, 4294901760
        %3772 = vmatpush1.msra.mxu0 %v3771
        %v3773 = vand.u32 %v1311, 4294901760
        %v3774 = vsub.f32 %v1311, %v3773
        %v3775 = vand.u32 %v3774, 4294901760
        %v3776 = vsub.f32 %v3774, %v3775
        %v3777 = vand.u32 %v3776, 4294901760
        %3778 = vmatprep.subr.mxu0 %v3777
        %v3779 = vand.u32 %v1310, 4294901760
        %v3780 = vsub.f32 %v1310, %v3779
        %v3781 = vand.u32 %v3780, 4294901760
        %v3782 = vsub.f32 %v3780, %v3781
        %v3783 = vand.u32 %v3782, 4294901760
        %3784 = vmatpush1.msra.mxu0 %v3783
        %v3785 = vand.u32 %v1304, 4294901760
        %v3786 = vsub.f32 %v1304, %v3785
        %v3787 = vand.u32 %v3786, 4294901760
        %v3788 = vsub.f32 %v3786, %v3787
        %v3789 = vand.u32 %v3788, 4294901760
        %3790 = vmatprep.subr.mxu0 %v3789
        %v3791 = vand.u32 %v1303, 4294901760
        %v3792 = vsub.f32 %v1303, %v3791
        %v3793 = vand.u32 %v3792, 4294901760
        %v3794 = vsub.f32 %v3792, %v3793
        %v3795 = vand.u32 %v3794, 4294901760
        %3796 = vmatpush1.msra.mxu0 %v3795
        %v3797 = vand.u32 %v1297, 4294901760
        %v3798 = vsub.f32 %v1297, %v3797
        %v3799 = vand.u32 %v3798, 4294901760
        %v3800 = vsub.f32 %v3798, %v3799
        %v3801 = vand.u32 %v3800, 4294901760
        %3802 = vmatprep.subr.mxu0 %v3801
        %v3803 = vand.u32 %v1296, 4294901760
        %v3804 = vsub.f32 %v1296, %v3803
        %v3805 = vand.u32 %v3804, 4294901760
        %v3806 = vsub.f32 %v3804, %v3805
        %v3807 = vand.u32 %v3806, 4294901760
        %3808 = vmatpush1.msra.mxu0 %v3807
        %v3809 = vand.u32 %v1290, 4294901760
        %v3810 = vsub.f32 %v1290, %v3809
        %v3811 = vand.u32 %v3810, 4294901760
        %v3812 = vsub.f32 %v3810, %v3811
        %v3813 = vand.u32 %v3812, 4294901760
        %3814 = vmatprep.subr.mxu0 %v3813
        %v3815 = vand.u32 %v1289, 4294901760
        %v3816 = vsub.f32 %v1289, %v3815
        %v3817 = vand.u32 %v3816, 4294901760
        %v3818 = vsub.f32 %v3816, %v3817
        %v3819 = vand.u32 %v3818, 4294901760
        %3820 = vmatpush1.msra.mxu0 %v3819
        %v3821 = vand.u32 %v1283, 4294901760
        %v3822 = vsub.f32 %v1283, %v3821
        %v3823 = vand.u32 %v3822, 4294901760
        %v3824 = vsub.f32 %v3822, %v3823
        %v3825 = vand.u32 %v3824, 4294901760
        %3826 = vmatprep.subr.mxu0 %v3825
        %v3827 = vand.u32 %v1282, 4294901760
        %v3828 = vsub.f32 %v1282, %v3827
        %v3829 = vand.u32 %v3828, 4294901760
        %v3830 = vsub.f32 %v3828, %v3829
        %v3831 = vand.u32 %v3830, 4294901760
        %3832 = vmatpush1.msra.mxu0 %v3831
        %v3833 = vand.u32 %v1276, 4294901760
        %v3834 = vsub.f32 %v1276, %v3833
        %v3835 = vand.u32 %v3834, 4294901760
        %v3836 = vsub.f32 %v3834, %v3835
        %v3837 = vand.u32 %v3836, 4294901760
        %3838 = vmatprep.subr.mxu0 %v3837
        %v3839 = vand.u32 %v1275, 4294901760
        %v3840 = vsub.f32 %v1275, %v3839
        %v3841 = vand.u32 %v3840, 4294901760
        %v3842 = vsub.f32 %v3840, %v3841
        %v3843 = vand.u32 %v3842, 4294901760
        %3844 = vmatpush1.msra.mxu0 %v3843
        %v3845 = vand.u32 %v1269, 4294901760
        %v3846 = vsub.f32 %v1269, %v3845
        %v3847 = vand.u32 %v3846, 4294901760
        %v3848 = vsub.f32 %v3846, %v3847
        %v3849 = vand.u32 %v3848, 4294901760
        %3850 = vmatprep.subr.mxu0 %v3849
        %v3851 = vand.u32 %v1268, 4294901760
        %v3852 = vsub.f32 %v1268, %v3851
        %v3853 = vand.u32 %v3852, 4294901760
        %v3854 = vsub.f32 %v3852, %v3853
        %v3855 = vand.u32 %v3854, 4294901760
        %3856 = vmatpush1.msra.mxu0 %v3855
        %v3857 = vand.u32 %v1262, 4294901760
        %v3858 = vsub.f32 %v1262, %v3857
        %v3859 = vand.u32 %v3858, 4294901760
        %v3860 = vsub.f32 %v3858, %v3859
        %v3861 = vand.u32 %v3860, 4294901760
        %3862 = vmatprep.subr.mxu0 %v3861
        %v3863 = vand.u32 %v1261, 4294901760
        %v3864 = vsub.f32 %v1261, %v3863
        %v3865 = vand.u32 %v3864, 4294901760
        %v3866 = vsub.f32 %v3864, %v3865
        %v3867 = vand.u32 %v3866, 4294901760
        %3868 = vmatpush1.msra.mxu0 %v3867
        %v3869 = vand.u32 %v1255, 4294901760
        %v3870 = vsub.f32 %v1255, %v3869
        %v3871 = vand.u32 %v3870, 4294901760
        %v3872 = vsub.f32 %v3870, %v3871
        %v3873 = vand.u32 %v3872, 4294901760
        %3874 = vmatprep.subr.mxu0 %v3873
        %v3875 = vand.u32 %v1254, 4294901760
        %v3876 = vsub.f32 %v1254, %v3875
        %v3877 = vand.u32 %v3876, 4294901760
        %v3878 = vsub.f32 %v3876, %v3877
        %v3879 = vand.u32 %v3878, 4294901760
        %3880 = vmatpush1.msra.mxu0 %v3879
        %v3881 = vand.u32 %v1248, 4294901760
        %v3882 = vsub.f32 %v1248, %v3881
        %v3883 = vand.u32 %v3882, 4294901760
        %v3884 = vsub.f32 %v3882, %v3883
        %v3885 = vand.u32 %v3884, 4294901760
        %3886 = vmatprep.subr.mxu0 %v3885
        %v3887 = vand.u32 %v1247, 4294901760
        %v3888 = vsub.f32 %v1247, %v3887
        %v3889 = vand.u32 %v3888, 4294901760
        %v3890 = vsub.f32 %v3888, %v3889
        %v3891 = vand.u32 %v3890, 4294901760
        %3892 = vmatpush1.msra.mxu0 %v3891
        %v3893 = vand.u32 %v1241, 4294901760
        %v3894 = vsub.f32 %v1241, %v3893
        %v3895 = vand.u32 %v3894, 4294901760
        %v3896 = vsub.f32 %v3894, %v3895
        %v3897 = vand.u32 %v3896, 4294901760
        %3898 = vmatprep.subr.mxu0 %v3897
        %v3899 = vand.u32 %v1240, 4294901760
        %v3900 = vsub.f32 %v1240, %v3899
        %v3901 = vand.u32 %v3900, 4294901760
        %v3902 = vsub.f32 %v3900, %v3901
        %v3903 = vand.u32 %v3902, 4294901760
        %3904 = vmatpush1.msra.mxu0 %v3903
        %v3905 = vand.u32 %v1234, 4294901760
        %v3906 = vsub.f32 %v1234, %v3905
        %v3907 = vand.u32 %v3906, 4294901760
        %v3908 = vsub.f32 %v3906, %v3907
        %v3909 = vand.u32 %v3908, 4294901760
        %3910 = vmatprep.subr.mxu0 %v3909
        %v3911 = vand.u32 %v1233, 4294901760
        %v3912 = vsub.f32 %v1233, %v3911
        %v3913 = vand.u32 %v3912, 4294901760
        %v3914 = vsub.f32 %v3912, %v3913
        %v3915 = vand.u32 %v3914, 4294901760
        %3916 = vmatpush1.msra.mxu0 %v3915
        %v3917 = vand.u32 %v1227, 4294901760
        %v3918 = vsub.f32 %v1227, %v3917
        %v3919 = vand.u32 %v3918, 4294901760
        %v3920 = vsub.f32 %v3918, %v3919
        %v3921 = vand.u32 %v3920, 4294901760
        %3922 = vmatprep.subr.mxu0 %v3921
        %v3923 = vand.u32 %v1226, 4294901760
        %v3924 = vsub.f32 %v1226, %v3923
        %v3925 = vand.u32 %v3924, 4294901760
        %v3926 = vsub.f32 %v3924, %v3925
        %v3927 = vand.u32 %v3926, 4294901760
        %3928 = vmatpush1.msra.mxu0 %v3927
        %3929 = vmatprep.subr.mxu0 0.0
        %3930 = vmatpush2.msra.mxu0 0.0
        %3931 = vmatprep.subr.mxu0 0.0
        %3932 = vmatpush2.msra.mxu0 0.0
        %3933 = vmatprep.subr.mxu0 0.0
        %3934 = vmatpush2.msra.mxu0 0.0
        %3935 = vmatprep.subr.mxu0 0.0
        %3936 = vmatpush2.msra.mxu0 0.0
        %3937 = vmatprep.subr.mxu0 0.0
        %3938 = vmatpush2.msra.mxu0 0.0
        %3939 = vmatprep.subr.mxu0 0.0
        %3940 = vmatpush2.msra.mxu0 0.0
        %3941 = vmatprep.subr.mxu0 0.0
        %3942 = vmatpush2.msra.mxu0 0.0
        %3943 = vmatprep.subr.mxu0 0.0
        %3944 = vmatpush2.msra.mxu0 0.0
        %3945 = vmatprep.subr.mxu0 0.0
        %3946 = vmatpush2.msra.mxu0 0.0
        %3947 = vmatprep.subr.mxu0 0.0
        %3948 = vmatpush2.msra.mxu0 0.0
        %3949 = vmatprep.subr.mxu0 0.0
        %3950 = vmatpush2.msra.mxu0 0.0
        %3951 = vmatprep.subr.mxu0 0.0
        %3952 = vmatpush2.msra.mxu0 0.0
        %3953 = vmatprep.subr.mxu0 0.0
        %3954 = vmatpush2.msra.mxu0 0.0
        %3955 = vmatprep.subr.mxu0 0.0
        %3956 = vmatpush2.msra.mxu0 0.0
        %v3957 = vand.u32 %v1346, 4294901760
        %v3958 = vsub.f32 %v1346, %v3957
        %v3959 = vand.u32 %v3958, 4294901760
        %v3960 = vsub.f32 %v3958, %v3959
        %v3961 = vand.u32 %v3960, 4294901760
        %3962 = vmatprep.subr.mxu0 %v3961
        %v3963 = vand.u32 %v1345, 4294901760
        %v3964 = vsub.f32 %v1345, %v3963
        %v3965 = vand.u32 %v3964, 4294901760
        %v3966 = vsub.f32 %v3964, %v3965
        %v3967 = vand.u32 %v3966, 4294901760
        %3968 = vmatpush2.msra.mxu0 %v3967
        %v3969 = vand.u32 %v1339, 4294901760
        %v3970 = vsub.f32 %v1339, %v3969
        %v3971 = vand.u32 %v3970, 4294901760
        %v3972 = vsub.f32 %v3970, %v3971
        %v3973 = vand.u32 %v3972, 4294901760
        %3974 = vmatprep.subr.mxu0 %v3973
        %v3975 = vand.u32 %v1338, 4294901760
        %v3976 = vsub.f32 %v1338, %v3975
        %v3977 = vand.u32 %v3976, 4294901760
        %v3978 = vsub.f32 %v3976, %v3977
        %v3979 = vand.u32 %v3978, 4294901760
        %3980 = vmatpush2.msra.mxu0 %v3979
        %v3981 = vand.u32 %v1349, 4294901760
        %3982 = vmatprep.mubr.f32.mxu0 %v3981
        %v3983 = vand.u32 %v1214, 4294901760
        %3984 = vmatmul.mubr.f32.gmra.mxu0 %v3983
        %v3985 = vpop.f32.mrf.mxu0
        %v3986 = vadd.f32 %v3685, %v3985
        %v3987 = vpop.f32.mrf.mxu0
        %v3988 = vadd.f32 %v3687, %v3987
        %v3989 = vand.u32 %v1352, 4294901760
        %3990 = vmatprep.mubr.f32.mxu0 %v3989
        %v3991 = vand.u32 %v1216, 4294901760
        %3992 = vmatmul.mubr.f32.gmra.mxu0 %v3991
        %v3993 = vpop.f32.mrf.mxu0
        %v3994 = vadd.f32 %v3701, %v3993
        %v3995 = vpop.f32.mrf.mxu0
        %v3996 = vadd.f32 %v3703, %v3995
        %v3997 = vand.u32 %v1355, 4294901760
        %3998 = vmatprep.mubr.f32.mxu0 %v3997
        %v3999 = vand.u32 %v1218, 4294901760
        %4000 = vmatmul.mubr.f32.gmra.mxu0 %v3999
        %v4001 = vpop.f32.mrf.mxu0
        %v4002 = vadd.f32 %v3717, %v4001
        %v4003 = vpop.f32.mrf.mxu0
        %v4004 = vadd.f32 %v3719, %v4003
        %v4005 = vand.u32 %v1358, 4294901760
        %4006 = vmatprep.mubr.f32.mxu0 %v4005
        %v4007 = vand.u32 %v1220, 4294901760
        %4008 = vmatmul.mubr.f32.gmra.mxu0 %v4007
        %v4009 = vpop.f32.mrf.mxu0
        %v4010 = vadd.f32 %v3733, %v4009
        %v4011 = vpop.f32.mrf.mxu0
        %v4012 = vadd.f32 %v3735, %v4011
        %4013 = vdwg.mxu0
        %v4014 = vand.u32 %v1332, 4294901760
        %v4015 = vsub.f32 %v1332, %v4014
        %4016 = vmatprep.subr.mxu0 %v4015
        %v4017 = vand.u32 %v1331, 4294901760
        %v4018 = vsub.f32 %v1331, %v4017
        %4019 = vmatpush1.msra.mxu0 %v4018
        %v4020 = vand.u32 %v1325, 4294901760
        %v4021 = vsub.f32 %v1325, %v4020
        %4022 = vmatprep.subr.mxu0 %v4021
        %v4023 = vand.u32 %v1324, 4294901760
        %v4024 = vsub.f32 %v1324, %v4023
        %4025 = vmatpush1.msra.mxu0 %v4024
        %v4026 = vand.u32 %v1318, 4294901760
        %v4027 = vsub.f32 %v1318, %v4026
        %4028 = vmatprep.subr.mxu0 %v4027
        %v4029 = vand.u32 %v1317, 4294901760
        %v4030 = vsub.f32 %v1317, %v4029
        %4031 = vmatpush1.msra.mxu0 %v4030
        %v4032 = vand.u32 %v1311, 4294901760
        %v4033 = vsub.f32 %v1311, %v4032
        %4034 = vmatprep.subr.mxu0 %v4033
        %v4035 = vand.u32 %v1310, 4294901760
        %v4036 = vsub.f32 %v1310, %v4035
        %4037 = vmatpush1.msra.mxu0 %v4036
        %v4038 = vand.u32 %v1304, 4294901760
        %v4039 = vsub.f32 %v1304, %v4038
        %4040 = vmatprep.subr.mxu0 %v4039
        %v4041 = vand.u32 %v1303, 4294901760
        %v4042 = vsub.f32 %v1303, %v4041
        %4043 = vmatpush1.msra.mxu0 %v4042
        %v4044 = vand.u32 %v1297, 4294901760
        %v4045 = vsub.f32 %v1297, %v4044
        %4046 = vmatprep.subr.mxu0 %v4045
        %v4047 = vand.u32 %v1296, 4294901760
        %v4048 = vsub.f32 %v1296, %v4047
        %4049 = vmatpush1.msra.mxu0 %v4048
        %v4050 = vand.u32 %v1290, 4294901760
        %v4051 = vsub.f32 %v1290, %v4050
        %4052 = vmatprep.subr.mxu0 %v4051
        %v4053 = vand.u32 %v1289, 4294901760
        %v4054 = vsub.f32 %v1289, %v4053
        %4055 = vmatpush1.msra.mxu0 %v4054
        %v4056 = vand.u32 %v1283, 4294901760
        %v4057 = vsub.f32 %v1283, %v4056
        %4058 = vmatprep.subr.mxu0 %v4057
        %v4059 = vand.u32 %v1282, 4294901760
        %v4060 = vsub.f32 %v1282, %v4059
        %4061 = vmatpush1.msra.mxu0 %v4060
        %v4062 = vand.u32 %v1276, 4294901760
        %v4063 = vsub.f32 %v1276, %v4062
        %4064 = vmatprep.subr.mxu0 %v4063
        %v4065 = vand.u32 %v1275, 4294901760
        %v4066 = vsub.f32 %v1275, %v4065
        %4067 = vmatpush1.msra.mxu0 %v4066
        %v4068 = vand.u32 %v1269, 4294901760
        %v4069 = vsub.f32 %v1269, %v4068
        %4070 = vmatprep.subr.mxu0 %v4069
        %v4071 = vand.u32 %v1268, 4294901760
        %v4072 = vsub.f32 %v1268, %v4071
        %4073 = vmatpush1.msra.mxu0 %v4072
        %v4074 = vand.u32 %v1262, 4294901760
        %v4075 = vsub.f32 %v1262, %v4074
        %4076 = vmatprep.subr.mxu0 %v4075
        %v4077 = vand.u32 %v1261, 4294901760
        %v4078 = vsub.f32 %v1261, %v4077
        %4079 = vmatpush1.msra.mxu0 %v4078
        %v4080 = vand.u32 %v1255, 4294901760
        %v4081 = vsub.f32 %v1255, %v4080
        %4082 = vmatprep.subr.mxu0 %v4081
        %v4083 = vand.u32 %v1254, 4294901760
        %v4084 = vsub.f32 %v1254, %v4083
        %4085 = vmatpush1.msra.mxu0 %v4084
        %v4086 = vand.u32 %v1248, 4294901760
        %v4087 = vsub.f32 %v1248, %v4086
        %4088 = vmatprep.subr.mxu0 %v4087
        %v4089 = vand.u32 %v1247, 4294901760
        %v4090 = vsub.f32 %v1247, %v4089
        %4091 = vmatpush1.msra.mxu0 %v4090
        %v4092 = vand.u32 %v1241, 4294901760
        %v4093 = vsub.f32 %v1241, %v4092
        %4094 = vmatprep.subr.mxu0 %v4093
        %v4095 = vand.u32 %v1240, 4294901760
        %v4096 = vsub.f32 %v1240, %v4095
        %4097 = vmatpush1.msra.mxu0 %v4096
        %v4098 = vand.u32 %v1234, 4294901760
        %v4099 = vsub.f32 %v1234, %v4098
        %4100 = vmatprep.subr.mxu0 %v4099
        %v4101 = vand.u32 %v1233, 4294901760
        %v4102 = vsub.f32 %v1233, %v4101
        %4103 = vmatpush1.msra.mxu0 %v4102
        %v4104 = vand.u32 %v1227, 4294901760
        %v4105 = vsub.f32 %v1227, %v4104
        %4106 = vmatprep.subr.mxu0 %v4105
        %v4107 = vand.u32 %v1226, 4294901760
        %v4108 = vsub.f32 %v1226, %v4107
        %4109 = vmatpush1.msra.mxu0 %v4108
        %4110 = vmatprep.subr.mxu0 0.0
        %4111 = vmatpush2.msra.mxu0 0.0
        %4112 = vmatprep.subr.mxu0 0.0
        %4113 = vmatpush2.msra.mxu0 0.0
        %4114 = vmatprep.subr.mxu0 0.0
        %4115 = vmatpush2.msra.mxu0 0.0
        %4116 = vmatprep.subr.mxu0 0.0
        %4117 = vmatpush2.msra.mxu0 0.0
        %4118 = vmatprep.subr.mxu0 0.0
        %4119 = vmatpush2.msra.mxu0 0.0
        %4120 = vmatprep.subr.mxu0 0.0
        %4121 = vmatpush2.msra.mxu0 0.0
        %4122 = vmatprep.subr.mxu0 0.0
        %4123 = vmatpush2.msra.mxu0 0.0
        %4124 = vmatprep.subr.mxu0 0.0
        %4125 = vmatpush2.msra.mxu0 0.0
        %4126 = vmatprep.subr.mxu0 0.0
        %4127 = vmatpush2.msra.mxu0 0.0
        %4128 = vmatprep.subr.mxu0 0.0
        %4129 = vmatpush2.msra.mxu0 0.0
        %4130 = vmatprep.subr.mxu0 0.0
        %4131 = vmatpush2.msra.mxu0 0.0
        %4132 = vmatprep.subr.mxu0 0.0
        %4133 = vmatpush2.msra.mxu0 0.0
        %4134 = vmatprep.subr.mxu0 0.0
        %4135 = vmatpush2.msra.mxu0 0.0
        %4136 = vmatprep.subr.mxu0 0.0
        %4137 = vmatpush2.msra.mxu0 0.0
        %v4138 = vand.u32 %v1346, 4294901760
        %v4139 = vsub.f32 %v1346, %v4138
        %4140 = vmatprep.subr.mxu0 %v4139
        %v4141 = vand.u32 %v1345, 4294901760
        %v4142 = vsub.f32 %v1345, %v4141
        %4143 = vmatpush2.msra.mxu0 %v4142
        %v4144 = vand.u32 %v1339, 4294901760
        %v4145 = vsub.f32 %v1339, %v4144
        %4146 = vmatprep.subr.mxu0 %v4145
        %v4147 = vand.u32 %v1338, 4294901760
        %v4148 = vsub.f32 %v1338, %v4147
        %4149 = vmatpush2.msra.mxu0 %v4148
        %v4150 = vand.u32 %v1349, 4294901760
        %v4151 = vsub.f32 %v1349, %v4150
        %4152 = vmatprep.mubr.f32.mxu0 %v4151
        %v4153 = vand.u32 %v1214, 4294901760
        %v4154 = vsub.f32 %v1214, %v4153
        %4155 = vmatmul.mubr.f32.gmra.mxu0 %v4154
        %v4156 = vpop.f32.mrf.mxu0
        %v4157 = vadd.f32 %v3986, %v4156
        %v4158 = vpop.f32.mrf.mxu0
        %v4159 = vadd.f32 %v3988, %v4158
        %v4160 = vand.u32 %v1352, 4294901760
        %v4161 = vsub.f32 %v1352, %v4160
        %4162 = vmatprep.mubr.f32.mxu0 %v4161
        %v4163 = vand.u32 %v1216, 4294901760
        %v4164 = vsub.f32 %v1216, %v4163
        %4165 = vmatmul.mubr.f32.gmra.mxu0 %v4164
        %v4166 = vpop.f32.mrf.mxu0
        %v4167 = vadd.f32 %v3994, %v4166
        %v4168 = vpop.f32.mrf.mxu0
        %v4169 = vadd.f32 %v3996, %v4168
        %v4170 = vand.u32 %v1355, 4294901760
        %v4171 = vsub.f32 %v1355, %v4170
        %4172 = vmatprep.mubr.f32.mxu0 %v4171
        %v4173 = vand.u32 %v1218, 4294901760
        %v4174 = vsub.f32 %v1218, %v4173
        %4175 = vmatmul.mubr.f32.gmra.mxu0 %v4174
        %v4176 = vpop.f32.mrf.mxu0
        %v4177 = vadd.f32 %v4002, %v4176
        %v4178 = vpop.f32.mrf.mxu0
        %v4179 = vadd.f32 %v4004, %v4178
        %v4180 = vand.u32 %v1358, 4294901760
        %v4181 = vsub.f32 %v1358, %v4180
        %4182 = vmatprep.mubr.f32.mxu0 %v4181
        %v4183 = vand.u32 %v1220, 4294901760
        %v4184 = vsub.f32 %v1220, %v4183
        %4185 = vmatmul.mubr.f32.gmra.mxu0 %v4184
        %v4186 = vpop.f32.mrf.mxu0
        %v4187 = vadd.f32 %v4010, %v4186
        %v4188 = vpop.f32.mrf.mxu0
        %v4189 = vadd.f32 %v4012, %v4188
        %4190 = vdwg.mxu0
        %v4191 = vand.u32 %v1332, 4294901760
        %4192 = vmatprep.subr.mxu0 %v4191
        %v4193 = vand.u32 %v1331, 4294901760
        %4194 = vmatpush1.msra.mxu0 %v4193
        %v4195 = vand.u32 %v1325, 4294901760
        %4196 = vmatprep.subr.mxu0 %v4195
        %v4197 = vand.u32 %v1324, 4294901760
        %4198 = vmatpush1.msra.mxu0 %v4197
        %v4199 = vand.u32 %v1318, 4294901760
        %4200 = vmatprep.subr.mxu0 %v4199
        %v4201 = vand.u32 %v1317, 4294901760
        %4202 = vmatpush1.msra.mxu0 %v4201
        %v4203 = vand.u32 %v1311, 4294901760
        %4204 = vmatprep.subr.mxu0 %v4203
        %v4205 = vand.u32 %v1310, 4294901760
        %4206 = vmatpush1.msra.mxu0 %v4205
        %v4207 = vand.u32 %v1304, 4294901760
        %4208 = vmatprep.subr.mxu0 %v4207
        %v4209 = vand.u32 %v1303, 4294901760
        %4210 = vmatpush1.msra.mxu0 %v4209
        %v4211 = vand.u32 %v1297, 4294901760
        %4212 = vmatprep.subr.mxu0 %v4211
        %v4213 = vand.u32 %v1296, 4294901760
        %4214 = vmatpush1.msra.mxu0 %v4213
        %v4215 = vand.u32 %v1290, 4294901760
        %4216 = vmatprep.subr.mxu0 %v4215
        %v4217 = vand.u32 %v1289, 4294901760
        %4218 = vmatpush1.msra.mxu0 %v4217
        %v4219 = vand.u32 %v1283, 4294901760
        %4220 = vmatprep.subr.mxu0 %v4219
        %v4221 = vand.u32 %v1282, 4294901760
        %4222 = vmatpush1.msra.mxu0 %v4221
        %v4223 = vand.u32 %v1276, 4294901760
        %4224 = vmatprep.subr.mxu0 %v4223
        %v4225 = vand.u32 %v1275, 4294901760
        %4226 = vmatpush1.msra.mxu0 %v4225
        %v4227 = vand.u32 %v1269, 4294901760
        %4228 = vmatprep.subr.mxu0 %v4227
        %v4229 = vand.u32 %v1268, 4294901760
        %4230 = vmatpush1.msra.mxu0 %v4229
        %v4231 = vand.u32 %v1262, 4294901760
        %4232 = vmatprep.subr.mxu0 %v4231
        %v4233 = vand.u32 %v1261, 4294901760
        %4234 = vmatpush1.msra.mxu0 %v4233
        %v4235 = vand.u32 %v1255, 4294901760
        %4236 = vmatprep.subr.mxu0 %v4235
        %v4237 = vand.u32 %v1254, 4294901760
        %4238 = vmatpush1.msra.mxu0 %v4237
        %v4239 = vand.u32 %v1248, 4294901760
        %4240 = vmatprep.subr.mxu0 %v4239
        %v4241 = vand.u32 %v1247, 4294901760
        %4242 = vmatpush1.msra.mxu0 %v4241
        %v4243 = vand.u32 %v1241, 4294901760
        %4244 = vmatprep.subr.mxu0 %v4243
        %v4245 = vand.u32 %v1240, 4294901760
        %4246 = vmatpush1.msra.mxu0 %v4245
        %v4247 = vand.u32 %v1234, 4294901760
        %4248 = vmatprep.subr.mxu0 %v4247
        %v4249 = vand.u32 %v1233, 4294901760
        %4250 = vmatpush1.msra.mxu0 %v4249
        %v4251 = vand.u32 %v1227, 4294901760
        %4252 = vmatprep.subr.mxu0 %v4251
        %v4253 = vand.u32 %v1226, 4294901760
        %4254 = vmatpush1.msra.mxu0 %v4253
        %4255 = vmatprep.subr.mxu0 0.0
        %4256 = vmatpush2.msra.mxu0 0.0
        %4257 = vmatprep.subr.mxu0 0.0
        %4258 = vmatpush2.msra.mxu0 0.0
        %4259 = vmatprep.subr.mxu0 0.0
        %4260 = vmatpush2.msra.mxu0 0.0
        %4261 = vmatprep.subr.mxu0 0.0
        %4262 = vmatpush2.msra.mxu0 0.0
        %4263 = vmatprep.subr.mxu0 0.0
        %4264 = vmatpush2.msra.mxu0 0.0
        %4265 = vmatprep.subr.mxu0 0.0
        %4266 = vmatpush2.msra.mxu0 0.0
        %4267 = vmatprep.subr.mxu0 0.0
        %4268 = vmatpush2.msra.mxu0 0.0
        %4269 = vmatprep.subr.mxu0 0.0
        %4270 = vmatpush2.msra.mxu0 0.0
        %4271 = vmatprep.subr.mxu0 0.0
        %4272 = vmatpush2.msra.mxu0 0.0
        %4273 = vmatprep.subr.mxu0 0.0
        %4274 = vmatpush2.msra.mxu0 0.0
        %4275 = vmatprep.subr.mxu0 0.0
        %4276 = vmatpush2.msra.mxu0 0.0
        %4277 = vmatprep.subr.mxu0 0.0
        %4278 = vmatpush2.msra.mxu0 0.0
        %4279 = vmatprep.subr.mxu0 0.0
        %4280 = vmatpush2.msra.mxu0 0.0
        %4281 = vmatprep.subr.mxu0 0.0
        %4282 = vmatpush2.msra.mxu0 0.0
        %v4283 = vand.u32 %v1346, 4294901760
        %4284 = vmatprep.subr.mxu0 %v4283
        %v4285 = vand.u32 %v1345, 4294901760
        %4286 = vmatpush2.msra.mxu0 %v4285
        %v4287 = vand.u32 %v1339, 4294901760
        %4288 = vmatprep.subr.mxu0 %v4287
        %v4289 = vand.u32 %v1338, 4294901760
        %4290 = vmatpush2.msra.mxu0 %v4289
        %v4291 = vand.u32 %v1349, 4294901760
        %v4292 = vsub.f32 %v1349, %v4291
        %v4293 = vand.u32 %v4292, 4294901760
        %4294 = vmatprep.mubr.f32.mxu0 %v4293
        %v4295 = vand.u32 %v1214, 4294901760
        %v4296 = vsub.f32 %v1214, %v4295
        %v4297 = vand.u32 %v4296, 4294901760
        %4298 = vmatmul.mubr.f32.gmra.mxu0 %v4297
        %v4299 = vpop.f32.mrf.mxu0
        %v4300 = vadd.f32 %v4157, %v4299
        %v4301 = vpop.f32.mrf.mxu0
        %v4302 = vadd.f32 %v4159, %v4301
        %v4303 = vand.u32 %v1352, 4294901760
        %v4304 = vsub.f32 %v1352, %v4303
        %v4305 = vand.u32 %v4304, 4294901760
        %4306 = vmatprep.mubr.f32.mxu0 %v4305
        %v4307 = vand.u32 %v1216, 4294901760
        %v4308 = vsub.f32 %v1216, %v4307
        %v4309 = vand.u32 %v4308, 4294901760
        %4310 = vmatmul.mubr.f32.gmra.mxu0 %v4309
        %v4311 = vpop.f32.mrf.mxu0
        %v4312 = vadd.f32 %v4167, %v4311
        %v4313 = vpop.f32.mrf.mxu0
        %v4314 = vadd.f32 %v4169, %v4313
        %v4315 = vand.u32 %v1355, 4294901760
        %v4316 = vsub.f32 %v1355, %v4315
        %v4317 = vand.u32 %v4316, 4294901760
        %4318 = vmatprep.mubr.f32.mxu0 %v4317
        %v4319 = vand.u32 %v1218, 4294901760
        %v4320 = vsub.f32 %v1218, %v4319
        %v4321 = vand.u32 %v4320, 4294901760
        %4322 = vmatmul.mubr.f32.gmra.mxu0 %v4321
        %v4323 = vpop.f32.mrf.mxu0
        %v4324 = vadd.f32 %v4177, %v4323
        %v4325 = vpop.f32.mrf.mxu0
        %v4326 = vadd.f32 %v4179, %v4325
        %v4327 = vand.u32 %v1358, 4294901760
        %v4328 = vsub.f32 %v1358, %v4327
        %v4329 = vand.u32 %v4328, 4294901760
        %4330 = vmatprep.mubr.f32.mxu0 %v4329
        %v4331 = vand.u32 %v1220, 4294901760
        %v4332 = vsub.f32 %v1220, %v4331
        %v4333 = vand.u32 %v4332, 4294901760
        %4334 = vmatmul.mubr.f32.gmra.mxu0 %v4333
        %v4335 = vpop.f32.mrf.mxu0
        %v4336 = vadd.f32 %v4187, %v4335
        %v4337 = vpop.f32.mrf.mxu0
        %v4338 = vadd.f32 %v4189, %v4337
        %4339 = vdwg.mxu0
        %v4340 = vand.u32 %v1332, 4294901760
        %v4341 = vsub.f32 %v1332, %v4340
        %v4342 = vand.u32 %v4341, 4294901760
        %4343 = vmatprep.subr.mxu0 %v4342
        %v4344 = vand.u32 %v1331, 4294901760
        %v4345 = vsub.f32 %v1331, %v4344
        %v4346 = vand.u32 %v4345, 4294901760
        %4347 = vmatpush1.msra.mxu0 %v4346
        %v4348 = vand.u32 %v1325, 4294901760
        %v4349 = vsub.f32 %v1325, %v4348
        %v4350 = vand.u32 %v4349, 4294901760
        %4351 = vmatprep.subr.mxu0 %v4350
        %v4352 = vand.u32 %v1324, 4294901760
        %v4353 = vsub.f32 %v1324, %v4352
        %v4354 = vand.u32 %v4353, 4294901760
        %4355 = vmatpush1.msra.mxu0 %v4354
        %v4356 = vand.u32 %v1318, 4294901760
        %v4357 = vsub.f32 %v1318, %v4356
        %v4358 = vand.u32 %v4357, 4294901760
        %4359 = vmatprep.subr.mxu0 %v4358
        %v4360 = vand.u32 %v1317, 4294901760
        %v4361 = vsub.f32 %v1317, %v4360
        %v4362 = vand.u32 %v4361, 4294901760
        %4363 = vmatpush1.msra.mxu0 %v4362
        %v4364 = vand.u32 %v1311, 4294901760
        %v4365 = vsub.f32 %v1311, %v4364
        %v4366 = vand.u32 %v4365, 4294901760
        %4367 = vmatprep.subr.mxu0 %v4366
        %v4368 = vand.u32 %v1310, 4294901760
        %v4369 = vsub.f32 %v1310, %v4368
        %v4370 = vand.u32 %v4369, 4294901760
        %4371 = vmatpush1.msra.mxu0 %v4370
        %v4372 = vand.u32 %v1304, 4294901760
        %v4373 = vsub.f32 %v1304, %v4372
        %v4374 = vand.u32 %v4373, 4294901760
        %4375 = vmatprep.subr.mxu0 %v4374
        %v4376 = vand.u32 %v1303, 4294901760
        %v4377 = vsub.f32 %v1303, %v4376
        %v4378 = vand.u32 %v4377, 4294901760
        %4379 = vmatpush1.msra.mxu0 %v4378
        %v4380 = vand.u32 %v1297, 4294901760
        %v4381 = vsub.f32 %v1297, %v4380
        %v4382 = vand.u32 %v4381, 4294901760
        %4383 = vmatprep.subr.mxu0 %v4382
        %v4384 = vand.u32 %v1296, 4294901760
        %v4385 = vsub.f32 %v1296, %v4384
        %v4386 = vand.u32 %v4385, 4294901760
        %4387 = vmatpush1.msra.mxu0 %v4386
        %v4388 = vand.u32 %v1290, 4294901760
        %v4389 = vsub.f32 %v1290, %v4388
        %v4390 = vand.u32 %v4389, 4294901760
        %4391 = vmatprep.subr.mxu0 %v4390
        %v4392 = vand.u32 %v1289, 4294901760
        %v4393 = vsub.f32 %v1289, %v4392
        %v4394 = vand.u32 %v4393, 4294901760
        %4395 = vmatpush1.msra.mxu0 %v4394
        %v4396 = vand.u32 %v1283, 4294901760
        %v4397 = vsub.f32 %v1283, %v4396
        %v4398 = vand.u32 %v4397, 4294901760
        %4399 = vmatprep.subr.mxu0 %v4398
        %v4400 = vand.u32 %v1282, 4294901760
        %v4401 = vsub.f32 %v1282, %v4400
        %v4402 = vand.u32 %v4401, 4294901760
        %4403 = vmatpush1.msra.mxu0 %v4402
        %v4404 = vand.u32 %v1276, 4294901760
        %v4405 = vsub.f32 %v1276, %v4404
        %v4406 = vand.u32 %v4405, 4294901760
        %4407 = vmatprep.subr.mxu0 %v4406
        %v4408 = vand.u32 %v1275, 4294901760
        %v4409 = vsub.f32 %v1275, %v4408
        %v4410 = vand.u32 %v4409, 4294901760
        %4411 = vmatpush1.msra.mxu0 %v4410
        %v4412 = vand.u32 %v1269, 4294901760
        %v4413 = vsub.f32 %v1269, %v4412
        %v4414 = vand.u32 %v4413, 4294901760
        %4415 = vmatprep.subr.mxu0 %v4414
        %v4416 = vand.u32 %v1268, 4294901760
        %v4417 = vsub.f32 %v1268, %v4416
        %v4418 = vand.u32 %v4417, 4294901760
        %4419 = vmatpush1.msra.mxu0 %v4418
        %v4420 = vand.u32 %v1262, 4294901760
        %v4421 = vsub.f32 %v1262, %v4420
        %v4422 = vand.u32 %v4421, 4294901760
        %4423 = vmatprep.subr.mxu0 %v4422
        %v4424 = vand.u32 %v1261, 4294901760
        %v4425 = vsub.f32 %v1261, %v4424
        %v4426 = vand.u32 %v4425, 4294901760
        %4427 = vmatpush1.msra.mxu0 %v4426
        %v4428 = vand.u32 %v1255, 4294901760
        %v4429 = vsub.f32 %v1255, %v4428
        %v4430 = vand.u32 %v4429, 4294901760
        %4431 = vmatprep.subr.mxu0 %v4430
        %v4432 = vand.u32 %v1254, 4294901760
        %v4433 = vsub.f32 %v1254, %v4432
        %v4434 = vand.u32 %v4433, 4294901760
        %4435 = vmatpush1.msra.mxu0 %v4434
        %v4436 = vand.u32 %v1248, 4294901760
        %v4437 = vsub.f32 %v1248, %v4436
        %v4438 = vand.u32 %v4437, 4294901760
        %4439 = vmatprep.subr.mxu0 %v4438
        %v4440 = vand.u32 %v1247, 4294901760
        %v4441 = vsub.f32 %v1247, %v4440
        %v4442 = vand.u32 %v4441, 4294901760
        %4443 = vmatpush1.msra.mxu0 %v4442
        %v4444 = vand.u32 %v1241, 4294901760
        %v4445 = vsub.f32 %v1241, %v4444
        %v4446 = vand.u32 %v4445, 4294901760
        %4447 = vmatprep.subr.mxu0 %v4446
        %v4448 = vand.u32 %v1240, 4294901760
        %v4449 = vsub.f32 %v1240, %v4448
        %v4450 = vand.u32 %v4449, 4294901760
        %4451 = vmatpush1.msra.mxu0 %v4450
        %v4452 = vand.u32 %v1234, 4294901760
        %v4453 = vsub.f32 %v1234, %v4452
        %v4454 = vand.u32 %v4453, 4294901760
        %4455 = vmatprep.subr.mxu0 %v4454
        %v4456 = vand.u32 %v1233, 4294901760
        %v4457 = vsub.f32 %v1233, %v4456
        %v4458 = vand.u32 %v4457, 4294901760
        %4459 = vmatpush1.msra.mxu0 %v4458
        %v4460 = vand.u32 %v1227, 4294901760
        %v4461 = vsub.f32 %v1227, %v4460
        %v4462 = vand.u32 %v4461, 4294901760
        %4463 = vmatprep.subr.mxu0 %v4462
        %v4464 = vand.u32 %v1226, 4294901760
        %v4465 = vsub.f32 %v1226, %v4464
        %v4466 = vand.u32 %v4465, 4294901760
        %4467 = vmatpush1.msra.mxu0 %v4466
        %4468 = vmatprep.subr.mxu0 0.0
        %4469 = vmatpush2.msra.mxu0 0.0
        %4470 = vmatprep.subr.mxu0 0.0
        %4471 = vmatpush2.msra.mxu0 0.0
        %4472 = vmatprep.subr.mxu0 0.0
        %4473 = vmatpush2.msra.mxu0 0.0
        %4474 = vmatprep.subr.mxu0 0.0
        %4475 = vmatpush2.msra.mxu0 0.0
        %4476 = vmatprep.subr.mxu0 0.0
        %4477 = vmatpush2.msra.mxu0 0.0
        %4478 = vmatprep.subr.mxu0 0.0
        %4479 = vmatpush2.msra.mxu0 0.0
        %4480 = vmatprep.subr.mxu0 0.0
        %4481 = vmatpush2.msra.mxu0 0.0
        %4482 = vmatprep.subr.mxu0 0.0
        %4483 = vmatpush2.msra.mxu0 0.0
        %4484 = vmatprep.subr.mxu0 0.0
        %4485 = vmatpush2.msra.mxu0 0.0
        %4486 = vmatprep.subr.mxu0 0.0
        %4487 = vmatpush2.msra.mxu0 0.0
        %4488 = vmatprep.subr.mxu0 0.0
        %4489 = vmatpush2.msra.mxu0 0.0
        %4490 = vmatprep.subr.mxu0 0.0
        %4491 = vmatpush2.msra.mxu0 0.0
        %4492 = vmatprep.subr.mxu0 0.0
        %4493 = vmatpush2.msra.mxu0 0.0
        %4494 = vmatprep.subr.mxu0 0.0
        %4495 = vmatpush2.msra.mxu0 0.0
        %v4496 = vand.u32 %v1346, 4294901760
        %v4497 = vsub.f32 %v1346, %v4496
        %v4498 = vand.u32 %v4497, 4294901760
        %4499 = vmatprep.subr.mxu0 %v4498
        %v4500 = vand.u32 %v1345, 4294901760
        %v4501 = vsub.f32 %v1345, %v4500
        %v4502 = vand.u32 %v4501, 4294901760
        %4503 = vmatpush2.msra.mxu0 %v4502
        %v4504 = vand.u32 %v1339, 4294901760
        %v4505 = vsub.f32 %v1339, %v4504
        %v4506 = vand.u32 %v4505, 4294901760
        %4507 = vmatprep.subr.mxu0 %v4506
        %v4508 = vand.u32 %v1338, 4294901760
        %v4509 = vsub.f32 %v1338, %v4508
        %v4510 = vand.u32 %v4509, 4294901760
        %4511 = vmatpush2.msra.mxu0 %v4510
        %v4512 = vand.u32 %v1349, 4294901760
        %4513 = vmatprep.mubr.f32.mxu0 %v4512
        %v4514 = vand.u32 %v1214, 4294901760
        %4515 = vmatmul.mubr.f32.gmra.mxu0 %v4514
        %v4516 = vpop.f32.mrf.mxu0
        %v4517 = vadd.f32 %v4300, %v4516
        %v4518 = vpop.f32.mrf.mxu0
        %v4519 = vadd.f32 %v4302, %v4518
        %v4520 = vand.u32 %v1352, 4294901760
        %4521 = vmatprep.mubr.f32.mxu0 %v4520
        %v4522 = vand.u32 %v1216, 4294901760
        %4523 = vmatmul.mubr.f32.gmra.mxu0 %v4522
        %v4524 = vpop.f32.mrf.mxu0
        %v4525 = vadd.f32 %v4312, %v4524
        %v4526 = vpop.f32.mrf.mxu0
        %v4527 = vadd.f32 %v4314, %v4526
        %v4528 = vand.u32 %v1355, 4294901760
        %4529 = vmatprep.mubr.f32.mxu0 %v4528
        %v4530 = vand.u32 %v1218, 4294901760
        %4531 = vmatmul.mubr.f32.gmra.mxu0 %v4530
        %v4532 = vpop.f32.mrf.mxu0
        %v4533 = vadd.f32 %v4324, %v4532
        %v4534 = vpop.f32.mrf.mxu0
        %v4535 = vadd.f32 %v4326, %v4534
        %v4536 = vand.u32 %v1358, 4294901760
        %4537 = vmatprep.mubr.f32.mxu0 %v4536
        %v4538 = vand.u32 %v1220, 4294901760
        %4539 = vmatmul.mubr.f32.gmra.mxu0 %v4538
        %v4540 = vpop.f32.mrf.mxu0
        %v4541 = vadd.f32 %v4336, %v4540
        %v4542 = vpop.f32.mrf.mxu0
        %v4543 = vadd.f32 %v4338, %v4542
        %4544 = vdwg.mxu0
        %v4545 = vand.u32 %v1332, 4294901760
        %4546 = vmatprep.subr.mxu0 %v4545
        %v4547 = vand.u32 %v1331, 4294901760
        %4548 = vmatpush1.msra.mxu0 %v4547
        %v4549 = vand.u32 %v1325, 4294901760
        %4550 = vmatprep.subr.mxu0 %v4549
        %v4551 = vand.u32 %v1324, 4294901760
        %4552 = vmatpush1.msra.mxu0 %v4551
        %v4553 = vand.u32 %v1318, 4294901760
        %4554 = vmatprep.subr.mxu0 %v4553
        %v4555 = vand.u32 %v1317, 4294901760
        %4556 = vmatpush1.msra.mxu0 %v4555
        %v4557 = vand.u32 %v1311, 4294901760
        %4558 = vmatprep.subr.mxu0 %v4557
        %v4559 = vand.u32 %v1310, 4294901760
        %4560 = vmatpush1.msra.mxu0 %v4559
        %v4561 = vand.u32 %v1304, 4294901760
        %4562 = vmatprep.subr.mxu0 %v4561
        %v4563 = vand.u32 %v1303, 4294901760
        %4564 = vmatpush1.msra.mxu0 %v4563
        %v4565 = vand.u32 %v1297, 4294901760
        %4566 = vmatprep.subr.mxu0 %v4565
        %v4567 = vand.u32 %v1296, 4294901760
        %4568 = vmatpush1.msra.mxu0 %v4567
        %v4569 = vand.u32 %v1290, 4294901760
        %4570 = vmatprep.subr.mxu0 %v4569
        %v4571 = vand.u32 %v1289, 4294901760
        %4572 = vmatpush1.msra.mxu0 %v4571
        %v4573 = vand.u32 %v1283, 4294901760
        %4574 = vmatprep.subr.mxu0 %v4573
        %v4575 = vand.u32 %v1282, 4294901760
        %4576 = vmatpush1.msra.mxu0 %v4575
        %v4577 = vand.u32 %v1276, 4294901760
        %4578 = vmatprep.subr.mxu0 %v4577
        %v4579 = vand.u32 %v1275, 4294901760
        %4580 = vmatpush1.msra.mxu0 %v4579
        %v4581 = vand.u32 %v1269, 4294901760
        %4582 = vmatprep.subr.mxu0 %v4581
        %v4583 = vand.u32 %v1268, 4294901760
        %4584 = vmatpush1.msra.mxu0 %v4583
        %v4585 = vand.u32 %v1262, 4294901760
        %4586 = vmatprep.subr.mxu0 %v4585
        %v4587 = vand.u32 %v1261, 4294901760
        %4588 = vmatpush1.msra.mxu0 %v4587
        %v4589 = vand.u32 %v1255, 4294901760
        %4590 = vmatprep.subr.mxu0 %v4589
        %v4591 = vand.u32 %v1254, 4294901760
        %4592 = vmatpush1.msra.mxu0 %v4591
        %v4593 = vand.u32 %v1248, 4294901760
        %4594 = vmatprep.subr.mxu0 %v4593
        %v4595 = vand.u32 %v1247, 4294901760
        %4596 = vmatpush1.msra.mxu0 %v4595
        %v4597 = vand.u32 %v1241, 4294901760
        %4598 = vmatprep.subr.mxu0 %v4597
        %v4599 = vand.u32 %v1240, 4294901760
        %4600 = vmatpush1.msra.mxu0 %v4599
        %v4601 = vand.u32 %v1234, 4294901760
        %4602 = vmatprep.subr.mxu0 %v4601
        %v4603 = vand.u32 %v1233, 4294901760
        %4604 = vmatpush1.msra.mxu0 %v4603
        %v4605 = vand.u32 %v1227, 4294901760
        %4606 = vmatprep.subr.mxu0 %v4605
        %v4607 = vand.u32 %v1226, 4294901760
        %4608 = vmatpush1.msra.mxu0 %v4607
        %4609 = vmatprep.subr.mxu0 0.0
        %4610 = vmatpush2.msra.mxu0 0.0
        %4611 = vmatprep.subr.mxu0 0.0
        %4612 = vmatpush2.msra.mxu0 0.0
        %4613 = vmatprep.subr.mxu0 0.0
        %4614 = vmatpush2.msra.mxu0 0.0
        %4615 = vmatprep.subr.mxu0 0.0
        %4616 = vmatpush2.msra.mxu0 0.0
        %4617 = vmatprep.subr.mxu0 0.0
        %4618 = vmatpush2.msra.mxu0 0.0
        %4619 = vmatprep.subr.mxu0 0.0
        %4620 = vmatpush2.msra.mxu0 0.0
        %4621 = vmatprep.subr.mxu0 0.0
        %4622 = vmatpush2.msra.mxu0 0.0
        %4623 = vmatprep.subr.mxu0 0.0
        %4624 = vmatpush2.msra.mxu0 0.0
        %4625 = vmatprep.subr.mxu0 0.0
        %4626 = vmatpush2.msra.mxu0 0.0
        %4627 = vmatprep.subr.mxu0 0.0
        %4628 = vmatpush2.msra.mxu0 0.0
        %4629 = vmatprep.subr.mxu0 0.0
        %4630 = vmatpush2.msra.mxu0 0.0
        %4631 = vmatprep.subr.mxu0 0.0
        %4632 = vmatpush2.msra.mxu0 0.0
        %4633 = vmatprep.subr.mxu0 0.0
        %4634 = vmatpush2.msra.mxu0 0.0
        %4635 = vmatprep.subr.mxu0 0.0
        %4636 = vmatpush2.msra.mxu0 0.0
        %v4637 = vand.u32 %v1346, 4294901760
        %4638 = vmatprep.subr.mxu0 %v4637
        %v4639 = vand.u32 %v1345, 4294901760
        %4640 = vmatpush2.msra.mxu0 %v4639
        %v4641 = vand.u32 %v1339, 4294901760
        %4642 = vmatprep.subr.mxu0 %v4641
        %v4643 = vand.u32 %v1338, 4294901760
        %4644 = vmatpush2.msra.mxu0 %v4643
        %v4645 = vand.u32 %v1349, 4294901760
        %4646 = vmatprep.mubr.f32.mxu0 %v4645
        %v4647 = vand.u32 %v1214, 4294901760
        %4648 = vmatmul.mubr.f32.gmra.mxu0 %v4647
        %v4649 = vpop.f32.mrf.mxu0
        %v4650 = vadd.f32 %v4517, %v4649
        %v4651 = vpop.f32.mrf.mxu0
        %v4652 = vadd.f32 %v4519, %v4651
        %v4653 = vand.u32 %v1352, 4294901760
        %4654 = vmatprep.mubr.f32.mxu0 %v4653
        %v4655 = vand.u32 %v1216, 4294901760
        %4656 = vmatmul.mubr.f32.gmra.mxu0 %v4655
        %v4657 = vpop.f32.mrf.mxu0
        %v4658 = vadd.f32 %v4525, %v4657
        %v4659 = vpop.f32.mrf.mxu0
        %v4660 = vadd.f32 %v4527, %v4659
        %v4661 = vand.u32 %v1355, 4294901760
        %4662 = vmatprep.mubr.f32.mxu0 %v4661
        %v4663 = vand.u32 %v1218, 4294901760
        %4664 = vmatmul.mubr.f32.gmra.mxu0 %v4663
        %v4665 = vpop.f32.mrf.mxu0
        %v4666 = vadd.f32 %v4533, %v4665
        %v4667 = vpop.f32.mrf.mxu0
        %v4668 = vadd.f32 %v4535, %v4667
        %v4669 = vand.u32 %v1358, 4294901760
        %4670 = vmatprep.mubr.f32.mxu0 %v4669
        %v4671 = vand.u32 %v1220, 4294901760
        %4672 = vmatmul.mubr.f32.gmra.mxu0 %v4671
        %v4673 = vpop.f32.mrf.mxu0
        %v4674 = vadd.f32 %v4541, %v4673
        %v4675 = vpop.f32.mrf.mxu0
        %v4676 = vadd.f32 %v4543, %v4675
        %4677 = vdwg.mxu0
        %4678 = vmatprep.subr.mxu0 0.0
        %v4679 = vand.u32 %v1333, 4294901760
        %4680 = vmatpush1.msra.mxu0 %v4679
        %4681 = vmatprep.subr.mxu0 0.0
        %v4682 = vand.u32 %v1326, 4294901760
        %4683 = vmatpush1.msra.mxu0 %v4682
        %4684 = vmatprep.subr.mxu0 0.0
        %v4685 = vand.u32 %v1319, 4294901760
        %4686 = vmatpush1.msra.mxu0 %v4685
        %4687 = vmatprep.subr.mxu0 0.0
        %v4688 = vand.u32 %v1312, 4294901760
        %4689 = vmatpush1.msra.mxu0 %v4688
        %4690 = vmatprep.subr.mxu0 0.0
        %v4691 = vand.u32 %v1305, 4294901760
        %4692 = vmatpush1.msra.mxu0 %v4691
        %4693 = vmatprep.subr.mxu0 0.0
        %v4694 = vand.u32 %v1298, 4294901760
        %4695 = vmatpush1.msra.mxu0 %v4694
        %4696 = vmatprep.subr.mxu0 0.0
        %v4697 = vand.u32 %v1291, 4294901760
        %4698 = vmatpush1.msra.mxu0 %v4697
        %4699 = vmatprep.subr.mxu0 0.0
        %v4700 = vand.u32 %v1284, 4294901760
        %4701 = vmatpush1.msra.mxu0 %v4700
        %4702 = vmatprep.subr.mxu0 0.0
        %v4703 = vand.u32 %v1277, 4294901760
        %4704 = vmatpush1.msra.mxu0 %v4703
        %4705 = vmatprep.subr.mxu0 0.0
        %v4706 = vand.u32 %v1270, 4294901760
        %4707 = vmatpush1.msra.mxu0 %v4706
        %4708 = vmatprep.subr.mxu0 0.0
        %v4709 = vand.u32 %v1263, 4294901760
        %4710 = vmatpush1.msra.mxu0 %v4709
        %4711 = vmatprep.subr.mxu0 0.0
        %v4712 = vand.u32 %v1256, 4294901760
        %4713 = vmatpush1.msra.mxu0 %v4712
        %4714 = vmatprep.subr.mxu0 0.0
        %v4715 = vand.u32 %v1249, 4294901760
        %4716 = vmatpush1.msra.mxu0 %v4715
        %4717 = vmatprep.subr.mxu0 0.0
        %v4718 = vand.u32 %v1242, 4294901760
        %4719 = vmatpush1.msra.mxu0 %v4718
        %4720 = vmatprep.subr.mxu0 0.0
        %v4721 = vand.u32 %v1235, 4294901760
        %4722 = vmatpush1.msra.mxu0 %v4721
        %4723 = vmatprep.subr.mxu0 0.0
        %v4724 = vand.u32 %v1228, 4294901760
        %4725 = vmatpush1.msra.mxu0 %v4724
        %4726 = vmatprep.subr.mxu0 0.0
        %4727 = vmatpush2.msra.mxu0 0.0
        %4728 = vmatprep.subr.mxu0 0.0
        %4729 = vmatpush2.msra.mxu0 0.0
        %4730 = vmatprep.subr.mxu0 0.0
        %4731 = vmatpush2.msra.mxu0 0.0
        %4732 = vmatprep.subr.mxu0 0.0
        %4733 = vmatpush2.msra.mxu0 0.0
        %4734 = vmatprep.subr.mxu0 0.0
        %4735 = vmatpush2.msra.mxu0 0.0
        %4736 = vmatprep.subr.mxu0 0.0
        %4737 = vmatpush2.msra.mxu0 0.0
        %4738 = vmatprep.subr.mxu0 0.0
        %4739 = vmatpush2.msra.mxu0 0.0
        %4740 = vmatprep.subr.mxu0 0.0
        %4741 = vmatpush2.msra.mxu0 0.0
        %4742 = vmatprep.subr.mxu0 0.0
        %4743 = vmatpush2.msra.mxu0 0.0
        %4744 = vmatprep.subr.mxu0 0.0
        %4745 = vmatpush2.msra.mxu0 0.0
        %4746 = vmatprep.subr.mxu0 0.0
        %4747 = vmatpush2.msra.mxu0 0.0
        %4748 = vmatprep.subr.mxu0 0.0
        %4749 = vmatpush2.msra.mxu0 0.0
        %4750 = vmatprep.subr.mxu0 0.0
        %4751 = vmatpush2.msra.mxu0 0.0
        %4752 = vmatprep.subr.mxu0 0.0
        %4753 = vmatpush2.msra.mxu0 0.0
        %4754 = vmatprep.subr.mxu0 0.0
        %v4755 = vand.u32 %v1347, 4294901760
        %4756 = vmatpush2.msra.mxu0 %v4755
        %4757 = vmatprep.subr.mxu0 0.0
        %v4758 = vand.u32 %v1340, 4294901760
        %4759 = vmatpush2.msra.mxu0 %v4758
        %v4760 = vand.u32 %v1349, 4294901760
        %v4761 = vsub.f32 %v1349, %v4760
        %v4762 = vand.u32 %v4761, 4294901760
        %v4763 = vsub.f32 %v4761, %v4762
        %v4764 = vand.u32 %v4763, 4294901760
        %4765 = vmatprep.mubr.f32.mxu0 %v4764
        %v4766 = vand.u32 %v1214, 4294901760
        %v4767 = vsub.f32 %v1214, %v4766
        %v4768 = vand.u32 %v4767, 4294901760
        %v4769 = vsub.f32 %v4767, %v4768
        %v4770 = vand.u32 %v4769, 4294901760
        %4771 = vmatmul.mubr.f32.gmra.mxu0 %v4770
        %v4772 = vpop.f32.mrf.mxu0
        %v4773 = vadd.f32 0.0, %v4772
        %v4774 = vpop.f32.mrf.mxu0
        %v4775 = vand.u32 %v1352, 4294901760
        %v4776 = vsub.f32 %v1352, %v4775
        %v4777 = vand.u32 %v4776, 4294901760
        %v4778 = vsub.f32 %v4776, %v4777
        %v4779 = vand.u32 %v4778, 4294901760
        %4780 = vmatprep.mubr.f32.mxu0 %v4779
        %v4781 = vand.u32 %v1216, 4294901760
        %v4782 = vsub.f32 %v1216, %v4781
        %v4783 = vand.u32 %v4782, 4294901760
        %v4784 = vsub.f32 %v4782, %v4783
        %v4785 = vand.u32 %v4784, 4294901760
        %4786 = vmatmul.mubr.f32.gmra.mxu0 %v4785
        %v4787 = vpop.f32.mrf.mxu0
        %v4788 = vadd.f32 0.0, %v4787
        %v4789 = vpop.f32.mrf.mxu0
        %v4790 = vand.u32 %v1355, 4294901760
        %v4791 = vsub.f32 %v1355, %v4790
        %v4792 = vand.u32 %v4791, 4294901760
        %v4793 = vsub.f32 %v4791, %v4792
        %v4794 = vand.u32 %v4793, 4294901760
        %4795 = vmatprep.mubr.f32.mxu0 %v4794
        %v4796 = vand.u32 %v1218, 4294901760
        %v4797 = vsub.f32 %v1218, %v4796
        %v4798 = vand.u32 %v4797, 4294901760
        %v4799 = vsub.f32 %v4797, %v4798
        %v4800 = vand.u32 %v4799, 4294901760
        %4801 = vmatmul.mubr.f32.gmra.mxu0 %v4800
        %v4802 = vpop.f32.mrf.mxu0
        %v4803 = vadd.f32 0.0, %v4802
        %v4804 = vpop.f32.mrf.mxu0
        %v4805 = vand.u32 %v1358, 4294901760
        %v4806 = vsub.f32 %v1358, %v4805
        %v4807 = vand.u32 %v4806, 4294901760
        %v4808 = vsub.f32 %v4806, %v4807
        %v4809 = vand.u32 %v4808, 4294901760
        %4810 = vmatprep.mubr.f32.mxu0 %v4809
        %v4811 = vand.u32 %v1220, 4294901760
        %v4812 = vsub.f32 %v1220, %v4811
        %v4813 = vand.u32 %v4812, 4294901760
        %v4814 = vsub.f32 %v4812, %v4813
        %v4815 = vand.u32 %v4814, 4294901760
        %4816 = vmatmul.mubr.f32.gmra.mxu0 %v4815
        %v4817 = vpop.f32.mrf.mxu0
        %v4818 = vadd.f32 0.0, %v4817
        %v4819 = vpop.f32.mrf.mxu0
        %4820 = vdwg.mxu0
        %4821 = vmatprep.subr.mxu0 0.0
        %v4822 = vand.u32 %v1333, 4294901760
        %v4823 = vsub.f32 %v1333, %v4822
        %v4824 = vand.u32 %v4823, 4294901760
        %v4825 = vsub.f32 %v4823, %v4824
        %v4826 = vand.u32 %v4825, 4294901760
        %4827 = vmatpush1.msra.mxu0 %v4826
        %4828 = vmatprep.subr.mxu0 0.0
        %v4829 = vand.u32 %v1326, 4294901760
        %v4830 = vsub.f32 %v1326, %v4829
        %v4831 = vand.u32 %v4830, 4294901760
        %v4832 = vsub.f32 %v4830, %v4831
        %v4833 = vand.u32 %v4832, 4294901760
        %4834 = vmatpush1.msra.mxu0 %v4833
        %4835 = vmatprep.subr.mxu0 0.0
        %v4836 = vand.u32 %v1319, 4294901760
        %v4837 = vsub.f32 %v1319, %v4836
        %v4838 = vand.u32 %v4837, 4294901760
        %v4839 = vsub.f32 %v4837, %v4838
        %v4840 = vand.u32 %v4839, 4294901760
        %4841 = vmatpush1.msra.mxu0 %v4840
        %4842 = vmatprep.subr.mxu0 0.0
        %v4843 = vand.u32 %v1312, 4294901760
        %v4844 = vsub.f32 %v1312, %v4843
        %v4845 = vand.u32 %v4844, 4294901760
        %v4846 = vsub.f32 %v4844, %v4845
        %v4847 = vand.u32 %v4846, 4294901760
        %4848 = vmatpush1.msra.mxu0 %v4847
        %4849 = vmatprep.subr.mxu0 0.0
        %v4850 = vand.u32 %v1305, 4294901760
        %v4851 = vsub.f32 %v1305, %v4850
        %v4852 = vand.u32 %v4851, 4294901760
        %v4853 = vsub.f32 %v4851, %v4852
        %v4854 = vand.u32 %v4853, 4294901760
        %4855 = vmatpush1.msra.mxu0 %v4854
        %4856 = vmatprep.subr.mxu0 0.0
        %v4857 = vand.u32 %v1298, 4294901760
        %v4858 = vsub.f32 %v1298, %v4857
        %v4859 = vand.u32 %v4858, 4294901760
        %v4860 = vsub.f32 %v4858, %v4859
        %v4861 = vand.u32 %v4860, 4294901760
        %4862 = vmatpush1.msra.mxu0 %v4861
        %4863 = vmatprep.subr.mxu0 0.0
        %v4864 = vand.u32 %v1291, 4294901760
        %v4865 = vsub.f32 %v1291, %v4864
        %v4866 = vand.u32 %v4865, 4294901760
        %v4867 = vsub.f32 %v4865, %v4866
        %v4868 = vand.u32 %v4867, 4294901760
        %4869 = vmatpush1.msra.mxu0 %v4868
        %4870 = vmatprep.subr.mxu0 0.0
        %v4871 = vand.u32 %v1284, 4294901760
        %v4872 = vsub.f32 %v1284, %v4871
        %v4873 = vand.u32 %v4872, 4294901760
        %v4874 = vsub.f32 %v4872, %v4873
        %v4875 = vand.u32 %v4874, 4294901760
        %4876 = vmatpush1.msra.mxu0 %v4875
        %4877 = vmatprep.subr.mxu0 0.0
        %v4878 = vand.u32 %v1277, 4294901760
        %v4879 = vsub.f32 %v1277, %v4878
        %v4880 = vand.u32 %v4879, 4294901760
        %v4881 = vsub.f32 %v4879, %v4880
        %v4882 = vand.u32 %v4881, 4294901760
        %4883 = vmatpush1.msra.mxu0 %v4882
        %4884 = vmatprep.subr.mxu0 0.0
        %v4885 = vand.u32 %v1270, 4294901760
        %v4886 = vsub.f32 %v1270, %v4885
        %v4887 = vand.u32 %v4886, 4294901760
        %v4888 = vsub.f32 %v4886, %v4887
        %v4889 = vand.u32 %v4888, 4294901760
        %4890 = vmatpush1.msra.mxu0 %v4889
        %4891 = vmatprep.subr.mxu0 0.0
        %v4892 = vand.u32 %v1263, 4294901760
        %v4893 = vsub.f32 %v1263, %v4892
        %v4894 = vand.u32 %v4893, 4294901760
        %v4895 = vsub.f32 %v4893, %v4894
        %v4896 = vand.u32 %v4895, 4294901760
        %4897 = vmatpush1.msra.mxu0 %v4896
        %4898 = vmatprep.subr.mxu0 0.0
        %v4899 = vand.u32 %v1256, 4294901760
        %v4900 = vsub.f32 %v1256, %v4899
        %v4901 = vand.u32 %v4900, 4294901760
        %v4902 = vsub.f32 %v4900, %v4901
        %v4903 = vand.u32 %v4902, 4294901760
        %4904 = vmatpush1.msra.mxu0 %v4903
        %4905 = vmatprep.subr.mxu0 0.0
        %v4906 = vand.u32 %v1249, 4294901760
        %v4907 = vsub.f32 %v1249, %v4906
        %v4908 = vand.u32 %v4907, 4294901760
        %v4909 = vsub.f32 %v4907, %v4908
        %v4910 = vand.u32 %v4909, 4294901760
        %4911 = vmatpush1.msra.mxu0 %v4910
        %4912 = vmatprep.subr.mxu0 0.0
        %v4913 = vand.u32 %v1242, 4294901760
        %v4914 = vsub.f32 %v1242, %v4913
        %v4915 = vand.u32 %v4914, 4294901760
        %v4916 = vsub.f32 %v4914, %v4915
        %v4917 = vand.u32 %v4916, 4294901760
        %4918 = vmatpush1.msra.mxu0 %v4917
        %4919 = vmatprep.subr.mxu0 0.0
        %v4920 = vand.u32 %v1235, 4294901760
        %v4921 = vsub.f32 %v1235, %v4920
        %v4922 = vand.u32 %v4921, 4294901760
        %v4923 = vsub.f32 %v4921, %v4922
        %v4924 = vand.u32 %v4923, 4294901760
        %4925 = vmatpush1.msra.mxu0 %v4924
        %4926 = vmatprep.subr.mxu0 0.0
        %v4927 = vand.u32 %v1228, 4294901760
        %v4928 = vsub.f32 %v1228, %v4927
        %v4929 = vand.u32 %v4928, 4294901760
        %v4930 = vsub.f32 %v4928, %v4929
        %v4931 = vand.u32 %v4930, 4294901760
        %4932 = vmatpush1.msra.mxu0 %v4931
        %4933 = vmatprep.subr.mxu0 0.0
        %4934 = vmatpush2.msra.mxu0 0.0
        %4935 = vmatprep.subr.mxu0 0.0
        %4936 = vmatpush2.msra.mxu0 0.0
        %4937 = vmatprep.subr.mxu0 0.0
        %4938 = vmatpush2.msra.mxu0 0.0
        %4939 = vmatprep.subr.mxu0 0.0
        %4940 = vmatpush2.msra.mxu0 0.0
        %4941 = vmatprep.subr.mxu0 0.0
        %4942 = vmatpush2.msra.mxu0 0.0
        %4943 = vmatprep.subr.mxu0 0.0
        %4944 = vmatpush2.msra.mxu0 0.0
        %4945 = vmatprep.subr.mxu0 0.0
        %4946 = vmatpush2.msra.mxu0 0.0
        %4947 = vmatprep.subr.mxu0 0.0
        %4948 = vmatpush2.msra.mxu0 0.0
        %4949 = vmatprep.subr.mxu0 0.0
        %4950 = vmatpush2.msra.mxu0 0.0
        %4951 = vmatprep.subr.mxu0 0.0
        %4952 = vmatpush2.msra.mxu0 0.0
        %4953 = vmatprep.subr.mxu0 0.0
        %4954 = vmatpush2.msra.mxu0 0.0
        %4955 = vmatprep.subr.mxu0 0.0
        %4956 = vmatpush2.msra.mxu0 0.0
        %4957 = vmatprep.subr.mxu0 0.0
        %4958 = vmatpush2.msra.mxu0 0.0
        %4959 = vmatprep.subr.mxu0 0.0
        %4960 = vmatpush2.msra.mxu0 0.0
        %4961 = vmatprep.subr.mxu0 0.0
        %v4962 = vand.u32 %v1347, 4294901760
        %v4963 = vsub.f32 %v1347, %v4962
        %v4964 = vand.u32 %v4963, 4294901760
        %v4965 = vsub.f32 %v4963, %v4964
        %v4966 = vand.u32 %v4965, 4294901760
        %4967 = vmatpush2.msra.mxu0 %v4966
        %4968 = vmatprep.subr.mxu0 0.0
        %v4969 = vand.u32 %v1340, 4294901760
        %v4970 = vsub.f32 %v1340, %v4969
        %v4971 = vand.u32 %v4970, 4294901760
        %v4972 = vsub.f32 %v4970, %v4971
        %v4973 = vand.u32 %v4972, 4294901760
        %4974 = vmatpush2.msra.mxu0 %v4973
        %v4975 = vand.u32 %v1349, 4294901760
        %4976 = vmatprep.mubr.f32.mxu0 %v4975
        %v4977 = vand.u32 %v1214, 4294901760
        %4978 = vmatmul.mubr.f32.gmra.mxu0 %v4977
        %v4979 = vpop.f32.mrf.mxu0
        %v4980 = vadd.f32 %v4773, %v4979
        %v4981 = vpop.f32.mrf.mxu0
        %v4982 = vand.u32 %v1352, 4294901760
        %4983 = vmatprep.mubr.f32.mxu0 %v4982
        %v4984 = vand.u32 %v1216, 4294901760
        %4985 = vmatmul.mubr.f32.gmra.mxu0 %v4984
        %v4986 = vpop.f32.mrf.mxu0
        %v4987 = vadd.f32 %v4788, %v4986
        %v4988 = vpop.f32.mrf.mxu0
        %v4989 = vand.u32 %v1355, 4294901760
        %4990 = vmatprep.mubr.f32.mxu0 %v4989
        %v4991 = vand.u32 %v1218, 4294901760
        %4992 = vmatmul.mubr.f32.gmra.mxu0 %v4991
        %v4993 = vpop.f32.mrf.mxu0
        %v4994 = vadd.f32 %v4803, %v4993
        %v4995 = vpop.f32.mrf.mxu0
        %v4996 = vand.u32 %v1358, 4294901760
        %4997 = vmatprep.mubr.f32.mxu0 %v4996
        %v4998 = vand.u32 %v1220, 4294901760
        %4999 = vmatmul.mubr.f32.gmra.mxu0 %v4998
        %v5000 = vpop.f32.mrf.mxu0
        %v5001 = vadd.f32 %v4818, %v5000
        %v5002 = vpop.f32.mrf.mxu0
        %5003 = vdwg.mxu0
        %5004 = vmatprep.subr.mxu0 0.0
        %v5005 = vand.u32 %v1333, 4294901760
        %v5006 = vsub.f32 %v1333, %v5005
        %5007 = vmatpush1.msra.mxu0 %v5006
        %5008 = vmatprep.subr.mxu0 0.0
        %v5009 = vand.u32 %v1326, 4294901760
        %v5010 = vsub.f32 %v1326, %v5009
        %5011 = vmatpush1.msra.mxu0 %v5010
        %5012 = vmatprep.subr.mxu0 0.0
        %v5013 = vand.u32 %v1319, 4294901760
        %v5014 = vsub.f32 %v1319, %v5013
        %5015 = vmatpush1.msra.mxu0 %v5014
        %5016 = vmatprep.subr.mxu0 0.0
        %v5017 = vand.u32 %v1312, 4294901760
        %v5018 = vsub.f32 %v1312, %v5017
        %5019 = vmatpush1.msra.mxu0 %v5018
        %5020 = vmatprep.subr.mxu0 0.0
        %v5021 = vand.u32 %v1305, 4294901760
        %v5022 = vsub.f32 %v1305, %v5021
        %5023 = vmatpush1.msra.mxu0 %v5022
        %5024 = vmatprep.subr.mxu0 0.0
        %v5025 = vand.u32 %v1298, 4294901760
        %v5026 = vsub.f32 %v1298, %v5025
        %5027 = vmatpush1.msra.mxu0 %v5026
        %5028 = vmatprep.subr.mxu0 0.0
        %v5029 = vand.u32 %v1291, 4294901760
        %v5030 = vsub.f32 %v1291, %v5029
        %5031 = vmatpush1.msra.mxu0 %v5030
        %5032 = vmatprep.subr.mxu0 0.0
        %v5033 = vand.u32 %v1284, 4294901760
        %v5034 = vsub.f32 %v1284, %v5033
        %5035 = vmatpush1.msra.mxu0 %v5034
        %5036 = vmatprep.subr.mxu0 0.0
        %v5037 = vand.u32 %v1277, 4294901760
        %v5038 = vsub.f32 %v1277, %v5037
        %5039 = vmatpush1.msra.mxu0 %v5038
        %5040 = vmatprep.subr.mxu0 0.0
        %v5041 = vand.u32 %v1270, 4294901760
        %v5042 = vsub.f32 %v1270, %v5041
        %5043 = vmatpush1.msra.mxu0 %v5042
        %5044 = vmatprep.subr.mxu0 0.0
        %v5045 = vand.u32 %v1263, 4294901760
        %v5046 = vsub.f32 %v1263, %v5045
        %5047 = vmatpush1.msra.mxu0 %v5046
        %5048 = vmatprep.subr.mxu0 0.0
        %v5049 = vand.u32 %v1256, 4294901760
        %v5050 = vsub.f32 %v1256, %v5049
        %5051 = vmatpush1.msra.mxu0 %v5050
        %5052 = vmatprep.subr.mxu0 0.0
        %v5053 = vand.u32 %v1249, 4294901760
        %v5054 = vsub.f32 %v1249, %v5053
        %5055 = vmatpush1.msra.mxu0 %v5054
        %5056 = vmatprep.subr.mxu0 0.0
        %v5057 = vand.u32 %v1242, 4294901760
        %v5058 = vsub.f32 %v1242, %v5057
        %5059 = vmatpush1.msra.mxu0 %v5058
        %5060 = vmatprep.subr.mxu0 0.0
        %v5061 = vand.u32 %v1235, 4294901760
        %v5062 = vsub.f32 %v1235, %v5061
        %5063 = vmatpush1.msra.mxu0 %v5062
        %5064 = vmatprep.subr.mxu0 0.0
        %v5065 = vand.u32 %v1228, 4294901760
        %v5066 = vsub.f32 %v1228, %v5065
        %5067 = vmatpush1.msra.mxu0 %v5066
        %5068 = vmatprep.subr.mxu0 0.0
        %5069 = vmatpush2.msra.mxu0 0.0
        %5070 = vmatprep.subr.mxu0 0.0
        %5071 = vmatpush2.msra.mxu0 0.0
        %5072 = vmatprep.subr.mxu0 0.0
        %5073 = vmatpush2.msra.mxu0 0.0
        %5074 = vmatprep.subr.mxu0 0.0
        %5075 = vmatpush2.msra.mxu0 0.0
        %5076 = vmatprep.subr.mxu0 0.0
        %5077 = vmatpush2.msra.mxu0 0.0
        %5078 = vmatprep.subr.mxu0 0.0
        %5079 = vmatpush2.msra.mxu0 0.0
        %5080 = vmatprep.subr.mxu0 0.0
        %5081 = vmatpush2.msra.mxu0 0.0
        %5082 = vmatprep.subr.mxu0 0.0
        %5083 = vmatpush2.msra.mxu0 0.0
        %5084 = vmatprep.subr.mxu0 0.0
        %5085 = vmatpush2.msra.mxu0 0.0
        %5086 = vmatprep.subr.mxu0 0.0
        %5087 = vmatpush2.msra.mxu0 0.0
        %5088 = vmatprep.subr.mxu0 0.0
        %5089 = vmatpush2.msra.mxu0 0.0
        %5090 = vmatprep.subr.mxu0 0.0
        %5091 = vmatpush2.msra.mxu0 0.0
        %5092 = vmatprep.subr.mxu0 0.0
        %5093 = vmatpush2.msra.mxu0 0.0
        %5094 = vmatprep.subr.mxu0 0.0
        %5095 = vmatpush2.msra.mxu0 0.0
        %5096 = vmatprep.subr.mxu0 0.0
        %v5097 = vand.u32 %v1347, 4294901760
        %v5098 = vsub.f32 %v1347, %v5097
        %5099 = vmatpush2.msra.mxu0 %v5098
        %5100 = vmatprep.subr.mxu0 0.0
        %v5101 = vand.u32 %v1340, 4294901760
        %v5102 = vsub.f32 %v1340, %v5101
        %5103 = vmatpush2.msra.mxu0 %v5102
        %v5104 = vand.u32 %v1349, 4294901760
        %v5105 = vsub.f32 %v1349, %v5104
        %5106 = vmatprep.mubr.f32.mxu0 %v5105
        %v5107 = vand.u32 %v1214, 4294901760
        %v5108 = vsub.f32 %v1214, %v5107
        %5109 = vmatmul.mubr.f32.gmra.mxu0 %v5108
        %v5110 = vpop.f32.mrf.mxu0
        %v5111 = vadd.f32 %v4980, %v5110
        %v5112 = vpop.f32.mrf.mxu0
        %v5113 = vand.u32 %v1352, 4294901760
        %v5114 = vsub.f32 %v1352, %v5113
        %5115 = vmatprep.mubr.f32.mxu0 %v5114
        %v5116 = vand.u32 %v1216, 4294901760
        %v5117 = vsub.f32 %v1216, %v5116
        %5118 = vmatmul.mubr.f32.gmra.mxu0 %v5117
        %v5119 = vpop.f32.mrf.mxu0
        %v5120 = vadd.f32 %v4987, %v5119
        %v5121 = vpop.f32.mrf.mxu0
        %v5122 = vand.u32 %v1355, 4294901760
        %v5123 = vsub.f32 %v1355, %v5122
        %5124 = vmatprep.mubr.f32.mxu0 %v5123
        %v5125 = vand.u32 %v1218, 4294901760
        %v5126 = vsub.f32 %v1218, %v5125
        %5127 = vmatmul.mubr.f32.gmra.mxu0 %v5126
        %v5128 = vpop.f32.mrf.mxu0
        %v5129 = vadd.f32 %v4994, %v5128
        %v5130 = vpop.f32.mrf.mxu0
        %v5131 = vand.u32 %v1358, 4294901760
        %v5132 = vsub.f32 %v1358, %v5131
        %5133 = vmatprep.mubr.f32.mxu0 %v5132
        %v5134 = vand.u32 %v1220, 4294901760
        %v5135 = vsub.f32 %v1220, %v5134
        %5136 = vmatmul.mubr.f32.gmra.mxu0 %v5135
        %v5137 = vpop.f32.mrf.mxu0
        %v5138 = vadd.f32 %v5001, %v5137
        %v5139 = vpop.f32.mrf.mxu0
        %5140 = vdwg.mxu0
        %5141 = vmatprep.subr.mxu0 0.0
        %v5142 = vand.u32 %v1333, 4294901760
        %5143 = vmatpush1.msra.mxu0 %v5142
        %5144 = vmatprep.subr.mxu0 0.0
        %v5145 = vand.u32 %v1326, 4294901760
        %5146 = vmatpush1.msra.mxu0 %v5145
        %5147 = vmatprep.subr.mxu0 0.0
        %v5148 = vand.u32 %v1319, 4294901760
        %5149 = vmatpush1.msra.mxu0 %v5148
        %5150 = vmatprep.subr.mxu0 0.0
        %v5151 = vand.u32 %v1312, 4294901760
        %5152 = vmatpush1.msra.mxu0 %v5151
        %5153 = vmatprep.subr.mxu0 0.0
        %v5154 = vand.u32 %v1305, 4294901760
        %5155 = vmatpush1.msra.mxu0 %v5154
        %5156 = vmatprep.subr.mxu0 0.0
        %v5157 = vand.u32 %v1298, 4294901760
        %5158 = vmatpush1.msra.mxu0 %v5157
        %5159 = vmatprep.subr.mxu0 0.0
        %v5160 = vand.u32 %v1291, 4294901760
        %5161 = vmatpush1.msra.mxu0 %v5160
        %5162 = vmatprep.subr.mxu0 0.0
        %v5163 = vand.u32 %v1284, 4294901760
        %5164 = vmatpush1.msra.mxu0 %v5163
        %5165 = vmatprep.subr.mxu0 0.0
        %v5166 = vand.u32 %v1277, 4294901760
        %5167 = vmatpush1.msra.mxu0 %v5166
        %5168 = vmatprep.subr.mxu0 0.0
        %v5169 = vand.u32 %v1270, 4294901760
        %5170 = vmatpush1.msra.mxu0 %v5169
        %5171 = vmatprep.subr.mxu0 0.0
        %v5172 = vand.u32 %v1263, 4294901760
        %5173 = vmatpush1.msra.mxu0 %v5172
        %5174 = vmatprep.subr.mxu0 0.0
        %v5175 = vand.u32 %v1256, 4294901760
        %5176 = vmatpush1.msra.mxu0 %v5175
        %5177 = vmatprep.subr.mxu0 0.0
        %v5178 = vand.u32 %v1249, 4294901760
        %5179 = vmatpush1.msra.mxu0 %v5178
        %5180 = vmatprep.subr.mxu0 0.0
        %v5181 = vand.u32 %v1242, 4294901760
        %5182 = vmatpush1.msra.mxu0 %v5181
        %5183 = vmatprep.subr.mxu0 0.0
        %v5184 = vand.u32 %v1235, 4294901760
        %5185 = vmatpush1.msra.mxu0 %v5184
        %5186 = vmatprep.subr.mxu0 0.0
        %v5187 = vand.u32 %v1228, 4294901760
        %5188 = vmatpush1.msra.mxu0 %v5187
        %5189 = vmatprep.subr.mxu0 0.0
        %5190 = vmatpush2.msra.mxu0 0.0
        %5191 = vmatprep.subr.mxu0 0.0
        %5192 = vmatpush2.msra.mxu0 0.0
        %5193 = vmatprep.subr.mxu0 0.0
        %5194 = vmatpush2.msra.mxu0 0.0
        %5195 = vmatprep.subr.mxu0 0.0
        %5196 = vmatpush2.msra.mxu0 0.0
        %5197 = vmatprep.subr.mxu0 0.0
        %5198 = vmatpush2.msra.mxu0 0.0
        %5199 = vmatprep.subr.mxu0 0.0
        %5200 = vmatpush2.msra.mxu0 0.0
        %5201 = vmatprep.subr.mxu0 0.0
        %5202 = vmatpush2.msra.mxu0 0.0
        %5203 = vmatprep.subr.mxu0 0.0
        %5204 = vmatpush2.msra.mxu0 0.0
        %5205 = vmatprep.subr.mxu0 0.0
        %5206 = vmatpush2.msra.mxu0 0.0
        %5207 = vmatprep.subr.mxu0 0.0
        %5208 = vmatpush2.msra.mxu0 0.0
        %5209 = vmatprep.subr.mxu0 0.0
        %5210 = vmatpush2.msra.mxu0 0.0
        %5211 = vmatprep.subr.mxu0 0.0
        %5212 = vmatpush2.msra.mxu0 0.0
        %5213 = vmatprep.subr.mxu0 0.0
        %5214 = vmatpush2.msra.mxu0 0.0
        %5215 = vmatprep.subr.mxu0 0.0
        %5216 = vmatpush2.msra.mxu0 0.0
        %5217 = vmatprep.subr.mxu0 0.0
        %v5218 = vand.u32 %v1347, 4294901760
        %5219 = vmatpush2.msra.mxu0 %v5218
        %5220 = vmatprep.subr.mxu0 0.0
        %v5221 = vand.u32 %v1340, 4294901760
        %5222 = vmatpush2.msra.mxu0 %v5221
        %v5223 = vand.u32 %v1349, 4294901760
        %v5224 = vsub.f32 %v1349, %v5223
        %v5225 = vand.u32 %v5224, 4294901760
        %5226 = vmatprep.mubr.f32.mxu0 %v5225
        %v5227 = vand.u32 %v1214, 4294901760
        %v5228 = vsub.f32 %v1214, %v5227
        %v5229 = vand.u32 %v5228, 4294901760
        %5230 = vmatmul.mubr.f32.gmra.mxu0 %v5229
        %v5231 = vpop.f32.mrf.mxu0
        %v5232 = vadd.f32 %v5111, %v5231
        %v5233 = vpop.f32.mrf.mxu0
        %v5234 = vand.u32 %v1352, 4294901760
        %v5235 = vsub.f32 %v1352, %v5234
        %v5236 = vand.u32 %v5235, 4294901760
        %5237 = vmatprep.mubr.f32.mxu0 %v5236
        %v5238 = vand.u32 %v1216, 4294901760
        %v5239 = vsub.f32 %v1216, %v5238
        %v5240 = vand.u32 %v5239, 4294901760
        %5241 = vmatmul.mubr.f32.gmra.mxu0 %v5240
        %v5242 = vpop.f32.mrf.mxu0
        %v5243 = vadd.f32 %v5120, %v5242
        %v5244 = vpop.f32.mrf.mxu0
        %v5245 = vand.u32 %v1355, 4294901760
        %v5246 = vsub.f32 %v1355, %v5245
        %v5247 = vand.u32 %v5246, 4294901760
        %5248 = vmatprep.mubr.f32.mxu0 %v5247
        %v5249 = vand.u32 %v1218, 4294901760
        %v5250 = vsub.f32 %v1218, %v5249
        %v5251 = vand.u32 %v5250, 4294901760
        %5252 = vmatmul.mubr.f32.gmra.mxu0 %v5251
        %v5253 = vpop.f32.mrf.mxu0
        %v5254 = vadd.f32 %v5129, %v5253
        %v5255 = vpop.f32.mrf.mxu0
        %v5256 = vand.u32 %v1358, 4294901760
        %v5257 = vsub.f32 %v1358, %v5256
        %v5258 = vand.u32 %v5257, 4294901760
        %5259 = vmatprep.mubr.f32.mxu0 %v5258
        %v5260 = vand.u32 %v1220, 4294901760
        %v5261 = vsub.f32 %v1220, %v5260
        %v5262 = vand.u32 %v5261, 4294901760
        %5263 = vmatmul.mubr.f32.gmra.mxu0 %v5262
        %v5264 = vpop.f32.mrf.mxu0
        %v5265 = vadd.f32 %v5138, %v5264
        %v5266 = vpop.f32.mrf.mxu0
        %5267 = vdwg.mxu0
        %5268 = vmatprep.subr.mxu0 0.0
        %v5269 = vand.u32 %v1333, 4294901760
        %v5270 = vsub.f32 %v1333, %v5269
        %v5271 = vand.u32 %v5270, 4294901760
        %5272 = vmatpush1.msra.mxu0 %v5271
        %5273 = vmatprep.subr.mxu0 0.0
        %v5274 = vand.u32 %v1326, 4294901760
        %v5275 = vsub.f32 %v1326, %v5274
        %v5276 = vand.u32 %v5275, 4294901760
        %5277 = vmatpush1.msra.mxu0 %v5276
        %5278 = vmatprep.subr.mxu0 0.0
        %v5279 = vand.u32 %v1319, 4294901760
        %v5280 = vsub.f32 %v1319, %v5279
        %v5281 = vand.u32 %v5280, 4294901760
        %5282 = vmatpush1.msra.mxu0 %v5281
        %5283 = vmatprep.subr.mxu0 0.0
        %v5284 = vand.u32 %v1312, 4294901760
        %v5285 = vsub.f32 %v1312, %v5284
        %v5286 = vand.u32 %v5285, 4294901760
        %5287 = vmatpush1.msra.mxu0 %v5286
        %5288 = vmatprep.subr.mxu0 0.0
        %v5289 = vand.u32 %v1305, 4294901760
        %v5290 = vsub.f32 %v1305, %v5289
        %v5291 = vand.u32 %v5290, 4294901760
        %5292 = vmatpush1.msra.mxu0 %v5291
        %5293 = vmatprep.subr.mxu0 0.0
        %v5294 = vand.u32 %v1298, 4294901760
        %v5295 = vsub.f32 %v1298, %v5294
        %v5296 = vand.u32 %v5295, 4294901760
        %5297 = vmatpush1.msra.mxu0 %v5296
        %5298 = vmatprep.subr.mxu0 0.0
        %v5299 = vand.u32 %v1291, 4294901760
        %v5300 = vsub.f32 %v1291, %v5299
        %v5301 = vand.u32 %v5300, 4294901760
        %5302 = vmatpush1.msra.mxu0 %v5301
        %5303 = vmatprep.subr.mxu0 0.0
        %v5304 = vand.u32 %v1284, 4294901760
        %v5305 = vsub.f32 %v1284, %v5304
        %v5306 = vand.u32 %v5305, 4294901760
        %5307 = vmatpush1.msra.mxu0 %v5306
        %5308 = vmatprep.subr.mxu0 0.0
        %v5309 = vand.u32 %v1277, 4294901760
        %v5310 = vsub.f32 %v1277, %v5309
        %v5311 = vand.u32 %v5310, 4294901760
        %5312 = vmatpush1.msra.mxu0 %v5311
        %5313 = vmatprep.subr.mxu0 0.0
        %v5314 = vand.u32 %v1270, 4294901760
        %v5315 = vsub.f32 %v1270, %v5314
        %v5316 = vand.u32 %v5315, 4294901760
        %5317 = vmatpush1.msra.mxu0 %v5316
        %5318 = vmatprep.subr.mxu0 0.0
        %v5319 = vand.u32 %v1263, 4294901760
        %v5320 = vsub.f32 %v1263, %v5319
        %v5321 = vand.u32 %v5320, 4294901760
        %5322 = vmatpush1.msra.mxu0 %v5321
        %5323 = vmatprep.subr.mxu0 0.0
        %v5324 = vand.u32 %v1256, 4294901760
        %v5325 = vsub.f32 %v1256, %v5324
        %v5326 = vand.u32 %v5325, 4294901760
        %5327 = vmatpush1.msra.mxu0 %v5326
        %5328 = vmatprep.subr.mxu0 0.0
        %v5329 = vand.u32 %v1249, 4294901760
        %v5330 = vsub.f32 %v1249, %v5329
        %v5331 = vand.u32 %v5330, 4294901760
        %5332 = vmatpush1.msra.mxu0 %v5331
        %5333 = vmatprep.subr.mxu0 0.0
        %v5334 = vand.u32 %v1242, 4294901760
        %v5335 = vsub.f32 %v1242, %v5334
        %v5336 = vand.u32 %v5335, 4294901760
        %5337 = vmatpush1.msra.mxu0 %v5336
        %5338 = vmatprep.subr.mxu0 0.0
        %v5339 = vand.u32 %v1235, 4294901760
        %v5340 = vsub.f32 %v1235, %v5339
        %v5341 = vand.u32 %v5340, 4294901760
        %5342 = vmatpush1.msra.mxu0 %v5341
        %5343 = vmatprep.subr.mxu0 0.0
        %v5344 = vand.u32 %v1228, 4294901760
        %v5345 = vsub.f32 %v1228, %v5344
        %v5346 = vand.u32 %v5345, 4294901760
        %5347 = vmatpush1.msra.mxu0 %v5346
        %5348 = vmatprep.subr.mxu0 0.0
        %5349 = vmatpush2.msra.mxu0 0.0
        %5350 = vmatprep.subr.mxu0 0.0
        %5351 = vmatpush2.msra.mxu0 0.0
        %5352 = vmatprep.subr.mxu0 0.0
        %5353 = vmatpush2.msra.mxu0 0.0
        %5354 = vmatprep.subr.mxu0 0.0
        %5355 = vmatpush2.msra.mxu0 0.0
        %5356 = vmatprep.subr.mxu0 0.0
        %5357 = vmatpush2.msra.mxu0 0.0
        %5358 = vmatprep.subr.mxu0 0.0
        %5359 = vmatpush2.msra.mxu0 0.0
        %5360 = vmatprep.subr.mxu0 0.0
        %5361 = vmatpush2.msra.mxu0 0.0
        %5362 = vmatprep.subr.mxu0 0.0
        %5363 = vmatpush2.msra.mxu0 0.0
        %5364 = vmatprep.subr.mxu0 0.0
        %5365 = vmatpush2.msra.mxu0 0.0
        %5366 = vmatprep.subr.mxu0 0.0
        %5367 = vmatpush2.msra.mxu0 0.0
        %5368 = vmatprep.subr.mxu0 0.0
        %5369 = vmatpush2.msra.mxu0 0.0
        %5370 = vmatprep.subr.mxu0 0.0
        %5371 = vmatpush2.msra.mxu0 0.0
        %5372 = vmatprep.subr.mxu0 0.0
        %5373 = vmatpush2.msra.mxu0 0.0
        %5374 = vmatprep.subr.mxu0 0.0
        %5375 = vmatpush2.msra.mxu0 0.0
        %5376 = vmatprep.subr.mxu0 0.0
        %v5377 = vand.u32 %v1347, 4294901760
        %v5378 = vsub.f32 %v1347, %v5377
        %v5379 = vand.u32 %v5378, 4294901760
        %5380 = vmatpush2.msra.mxu0 %v5379
        %5381 = vmatprep.subr.mxu0 0.0
        %v5382 = vand.u32 %v1340, 4294901760
        %v5383 = vsub.f32 %v1340, %v5382
        %v5384 = vand.u32 %v5383, 4294901760
        %5385 = vmatpush2.msra.mxu0 %v5384
        %v5386 = vand.u32 %v1349, 4294901760
        %5387 = vmatprep.mubr.f32.mxu0 %v5386
        %v5388 = vand.u32 %v1214, 4294901760
        %5389 = vmatmul.mubr.f32.gmra.mxu0 %v5388
        %v5390 = vpop.f32.mrf.mxu0
        %v5391 = vadd.f32 %v5232, %v5390
        %v5392 = vpop.f32.mrf.mxu0
        %v5393 = vand.u32 %v1352, 4294901760
        %5394 = vmatprep.mubr.f32.mxu0 %v5393
        %v5395 = vand.u32 %v1216, 4294901760
        %5396 = vmatmul.mubr.f32.gmra.mxu0 %v5395
        %v5397 = vpop.f32.mrf.mxu0
        %v5398 = vadd.f32 %v5243, %v5397
        %v5399 = vpop.f32.mrf.mxu0
        %v5400 = vand.u32 %v1355, 4294901760
        %5401 = vmatprep.mubr.f32.mxu0 %v5400
        %v5402 = vand.u32 %v1218, 4294901760
        %5403 = vmatmul.mubr.f32.gmra.mxu0 %v5402
        %v5404 = vpop.f32.mrf.mxu0
        %v5405 = vadd.f32 %v5254, %v5404
        %v5406 = vpop.f32.mrf.mxu0
        %v5407 = vand.u32 %v1358, 4294901760
        %5408 = vmatprep.mubr.f32.mxu0 %v5407
        %v5409 = vand.u32 %v1220, 4294901760
        %5410 = vmatmul.mubr.f32.gmra.mxu0 %v5409
        %v5411 = vpop.f32.mrf.mxu0
        %v5412 = vadd.f32 %v5265, %v5411
        %v5413 = vpop.f32.mrf.mxu0
        %5414 = vdwg.mxu0
        %5415 = vmatprep.subr.mxu0 0.0
        %v5416 = vand.u32 %v1333, 4294901760
        %5417 = vmatpush1.msra.mxu0 %v5416
        %5418 = vmatprep.subr.mxu0 0.0
        %v5419 = vand.u32 %v1326, 4294901760
        %5420 = vmatpush1.msra.mxu0 %v5419
        %5421 = vmatprep.subr.mxu0 0.0
        %v5422 = vand.u32 %v1319, 4294901760
        %5423 = vmatpush1.msra.mxu0 %v5422
        %5424 = vmatprep.subr.mxu0 0.0
        %v5425 = vand.u32 %v1312, 4294901760
        %5426 = vmatpush1.msra.mxu0 %v5425
        %5427 = vmatprep.subr.mxu0 0.0
        %v5428 = vand.u32 %v1305, 4294901760
        %5429 = vmatpush1.msra.mxu0 %v5428
        %5430 = vmatprep.subr.mxu0 0.0
        %v5431 = vand.u32 %v1298, 4294901760
        %5432 = vmatpush1.msra.mxu0 %v5431
        %5433 = vmatprep.subr.mxu0 0.0
        %v5434 = vand.u32 %v1291, 4294901760
        %5435 = vmatpush1.msra.mxu0 %v5434
        %5436 = vmatprep.subr.mxu0 0.0
        %v5437 = vand.u32 %v1284, 4294901760
        %5438 = vmatpush1.msra.mxu0 %v5437
        %5439 = vmatprep.subr.mxu0 0.0
        %v5440 = vand.u32 %v1277, 4294901760
        %5441 = vmatpush1.msra.mxu0 %v5440
        %5442 = vmatprep.subr.mxu0 0.0
        %v5443 = vand.u32 %v1270, 4294901760
        %5444 = vmatpush1.msra.mxu0 %v5443
        %5445 = vmatprep.subr.mxu0 0.0
        %v5446 = vand.u32 %v1263, 4294901760
        %5447 = vmatpush1.msra.mxu0 %v5446
        %5448 = vmatprep.subr.mxu0 0.0
        %v5449 = vand.u32 %v1256, 4294901760
        %5450 = vmatpush1.msra.mxu0 %v5449
        %5451 = vmatprep.subr.mxu0 0.0
        %v5452 = vand.u32 %v1249, 4294901760
        %5453 = vmatpush1.msra.mxu0 %v5452
        %5454 = vmatprep.subr.mxu0 0.0
        %v5455 = vand.u32 %v1242, 4294901760
        %5456 = vmatpush1.msra.mxu0 %v5455
        %5457 = vmatprep.subr.mxu0 0.0
        %v5458 = vand.u32 %v1235, 4294901760
        %5459 = vmatpush1.msra.mxu0 %v5458
        %5460 = vmatprep.subr.mxu0 0.0
        %v5461 = vand.u32 %v1228, 4294901760
        %5462 = vmatpush1.msra.mxu0 %v5461
        %5463 = vmatprep.subr.mxu0 0.0
        %5464 = vmatpush2.msra.mxu0 0.0
        %5465 = vmatprep.subr.mxu0 0.0
        %5466 = vmatpush2.msra.mxu0 0.0
        %5467 = vmatprep.subr.mxu0 0.0
        %5468 = vmatpush2.msra.mxu0 0.0
        %5469 = vmatprep.subr.mxu0 0.0
        %5470 = vmatpush2.msra.mxu0 0.0
        %5471 = vmatprep.subr.mxu0 0.0
        %5472 = vmatpush2.msra.mxu0 0.0
        %5473 = vmatprep.subr.mxu0 0.0
        %5474 = vmatpush2.msra.mxu0 0.0
        %5475 = vmatprep.subr.mxu0 0.0
        %5476 = vmatpush2.msra.mxu0 0.0
        %5477 = vmatprep.subr.mxu0 0.0
        %5478 = vmatpush2.msra.mxu0 0.0
        %5479 = vmatprep.subr.mxu0 0.0
        %5480 = vmatpush2.msra.mxu0 0.0
        %5481 = vmatprep.subr.mxu0 0.0
        %5482 = vmatpush2.msra.mxu0 0.0
        %5483 = vmatprep.subr.mxu0 0.0
        %5484 = vmatpush2.msra.mxu0 0.0
        %5485 = vmatprep.subr.mxu0 0.0
        %5486 = vmatpush2.msra.mxu0 0.0
        %5487 = vmatprep.subr.mxu0 0.0
        %5488 = vmatpush2.msra.mxu0 0.0
        %5489 = vmatprep.subr.mxu0 0.0
        %5490 = vmatpush2.msra.mxu0 0.0
        %5491 = vmatprep.subr.mxu0 0.0
        %v5492 = vand.u32 %v1347, 4294901760
        %5493 = vmatpush2.msra.mxu0 %v5492
        %5494 = vmatprep.subr.mxu0 0.0
        %v5495 = vand.u32 %v1340, 4294901760
        %5496 = vmatpush2.msra.mxu0 %v5495
        %v5497 = vand.u32 %v1349, 4294901760
        %5498 = vmatprep.mubr.f32.mxu0 %v5497
        %v5499 = vand.u32 %v1214, 4294901760
        %5500 = vmatmul.mubr.f32.gmra.mxu0 %v5499
        %v5501 = vpop.f32.mrf.mxu0
        %v5502 = vadd.f32 %v5391, %v5501
        %v5503 = vpop.f32.mrf.mxu0
        %v5504 = vand.u32 %v1352, 4294901760
        %5505 = vmatprep.mubr.f32.mxu0 %v5504
        %v5506 = vand.u32 %v1216, 4294901760
        %5507 = vmatmul.mubr.f32.gmra.mxu0 %v5506
        %v5508 = vpop.f32.mrf.mxu0
        %v5509 = vadd.f32 %v5398, %v5508
        %v5510 = vpop.f32.mrf.mxu0
        %v5511 = vand.u32 %v1355, 4294901760
        %5512 = vmatprep.mubr.f32.mxu0 %v5511
        %v5513 = vand.u32 %v1218, 4294901760
        %5514 = vmatmul.mubr.f32.gmra.mxu0 %v5513
        %v5515 = vpop.f32.mrf.mxu0
        %v5516 = vadd.f32 %v5405, %v5515
        %v5517 = vpop.f32.mrf.mxu0
        %v5518 = vand.u32 %v1358, 4294901760
        %5519 = vmatprep.mubr.f32.mxu0 %v5518
        %v5520 = vand.u32 %v1220, 4294901760
        %5521 = vmatmul.mubr.f32.gmra.mxu0 %v5520
        %v5522 = vpop.f32.mrf.mxu0
        %v5523 = vadd.f32 %v5412, %v5522
        %v5524 = vpop.f32.mrf.mxu0
        %5525 = vdwg.mxu0
        %5526 = vst [vmem:[%s200] sm:$0xff] %v2438
        %5527 = vst [vmem:[%s200 + $0x8] sm:$0xff] %v2440
        %5528 = vst [vmem:[%s200 + $0x10] sm:$0xff] %v3544
        %5529 = vst [vmem:[%s200 + $0x18] sm:$0xff] %v3546
        %5530 = vst [vmem:[%s200 + $0x20] sm:$0xff] %v4650
        %5531 = vst [vmem:[%s200 + $0x28] sm:$0xff] %v4652
        %5532 = vst [vmem:[%s200 + $0x30] sm:$0xff] %v5502
        %5533 = vst [vmem:[%s200 + $0x38] sm:$0xff] %v2446
        %5534 = vst [vmem:[%s200 + $0x40] sm:$0xff] %v2448
        %5535 = vst [vmem:[%s200 + $0x48] sm:$0xff] %v3552
        %5536 = vst [vmem:[%s200 + $0x50] sm:$0xff] %v3554
        %5537 = vst [vmem:[%s200 + $0x58] sm:$0xff] %v4658
        %5538 = vst [vmem:[%s200 + $0x60] sm:$0xff] %v4660
        %5539 = vst [vmem:[%s200 + $0x68] sm:$0xff] %v5509
        %5540 = vst [vmem:[%s200 + $0x70] sm:$0xff] %v2454
        %5541 = vst [vmem:[%s200 + $0x78] sm:$0xff] %v2456
        %5542 = vst [vmem:[%s200 + $0x80] sm:$0xff] %v3560
        %5543 = vst [vmem:[%s200 + $0x88] sm:$0xff] %v3562
        %5544 = vst [vmem:[%s200 + $0x90] sm:$0xff] %v4666
        %5545 = vst [vmem:[%s200 + $0x98] sm:$0xff] %v4668
        %5546 = vst [vmem:[%s200 + $0xa0] sm:$0xff] %v5516
        %5547 = vst [vmem:[%s200 + $0xa8] sm:$0xff] %v2462
        %5548 = vst [vmem:[%s200 + $0xb0] sm:$0xff] %v2464
        %5549 = vst [vmem:[%s200 + $0xb8] sm:$0xff] %v3568
        %5550 = vst [vmem:[%s200 + $0xc0] sm:$0xff] %v3570
        %5551 = vst [vmem:[%s200 + $0xc8] sm:$0xff] %v4674
        %5552 = vst [vmem:[%s200 + $0xd0] sm:$0xff] %v4676
        %5553 = vst [vmem:[%s200 + $0xd8] sm:$0xff] %v5523
        %v5554 = vld [vmem:[#allocation5] sm:$0xff]
        %v5555 = vld [vmem:[#allocation5 + $0x8] sm:$0xff]
        %v5556 = vld [vmem:[#allocation5 + $0x10] sm:$0xff]
        %v5557 = vld [vmem:[#allocation5 + $0x18] sm:$0xff]
        %v5558 = vld [vmem:[#allocation5 + $0x20] sm:$0xff]
        %v5559 = vld [vmem:[#allocation5 + $0x28] sm:$0xff]
        %v5560 = vld [vmem:[#allocation5 + $0x30] sm:$0xff]
        %v5561 = vld [vmem:[#allocation5 + $0x38] sm:$0xff]
        %v5562 = vld [vmem:[#allocation2 + $0x1f8] sm:$0xff]
        %v5563 = vld [vmem:[#allocation2 + $0x200] sm:$0xff]
        %v5564 = vld [vmem:[#allocation2 + $0x208] sm:$0xff]
        %v5565 = vld [vmem:[#allocation2 + $0x210] sm:$0xff]
        %v5566 = vld [vmem:[#allocation2 + $0x218] sm:$0xff]
        %v5567 = vld [vmem:[#allocation2 + $0x220] sm:$0xff]
        %v5568 = vld [vmem:[#allocation2 + $0x228] sm:$0xff]
        %v5569 = vld [vmem:[#allocation2 + $0x230] sm:$0xff]
        %v5570 = vld [vmem:[#allocation2 + $0x238] sm:$0xff]
        %v5571 = vld [vmem:[#allocation2 + $0x240] sm:$0xff]
        %v5572 = vld [vmem:[#allocation2 + $0x248] sm:$0xff]
        %v5573 = vld [vmem:[#allocation2 + $0x250] sm:$0xff]
        %v5574 = vld [vmem:[#allocation2 + $0x258] sm:$0xff]
        %v5575 = vld [vmem:[#allocation2 + $0x260] sm:$0xff]
        %v5576 = vld [vmem:[#allocation2 + $0x268] sm:$0xff]
        %v5577 = vld [vmem:[#allocation2 + $0x270] sm:$0xff]
        %v5578 = vld [vmem:[#allocation2 + $0x278] sm:$0xff]
        %v5579 = vld [vmem:[#allocation2 + $0x280] sm:$0xff]
        %v5580 = vld [vmem:[#allocation2 + $0x288] sm:$0xff]
        %v5581 = vld [vmem:[#allocation2 + $0x290] sm:$0xff]
        %v5582 = vld [vmem:[#allocation2 + $0x298] sm:$0xff]
        %v5583 = vld [vmem:[#allocation2 + $0x2a0] sm:$0xff]
        %v5584 = vld [vmem:[#allocation2 + $0x2a8] sm:$0xff]
        %v5585 = vld [vmem:[#allocation2 + $0x2b0] sm:$0xff]
        %v5586 = vld [vmem:[#allocation2 + $0x2b8] sm:$0xff]
        %v5587 = vld [vmem:[#allocation2 + $0x2c0] sm:$0xff]
        %v5588 = vld [vmem:[#allocation2 + $0x2c8] sm:$0xff]
        %v5589 = vld [vmem:[#allocation2 + $0x2d0] sm:$0xff]
        %v5590 = vld [vmem:[#allocation2 + $0x2d8] sm:$0xff]
        %v5591 = vld [vmem:[#allocation2 + $0x2e0] sm:$0xff]
        %v5592 = vld [vmem:[#allocation2 + $0x2e8] sm:$0xff]
        %v5593 = vld [vmem:[#allocation2 + $0x2f0] sm:$0xff]
        %v5594 = vld [vmem:[#allocation2 + $0x2f8] sm:$0xff]
        %v5595 = vld [vmem:[#allocation2 + $0x300] sm:$0xff]
        %v5596 = vld [vmem:[#allocation2 + $0x308] sm:$0xff]
        %v5597 = vld [vmem:[#allocation2 + $0x310] sm:$0xff]
        %v5598 = vld [vmem:[#allocation2 + $0x318] sm:$0xff]
        %v5599 = vld [vmem:[#allocation2 + $0x320] sm:$0xff]
        %v5600 = vld [vmem:[#allocation2 + $0x328] sm:$0xff]
        %v5601 = vld [vmem:[#allocation2 + $0x330] sm:$0xff]
        %v5602 = vld [vmem:[#allocation2 + $0x338] sm:$0xff]
        %v5603 = vld [vmem:[#allocation2 + $0x340] sm:$0xff]
        %v5604 = vld [vmem:[#allocation2 + $0x348] sm:$0xff]
        %v5605 = vld [vmem:[#allocation2 + $0x350] sm:$0xff]
        %v5606 = vld [vmem:[#allocation2 + $0x358] sm:$0xff]
        %v5607 = vld [vmem:[#allocation2 + $0x360] sm:$0xff]
        %v5608 = vld [vmem:[#allocation2 + $0x368] sm:$0xff]
        %v5609 = vld [vmem:[#allocation2 + $0x370] sm:$0xff]
        %v5610 = vld [vmem:[#allocation2 + $0x378] sm:$0xff]
        %v5611 = vld [vmem:[#allocation2 + $0x380] sm:$0xff]
        %v5612 = vld [vmem:[#allocation2 + $0x388] sm:$0xff]
        %v5613 = vld [vmem:[#allocation2 + $0x390] sm:$0xff]
        %v5614 = vld [vmem:[#allocation2 + $0x398] sm:$0xff]
        %v5615 = vld [vmem:[#allocation2 + $0x3a0] sm:$0xff]
        %v5616 = vld [vmem:[#allocation2 + $0x3a8] sm:$0xff]
        %v5617 = vld [vmem:[#allocation2 + $0x3b0] sm:$0xff]
        %v5618 = vld [vmem:[#allocation2 + $0x3b8] sm:$0xff]
        %v5619 = vld [vmem:[#allocation2 + $0x3c0] sm:$0xff]
        %v5620 = vld [vmem:[#allocation2 + $0x3c8] sm:$0xff]
        %v5621 = vld [vmem:[#allocation2 + $0x3d0] sm:$0xff]
        %v5622 = vld [vmem:[#allocation2 + $0x3d8] sm:$0xff]
        %v5623 = vld [vmem:[#allocation2 + $0x3e0] sm:$0xff]
        %v5624 = vld [vmem:[#allocation2 + $0x3e8] sm:$0xff]
        %v5625 = vld [vmem:[#allocation2 + $0x3f0] sm:$0xff]
        %v5626 = vld [vmem:[#allocation2 + $0x3f8] sm:$0xff]
        %v5627 = vld [vmem:[#allocation2 + $0x400] sm:$0xff]
        %v5628 = vld [vmem:[#allocation2 + $0x408] sm:$0xff]
        %v5629 = vld [vmem:[#allocation2 + $0x410] sm:$0xff]
        %v5630 = vld [vmem:[#allocation2 + $0x418] sm:$0xff]
        %v5631 = vld [vmem:[#allocation2 + $0x420] sm:$0xff]
        %v5632 = vld [vmem:[#allocation2 + $0x428] sm:$0xff]
        %v5633 = vld [vmem:[#allocation2 + $0x430] sm:$0xff]
        %v5634 = vld [vmem:[#allocation2 + $0x438] sm:$0xff]
        %v5635 = vld [vmem:[#allocation2 + $0x440] sm:$0xff]
        %v5636 = vld [vmem:[#allocation2 + $0x448] sm:$0xff]
        %v5637 = vld [vmem:[#allocation2 + $0x450] sm:$0xff]
        %v5638 = vld [vmem:[#allocation2 + $0x458] sm:$0xff]
        %v5639 = vld [vmem:[#allocation2 + $0x460] sm:$0xff]
        %v5640 = vld [vmem:[#allocation2 + $0x468] sm:$0xff]
        %v5641 = vld [vmem:[#allocation2 + $0x470] sm:$0xff]
        %v5642 = vld [vmem:[#allocation2 + $0x478] sm:$0xff]
        %v5643 = vld [vmem:[#allocation2 + $0x480] sm:$0xff]
        %v5644 = vld [vmem:[#allocation2 + $0x488] sm:$0xff]
        %v5645 = vld [vmem:[#allocation2 + $0x490] sm:$0xff]
        %v5646 = vld [vmem:[#allocation2 + $0x498] sm:$0xff]
        %v5647 = vld [vmem:[#allocation2 + $0x4a0] sm:$0xff]
        %v5648 = vld [vmem:[#allocation2 + $0x4a8] sm:$0xff]
        %v5649 = vld [vmem:[#allocation2 + $0x4b0] sm:$0xff]
        %v5650 = vld [vmem:[#allocation2 + $0x4b8] sm:$0xff]
        %v5651 = vld [vmem:[#allocation2 + $0x4c0] sm:$0xff]
        %v5652 = vld [vmem:[#allocation2 + $0x4c8] sm:$0xff]
        %v5653 = vld [vmem:[#allocation2 + $0x4d0] sm:$0xff]
        %v5654 = vld [vmem:[#allocation2 + $0x4d8] sm:$0xff]
        %v5655 = vld [vmem:[#allocation2 + $0x4e0] sm:$0xff]
        %v5656 = vld [vmem:[#allocation2 + $0x4e8] sm:$0xff]
        %v5657 = vld [vmem:[#allocation2 + $0x4f0] sm:$0xff]
        %v5658 = vld [vmem:[#allocation2 + $0x4f8] sm:$0xff]
        %v5659 = vld [vmem:[#allocation2 + $0x500] sm:$0xff]
        %v5660 = vld [vmem:[#allocation2 + $0x508] sm:$0xff]
        %v5661 = vld [vmem:[#allocation2 + $0x510] sm:$0xff]
        %v5662 = vld [vmem:[#allocation2 + $0x518] sm:$0xff]
        %v5663 = vld [vmem:[#allocation2 + $0x520] sm:$0xff]
        %v5664 = vld [vmem:[#allocation2 + $0x528] sm:$0xff]
        %v5665 = vld [vmem:[#allocation2 + $0x530] sm:$0xff]
        %v5666 = vld [vmem:[#allocation2 + $0x538] sm:$0xff]
        %v5667 = vld [vmem:[#allocation2 + $0x540] sm:$0xff]
        %v5668 = vld [vmem:[#allocation2 + $0x548] sm:$0xff]
        %v5669 = vld [vmem:[#allocation2 + $0x550] sm:$0xff]
        %v5670 = vld [vmem:[#allocation2 + $0x558] sm:$0xff]
        %v5671 = vld [vmem:[#allocation2 + $0x560] sm:$0xff]
        %v5672 = vld [vmem:[#allocation2 + $0x568] sm:$0xff]
        %v5673 = vld [vmem:[#allocation2 + $0x570] sm:$0xff]
        %v5674 = vld [vmem:[#allocation2 + $0x578] sm:$0xff]
        %v5675 = vld [vmem:[#allocation2 + $0x580] sm:$0xff]
        %v5676 = vld [vmem:[#allocation2 + $0x588] sm:$0xff]
        %v5677 = vld [vmem:[#allocation2 + $0x590] sm:$0xff]
        %v5678 = vld [vmem:[#allocation2 + $0x598] sm:$0xff]
        %v5679 = vld [vmem:[#allocation2 + $0x5a0] sm:$0xff]
        %v5680 = vld [vmem:[#allocation2 + $0x5a8] sm:$0xff]
        %v5681 = vld [vmem:[#allocation2 + $0x5b0] sm:$0xff]
        %v5682 = vld [vmem:[#allocation2 + $0x5b8] sm:$0xff]
        %v5683 = vld [vmem:[#allocation2 + $0x5c0] sm:$0xff]
        %v5684 = vld [vmem:[#allocation2 + $0x5c8] sm:$0xff]
        %v5685 = vld [vmem:[#allocation2 + $0x5d0] sm:$0xff]
        %v5686 = vld [vmem:[#allocation2 + $0x5d8] sm:$0xff]
        %v5687 = vld [vmem:[#allocation2 + $0x5e0] sm:$0xff]
        %v5689 = vsel %vm735, %v5555, 0
        %v5692 = vsel %vm735, %v5557, 0
        %v5695 = vsel %vm735, %v5559, 0
        %v5698 = vsel %vm735, %v5561, 0
        %v5700 = vand.u32 %v5668, 4294901760
        %5701 = vmatprep.subr.mxu0 %v5700
        %v5702 = vand.u32 %v5667, 4294901760
        %5703 = vmatpush1.msra.mxu0 %v5702
        %v5704 = vand.u32 %v5661, 4294901760
        %5705 = vmatprep.subr.mxu0 %v5704
        %v5706 = vand.u32 %v5660, 4294901760
        %5707 = vmatpush1.msra.mxu0 %v5706
        %v5708 = vand.u32 %v5654, 4294901760
        %5709 = vmatprep.subr.mxu0 %v5708
        %v5710 = vand.u32 %v5653, 4294901760
        %5711 = vmatpush1.msra.mxu0 %v5710
        %v5712 = vand.u32 %v5647, 4294901760
        %5713 = vmatprep.subr.mxu0 %v5712
        %v5714 = vand.u32 %v5646, 4294901760
        %5715 = vmatpush1.msra.mxu0 %v5714
        %v5716 = vand.u32 %v5640, 4294901760
        %5717 = vmatprep.subr.mxu0 %v5716
        %v5718 = vand.u32 %v5639, 4294901760
        %5719 = vmatpush1.msra.mxu0 %v5718
        %v5720 = vand.u32 %v5633, 4294901760
        %5721 = vmatprep.subr.mxu0 %v5720
        %v5722 = vand.u32 %v5632, 4294901760
        %5723 = vmatpush1.msra.mxu0 %v5722
        %v5724 = vand.u32 %v5626, 4294901760
        %5725 = vmatprep.subr.mxu0 %v5724
        %v5726 = vand.u32 %v5625, 4294901760
        %5727 = vmatpush1.msra.mxu0 %v5726
        %v5728 = vand.u32 %v5619, 4294901760
        %5729 = vmatprep.subr.mxu0 %v5728
        %v5730 = vand.u32 %v5618, 4294901760
        %5731 = vmatpush1.msra.mxu0 %v5730
        %v5732 = vand.u32 %v5612, 4294901760
        %5733 = vmatprep.subr.mxu0 %v5732
        %v5734 = vand.u32 %v5611, 4294901760
        %5735 = vmatpush1.msra.mxu0 %v5734
        %v5736 = vand.u32 %v5605, 4294901760
        %5737 = vmatprep.subr.mxu0 %v5736
        %v5738 = vand.u32 %v5604, 4294901760
        %5739 = vmatpush1.msra.mxu0 %v5738
        %v5740 = vand.u32 %v5598, 4294901760
        %5741 = vmatprep.subr.mxu0 %v5740
        %v5742 = vand.u32 %v5597, 4294901760
        %5743 = vmatpush1.msra.mxu0 %v5742
        %v5744 = vand.u32 %v5591, 4294901760
        %5745 = vmatprep.subr.mxu0 %v5744
        %v5746 = vand.u32 %v5590, 4294901760
        %5747 = vmatpush1.msra.mxu0 %v5746
        %v5748 = vand.u32 %v5584, 4294901760
        %5749 = vmatprep.subr.mxu0 %v5748
        %v5750 = vand.u32 %v5583, 4294901760
        %5751 = vmatpush1.msra.mxu0 %v5750
        %v5752 = vand.u32 %v5577, 4294901760
        %5753 = vmatprep.subr.mxu0 %v5752
        %v5754 = vand.u32 %v5576, 4294901760
        %5755 = vmatpush1.msra.mxu0 %v5754
        %v5756 = vand.u32 %v5570, 4294901760
        %5757 = vmatprep.subr.mxu0 %v5756
        %v5758 = vand.u32 %v5569, 4294901760
        %5759 = vmatpush1.msra.mxu0 %v5758
        %v5760 = vand.u32 %v5563, 4294901760
        %5761 = vmatprep.subr.mxu0 %v5760
        %v5762 = vand.u32 %v5562, 4294901760
        %5763 = vmatpush1.msra.mxu0 %v5762
        %5764 = vmatprep.subr.mxu0 0.0
        %5765 = vmatpush2.msra.mxu0 0.0
        %5766 = vmatprep.subr.mxu0 0.0
        %5767 = vmatpush2.msra.mxu0 0.0
        %5768 = vmatprep.subr.mxu0 0.0
        %5769 = vmatpush2.msra.mxu0 0.0
        %5770 = vmatprep.subr.mxu0 0.0
        %5771 = vmatpush2.msra.mxu0 0.0
        %5772 = vmatprep.subr.mxu0 0.0
        %5773 = vmatpush2.msra.mxu0 0.0
        %5774 = vmatprep.subr.mxu0 0.0
        %5775 = vmatpush2.msra.mxu0 0.0
        %5776 = vmatprep.subr.mxu0 0.0
        %5777 = vmatpush2.msra.mxu0 0.0
        %5778 = vmatprep.subr.mxu0 0.0
        %5779 = vmatpush2.msra.mxu0 0.0
        %5780 = vmatprep.subr.mxu0 0.0
        %5781 = vmatpush2.msra.mxu0 0.0
        %5782 = vmatprep.subr.mxu0 0.0
        %5783 = vmatpush2.msra.mxu0 0.0
        %5784 = vmatprep.subr.mxu0 0.0
        %5785 = vmatpush2.msra.mxu0 0.0
        %5786 = vmatprep.subr.mxu0 0.0
        %5787 = vmatpush2.msra.mxu0 0.0
        %5788 = vmatprep.subr.mxu0 0.0
        %5789 = vmatpush2.msra.mxu0 0.0
        %5790 = vmatprep.subr.mxu0 0.0
        %5791 = vmatpush2.msra.mxu0 0.0
        %v5792 = vand.u32 %v5682, 4294901760
        %5793 = vmatprep.subr.mxu0 %v5792
        %v5794 = vand.u32 %v5681, 4294901760
        %5795 = vmatpush2.msra.mxu0 %v5794
        %v5796 = vand.u32 %v5675, 4294901760
        %5797 = vmatprep.subr.mxu0 %v5796
        %v5798 = vand.u32 %v5674, 4294901760
        %5799 = vmatpush2.msra.mxu0 %v5798
        %v5800 = vand.u32 %v5689, 4294901760
        %v5801 = vsub.f32 %v5689, %v5800
        %v5802 = vand.u32 %v5801, 4294901760
        %v5803 = vsub.f32 %v5801, %v5802
        %v5804 = vand.u32 %v5803, 4294901760
        %5805 = vmatprep.mubr.f32.mxu0 %v5804
        %v5806 = vand.u32 %v5554, 4294901760
        %v5807 = vsub.f32 %v5554, %v5806
        %v5808 = vand.u32 %v5807, 4294901760
        %v5809 = vsub.f32 %v5807, %v5808
        %v5810 = vand.u32 %v5809, 4294901760
        %5811 = vmatmul.mubr.f32.gmra.mxu0 %v5810
        %v5812 = vpop.f32.mrf.mxu0
        %v5813 = vadd.f32 0.0, %v5812
        %v5814 = vpop.f32.mrf.mxu0
        %v5815 = vadd.f32 0.0, %v5814
        %v5816 = vand.u32 %v5692, 4294901760
        %v5817 = vsub.f32 %v5692, %v5816
        %v5818 = vand.u32 %v5817, 4294901760
        %v5819 = vsub.f32 %v5817, %v5818
        %v5820 = vand.u32 %v5819, 4294901760
        %5821 = vmatprep.mubr.f32.mxu0 %v5820
        %v5822 = vand.u32 %v5556, 4294901760
        %v5823 = vsub.f32 %v5556, %v5822
        %v5824 = vand.u32 %v5823, 4294901760
        %v5825 = vsub.f32 %v5823, %v5824
        %v5826 = vand.u32 %v5825, 4294901760
        %5827 = vmatmul.mubr.f32.gmra.mxu0 %v5826
        %v5828 = vpop.f32.mrf.mxu0
        %v5829 = vadd.f32 0.0, %v5828
        %v5830 = vpop.f32.mrf.mxu0
        %v5831 = vadd.f32 0.0, %v5830
        %v5832 = vand.u32 %v5695, 4294901760
        %v5833 = vsub.f32 %v5695, %v5832
        %v5834 = vand.u32 %v5833, 4294901760
        %v5835 = vsub.f32 %v5833, %v5834
        %v5836 = vand.u32 %v5835, 4294901760
        %5837 = vmatprep.mubr.f32.mxu0 %v5836
        %v5838 = vand.u32 %v5558, 4294901760
        %v5839 = vsub.f32 %v5558, %v5838
        %v5840 = vand.u32 %v5839, 4294901760
        %v5841 = vsub.f32 %v5839, %v5840
        %v5842 = vand.u32 %v5841, 4294901760
        %5843 = vmatmul.mubr.f32.gmra.mxu0 %v5842
        %v5844 = vpop.f32.mrf.mxu0
        %v5845 = vadd.f32 0.0, %v5844
        %v5846 = vpop.f32.mrf.mxu0
        %v5847 = vadd.f32 0.0, %v5846
        %v5848 = vand.u32 %v5698, 4294901760
        %v5849 = vsub.f32 %v5698, %v5848
        %v5850 = vand.u32 %v5849, 4294901760
        %v5851 = vsub.f32 %v5849, %v5850
        %v5852 = vand.u32 %v5851, 4294901760
        %5853 = vmatprep.mubr.f32.mxu0 %v5852
        %v5854 = vand.u32 %v5560, 4294901760
        %v5855 = vsub.f32 %v5560, %v5854
        %v5856 = vand.u32 %v5855, 4294901760
        %v5857 = vsub.f32 %v5855, %v5856
        %v5858 = vand.u32 %v5857, 4294901760
        %5859 = vmatmul.mubr.f32.gmra.mxu0 %v5858
        %v5860 = vpop.f32.mrf.mxu0
        %v5861 = vadd.f32 0.0, %v5860
        %v5862 = vpop.f32.mrf.mxu0
        %v5863 = vadd.f32 0.0, %v5862
        %5864 = vdwg.mxu0
        %v5865 = vand.u32 %v5668, 4294901760
        %v5866 = vsub.f32 %v5668, %v5865
        %v5867 = vand.u32 %v5866, 4294901760
        %v5868 = vsub.f32 %v5866, %v5867
        %v5869 = vand.u32 %v5868, 4294901760
        %5870 = vmatprep.subr.mxu0 %v5869
        %v5871 = vand.u32 %v5667, 4294901760
        %v5872 = vsub.f32 %v5667, %v5871
        %v5873 = vand.u32 %v5872, 4294901760
        %v5874 = vsub.f32 %v5872, %v5873
        %v5875 = vand.u32 %v5874, 4294901760
        %5876 = vmatpush1.msra.mxu0 %v5875
        %v5877 = vand.u32 %v5661, 4294901760
        %v5878 = vsub.f32 %v5661, %v5877
        %v5879 = vand.u32 %v5878, 4294901760
        %v5880 = vsub.f32 %v5878, %v5879
        %v5881 = vand.u32 %v5880, 4294901760
        %5882 = vmatprep.subr.mxu0 %v5881
        %v5883 = vand.u32 %v5660, 4294901760
        %v5884 = vsub.f32 %v5660, %v5883
        %v5885 = vand.u32 %v5884, 4294901760
        %v5886 = vsub.f32 %v5884, %v5885
        %v5887 = vand.u32 %v5886, 4294901760
        %5888 = vmatpush1.msra.mxu0 %v5887
        %v5889 = vand.u32 %v5654, 4294901760
        %v5890 = vsub.f32 %v5654, %v5889
        %v5891 = vand.u32 %v5890, 4294901760
        %v5892 = vsub.f32 %v5890, %v5891
        %v5893 = vand.u32 %v5892, 4294901760
        %5894 = vmatprep.subr.mxu0 %v5893
        %v5895 = vand.u32 %v5653, 4294901760
        %v5896 = vsub.f32 %v5653, %v5895
        %v5897 = vand.u32 %v5896, 4294901760
        %v5898 = vsub.f32 %v5896, %v5897
        %v5899 = vand.u32 %v5898, 4294901760
        %5900 = vmatpush1.msra.mxu0 %v5899
        %v5901 = vand.u32 %v5647, 4294901760
        %v5902 = vsub.f32 %v5647, %v5901
        %v5903 = vand.u32 %v5902, 4294901760
        %v5904 = vsub.f32 %v5902, %v5903
        %v5905 = vand.u32 %v5904, 4294901760
        %5906 = vmatprep.subr.mxu0 %v5905
        %v5907 = vand.u32 %v5646, 4294901760
        %v5908 = vsub.f32 %v5646, %v5907
        %v5909 = vand.u32 %v5908, 4294901760
        %v5910 = vsub.f32 %v5908, %v5909
        %v5911 = vand.u32 %v5910, 4294901760
        %5912 = vmatpush1.msra.mxu0 %v5911
        %v5913 = vand.u32 %v5640, 4294901760
        %v5914 = vsub.f32 %v5640, %v5913
        %v5915 = vand.u32 %v5914, 4294901760
        %v5916 = vsub.f32 %v5914, %v5915
        %v5917 = vand.u32 %v5916, 4294901760
        %5918 = vmatprep.subr.mxu0 %v5917
        %v5919 = vand.u32 %v5639, 4294901760
        %v5920 = vsub.f32 %v5639, %v5919
        %v5921 = vand.u32 %v5920, 4294901760
        %v5922 = vsub.f32 %v5920, %v5921
        %v5923 = vand.u32 %v5922, 4294901760
        %5924 = vmatpush1.msra.mxu0 %v5923
        %v5925 = vand.u32 %v5633, 4294901760
        %v5926 = vsub.f32 %v5633, %v5925
        %v5927 = vand.u32 %v5926, 4294901760
        %v5928 = vsub.f32 %v5926, %v5927
        %v5929 = vand.u32 %v5928, 4294901760
        %5930 = vmatprep.subr.mxu0 %v5929
        %v5931 = vand.u32 %v5632, 4294901760
        %v5932 = vsub.f32 %v5632, %v5931
        %v5933 = vand.u32 %v5932, 4294901760
        %v5934 = vsub.f32 %v5932, %v5933
        %v5935 = vand.u32 %v5934, 4294901760
        %5936 = vmatpush1.msra.mxu0 %v5935
        %v5937 = vand.u32 %v5626, 4294901760
        %v5938 = vsub.f32 %v5626, %v5937
        %v5939 = vand.u32 %v5938, 4294901760
        %v5940 = vsub.f32 %v5938, %v5939
        %v5941 = vand.u32 %v5940, 4294901760
        %5942 = vmatprep.subr.mxu0 %v5941
        %v5943 = vand.u32 %v5625, 4294901760
        %v5944 = vsub.f32 %v5625, %v5943
        %v5945 = vand.u32 %v5944, 4294901760
        %v5946 = vsub.f32 %v5944, %v5945
        %v5947 = vand.u32 %v5946, 4294901760
        %5948 = vmatpush1.msra.mxu0 %v5947
        %v5949 = vand.u32 %v5619, 4294901760
        %v5950 = vsub.f32 %v5619, %v5949
        %v5951 = vand.u32 %v5950, 4294901760
        %v5952 = vsub.f32 %v5950, %v5951
        %v5953 = vand.u32 %v5952, 4294901760
        %5954 = vmatprep.subr.mxu0 %v5953
        %v5955 = vand.u32 %v5618, 4294901760
        %v5956 = vsub.f32 %v5618, %v5955
        %v5957 = vand.u32 %v5956, 4294901760
        %v5958 = vsub.f32 %v5956, %v5957
        %v5959 = vand.u32 %v5958, 4294901760
        %5960 = vmatpush1.msra.mxu0 %v5959
        %v5961 = vand.u32 %v5612, 4294901760
        %v5962 = vsub.f32 %v5612, %v5961
        %v5963 = vand.u32 %v5962, 4294901760
        %v5964 = vsub.f32 %v5962, %v5963
        %v5965 = vand.u32 %v5964, 4294901760
        %5966 = vmatprep.subr.mxu0 %v5965
        %v5967 = vand.u32 %v5611, 4294901760
        %v5968 = vsub.f32 %v5611, %v5967
        %v5969 = vand.u32 %v5968, 4294901760
        %v5970 = vsub.f32 %v5968, %v5969
        %v5971 = vand.u32 %v5970, 4294901760
        %5972 = vmatpush1.msra.mxu0 %v5971
        %v5973 = vand.u32 %v5605, 4294901760
        %v5974 = vsub.f32 %v5605, %v5973
        %v5975 = vand.u32 %v5974, 4294901760
        %v5976 = vsub.f32 %v5974, %v5975
        %v5977 = vand.u32 %v5976, 4294901760
        %5978 = vmatprep.subr.mxu0 %v5977
        %v5979 = vand.u32 %v5604, 4294901760
        %v5980 = vsub.f32 %v5604, %v5979
        %v5981 = vand.u32 %v5980, 4294901760
        %v5982 = vsub.f32 %v5980, %v5981
        %v5983 = vand.u32 %v5982, 4294901760
        %5984 = vmatpush1.msra.mxu0 %v5983
        %v5985 = vand.u32 %v5598, 4294901760
        %v5986 = vsub.f32 %v5598, %v5985
        %v5987 = vand.u32 %v5986, 4294901760
        %v5988 = vsub.f32 %v5986, %v5987
        %v5989 = vand.u32 %v5988, 4294901760
        %5990 = vmatprep.subr.mxu0 %v5989
        %v5991 = vand.u32 %v5597, 4294901760
        %v5992 = vsub.f32 %v5597, %v5991
        %v5993 = vand.u32 %v5992, 4294901760
        %v5994 = vsub.f32 %v5992, %v5993
        %v5995 = vand.u32 %v5994, 4294901760
        %5996 = vmatpush1.msra.mxu0 %v5995
        %v5997 = vand.u32 %v5591, 4294901760
        %v5998 = vsub.f32 %v5591, %v5997
        %v5999 = vand.u32 %v5998, 4294901760
        %v6000 = vsub.f32 %v5998, %v5999
        %v6001 = vand.u32 %v6000, 4294901760
        %6002 = vmatprep.subr.mxu0 %v6001
        %v6003 = vand.u32 %v5590, 4294901760
        %v6004 = vsub.f32 %v5590, %v6003
        %v6005 = vand.u32 %v6004, 4294901760
        %v6006 = vsub.f32 %v6004, %v6005
        %v6007 = vand.u32 %v6006, 4294901760
        %6008 = vmatpush1.msra.mxu0 %v6007
        %v6009 = vand.u32 %v5584, 4294901760
        %v6010 = vsub.f32 %v5584, %v6009
        %v6011 = vand.u32 %v6010, 4294901760
        %v6012 = vsub.f32 %v6010, %v6011
        %v6013 = vand.u32 %v6012, 4294901760
        %6014 = vmatprep.subr.mxu0 %v6013
        %v6015 = vand.u32 %v5583, 4294901760
        %v6016 = vsub.f32 %v5583, %v6015
        %v6017 = vand.u32 %v6016, 4294901760
        %v6018 = vsub.f32 %v6016, %v6017
        %v6019 = vand.u32 %v6018, 4294901760
        %6020 = vmatpush1.msra.mxu0 %v6019
        %v6021 = vand.u32 %v5577, 4294901760
        %v6022 = vsub.f32 %v5577, %v6021
        %v6023 = vand.u32 %v6022, 4294901760
        %v6024 = vsub.f32 %v6022, %v6023
        %v6025 = vand.u32 %v6024, 4294901760
        %6026 = vmatprep.subr.mxu0 %v6025
        %v6027 = vand.u32 %v5576, 4294901760
        %v6028 = vsub.f32 %v5576, %v6027
        %v6029 = vand.u32 %v6028, 4294901760
        %v6030 = vsub.f32 %v6028, %v6029
        %v6031 = vand.u32 %v6030, 4294901760
        %6032 = vmatpush1.msra.mxu0 %v6031
        %v6033 = vand.u32 %v5570, 4294901760
        %v6034 = vsub.f32 %v5570, %v6033
        %v6035 = vand.u32 %v6034, 4294901760
        %v6036 = vsub.f32 %v6034, %v6035
        %v6037 = vand.u32 %v6036, 4294901760
        %6038 = vmatprep.subr.mxu0 %v6037
        %v6039 = vand.u32 %v5569, 4294901760
        %v6040 = vsub.f32 %v5569, %v6039
        %v6041 = vand.u32 %v6040, 4294901760
        %v6042 = vsub.f32 %v6040, %v6041
        %v6043 = vand.u32 %v6042, 4294901760
        %6044 = vmatpush1.msra.mxu0 %v6043
        %v6045 = vand.u32 %v5563, 4294901760
        %v6046 = vsub.f32 %v5563, %v6045
        %v6047 = vand.u32 %v6046, 4294901760
        %v6048 = vsub.f32 %v6046, %v6047
        %v6049 = vand.u32 %v6048, 4294901760
        %6050 = vmatprep.subr.mxu0 %v6049
        %v6051 = vand.u32 %v5562, 4294901760
        %v6052 = vsub.f32 %v5562, %v6051
        %v6053 = vand.u32 %v6052, 4294901760
        %v6054 = vsub.f32 %v6052, %v6053
        %v6055 = vand.u32 %v6054, 4294901760
        %6056 = vmatpush1.msra.mxu0 %v6055
        %6057 = vmatprep.subr.mxu0 0.0
        %6058 = vmatpush2.msra.mxu0 0.0
        %6059 = vmatprep.subr.mxu0 0.0
        %6060 = vmatpush2.msra.mxu0 0.0
        %6061 = vmatprep.subr.mxu0 0.0
        %6062 = vmatpush2.msra.mxu0 0.0
        %6063 = vmatprep.subr.mxu0 0.0
        %6064 = vmatpush2.msra.mxu0 0.0
        %6065 = vmatprep.subr.mxu0 0.0
        %6066 = vmatpush2.msra.mxu0 0.0
        %6067 = vmatprep.subr.mxu0 0.0
        %6068 = vmatpush2.msra.mxu0 0.0
        %6069 = vmatprep.subr.mxu0 0.0
        %6070 = vmatpush2.msra.mxu0 0.0
        %6071 = vmatprep.subr.mxu0 0.0
        %6072 = vmatpush2.msra.mxu0 0.0
        %6073 = vmatprep.subr.mxu0 0.0
        %6074 = vmatpush2.msra.mxu0 0.0
        %6075 = vmatprep.subr.mxu0 0.0
        %6076 = vmatpush2.msra.mxu0 0.0
        %6077 = vmatprep.subr.mxu0 0.0
        %6078 = vmatpush2.msra.mxu0 0.0
        %6079 = vmatprep.subr.mxu0 0.0
        %6080 = vmatpush2.msra.mxu0 0.0
        %6081 = vmatprep.subr.mxu0 0.0
        %6082 = vmatpush2.msra.mxu0 0.0
        %6083 = vmatprep.subr.mxu0 0.0
        %6084 = vmatpush2.msra.mxu0 0.0
        %v6085 = vand.u32 %v5682, 4294901760
        %v6086 = vsub.f32 %v5682, %v6085
        %v6087 = vand.u32 %v6086, 4294901760
        %v6088 = vsub.f32 %v6086, %v6087
        %v6089 = vand.u32 %v6088, 4294901760
        %6090 = vmatprep.subr.mxu0 %v6089
        %v6091 = vand.u32 %v5681, 4294901760
        %v6092 = vsub.f32 %v5681, %v6091
        %v6093 = vand.u32 %v6092, 4294901760
        %v6094 = vsub.f32 %v6092, %v6093
        %v6095 = vand.u32 %v6094, 4294901760
        %6096 = vmatpush2.msra.mxu0 %v6095
        %v6097 = vand.u32 %v5675, 4294901760
        %v6098 = vsub.f32 %v5675, %v6097
        %v6099 = vand.u32 %v6098, 4294901760
        %v6100 = vsub.f32 %v6098, %v6099
        %v6101 = vand.u32 %v6100, 4294901760
        %6102 = vmatprep.subr.mxu0 %v6101
        %v6103 = vand.u32 %v5674, 4294901760
        %v6104 = vsub.f32 %v5674, %v6103
        %v6105 = vand.u32 %v6104, 4294901760
        %v6106 = vsub.f32 %v6104, %v6105
        %v6107 = vand.u32 %v6106, 4294901760
        %6108 = vmatpush2.msra.mxu0 %v6107
        %v6109 = vand.u32 %v5689, 4294901760
        %6110 = vmatprep.mubr.f32.mxu0 %v6109
        %v6111 = vand.u32 %v5554, 4294901760
        %6112 = vmatmul.mubr.f32.gmra.mxu0 %v6111
        %v6113 = vpop.f32.mrf.mxu0
        %v6114 = vadd.f32 %v5813, %v6113
        %v6115 = vpop.f32.mrf.mxu0
        %v6116 = vadd.f32 %v5815, %v6115
        %v6117 = vand.u32 %v5692, 4294901760
        %6118 = vmatprep.mubr.f32.mxu0 %v6117
        %v6119 = vand.u32 %v5556, 4294901760
        %6120 = vmatmul.mubr.f32.gmra.mxu0 %v6119
        %v6121 = vpop.f32.mrf.mxu0
        %v6122 = vadd.f32 %v5829, %v6121
        %v6123 = vpop.f32.mrf.mxu0
        %v6124 = vadd.f32 %v5831, %v6123
        %v6125 = vand.u32 %v5695, 4294901760
        %6126 = vmatprep.mubr.f32.mxu0 %v6125
        %v6127 = vand.u32 %v5558, 4294901760
        %6128 = vmatmul.mubr.f32.gmra.mxu0 %v6127
        %v6129 = vpop.f32.mrf.mxu0
        %v6130 = vadd.f32 %v5845, %v6129
        %v6131 = vpop.f32.mrf.mxu0
        %v6132 = vadd.f32 %v5847, %v6131
        %v6133 = vand.u32 %v5698, 4294901760
        %6134 = vmatprep.mubr.f32.mxu0 %v6133
        %v6135 = vand.u32 %v5560, 4294901760
        %6136 = vmatmul.mubr.f32.gmra.mxu0 %v6135
        %v6137 = vpop.f32.mrf.mxu0
        %v6138 = vadd.f32 %v5861, %v6137
        %v6139 = vpop.f32.mrf.mxu0
        %v6140 = vadd.f32 %v5863, %v6139
        %6141 = vdwg.mxu0
        %v6142 = vand.u32 %v5668, 4294901760
        %v6143 = vsub.f32 %v5668, %v6142
        %6144 = vmatprep.subr.mxu0 %v6143
        %v6145 = vand.u32 %v5667, 4294901760
        %v6146 = vsub.f32 %v5667, %v6145
        %6147 = vmatpush1.msra.mxu0 %v6146
        %v6148 = vand.u32 %v5661, 4294901760
        %v6149 = vsub.f32 %v5661, %v6148
        %6150 = vmatprep.subr.mxu0 %v6149
        %v6151 = vand.u32 %v5660, 4294901760
        %v6152 = vsub.f32 %v5660, %v6151
        %6153 = vmatpush1.msra.mxu0 %v6152
        %v6154 = vand.u32 %v5654, 4294901760
        %v6155 = vsub.f32 %v5654, %v6154
        %6156 = vmatprep.subr.mxu0 %v6155
        %v6157 = vand.u32 %v5653, 4294901760
        %v6158 = vsub.f32 %v5653, %v6157
        %6159 = vmatpush1.msra.mxu0 %v6158
        %v6160 = vand.u32 %v5647, 4294901760
        %v6161 = vsub.f32 %v5647, %v6160
        %6162 = vmatprep.subr.mxu0 %v6161
        %v6163 = vand.u32 %v5646, 4294901760
        %v6164 = vsub.f32 %v5646, %v6163
        %6165 = vmatpush1.msra.mxu0 %v6164
        %v6166 = vand.u32 %v5640, 4294901760
        %v6167 = vsub.f32 %v5640, %v6166
        %6168 = vmatprep.subr.mxu0 %v6167
        %v6169 = vand.u32 %v5639, 4294901760
        %v6170 = vsub.f32 %v5639, %v6169
        %6171 = vmatpush1.msra.mxu0 %v6170
        %v6172 = vand.u32 %v5633, 4294901760
        %v6173 = vsub.f32 %v5633, %v6172
        %6174 = vmatprep.subr.mxu0 %v6173
        %v6175 = vand.u32 %v5632, 4294901760
        %v6176 = vsub.f32 %v5632, %v6175
        %6177 = vmatpush1.msra.mxu0 %v6176
        %v6178 = vand.u32 %v5626, 4294901760
        %v6179 = vsub.f32 %v5626, %v6178
        %6180 = vmatprep.subr.mxu0 %v6179
        %v6181 = vand.u32 %v5625, 4294901760
        %v6182 = vsub.f32 %v5625, %v6181
        %6183 = vmatpush1.msra.mxu0 %v6182
        %v6184 = vand.u32 %v5619, 4294901760
        %v6185 = vsub.f32 %v5619, %v6184
        %6186 = vmatprep.subr.mxu0 %v6185
        %v6187 = vand.u32 %v5618, 4294901760
        %v6188 = vsub.f32 %v5618, %v6187
        %6189 = vmatpush1.msra.mxu0 %v6188
        %v6190 = vand.u32 %v5612, 4294901760
        %v6191 = vsub.f32 %v5612, %v6190
        %6192 = vmatprep.subr.mxu0 %v6191
        %v6193 = vand.u32 %v5611, 4294901760
        %v6194 = vsub.f32 %v5611, %v6193
        %6195 = vmatpush1.msra.mxu0 %v6194
        %v6196 = vand.u32 %v5605, 4294901760
        %v6197 = vsub.f32 %v5605, %v6196
        %6198 = vmatprep.subr.mxu0 %v6197
        %v6199 = vand.u32 %v5604, 4294901760
        %v6200 = vsub.f32 %v5604, %v6199
        %6201 = vmatpush1.msra.mxu0 %v6200
        %v6202 = vand.u32 %v5598, 4294901760
        %v6203 = vsub.f32 %v5598, %v6202
        %6204 = vmatprep.subr.mxu0 %v6203
        %v6205 = vand.u32 %v5597, 4294901760
        %v6206 = vsub.f32 %v5597, %v6205
        %6207 = vmatpush1.msra.mxu0 %v6206
        %v6208 = vand.u32 %v5591, 4294901760
        %v6209 = vsub.f32 %v5591, %v6208
        %6210 = vmatprep.subr.mxu0 %v6209
        %v6211 = vand.u32 %v5590, 4294901760
        %v6212 = vsub.f32 %v5590, %v6211
        %6213 = vmatpush1.msra.mxu0 %v6212
        %v6214 = vand.u32 %v5584, 4294901760
        %v6215 = vsub.f32 %v5584, %v6214
        %6216 = vmatprep.subr.mxu0 %v6215
        %v6217 = vand.u32 %v5583, 4294901760
        %v6218 = vsub.f32 %v5583, %v6217
        %6219 = vmatpush1.msra.mxu0 %v6218
        %v6220 = vand.u32 %v5577, 4294901760
        %v6221 = vsub.f32 %v5577, %v6220
        %6222 = vmatprep.subr.mxu0 %v6221
        %v6223 = vand.u32 %v5576, 4294901760
        %v6224 = vsub.f32 %v5576, %v6223
        %6225 = vmatpush1.msra.mxu0 %v6224
        %v6226 = vand.u32 %v5570, 4294901760
        %v6227 = vsub.f32 %v5570, %v6226
        %6228 = vmatprep.subr.mxu0 %v6227
        %v6229 = vand.u32 %v5569, 4294901760
        %v6230 = vsub.f32 %v5569, %v6229
        %6231 = vmatpush1.msra.mxu0 %v6230
        %v6232 = vand.u32 %v5563, 4294901760
        %v6233 = vsub.f32 %v5563, %v6232
        %6234 = vmatprep.subr.mxu0 %v6233
        %v6235 = vand.u32 %v5562, 4294901760
        %v6236 = vsub.f32 %v5562, %v6235
        %6237 = vmatpush1.msra.mxu0 %v6236
        %6238 = vmatprep.subr.mxu0 0.0
        %6239 = vmatpush2.msra.mxu0 0.0
        %6240 = vmatprep.subr.mxu0 0.0
        %6241 = vmatpush2.msra.mxu0 0.0
        %6242 = vmatprep.subr.mxu0 0.0
        %6243 = vmatpush2.msra.mxu0 0.0
        %6244 = vmatprep.subr.mxu0 0.0
        %6245 = vmatpush2.msra.mxu0 0.0
        %6246 = vmatprep.subr.mxu0 0.0
        %6247 = vmatpush2.msra.mxu0 0.0
        %6248 = vmatprep.subr.mxu0 0.0
        %6249 = vmatpush2.msra.mxu0 0.0
        %6250 = vmatprep.subr.mxu0 0.0
        %6251 = vmatpush2.msra.mxu0 0.0
        %6252 = vmatprep.subr.mxu0 0.0
        %6253 = vmatpush2.msra.mxu0 0.0
        %6254 = vmatprep.subr.mxu0 0.0
        %6255 = vmatpush2.msra.mxu0 0.0
        %6256 = vmatprep.subr.mxu0 0.0
        %6257 = vmatpush2.msra.mxu0 0.0
        %6258 = vmatprep.subr.mxu0 0.0
        %6259 = vmatpush2.msra.mxu0 0.0
        %6260 = vmatprep.subr.mxu0 0.0
        %6261 = vmatpush2.msra.mxu0 0.0
        %6262 = vmatprep.subr.mxu0 0.0
        %6263 = vmatpush2.msra.mxu0 0.0
        %6264 = vmatprep.subr.mxu0 0.0
        %6265 = vmatpush2.msra.mxu0 0.0
        %v6266 = vand.u32 %v5682, 4294901760
        %v6267 = vsub.f32 %v5682, %v6266
        %6268 = vmatprep.subr.mxu0 %v6267
        %v6269 = vand.u32 %v5681, 4294901760
        %v6270 = vsub.f32 %v5681, %v6269
        %6271 = vmatpush2.msra.mxu0 %v6270
        %v6272 = vand.u32 %v5675, 4294901760
        %v6273 = vsub.f32 %v5675, %v6272
        %6274 = vmatprep.subr.mxu0 %v6273
        %v6275 = vand.u32 %v5674, 4294901760
        %v6276 = vsub.f32 %v5674, %v6275
        %6277 = vmatpush2.msra.mxu0 %v6276
        %v6278 = vand.u32 %v5689, 4294901760
        %v6279 = vsub.f32 %v5689, %v6278
        %6280 = vmatprep.mubr.f32.mxu0 %v6279
        %v6281 = vand.u32 %v5554, 4294901760
        %v6282 = vsub.f32 %v5554, %v6281
        %6283 = vmatmul.mubr.f32.gmra.mxu0 %v6282
        %v6284 = vpop.f32.mrf.mxu0
        %v6285 = vadd.f32 %v6114, %v6284
        %v6286 = vpop.f32.mrf.mxu0
        %v6287 = vadd.f32 %v6116, %v6286
        %v6288 = vand.u32 %v5692, 4294901760
        %v6289 = vsub.f32 %v5692, %v6288
        %6290 = vmatprep.mubr.f32.mxu0 %v6289
        %v6291 = vand.u32 %v5556, 4294901760
        %v6292 = vsub.f32 %v5556, %v6291
        %6293 = vmatmul.mubr.f32.gmra.mxu0 %v6292
        %v6294 = vpop.f32.mrf.mxu0
        %v6295 = vadd.f32 %v6122, %v6294
        %v6296 = vpop.f32.mrf.mxu0
        %v6297 = vadd.f32 %v6124, %v6296
        %v6298 = vand.u32 %v5695, 4294901760
        %v6299 = vsub.f32 %v5695, %v6298
        %6300 = vmatprep.mubr.f32.mxu0 %v6299
        %v6301 = vand.u32 %v5558, 4294901760
        %v6302 = vsub.f32 %v5558, %v6301
        %6303 = vmatmul.mubr.f32.gmra.mxu0 %v6302
        %v6304 = vpop.f32.mrf.mxu0
        %v6305 = vadd.f32 %v6130, %v6304
        %v6306 = vpop.f32.mrf.mxu0
        %v6307 = vadd.f32 %v6132, %v6306
        %v6308 = vand.u32 %v5698, 4294901760
        %v6309 = vsub.f32 %v5698, %v6308
        %6310 = vmatprep.mubr.f32.mxu0 %v6309
        %v6311 = vand.u32 %v5560, 4294901760
        %v6312 = vsub.f32 %v5560, %v6311
        %6313 = vmatmul.mubr.f32.gmra.mxu0 %v6312
        %v6314 = vpop.f32.mrf.mxu0
        %v6315 = vadd.f32 %v6138, %v6314
        %v6316 = vpop.f32.mrf.mxu0
        %v6317 = vadd.f32 %v6140, %v6316
        %6318 = vdwg.mxu0
        %v6319 = vand.u32 %v5668, 4294901760
        %6320 = vmatprep.subr.mxu0 %v6319
        %v6321 = vand.u32 %v5667, 4294901760
        %6322 = vmatpush1.msra.mxu0 %v6321
        %v6323 = vand.u32 %v5661, 4294901760
        %6324 = vmatprep.subr.mxu0 %v6323
        %v6325 = vand.u32 %v5660, 4294901760
        %6326 = vmatpush1.msra.mxu0 %v6325
        %v6327 = vand.u32 %v5654, 4294901760
        %6328 = vmatprep.subr.mxu0 %v6327
        %v6329 = vand.u32 %v5653, 4294901760
        %6330 = vmatpush1.msra.mxu0 %v6329
        %v6331 = vand.u32 %v5647, 4294901760
        %6332 = vmatprep.subr.mxu0 %v6331
        %v6333 = vand.u32 %v5646, 4294901760
        %6334 = vmatpush1.msra.mxu0 %v6333
        %v6335 = vand.u32 %v5640, 4294901760
        %6336 = vmatprep.subr.mxu0 %v6335
        %v6337 = vand.u32 %v5639, 4294901760
        %6338 = vmatpush1.msra.mxu0 %v6337
        %v6339 = vand.u32 %v5633, 4294901760
        %6340 = vmatprep.subr.mxu0 %v6339
        %v6341 = vand.u32 %v5632, 4294901760
        %6342 = vmatpush1.msra.mxu0 %v6341
        %v6343 = vand.u32 %v5626, 4294901760
        %6344 = vmatprep.subr.mxu0 %v6343
        %v6345 = vand.u32 %v5625, 4294901760
        %6346 = vmatpush1.msra.mxu0 %v6345
        %v6347 = vand.u32 %v5619, 4294901760
        %6348 = vmatprep.subr.mxu0 %v6347
        %v6349 = vand.u32 %v5618, 4294901760
        %6350 = vmatpush1.msra.mxu0 %v6349
        %v6351 = vand.u32 %v5612, 4294901760
        %6352 = vmatprep.subr.mxu0 %v6351
        %v6353 = vand.u32 %v5611, 4294901760
        %6354 = vmatpush1.msra.mxu0 %v6353
        %v6355 = vand.u32 %v5605, 4294901760
        %6356 = vmatprep.subr.mxu0 %v6355
        %v6357 = vand.u32 %v5604, 4294901760
        %6358 = vmatpush1.msra.mxu0 %v6357
        %v6359 = vand.u32 %v5598, 4294901760
        %6360 = vmatprep.subr.mxu0 %v6359
        %v6361 = vand.u32 %v5597, 4294901760
        %6362 = vmatpush1.msra.mxu0 %v6361
        %v6363 = vand.u32 %v5591, 4294901760
        %6364 = vmatprep.subr.mxu0 %v6363
        %v6365 = vand.u32 %v5590, 4294901760
        %6366 = vmatpush1.msra.mxu0 %v6365
        %v6367 = vand.u32 %v5584, 4294901760
        %6368 = vmatprep.subr.mxu0 %v6367
        %v6369 = vand.u32 %v5583, 4294901760
        %6370 = vmatpush1.msra.mxu0 %v6369
        %v6371 = vand.u32 %v5577, 4294901760
        %6372 = vmatprep.subr.mxu0 %v6371
        %v6373 = vand.u32 %v5576, 4294901760
        %6374 = vmatpush1.msra.mxu0 %v6373
        %v6375 = vand.u32 %v5570, 4294901760
        %6376 = vmatprep.subr.mxu0 %v6375
        %v6377 = vand.u32 %v5569, 4294901760
        %6378 = vmatpush1.msra.mxu0 %v6377
        %v6379 = vand.u32 %v5563, 4294901760
        %6380 = vmatprep.subr.mxu0 %v6379
        %v6381 = vand.u32 %v5562, 4294901760
        %6382 = vmatpush1.msra.mxu0 %v6381
        %6383 = vmatprep.subr.mxu0 0.0
        %6384 = vmatpush2.msra.mxu0 0.0
        %6385 = vmatprep.subr.mxu0 0.0
        %6386 = vmatpush2.msra.mxu0 0.0
        %6387 = vmatprep.subr.mxu0 0.0
        %6388 = vmatpush2.msra.mxu0 0.0
        %6389 = vmatprep.subr.mxu0 0.0
        %6390 = vmatpush2.msra.mxu0 0.0
        %6391 = vmatprep.subr.mxu0 0.0
        %6392 = vmatpush2.msra.mxu0 0.0
        %6393 = vmatprep.subr.mxu0 0.0
        %6394 = vmatpush2.msra.mxu0 0.0
        %6395 = vmatprep.subr.mxu0 0.0
        %6396 = vmatpush2.msra.mxu0 0.0
        %6397 = vmatprep.subr.mxu0 0.0
        %6398 = vmatpush2.msra.mxu0 0.0
        %6399 = vmatprep.subr.mxu0 0.0
        %6400 = vmatpush2.msra.mxu0 0.0
        %6401 = vmatprep.subr.mxu0 0.0
        %6402 = vmatpush2.msra.mxu0 0.0
        %6403 = vmatprep.subr.mxu0 0.0
        %6404 = vmatpush2.msra.mxu0 0.0
        %6405 = vmatprep.subr.mxu0 0.0
        %6406 = vmatpush2.msra.mxu0 0.0
        %6407 = vmatprep.subr.mxu0 0.0
        %6408 = vmatpush2.msra.mxu0 0.0
        %6409 = vmatprep.subr.mxu0 0.0
        %6410 = vmatpush2.msra.mxu0 0.0
        %v6411 = vand.u32 %v5682, 4294901760
        %6412 = vmatprep.subr.mxu0 %v6411
        %v6413 = vand.u32 %v5681, 4294901760
        %6414 = vmatpush2.msra.mxu0 %v6413
        %v6415 = vand.u32 %v5675, 4294901760
        %6416 = vmatprep.subr.mxu0 %v6415
        %v6417 = vand.u32 %v5674, 4294901760
        %6418 = vmatpush2.msra.mxu0 %v6417
        %v6419 = vand.u32 %v5689, 4294901760
        %v6420 = vsub.f32 %v5689, %v6419
        %v6421 = vand.u32 %v6420, 4294901760
        %6422 = vmatprep.mubr.f32.mxu0 %v6421
        %v6423 = vand.u32 %v5554, 4294901760
        %v6424 = vsub.f32 %v5554, %v6423
        %v6425 = vand.u32 %v6424, 4294901760
        %6426 = vmatmul.mubr.f32.gmra.mxu0 %v6425
        %v6427 = vpop.f32.mrf.mxu0
        %v6428 = vadd.f32 %v6285, %v6427
        %v6429 = vpop.f32.mrf.mxu0
        %v6430 = vadd.f32 %v6287, %v6429
        %v6431 = vand.u32 %v5692, 4294901760
        %v6432 = vsub.f32 %v5692, %v6431
        %v6433 = vand.u32 %v6432, 4294901760
        %6434 = vmatprep.mubr.f32.mxu0 %v6433
        %v6435 = vand.u32 %v5556, 4294901760
        %v6436 = vsub.f32 %v5556, %v6435
        %v6437 = vand.u32 %v6436, 4294901760
        %6438 = vmatmul.mubr.f32.gmra.mxu0 %v6437
        %v6439 = vpop.f32.mrf.mxu0
        %v6440 = vadd.f32 %v6295, %v6439
        %v6441 = vpop.f32.mrf.mxu0
        %v6442 = vadd.f32 %v6297, %v6441
        %v6443 = vand.u32 %v5695, 4294901760
        %v6444 = vsub.f32 %v5695, %v6443
        %v6445 = vand.u32 %v6444, 4294901760
        %6446 = vmatprep.mubr.f32.mxu0 %v6445
        %v6447 = vand.u32 %v5558, 4294901760
        %v6448 = vsub.f32 %v5558, %v6447
        %v6449 = vand.u32 %v6448, 4294901760
        %6450 = vmatmul.mubr.f32.gmra.mxu0 %v6449
        %v6451 = vpop.f32.mrf.mxu0
        %v6452 = vadd.f32 %v6305, %v6451
        %v6453 = vpop.f32.mrf.mxu0
        %v6454 = vadd.f32 %v6307, %v6453
        %v6455 = vand.u32 %v5698, 4294901760
        %v6456 = vsub.f32 %v5698, %v6455
        %v6457 = vand.u32 %v6456, 4294901760
        %6458 = vmatprep.mubr.f32.mxu0 %v6457
        %v6459 = vand.u32 %v5560, 4294901760
        %v6460 = vsub.f32 %v5560, %v6459
        %v6461 = vand.u32 %v6460, 4294901760
        %6462 = vmatmul.mubr.f32.gmra.mxu0 %v6461
        %v6463 = vpop.f32.mrf.mxu0
        %v6464 = vadd.f32 %v6315, %v6463
        %v6465 = vpop.f32.mrf.mxu0
        %v6466 = vadd.f32 %v6317, %v6465
        %6467 = vdwg.mxu0
        %v6468 = vand.u32 %v5668, 4294901760
        %v6469 = vsub.f32 %v5668, %v6468
        %v6470 = vand.u32 %v6469, 4294901760
        %6471 = vmatprep.subr.mxu0 %v6470
        %v6472 = vand.u32 %v5667, 4294901760
        %v6473 = vsub.f32 %v5667, %v6472
        %v6474 = vand.u32 %v6473, 4294901760
        %6475 = vmatpush1.msra.mxu0 %v6474
        %v6476 = vand.u32 %v5661, 4294901760
        %v6477 = vsub.f32 %v5661, %v6476
        %v6478 = vand.u32 %v6477, 4294901760
        %6479 = vmatprep.subr.mxu0 %v6478
        %v6480 = vand.u32 %v5660, 4294901760
        %v6481 = vsub.f32 %v5660, %v6480
        %v6482 = vand.u32 %v6481, 4294901760
        %6483 = vmatpush1.msra.mxu0 %v6482
        %v6484 = vand.u32 %v5654, 4294901760
        %v6485 = vsub.f32 %v5654, %v6484
        %v6486 = vand.u32 %v6485, 4294901760
        %6487 = vmatprep.subr.mxu0 %v6486
        %v6488 = vand.u32 %v5653, 4294901760
        %v6489 = vsub.f32 %v5653, %v6488
        %v6490 = vand.u32 %v6489, 4294901760
        %6491 = vmatpush1.msra.mxu0 %v6490
        %v6492 = vand.u32 %v5647, 4294901760
        %v6493 = vsub.f32 %v5647, %v6492
        %v6494 = vand.u32 %v6493, 4294901760
        %6495 = vmatprep.subr.mxu0 %v6494
        %v6496 = vand.u32 %v5646, 4294901760
        %v6497 = vsub.f32 %v5646, %v6496
        %v6498 = vand.u32 %v6497, 4294901760
        %6499 = vmatpush1.msra.mxu0 %v6498
        %v6500 = vand.u32 %v5640, 4294901760
        %v6501 = vsub.f32 %v5640, %v6500
        %v6502 = vand.u32 %v6501, 4294901760
        %6503 = vmatprep.subr.mxu0 %v6502
        %v6504 = vand.u32 %v5639, 4294901760
        %v6505 = vsub.f32 %v5639, %v6504
        %v6506 = vand.u32 %v6505, 4294901760
        %6507 = vmatpush1.msra.mxu0 %v6506
        %v6508 = vand.u32 %v5633, 4294901760
        %v6509 = vsub.f32 %v5633, %v6508
        %v6510 = vand.u32 %v6509, 4294901760
        %6511 = vmatprep.subr.mxu0 %v6510
        %v6512 = vand.u32 %v5632, 4294901760
        %v6513 = vsub.f32 %v5632, %v6512
        %v6514 = vand.u32 %v6513, 4294901760
        %6515 = vmatpush1.msra.mxu0 %v6514
        %v6516 = vand.u32 %v5626, 4294901760
        %v6517 = vsub.f32 %v5626, %v6516
        %v6518 = vand.u32 %v6517, 4294901760
        %6519 = vmatprep.subr.mxu0 %v6518
        %v6520 = vand.u32 %v5625, 4294901760
        %v6521 = vsub.f32 %v5625, %v6520
        %v6522 = vand.u32 %v6521, 4294901760
        %6523 = vmatpush1.msra.mxu0 %v6522
        %v6524 = vand.u32 %v5619, 4294901760
        %v6525 = vsub.f32 %v5619, %v6524
        %v6526 = vand.u32 %v6525, 4294901760
        %6527 = vmatprep.subr.mxu0 %v6526
        %v6528 = vand.u32 %v5618, 4294901760
        %v6529 = vsub.f32 %v5618, %v6528
        %v6530 = vand.u32 %v6529, 4294901760
        %6531 = vmatpush1.msra.mxu0 %v6530
        %v6532 = vand.u32 %v5612, 4294901760
        %v6533 = vsub.f32 %v5612, %v6532
        %v6534 = vand.u32 %v6533, 4294901760
        %6535 = vmatprep.subr.mxu0 %v6534
        %v6536 = vand.u32 %v5611, 4294901760
        %v6537 = vsub.f32 %v5611, %v6536
        %v6538 = vand.u32 %v6537, 4294901760
        %6539 = vmatpush1.msra.mxu0 %v6538
        %v6540 = vand.u32 %v5605, 4294901760
        %v6541 = vsub.f32 %v5605, %v6540
        %v6542 = vand.u32 %v6541, 4294901760
        %6543 = vmatprep.subr.mxu0 %v6542
        %v6544 = vand.u32 %v5604, 4294901760
        %v6545 = vsub.f32 %v5604, %v6544
        %v6546 = vand.u32 %v6545, 4294901760
        %6547 = vmatpush1.msra.mxu0 %v6546
        %v6548 = vand.u32 %v5598, 4294901760
        %v6549 = vsub.f32 %v5598, %v6548
        %v6550 = vand.u32 %v6549, 4294901760
        %6551 = vmatprep.subr.mxu0 %v6550
        %v6552 = vand.u32 %v5597, 4294901760
        %v6553 = vsub.f32 %v5597, %v6552
        %v6554 = vand.u32 %v6553, 4294901760
        %6555 = vmatpush1.msra.mxu0 %v6554
        %v6556 = vand.u32 %v5591, 4294901760
        %v6557 = vsub.f32 %v5591, %v6556
        %v6558 = vand.u32 %v6557, 4294901760
        %6559 = vmatprep.subr.mxu0 %v6558
        %v6560 = vand.u32 %v5590, 4294901760
        %v6561 = vsub.f32 %v5590, %v6560
        %v6562 = vand.u32 %v6561, 4294901760
        %6563 = vmatpush1.msra.mxu0 %v6562
        %v6564 = vand.u32 %v5584, 4294901760
        %v6565 = vsub.f32 %v5584, %v6564
        %v6566 = vand.u32 %v6565, 4294901760
        %6567 = vmatprep.subr.mxu0 %v6566
        %v6568 = vand.u32 %v5583, 4294901760
        %v6569 = vsub.f32 %v5583, %v6568
        %v6570 = vand.u32 %v6569, 4294901760
        %6571 = vmatpush1.msra.mxu0 %v6570
        %v6572 = vand.u32 %v5577, 4294901760
        %v6573 = vsub.f32 %v5577, %v6572
        %v6574 = vand.u32 %v6573, 4294901760
        %6575 = vmatprep.subr.mxu0 %v6574
        %v6576 = vand.u32 %v5576, 4294901760
        %v6577 = vsub.f32 %v5576, %v6576
        %v6578 = vand.u32 %v6577, 4294901760
        %6579 = vmatpush1.msra.mxu0 %v6578
        %v6580 = vand.u32 %v5570, 4294901760
        %v6581 = vsub.f32 %v5570, %v6580
        %v6582 = vand.u32 %v6581, 4294901760
        %6583 = vmatprep.subr.mxu0 %v6582
        %v6584 = vand.u32 %v5569, 4294901760
        %v6585 = vsub.f32 %v5569, %v6584
        %v6586 = vand.u32 %v6585, 4294901760
        %6587 = vmatpush1.msra.mxu0 %v6586
        %v6588 = vand.u32 %v5563, 4294901760
        %v6589 = vsub.f32 %v5563, %v6588
        %v6590 = vand.u32 %v6589, 4294901760
        %6591 = vmatprep.subr.mxu0 %v6590
        %v6592 = vand.u32 %v5562, 4294901760
        %v6593 = vsub.f32 %v5562, %v6592
        %v6594 = vand.u32 %v6593, 4294901760
        %6595 = vmatpush1.msra.mxu0 %v6594
        %6596 = vmatprep.subr.mxu0 0.0
        %6597 = vmatpush2.msra.mxu0 0.0
        %6598 = vmatprep.subr.mxu0 0.0
        %6599 = vmatpush2.msra.mxu0 0.0
        %6600 = vmatprep.subr.mxu0 0.0
        %6601 = vmatpush2.msra.mxu0 0.0
        %6602 = vmatprep.subr.mxu0 0.0
        %6603 = vmatpush2.msra.mxu0 0.0
        %6604 = vmatprep.subr.mxu0 0.0
        %6605 = vmatpush2.msra.mxu0 0.0
        %6606 = vmatprep.subr.mxu0 0.0
        %6607 = vmatpush2.msra.mxu0 0.0
        %6608 = vmatprep.subr.mxu0 0.0
        %6609 = vmatpush2.msra.mxu0 0.0
        %6610 = vmatprep.subr.mxu0 0.0
        %6611 = vmatpush2.msra.mxu0 0.0
        %6612 = vmatprep.subr.mxu0 0.0
        %6613 = vmatpush2.msra.mxu0 0.0
        %6614 = vmatprep.subr.mxu0 0.0
        %6615 = vmatpush2.msra.mxu0 0.0
        %6616 = vmatprep.subr.mxu0 0.0
        %6617 = vmatpush2.msra.mxu0 0.0
        %6618 = vmatprep.subr.mxu0 0.0
        %6619 = vmatpush2.msra.mxu0 0.0
        %6620 = vmatprep.subr.mxu0 0.0
        %6621 = vmatpush2.msra.mxu0 0.0
        %6622 = vmatprep.subr.mxu0 0.0
        %6623 = vmatpush2.msra.mxu0 0.0
        %v6624 = vand.u32 %v5682, 4294901760
        %v6625 = vsub.f32 %v5682, %v6624
        %v6626 = vand.u32 %v6625, 4294901760
        %6627 = vmatprep.subr.mxu0 %v6626
        %v6628 = vand.u32 %v5681, 4294901760
        %v6629 = vsub.f32 %v5681, %v6628
        %v6630 = vand.u32 %v6629, 4294901760
        %6631 = vmatpush2.msra.mxu0 %v6630
        %v6632 = vand.u32 %v5675, 4294901760
        %v6633 = vsub.f32 %v5675, %v6632
        %v6634 = vand.u32 %v6633, 4294901760
        %6635 = vmatprep.subr.mxu0 %v6634
        %v6636 = vand.u32 %v5674, 4294901760
        %v6637 = vsub.f32 %v5674, %v6636
        %v6638 = vand.u32 %v6637, 4294901760
        %6639 = vmatpush2.msra.mxu0 %v6638
        %v6640 = vand.u32 %v5689, 4294901760
        %6641 = vmatprep.mubr.f32.mxu0 %v6640
        %v6642 = vand.u32 %v5554, 4294901760
        %6643 = vmatmul.mubr.f32.gmra.mxu0 %v6642
        %v6644 = vpop.f32.mrf.mxu0
        %v6645 = vadd.f32 %v6428, %v6644
        %v6646 = vpop.f32.mrf.mxu0
        %v6647 = vadd.f32 %v6430, %v6646
        %v6648 = vand.u32 %v5692, 4294901760
        %6649 = vmatprep.mubr.f32.mxu0 %v6648
        %v6650 = vand.u32 %v5556, 4294901760
        %6651 = vmatmul.mubr.f32.gmra.mxu0 %v6650
        %v6652 = vpop.f32.mrf.mxu0
        %v6653 = vadd.f32 %v6440, %v6652
        %v6654 = vpop.f32.mrf.mxu0
        %v6655 = vadd.f32 %v6442, %v6654
        %v6656 = vand.u32 %v5695, 4294901760
        %6657 = vmatprep.mubr.f32.mxu0 %v6656
        %v6658 = vand.u32 %v5558, 4294901760
        %6659 = vmatmul.mubr.f32.gmra.mxu0 %v6658
        %v6660 = vpop.f32.mrf.mxu0
        %v6661 = vadd.f32 %v6452, %v6660
        %v6662 = vpop.f32.mrf.mxu0
        %v6663 = vadd.f32 %v6454, %v6662
        %v6664 = vand.u32 %v5698, 4294901760
        %6665 = vmatprep.mubr.f32.mxu0 %v6664
        %v6666 = vand.u32 %v5560, 4294901760
        %6667 = vmatmul.mubr.f32.gmra.mxu0 %v6666
        %v6668 = vpop.f32.mrf.mxu0
        %v6669 = vadd.f32 %v6464, %v6668
        %v6670 = vpop.f32.mrf.mxu0
        %v6671 = vadd.f32 %v6466, %v6670
        %6672 = vdwg.mxu0
        %v6673 = vand.u32 %v5668, 4294901760
        %6674 = vmatprep.subr.mxu0 %v6673
        %v6675 = vand.u32 %v5667, 4294901760
        %6676 = vmatpush1.msra.mxu0 %v6675
        %v6677 = vand.u32 %v5661, 4294901760
        %6678 = vmatprep.subr.mxu0 %v6677
        %v6679 = vand.u32 %v5660, 4294901760
        %6680 = vmatpush1.msra.mxu0 %v6679
        %v6681 = vand.u32 %v5654, 4294901760
        %6682 = vmatprep.subr.mxu0 %v6681
        %v6683 = vand.u32 %v5653, 4294901760
        %6684 = vmatpush1.msra.mxu0 %v6683
        %v6685 = vand.u32 %v5647, 4294901760
        %6686 = vmatprep.subr.mxu0 %v6685
        %v6687 = vand.u32 %v5646, 4294901760
        %6688 = vmatpush1.msra.mxu0 %v6687
        %v6689 = vand.u32 %v5640, 4294901760
        %6690 = vmatprep.subr.mxu0 %v6689
        %v6691 = vand.u32 %v5639, 4294901760
        %6692 = vmatpush1.msra.mxu0 %v6691
        %v6693 = vand.u32 %v5633, 4294901760
        %6694 = vmatprep.subr.mxu0 %v6693
        %v6695 = vand.u32 %v5632, 4294901760
        %6696 = vmatpush1.msra.mxu0 %v6695
        %v6697 = vand.u32 %v5626, 4294901760
        %6698 = vmatprep.subr.mxu0 %v6697
        %v6699 = vand.u32 %v5625, 4294901760
        %6700 = vmatpush1.msra.mxu0 %v6699
        %v6701 = vand.u32 %v5619, 4294901760
        %6702 = vmatprep.subr.mxu0 %v6701
        %v6703 = vand.u32 %v5618, 4294901760
        %6704 = vmatpush1.msra.mxu0 %v6703
        %v6705 = vand.u32 %v5612, 4294901760
        %6706 = vmatprep.subr.mxu0 %v6705
        %v6707 = vand.u32 %v5611, 4294901760
        %6708 = vmatpush1.msra.mxu0 %v6707
        %v6709 = vand.u32 %v5605, 4294901760
        %6710 = vmatprep.subr.mxu0 %v6709
        %v6711 = vand.u32 %v5604, 4294901760
        %6712 = vmatpush1.msra.mxu0 %v6711
        %v6713 = vand.u32 %v5598, 4294901760
        %6714 = vmatprep.subr.mxu0 %v6713
        %v6715 = vand.u32 %v5597, 4294901760
        %6716 = vmatpush1.msra.mxu0 %v6715
        %v6717 = vand.u32 %v5591, 4294901760
        %6718 = vmatprep.subr.mxu0 %v6717
        %v6719 = vand.u32 %v5590, 4294901760
        %6720 = vmatpush1.msra.mxu0 %v6719
        %v6721 = vand.u32 %v5584, 4294901760
        %6722 = vmatprep.subr.mxu0 %v6721
        %v6723 = vand.u32 %v5583, 4294901760
        %6724 = vmatpush1.msra.mxu0 %v6723
        %v6725 = vand.u32 %v5577, 4294901760
        %6726 = vmatprep.subr.mxu0 %v6725
        %v6727 = vand.u32 %v5576, 4294901760
        %6728 = vmatpush1.msra.mxu0 %v6727
        %v6729 = vand.u32 %v5570, 4294901760
        %6730 = vmatprep.subr.mxu0 %v6729
        %v6731 = vand.u32 %v5569, 4294901760
        %6732 = vmatpush1.msra.mxu0 %v6731
        %v6733 = vand.u32 %v5563, 4294901760
        %6734 = vmatprep.subr.mxu0 %v6733
        %v6735 = vand.u32 %v5562, 4294901760
        %6736 = vmatpush1.msra.mxu0 %v6735
        %6737 = vmatprep.subr.mxu0 0.0
        %6738 = vmatpush2.msra.mxu0 0.0
        %6739 = vmatprep.subr.mxu0 0.0
        %6740 = vmatpush2.msra.mxu0 0.0
        %6741 = vmatprep.subr.mxu0 0.0
        %6742 = vmatpush2.msra.mxu0 0.0
        %6743 = vmatprep.subr.mxu0 0.0
        %6744 = vmatpush2.msra.mxu0 0.0
        %6745 = vmatprep.subr.mxu0 0.0
        %6746 = vmatpush2.msra.mxu0 0.0
        %6747 = vmatprep.subr.mxu0 0.0
        %6748 = vmatpush2.msra.mxu0 0.0
        %6749 = vmatprep.subr.mxu0 0.0
        %6750 = vmatpush2.msra.mxu0 0.0
        %6751 = vmatprep.subr.mxu0 0.0
        %6752 = vmatpush2.msra.mxu0 0.0
        %6753 = vmatprep.subr.mxu0 0.0
        %6754 = vmatpush2.msra.mxu0 0.0
        %6755 = vmatprep.subr.mxu0 0.0
        %6756 = vmatpush2.msra.mxu0 0.0
        %6757 = vmatprep.subr.mxu0 0.0
        %6758 = vmatpush2.msra.mxu0 0.0
        %6759 = vmatprep.subr.mxu0 0.0
        %6760 = vmatpush2.msra.mxu0 0.0
        %6761 = vmatprep.subr.mxu0 0.0
        %6762 = vmatpush2.msra.mxu0 0.0
        %6763 = vmatprep.subr.mxu0 0.0
        %6764 = vmatpush2.msra.mxu0 0.0
        %v6765 = vand.u32 %v5682, 4294901760
        %6766 = vmatprep.subr.mxu0 %v6765
        %v6767 = vand.u32 %v5681, 4294901760
        %6768 = vmatpush2.msra.mxu0 %v6767
        %v6769 = vand.u32 %v5675, 4294901760
        %6770 = vmatprep.subr.mxu0 %v6769
        %v6771 = vand.u32 %v5674, 4294901760
        %6772 = vmatpush2.msra.mxu0 %v6771
        %v6773 = vand.u32 %v5689, 4294901760
        %6774 = vmatprep.mubr.f32.mxu0 %v6773
        %v6775 = vand.u32 %v5554, 4294901760
        %6776 = vmatmul.mubr.f32.gmra.mxu0 %v6775
        %v6777 = vpop.f32.mrf.mxu0
        %v6778 = vadd.f32 %v6645, %v6777
        %v6779 = vpop.f32.mrf.mxu0
        %v6780 = vadd.f32 %v6647, %v6779
        %v6781 = vand.u32 %v5692, 4294901760
        %6782 = vmatprep.mubr.f32.mxu0 %v6781
        %v6783 = vand.u32 %v5556, 4294901760
        %6784 = vmatmul.mubr.f32.gmra.mxu0 %v6783
        %v6785 = vpop.f32.mrf.mxu0
        %v6786 = vadd.f32 %v6653, %v6785
        %v6787 = vpop.f32.mrf.mxu0
        %v6788 = vadd.f32 %v6655, %v6787
        %v6789 = vand.u32 %v5695, 4294901760
        %6790 = vmatprep.mubr.f32.mxu0 %v6789
        %v6791 = vand.u32 %v5558, 4294901760
        %6792 = vmatmul.mubr.f32.gmra.mxu0 %v6791
        %v6793 = vpop.f32.mrf.mxu0
        %v6794 = vadd.f32 %v6661, %v6793
        %v6795 = vpop.f32.mrf.mxu0
        %v6796 = vadd.f32 %v6663, %v6795
        %v6797 = vand.u32 %v5698, 4294901760
        %6798 = vmatprep.mubr.f32.mxu0 %v6797
        %v6799 = vand.u32 %v5560, 4294901760
        %6800 = vmatmul.mubr.f32.gmra.mxu0 %v6799
        %v6801 = vpop.f32.mrf.mxu0
        %v6802 = vadd.f32 %v6669, %v6801
        %v6803 = vpop.f32.mrf.mxu0
        %v6804 = vadd.f32 %v6671, %v6803
        %6805 = vdwg.mxu0
        %v6806 = vand.u32 %v5670, 4294901760
        %6807 = vmatprep.subr.mxu0 %v6806
        %v6808 = vand.u32 %v5669, 4294901760
        %6809 = vmatpush1.msra.mxu0 %v6808
        %v6810 = vand.u32 %v5663, 4294901760
        %6811 = vmatprep.subr.mxu0 %v6810
        %v6812 = vand.u32 %v5662, 4294901760
        %6813 = vmatpush1.msra.mxu0 %v6812
        %v6814 = vand.u32 %v5656, 4294901760
        %6815 = vmatprep.subr.mxu0 %v6814
        %v6816 = vand.u32 %v5655, 4294901760
        %6817 = vmatpush1.msra.mxu0 %v6816
        %v6818 = vand.u32 %v5649, 4294901760
        %6819 = vmatprep.subr.mxu0 %v6818
        %v6820 = vand.u32 %v5648, 4294901760
        %6821 = vmatpush1.msra.mxu0 %v6820
        %v6822 = vand.u32 %v5642, 4294901760
        %6823 = vmatprep.subr.mxu0 %v6822
        %v6824 = vand.u32 %v5641, 4294901760
        %6825 = vmatpush1.msra.mxu0 %v6824
        %v6826 = vand.u32 %v5635, 4294901760
        %6827 = vmatprep.subr.mxu0 %v6826
        %v6828 = vand.u32 %v5634, 4294901760
        %6829 = vmatpush1.msra.mxu0 %v6828
        %v6830 = vand.u32 %v5628, 4294901760
        %6831 = vmatprep.subr.mxu0 %v6830
        %v6832 = vand.u32 %v5627, 4294901760
        %6833 = vmatpush1.msra.mxu0 %v6832
        %v6834 = vand.u32 %v5621, 4294901760
        %6835 = vmatprep.subr.mxu0 %v6834
        %v6836 = vand.u32 %v5620, 4294901760
        %6837 = vmatpush1.msra.mxu0 %v6836
        %v6838 = vand.u32 %v5614, 4294901760
        %6839 = vmatprep.subr.mxu0 %v6838
        %v6840 = vand.u32 %v5613, 4294901760
        %6841 = vmatpush1.msra.mxu0 %v6840
        %v6842 = vand.u32 %v5607, 4294901760
        %6843 = vmatprep.subr.mxu0 %v6842
        %v6844 = vand.u32 %v5606, 4294901760
        %6845 = vmatpush1.msra.mxu0 %v6844
        %v6846 = vand.u32 %v5600, 4294901760
        %6847 = vmatprep.subr.mxu0 %v6846
        %v6848 = vand.u32 %v5599, 4294901760
        %6849 = vmatpush1.msra.mxu0 %v6848
        %v6850 = vand.u32 %v5593, 4294901760
        %6851 = vmatprep.subr.mxu0 %v6850
        %v6852 = vand.u32 %v5592, 4294901760
        %6853 = vmatpush1.msra.mxu0 %v6852
        %v6854 = vand.u32 %v5586, 4294901760
        %6855 = vmatprep.subr.mxu0 %v6854
        %v6856 = vand.u32 %v5585, 4294901760
        %6857 = vmatpush1.msra.mxu0 %v6856
        %v6858 = vand.u32 %v5579, 4294901760
        %6859 = vmatprep.subr.mxu0 %v6858
        %v6860 = vand.u32 %v5578, 4294901760
        %6861 = vmatpush1.msra.mxu0 %v6860
        %v6862 = vand.u32 %v5572, 4294901760
        %6863 = vmatprep.subr.mxu0 %v6862
        %v6864 = vand.u32 %v5571, 4294901760
        %6865 = vmatpush1.msra.mxu0 %v6864
        %v6866 = vand.u32 %v5565, 4294901760
        %6867 = vmatprep.subr.mxu0 %v6866
        %v6868 = vand.u32 %v5564, 4294901760
        %6869 = vmatpush1.msra.mxu0 %v6868
        %6870 = vmatprep.subr.mxu0 0.0
        %6871 = vmatpush2.msra.mxu0 0.0
        %6872 = vmatprep.subr.mxu0 0.0
        %6873 = vmatpush2.msra.mxu0 0.0
        %6874 = vmatprep.subr.mxu0 0.0
        %6875 = vmatpush2.msra.mxu0 0.0
        %6876 = vmatprep.subr.mxu0 0.0
        %6877 = vmatpush2.msra.mxu0 0.0
        %6878 = vmatprep.subr.mxu0 0.0
        %6879 = vmatpush2.msra.mxu0 0.0
        %6880 = vmatprep.subr.mxu0 0.0
        %6881 = vmatpush2.msra.mxu0 0.0
        %6882 = vmatprep.subr.mxu0 0.0
        %6883 = vmatpush2.msra.mxu0 0.0
        %6884 = vmatprep.subr.mxu0 0.0
        %6885 = vmatpush2.msra.mxu0 0.0
        %6886 = vmatprep.subr.mxu0 0.0
        %6887 = vmatpush2.msra.mxu0 0.0
        %6888 = vmatprep.subr.mxu0 0.0
        %6889 = vmatpush2.msra.mxu0 0.0
        %6890 = vmatprep.subr.mxu0 0.0
        %6891 = vmatpush2.msra.mxu0 0.0
        %6892 = vmatprep.subr.mxu0 0.0
        %6893 = vmatpush2.msra.mxu0 0.0
        %6894 = vmatprep.subr.mxu0 0.0
        %6895 = vmatpush2.msra.mxu0 0.0
        %6896 = vmatprep.subr.mxu0 0.0
        %6897 = vmatpush2.msra.mxu0 0.0
        %v6898 = vand.u32 %v5684, 4294901760
        %6899 = vmatprep.subr.mxu0 %v6898
        %v6900 = vand.u32 %v5683, 4294901760
        %6901 = vmatpush2.msra.mxu0 %v6900
        %v6902 = vand.u32 %v5677, 4294901760
        %6903 = vmatprep.subr.mxu0 %v6902
        %v6904 = vand.u32 %v5676, 4294901760
        %6905 = vmatpush2.msra.mxu0 %v6904
        %v6906 = vand.u32 %v5689, 4294901760
        %v6907 = vsub.f32 %v5689, %v6906
        %v6908 = vand.u32 %v6907, 4294901760
        %v6909 = vsub.f32 %v6907, %v6908
        %v6910 = vand.u32 %v6909, 4294901760
        %6911 = vmatprep.mubr.f32.mxu0 %v6910
        %v6912 = vand.u32 %v5554, 4294901760
        %v6913 = vsub.f32 %v5554, %v6912
        %v6914 = vand.u32 %v6913, 4294901760
        %v6915 = vsub.f32 %v6913, %v6914
        %v6916 = vand.u32 %v6915, 4294901760
        %6917 = vmatmul.mubr.f32.gmra.mxu0 %v6916
        %v6918 = vpop.f32.mrf.mxu0
        %v6919 = vadd.f32 0.0, %v6918
        %v6920 = vpop.f32.mrf.mxu0
        %v6921 = vadd.f32 0.0, %v6920
        %v6922 = vand.u32 %v5692, 4294901760
        %v6923 = vsub.f32 %v5692, %v6922
        %v6924 = vand.u32 %v6923, 4294901760
        %v6925 = vsub.f32 %v6923, %v6924
        %v6926 = vand.u32 %v6925, 4294901760
        %6927 = vmatprep.mubr.f32.mxu0 %v6926
        %v6928 = vand.u32 %v5556, 4294901760
        %v6929 = vsub.f32 %v5556, %v6928
        %v6930 = vand.u32 %v6929, 4294901760
        %v6931 = vsub.f32 %v6929, %v6930
        %v6932 = vand.u32 %v6931, 4294901760
        %6933 = vmatmul.mubr.f32.gmra.mxu0 %v6932
        %v6934 = vpop.f32.mrf.mxu0
        %v6935 = vadd.f32 0.0, %v6934
        %v6936 = vpop.f32.mrf.mxu0
        %v6937 = vadd.f32 0.0, %v6936
        %v6938 = vand.u32 %v5695, 4294901760
        %v6939 = vsub.f32 %v5695, %v6938
        %v6940 = vand.u32 %v6939, 4294901760
        %v6941 = vsub.f32 %v6939, %v6940
        %v6942 = vand.u32 %v6941, 4294901760
        %6943 = vmatprep.mubr.f32.mxu0 %v6942
        %v6944 = vand.u32 %v5558, 4294901760
        %v6945 = vsub.f32 %v5558, %v6944
        %v6946 = vand.u32 %v6945, 4294901760
        %v6947 = vsub.f32 %v6945, %v6946
        %v6948 = vand.u32 %v6947, 4294901760
        %6949 = vmatmul.mubr.f32.gmra.mxu0 %v6948
        %v6950 = vpop.f32.mrf.mxu0
        %v6951 = vadd.f32 0.0, %v6950
        %v6952 = vpop.f32.mrf.mxu0
        %v6953 = vadd.f32 0.0, %v6952
        %v6954 = vand.u32 %v5698, 4294901760
        %v6955 = vsub.f32 %v5698, %v6954
        %v6956 = vand.u32 %v6955, 4294901760
        %v6957 = vsub.f32 %v6955, %v6956
        %v6958 = vand.u32 %v6957, 4294901760
        %6959 = vmatprep.mubr.f32.mxu0 %v6958
        %v6960 = vand.u32 %v5560, 4294901760
        %v6961 = vsub.f32 %v5560, %v6960
        %v6962 = vand.u32 %v6961, 4294901760
        %v6963 = vsub.f32 %v6961, %v6962
        %v6964 = vand.u32 %v6963, 4294901760
        %6965 = vmatmul.mubr.f32.gmra.mxu0 %v6964
        %v6966 = vpop.f32.mrf.mxu0
        %v6967 = vadd.f32 0.0, %v6966
        %v6968 = vpop.f32.mrf.mxu0
        %v6969 = vadd.f32 0.0, %v6968
        %6970 = vdwg.mxu0
        %v6971 = vand.u32 %v5670, 4294901760
        %v6972 = vsub.f32 %v5670, %v6971
        %v6973 = vand.u32 %v6972, 4294901760
        %v6974 = vsub.f32 %v6972, %v6973
        %v6975 = vand.u32 %v6974, 4294901760
        %6976 = vmatprep.subr.mxu0 %v6975
        %v6977 = vand.u32 %v5669, 4294901760
        %v6978 = vsub.f32 %v5669, %v6977
        %v6979 = vand.u32 %v6978, 4294901760
        %v6980 = vsub.f32 %v6978, %v6979
        %v6981 = vand.u32 %v6980, 4294901760
        %6982 = vmatpush1.msra.mxu0 %v6981
        %v6983 = vand.u32 %v5663, 4294901760
        %v6984 = vsub.f32 %v5663, %v6983
        %v6985 = vand.u32 %v6984, 4294901760
        %v6986 = vsub.f32 %v6984, %v6985
        %v6987 = vand.u32 %v6986, 4294901760
        %6988 = vmatprep.subr.mxu0 %v6987
        %v6989 = vand.u32 %v5662, 4294901760
        %v6990 = vsub.f32 %v5662, %v6989
        %v6991 = vand.u32 %v6990, 4294901760
        %v6992 = vsub.f32 %v6990, %v6991
        %v6993 = vand.u32 %v6992, 4294901760
        %6994 = vmatpush1.msra.mxu0 %v6993
        %v6995 = vand.u32 %v5656, 4294901760
        %v6996 = vsub.f32 %v5656, %v6995
        %v6997 = vand.u32 %v6996, 4294901760
        %v6998 = vsub.f32 %v6996, %v6997
        %v6999 = vand.u32 %v6998, 4294901760
        %7000 = vmatprep.subr.mxu0 %v6999
        %v7001 = vand.u32 %v5655, 4294901760
        %v7002 = vsub.f32 %v5655, %v7001
        %v7003 = vand.u32 %v7002, 4294901760
        %v7004 = vsub.f32 %v7002, %v7003
        %v7005 = vand.u32 %v7004, 4294901760
        %7006 = vmatpush1.msra.mxu0 %v7005
        %v7007 = vand.u32 %v5649, 4294901760
        %v7008 = vsub.f32 %v5649, %v7007
        %v7009 = vand.u32 %v7008, 4294901760
        %v7010 = vsub.f32 %v7008, %v7009
        %v7011 = vand.u32 %v7010, 4294901760
        %7012 = vmatprep.subr.mxu0 %v7011
        %v7013 = vand.u32 %v5648, 4294901760
        %v7014 = vsub.f32 %v5648, %v7013
        %v7015 = vand.u32 %v7014, 4294901760
        %v7016 = vsub.f32 %v7014, %v7015
        %v7017 = vand.u32 %v7016, 4294901760
        %7018 = vmatpush1.msra.mxu0 %v7017
        %v7019 = vand.u32 %v5642, 4294901760
        %v7020 = vsub.f32 %v5642, %v7019
        %v7021 = vand.u32 %v7020, 4294901760
        %v7022 = vsub.f32 %v7020, %v7021
        %v7023 = vand.u32 %v7022, 4294901760
        %7024 = vmatprep.subr.mxu0 %v7023
        %v7025 = vand.u32 %v5641, 4294901760
        %v7026 = vsub.f32 %v5641, %v7025
        %v7027 = vand.u32 %v7026, 4294901760
        %v7028 = vsub.f32 %v7026, %v7027
        %v7029 = vand.u32 %v7028, 4294901760
        %7030 = vmatpush1.msra.mxu0 %v7029
        %v7031 = vand.u32 %v5635, 4294901760
        %v7032 = vsub.f32 %v5635, %v7031
        %v7033 = vand.u32 %v7032, 4294901760
        %v7034 = vsub.f32 %v7032, %v7033
        %v7035 = vand.u32 %v7034, 4294901760
        %7036 = vmatprep.subr.mxu0 %v7035
        %v7037 = vand.u32 %v5634, 4294901760
        %v7038 = vsub.f32 %v5634, %v7037
        %v7039 = vand.u32 %v7038, 4294901760
        %v7040 = vsub.f32 %v7038, %v7039
        %v7041 = vand.u32 %v7040, 4294901760
        %7042 = vmatpush1.msra.mxu0 %v7041
        %v7043 = vand.u32 %v5628, 4294901760
        %v7044 = vsub.f32 %v5628, %v7043
        %v7045 = vand.u32 %v7044, 4294901760
        %v7046 = vsub.f32 %v7044, %v7045
        %v7047 = vand.u32 %v7046, 4294901760
        %7048 = vmatprep.subr.mxu0 %v7047
        %v7049 = vand.u32 %v5627, 4294901760
        %v7050 = vsub.f32 %v5627, %v7049
        %v7051 = vand.u32 %v7050, 4294901760
        %v7052 = vsub.f32 %v7050, %v7051
        %v7053 = vand.u32 %v7052, 4294901760
        %7054 = vmatpush1.msra.mxu0 %v7053
        %v7055 = vand.u32 %v5621, 4294901760
        %v7056 = vsub.f32 %v5621, %v7055
        %v7057 = vand.u32 %v7056, 4294901760
        %v7058 = vsub.f32 %v7056, %v7057
        %v7059 = vand.u32 %v7058, 4294901760
        %7060 = vmatprep.subr.mxu0 %v7059
        %v7061 = vand.u32 %v5620, 4294901760
        %v7062 = vsub.f32 %v5620, %v7061
        %v7063 = vand.u32 %v7062, 4294901760
        %v7064 = vsub.f32 %v7062, %v7063
        %v7065 = vand.u32 %v7064, 4294901760
        %7066 = vmatpush1.msra.mxu0 %v7065
        %v7067 = vand.u32 %v5614, 4294901760
        %v7068 = vsub.f32 %v5614, %v7067
        %v7069 = vand.u32 %v7068, 4294901760
        %v7070 = vsub.f32 %v7068, %v7069
        %v7071 = vand.u32 %v7070, 4294901760
        %7072 = vmatprep.subr.mxu0 %v7071
        %v7073 = vand.u32 %v5613, 4294901760
        %v7074 = vsub.f32 %v5613, %v7073
        %v7075 = vand.u32 %v7074, 4294901760
        %v7076 = vsub.f32 %v7074, %v7075
        %v7077 = vand.u32 %v7076, 4294901760
        %7078 = vmatpush1.msra.mxu0 %v7077
        %v7079 = vand.u32 %v5607, 4294901760
        %v7080 = vsub.f32 %v5607, %v7079
        %v7081 = vand.u32 %v7080, 4294901760
        %v7082 = vsub.f32 %v7080, %v7081
        %v7083 = vand.u32 %v7082, 4294901760
        %7084 = vmatprep.subr.mxu0 %v7083
        %v7085 = vand.u32 %v5606, 4294901760
        %v7086 = vsub.f32 %v5606, %v7085
        %v7087 = vand.u32 %v7086, 4294901760
        %v7088 = vsub.f32 %v7086, %v7087
        %v7089 = vand.u32 %v7088, 4294901760
        %7090 = vmatpush1.msra.mxu0 %v7089
        %v7091 = vand.u32 %v5600, 4294901760
        %v7092 = vsub.f32 %v5600, %v7091
        %v7093 = vand.u32 %v7092, 4294901760
        %v7094 = vsub.f32 %v7092, %v7093
        %v7095 = vand.u32 %v7094, 4294901760
        %7096 = vmatprep.subr.mxu0 %v7095
        %v7097 = vand.u32 %v5599, 4294901760
        %v7098 = vsub.f32 %v5599, %v7097
        %v7099 = vand.u32 %v7098, 4294901760
        %v7100 = vsub.f32 %v7098, %v7099
        %v7101 = vand.u32 %v7100, 4294901760
        %7102 = vmatpush1.msra.mxu0 %v7101
        %v7103 = vand.u32 %v5593, 4294901760
        %v7104 = vsub.f32 %v5593, %v7103
        %v7105 = vand.u32 %v7104, 4294901760
        %v7106 = vsub.f32 %v7104, %v7105
        %v7107 = vand.u32 %v7106, 4294901760
        %7108 = vmatprep.subr.mxu0 %v7107
        %v7109 = vand.u32 %v5592, 4294901760
        %v7110 = vsub.f32 %v5592, %v7109
        %v7111 = vand.u32 %v7110, 4294901760
        %v7112 = vsub.f32 %v7110, %v7111
        %v7113 = vand.u32 %v7112, 4294901760
        %7114 = vmatpush1.msra.mxu0 %v7113
        %v7115 = vand.u32 %v5586, 4294901760
        %v7116 = vsub.f32 %v5586, %v7115
        %v7117 = vand.u32 %v7116, 4294901760
        %v7118 = vsub.f32 %v7116, %v7117
        %v7119 = vand.u32 %v7118, 4294901760
        %7120 = vmatprep.subr.mxu0 %v7119
        %v7121 = vand.u32 %v5585, 4294901760
        %v7122 = vsub.f32 %v5585, %v7121
        %v7123 = vand.u32 %v7122, 4294901760
        %v7124 = vsub.f32 %v7122, %v7123
        %v7125 = vand.u32 %v7124, 4294901760
        %7126 = vmatpush1.msra.mxu0 %v7125
        %v7127 = vand.u32 %v5579, 4294901760
        %v7128 = vsub.f32 %v5579, %v7127
        %v7129 = vand.u32 %v7128, 4294901760
        %v7130 = vsub.f32 %v7128, %v7129
        %v7131 = vand.u32 %v7130, 4294901760
        %7132 = vmatprep.subr.mxu0 %v7131
        %v7133 = vand.u32 %v5578, 4294901760
        %v7134 = vsub.f32 %v5578, %v7133
        %v7135 = vand.u32 %v7134, 4294901760
        %v7136 = vsub.f32 %v7134, %v7135
        %v7137 = vand.u32 %v7136, 4294901760
        %7138 = vmatpush1.msra.mxu0 %v7137
        %v7139 = vand.u32 %v5572, 4294901760
        %v7140 = vsub.f32 %v5572, %v7139
        %v7141 = vand.u32 %v7140, 4294901760
        %v7142 = vsub.f32 %v7140, %v7141
        %v7143 = vand.u32 %v7142, 4294901760
        %7144 = vmatprep.subr.mxu0 %v7143
        %v7145 = vand.u32 %v5571, 4294901760
        %v7146 = vsub.f32 %v5571, %v7145
        %v7147 = vand.u32 %v7146, 4294901760
        %v7148 = vsub.f32 %v7146, %v7147
        %v7149 = vand.u32 %v7148, 4294901760
        %7150 = vmatpush1.msra.mxu0 %v7149
        %v7151 = vand.u32 %v5565, 4294901760
        %v7152 = vsub.f32 %v5565, %v7151
        %v7153 = vand.u32 %v7152, 4294901760
        %v7154 = vsub.f32 %v7152, %v7153
        %v7155 = vand.u32 %v7154, 4294901760
        %7156 = vmatprep.subr.mxu0 %v7155
        %v7157 = vand.u32 %v5564, 4294901760
        %v7158 = vsub.f32 %v5564, %v7157
        %v7159 = vand.u32 %v7158, 4294901760
        %v7160 = vsub.f32 %v7158, %v7159
        %v7161 = vand.u32 %v7160, 4294901760
        %7162 = vmatpush1.msra.mxu0 %v7161
        %7163 = vmatprep.subr.mxu0 0.0
        %7164 = vmatpush2.msra.mxu0 0.0
        %7165 = vmatprep.subr.mxu0 0.0
        %7166 = vmatpush2.msra.mxu0 0.0
        %7167 = vmatprep.subr.mxu0 0.0
        %7168 = vmatpush2.msra.mxu0 0.0
        %7169 = vmatprep.subr.mxu0 0.0
        %7170 = vmatpush2.msra.mxu0 0.0
        %7171 = vmatprep.subr.mxu0 0.0
        %7172 = vmatpush2.msra.mxu0 0.0
        %7173 = vmatprep.subr.mxu0 0.0
        %7174 = vmatpush2.msra.mxu0 0.0
        %7175 = vmatprep.subr.mxu0 0.0
        %7176 = vmatpush2.msra.mxu0 0.0
        %7177 = vmatprep.subr.mxu0 0.0
        %7178 = vmatpush2.msra.mxu0 0.0
        %7179 = vmatprep.subr.mxu0 0.0
        %7180 = vmatpush2.msra.mxu0 0.0
        %7181 = vmatprep.subr.mxu0 0.0
        %7182 = vmatpush2.msra.mxu0 0.0
        %7183 = vmatprep.subr.mxu0 0.0
        %7184 = vmatpush2.msra.mxu0 0.0
        %7185 = vmatprep.subr.mxu0 0.0
        %7186 = vmatpush2.msra.mxu0 0.0
        %7187 = vmatprep.subr.mxu0 0.0
        %7188 = vmatpush2.msra.mxu0 0.0
        %7189 = vmatprep.subr.mxu0 0.0
        %7190 = vmatpush2.msra.mxu0 0.0
        %v7191 = vand.u32 %v5684, 4294901760
        %v7192 = vsub.f32 %v5684, %v7191
        %v7193 = vand.u32 %v7192, 4294901760
        %v7194 = vsub.f32 %v7192, %v7193
        %v7195 = vand.u32 %v7194, 4294901760
        %7196 = vmatprep.subr.mxu0 %v7195
        %v7197 = vand.u32 %v5683, 4294901760
        %v7198 = vsub.f32 %v5683, %v7197
        %v7199 = vand.u32 %v7198, 4294901760
        %v7200 = vsub.f32 %v7198, %v7199
        %v7201 = vand.u32 %v7200, 4294901760
        %7202 = vmatpush2.msra.mxu0 %v7201
        %v7203 = vand.u32 %v5677, 4294901760
        %v7204 = vsub.f32 %v5677, %v7203
        %v7205 = vand.u32 %v7204, 4294901760
        %v7206 = vsub.f32 %v7204, %v7205
        %v7207 = vand.u32 %v7206, 4294901760
        %7208 = vmatprep.subr.mxu0 %v7207
        %v7209 = vand.u32 %v5676, 4294901760
        %v7210 = vsub.f32 %v5676, %v7209
        %v7211 = vand.u32 %v7210, 4294901760
        %v7212 = vsub.f32 %v7210, %v7211
        %v7213 = vand.u32 %v7212, 4294901760
        %7214 = vmatpush2.msra.mxu0 %v7213
        %v7215 = vand.u32 %v5689, 4294901760
        %7216 = vmatprep.mubr.f32.mxu0 %v7215
        %v7217 = vand.u32 %v5554, 4294901760
        %7218 = vmatmul.mubr.f32.gmra.mxu0 %v7217
        %v7219 = vpop.f32.mrf.mxu0
        %v7220 = vadd.f32 %v6919, %v7219
        %v7221 = vpop.f32.mrf.mxu0
        %v7222 = vadd.f32 %v6921, %v7221
        %v7223 = vand.u32 %v5692, 4294901760
        %7224 = vmatprep.mubr.f32.mxu0 %v7223
        %v7225 = vand.u32 %v5556, 4294901760
        %7226 = vmatmul.mubr.f32.gmra.mxu0 %v7225
        %v7227 = vpop.f32.mrf.mxu0
        %v7228 = vadd.f32 %v6935, %v7227
        %v7229 = vpop.f32.mrf.mxu0
        %v7230 = vadd.f32 %v6937, %v7229
        %v7231 = vand.u32 %v5695, 4294901760
        %7232 = vmatprep.mubr.f32.mxu0 %v7231
        %v7233 = vand.u32 %v5558, 4294901760
        %7234 = vmatmul.mubr.f32.gmra.mxu0 %v7233
        %v7235 = vpop.f32.mrf.mxu0
        %v7236 = vadd.f32 %v6951, %v7235
        %v7237 = vpop.f32.mrf.mxu0
        %v7238 = vadd.f32 %v6953, %v7237
        %v7239 = vand.u32 %v5698, 4294901760
        %7240 = vmatprep.mubr.f32.mxu0 %v7239
        %v7241 = vand.u32 %v5560, 4294901760
        %7242 = vmatmul.mubr.f32.gmra.mxu0 %v7241
        %v7243 = vpop.f32.mrf.mxu0
        %v7244 = vadd.f32 %v6967, %v7243
        %v7245 = vpop.f32.mrf.mxu0
        %v7246 = vadd.f32 %v6969, %v7245
        %7247 = vdwg.mxu0
        %v7248 = vand.u32 %v5670, 4294901760
        %v7249 = vsub.f32 %v5670, %v7248
        %7250 = vmatprep.subr.mxu0 %v7249
        %v7251 = vand.u32 %v5669, 4294901760
        %v7252 = vsub.f32 %v5669, %v7251
        %7253 = vmatpush1.msra.mxu0 %v7252
        %v7254 = vand.u32 %v5663, 4294901760
        %v7255 = vsub.f32 %v5663, %v7254
        %7256 = vmatprep.subr.mxu0 %v7255
        %v7257 = vand.u32 %v5662, 4294901760
        %v7258 = vsub.f32 %v5662, %v7257
        %7259 = vmatpush1.msra.mxu0 %v7258
        %v7260 = vand.u32 %v5656, 4294901760
        %v7261 = vsub.f32 %v5656, %v7260
        %7262 = vmatprep.subr.mxu0 %v7261
        %v7263 = vand.u32 %v5655, 4294901760
        %v7264 = vsub.f32 %v5655, %v7263
        %7265 = vmatpush1.msra.mxu0 %v7264
        %v7266 = vand.u32 %v5649, 4294901760
        %v7267 = vsub.f32 %v5649, %v7266
        %7268 = vmatprep.subr.mxu0 %v7267
        %v7269 = vand.u32 %v5648, 4294901760
        %v7270 = vsub.f32 %v5648, %v7269
        %7271 = vmatpush1.msra.mxu0 %v7270
        %v7272 = vand.u32 %v5642, 4294901760
        %v7273 = vsub.f32 %v5642, %v7272
        %7274 = vmatprep.subr.mxu0 %v7273
        %v7275 = vand.u32 %v5641, 4294901760
        %v7276 = vsub.f32 %v5641, %v7275
        %7277 = vmatpush1.msra.mxu0 %v7276
        %v7278 = vand.u32 %v5635, 4294901760
        %v7279 = vsub.f32 %v5635, %v7278
        %7280 = vmatprep.subr.mxu0 %v7279
        %v7281 = vand.u32 %v5634, 4294901760
        %v7282 = vsub.f32 %v5634, %v7281
        %7283 = vmatpush1.msra.mxu0 %v7282
        %v7284 = vand.u32 %v5628, 4294901760
        %v7285 = vsub.f32 %v5628, %v7284
        %7286 = vmatprep.subr.mxu0 %v7285
        %v7287 = vand.u32 %v5627, 4294901760
        %v7288 = vsub.f32 %v5627, %v7287
        %7289 = vmatpush1.msra.mxu0 %v7288
        %v7290 = vand.u32 %v5621, 4294901760
        %v7291 = vsub.f32 %v5621, %v7290
        %7292 = vmatprep.subr.mxu0 %v7291
        %v7293 = vand.u32 %v5620, 4294901760
        %v7294 = vsub.f32 %v5620, %v7293
        %7295 = vmatpush1.msra.mxu0 %v7294
        %v7296 = vand.u32 %v5614, 4294901760
        %v7297 = vsub.f32 %v5614, %v7296
        %7298 = vmatprep.subr.mxu0 %v7297
        %v7299 = vand.u32 %v5613, 4294901760
        %v7300 = vsub.f32 %v5613, %v7299
        %7301 = vmatpush1.msra.mxu0 %v7300
        %v7302 = vand.u32 %v5607, 4294901760
        %v7303 = vsub.f32 %v5607, %v7302
        %7304 = vmatprep.subr.mxu0 %v7303
        %v7305 = vand.u32 %v5606, 4294901760
        %v7306 = vsub.f32 %v5606, %v7305
        %7307 = vmatpush1.msra.mxu0 %v7306
        %v7308 = vand.u32 %v5600, 4294901760
        %v7309 = vsub.f32 %v5600, %v7308
        %7310 = vmatprep.subr.mxu0 %v7309
        %v7311 = vand.u32 %v5599, 4294901760
        %v7312 = vsub.f32 %v5599, %v7311
        %7313 = vmatpush1.msra.mxu0 %v7312
        %v7314 = vand.u32 %v5593, 4294901760
        %v7315 = vsub.f32 %v5593, %v7314
        %7316 = vmatprep.subr.mxu0 %v7315
        %v7317 = vand.u32 %v5592, 4294901760
        %v7318 = vsub.f32 %v5592, %v7317
        %7319 = vmatpush1.msra.mxu0 %v7318
        %v7320 = vand.u32 %v5586, 4294901760
        %v7321 = vsub.f32 %v5586, %v7320
        %7322 = vmatprep.subr.mxu0 %v7321
        %v7323 = vand.u32 %v5585, 4294901760
        %v7324 = vsub.f32 %v5585, %v7323
        %7325 = vmatpush1.msra.mxu0 %v7324
        %v7326 = vand.u32 %v5579, 4294901760
        %v7327 = vsub.f32 %v5579, %v7326
        %7328 = vmatprep.subr.mxu0 %v7327
        %v7329 = vand.u32 %v5578, 4294901760
        %v7330 = vsub.f32 %v5578, %v7329
        %7331 = vmatpush1.msra.mxu0 %v7330
        %v7332 = vand.u32 %v5572, 4294901760
        %v7333 = vsub.f32 %v5572, %v7332
        %7334 = vmatprep.subr.mxu0 %v7333
        %v7335 = vand.u32 %v5571, 4294901760
        %v7336 = vsub.f32 %v5571, %v7335
        %7337 = vmatpush1.msra.mxu0 %v7336
        %v7338 = vand.u32 %v5565, 4294901760
        %v7339 = vsub.f32 %v5565, %v7338
        %7340 = vmatprep.subr.mxu0 %v7339
        %v7341 = vand.u32 %v5564, 4294901760
        %v7342 = vsub.f32 %v5564, %v7341
        %7343 = vmatpush1.msra.mxu0 %v7342
        %7344 = vmatprep.subr.mxu0 0.0
        %7345 = vmatpush2.msra.mxu0 0.0
        %7346 = vmatprep.subr.mxu0 0.0
        %7347 = vmatpush2.msra.mxu0 0.0
        %7348 = vmatprep.subr.mxu0 0.0
        %7349 = vmatpush2.msra.mxu0 0.0
        %7350 = vmatprep.subr.mxu0 0.0
        %7351 = vmatpush2.msra.mxu0 0.0
        %7352 = vmatprep.subr.mxu0 0.0
        %7353 = vmatpush2.msra.mxu0 0.0
        %7354 = vmatprep.subr.mxu0 0.0
        %7355 = vmatpush2.msra.mxu0 0.0
        %7356 = vmatprep.subr.mxu0 0.0
        %7357 = vmatpush2.msra.mxu0 0.0
        %7358 = vmatprep.subr.mxu0 0.0
        %7359 = vmatpush2.msra.mxu0 0.0
        %7360 = vmatprep.subr.mxu0 0.0
        %7361 = vmatpush2.msra.mxu0 0.0
        %7362 = vmatprep.subr.mxu0 0.0
        %7363 = vmatpush2.msra.mxu0 0.0
        %7364 = vmatprep.subr.mxu0 0.0
        %7365 = vmatpush2.msra.mxu0 0.0
        %7366 = vmatprep.subr.mxu0 0.0
        %7367 = vmatpush2.msra.mxu0 0.0
        %7368 = vmatprep.subr.mxu0 0.0
        %7369 = vmatpush2.msra.mxu0 0.0
        %7370 = vmatprep.subr.mxu0 0.0
        %7371 = vmatpush2.msra.mxu0 0.0
        %v7372 = vand.u32 %v5684, 4294901760
        %v7373 = vsub.f32 %v5684, %v7372
        %7374 = vmatprep.subr.mxu0 %v7373
        %v7375 = vand.u32 %v5683, 4294901760
        %v7376 = vsub.f32 %v5683, %v7375
        %7377 = vmatpush2.msra.mxu0 %v7376
        %v7378 = vand.u32 %v5677, 4294901760
        %v7379 = vsub.f32 %v5677, %v7378
        %7380 = vmatprep.subr.mxu0 %v7379
        %v7381 = vand.u32 %v5676, 4294901760
        %v7382 = vsub.f32 %v5676, %v7381
        %7383 = vmatpush2.msra.mxu0 %v7382
        %v7384 = vand.u32 %v5689, 4294901760
        %v7385 = vsub.f32 %v5689, %v7384
        %7386 = vmatprep.mubr.f32.mxu0 %v7385
        %v7387 = vand.u32 %v5554, 4294901760
        %v7388 = vsub.f32 %v5554, %v7387
        %7389 = vmatmul.mubr.f32.gmra.mxu0 %v7388
        %v7390 = vpop.f32.mrf.mxu0
        %v7391 = vadd.f32 %v7220, %v7390
        %v7392 = vpop.f32.mrf.mxu0
        %v7393 = vadd.f32 %v7222, %v7392
        %v7394 = vand.u32 %v5692, 4294901760
        %v7395 = vsub.f32 %v5692, %v7394
        %7396 = vmatprep.mubr.f32.mxu0 %v7395
        %v7397 = vand.u32 %v5556, 4294901760
        %v7398 = vsub.f32 %v5556, %v7397
        %7399 = vmatmul.mubr.f32.gmra.mxu0 %v7398
        %v7400 = vpop.f32.mrf.mxu0
        %v7401 = vadd.f32 %v7228, %v7400
        %v7402 = vpop.f32.mrf.mxu0
        %v7403 = vadd.f32 %v7230, %v7402
        %v7404 = vand.u32 %v5695, 4294901760
        %v7405 = vsub.f32 %v5695, %v7404
        %7406 = vmatprep.mubr.f32.mxu0 %v7405
        %v7407 = vand.u32 %v5558, 4294901760
        %v7408 = vsub.f32 %v5558, %v7407
        %7409 = vmatmul.mubr.f32.gmra.mxu0 %v7408
        %v7410 = vpop.f32.mrf.mxu0
        %v7411 = vadd.f32 %v7236, %v7410
        %v7412 = vpop.f32.mrf.mxu0
        %v7413 = vadd.f32 %v7238, %v7412
        %v7414 = vand.u32 %v5698, 4294901760
        %v7415 = vsub.f32 %v5698, %v7414
        %7416 = vmatprep.mubr.f32.mxu0 %v7415
        %v7417 = vand.u32 %v5560, 4294901760
        %v7418 = vsub.f32 %v5560, %v7417
        %7419 = vmatmul.mubr.f32.gmra.mxu0 %v7418
        %v7420 = vpop.f32.mrf.mxu0
        %v7421 = vadd.f32 %v7244, %v7420
        %v7422 = vpop.f32.mrf.mxu0
        %v7423 = vadd.f32 %v7246, %v7422
        %7424 = vdwg.mxu0
        %v7425 = vand.u32 %v5670, 4294901760
        %7426 = vmatprep.subr.mxu0 %v7425
        %v7427 = vand.u32 %v5669, 4294901760
        %7428 = vmatpush1.msra.mxu0 %v7427
        %v7429 = vand.u32 %v5663, 4294901760
        %7430 = vmatprep.subr.mxu0 %v7429
        %v7431 = vand.u32 %v5662, 4294901760
        %7432 = vmatpush1.msra.mxu0 %v7431
        %v7433 = vand.u32 %v5656, 4294901760
        %7434 = vmatprep.subr.mxu0 %v7433
        %v7435 = vand.u32 %v5655, 4294901760
        %7436 = vmatpush1.msra.mxu0 %v7435
        %v7437 = vand.u32 %v5649, 4294901760
        %7438 = vmatprep.subr.mxu0 %v7437
        %v7439 = vand.u32 %v5648, 4294901760
        %7440 = vmatpush1.msra.mxu0 %v7439
        %v7441 = vand.u32 %v5642, 4294901760
        %7442 = vmatprep.subr.mxu0 %v7441
        %v7443 = vand.u32 %v5641, 4294901760
        %7444 = vmatpush1.msra.mxu0 %v7443
        %v7445 = vand.u32 %v5635, 4294901760
        %7446 = vmatprep.subr.mxu0 %v7445
        %v7447 = vand.u32 %v5634, 4294901760
        %7448 = vmatpush1.msra.mxu0 %v7447
        %v7449 = vand.u32 %v5628, 4294901760
        %7450 = vmatprep.subr.mxu0 %v7449
        %v7451 = vand.u32 %v5627, 4294901760
        %7452 = vmatpush1.msra.mxu0 %v7451
        %v7453 = vand.u32 %v5621, 4294901760
        %7454 = vmatprep.subr.mxu0 %v7453
        %v7455 = vand.u32 %v5620, 4294901760
        %7456 = vmatpush1.msra.mxu0 %v7455
        %v7457 = vand.u32 %v5614, 4294901760
        %7458 = vmatprep.subr.mxu0 %v7457
        %v7459 = vand.u32 %v5613, 4294901760
        %7460 = vmatpush1.msra.mxu0 %v7459
        %v7461 = vand.u32 %v5607, 4294901760
        %7462 = vmatprep.subr.mxu0 %v7461
        %v7463 = vand.u32 %v5606, 4294901760
        %7464 = vmatpush1.msra.mxu0 %v7463
        %v7465 = vand.u32 %v5600, 4294901760
        %7466 = vmatprep.subr.mxu0 %v7465
        %v7467 = vand.u32 %v5599, 4294901760
        %7468 = vmatpush1.msra.mxu0 %v7467
        %v7469 = vand.u32 %v5593, 4294901760
        %7470 = vmatprep.subr.mxu0 %v7469
        %v7471 = vand.u32 %v5592, 4294901760
        %7472 = vmatpush1.msra.mxu0 %v7471
        %v7473 = vand.u32 %v5586, 4294901760
        %7474 = vmatprep.subr.mxu0 %v7473
        %v7475 = vand.u32 %v5585, 4294901760
        %7476 = vmatpush1.msra.mxu0 %v7475
        %v7477 = vand.u32 %v5579, 4294901760
        %7478 = vmatprep.subr.mxu0 %v7477
        %v7479 = vand.u32 %v5578, 4294901760
        %7480 = vmatpush1.msra.mxu0 %v7479
        %v7481 = vand.u32 %v5572, 4294901760
        %7482 = vmatprep.subr.mxu0 %v7481
        %v7483 = vand.u32 %v5571, 4294901760
        %7484 = vmatpush1.msra.mxu0 %v7483
        %v7485 = vand.u32 %v5565, 4294901760
        %7486 = vmatprep.subr.mxu0 %v7485
        %v7487 = vand.u32 %v5564, 4294901760
        %7488 = vmatpush1.msra.mxu0 %v7487
        %7489 = vmatprep.subr.mxu0 0.0
        %7490 = vmatpush2.msra.mxu0 0.0
        %7491 = vmatprep.subr.mxu0 0.0
        %7492 = vmatpush2.msra.mxu0 0.0
        %7493 = vmatprep.subr.mxu0 0.0
        %7494 = vmatpush2.msra.mxu0 0.0
        %7495 = vmatprep.subr.mxu0 0.0
        %7496 = vmatpush2.msra.mxu0 0.0
        %7497 = vmatprep.subr.mxu0 0.0
        %7498 = vmatpush2.msra.mxu0 0.0
        %7499 = vmatprep.subr.mxu0 0.0
        %7500 = vmatpush2.msra.mxu0 0.0
        %7501 = vmatprep.subr.mxu0 0.0
        %7502 = vmatpush2.msra.mxu0 0.0
        %7503 = vmatprep.subr.mxu0 0.0
        %7504 = vmatpush2.msra.mxu0 0.0
        %7505 = vmatprep.subr.mxu0 0.0
        %7506 = vmatpush2.msra.mxu0 0.0
        %7507 = vmatprep.subr.mxu0 0.0
        %7508 = vmatpush2.msra.mxu0 0.0
        %7509 = vmatprep.subr.mxu0 0.0
        %7510 = vmatpush2.msra.mxu0 0.0
        %7511 = vmatprep.subr.mxu0 0.0
        %7512 = vmatpush2.msra.mxu0 0.0
        %7513 = vmatprep.subr.mxu0 0.0
        %7514 = vmatpush2.msra.mxu0 0.0
        %7515 = vmatprep.subr.mxu0 0.0
        %7516 = vmatpush2.msra.mxu0 0.0
        %v7517 = vand.u32 %v5684, 4294901760
        %7518 = vmatprep.subr.mxu0 %v7517
        %v7519 = vand.u32 %v5683, 4294901760
        %7520 = vmatpush2.msra.mxu0 %v7519
        %v7521 = vand.u32 %v5677, 4294901760
        %7522 = vmatprep.subr.mxu0 %v7521
        %v7523 = vand.u32 %v5676, 4294901760
        %7524 = vmatpush2.msra.mxu0 %v7523
        %v7525 = vand.u32 %v5689, 4294901760
        %v7526 = vsub.f32 %v5689, %v7525
        %v7527 = vand.u32 %v7526, 4294901760
        %7528 = vmatprep.mubr.f32.mxu0 %v7527
        %v7529 = vand.u32 %v5554, 4294901760
        %v7530 = vsub.f32 %v5554, %v7529
        %v7531 = vand.u32 %v7530, 4294901760
        %7532 = vmatmul.mubr.f32.gmra.mxu0 %v7531
        %v7533 = vpop.f32.mrf.mxu0
        %v7534 = vadd.f32 %v7391, %v7533
        %v7535 = vpop.f32.mrf.mxu0
        %v7536 = vadd.f32 %v7393, %v7535
        %v7537 = vand.u32 %v5692, 4294901760
        %v7538 = vsub.f32 %v5692, %v7537
        %v7539 = vand.u32 %v7538, 4294901760
        %7540 = vmatprep.mubr.f32.mxu0 %v7539
        %v7541 = vand.u32 %v5556, 4294901760
        %v7542 = vsub.f32 %v5556, %v7541
        %v7543 = vand.u32 %v7542, 4294901760
        %7544 = vmatmul.mubr.f32.gmra.mxu0 %v7543
        %v7545 = vpop.f32.mrf.mxu0
        %v7546 = vadd.f32 %v7401, %v7545
        %v7547 = vpop.f32.mrf.mxu0
        %v7548 = vadd.f32 %v7403, %v7547
        %v7549 = vand.u32 %v5695, 4294901760
        %v7550 = vsub.f32 %v5695, %v7549
        %v7551 = vand.u32 %v7550, 4294901760
        %7552 = vmatprep.mubr.f32.mxu0 %v7551
        %v7553 = vand.u32 %v5558, 4294901760
        %v7554 = vsub.f32 %v5558, %v7553
        %v7555 = vand.u32 %v7554, 4294901760
        %7556 = vmatmul.mubr.f32.gmra.mxu0 %v7555
        %v7557 = vpop.f32.mrf.mxu0
        %v7558 = vadd.f32 %v7411, %v7557
        %v7559 = vpop.f32.mrf.mxu0
        %v7560 = vadd.f32 %v7413, %v7559
        %v7561 = vand.u32 %v5698, 4294901760
        %v7562 = vsub.f32 %v5698, %v7561
        %v7563 = vand.u32 %v7562, 4294901760
        %7564 = vmatprep.mubr.f32.mxu0 %v7563
        %v7565 = vand.u32 %v5560, 4294901760
        %v7566 = vsub.f32 %v5560, %v7565
        %v7567 = vand.u32 %v7566, 4294901760
        %7568 = vmatmul.mubr.f32.gmra.mxu0 %v7567
        %v7569 = vpop.f32.mrf.mxu0
        %v7570 = vadd.f32 %v7421, %v7569
        %v7571 = vpop.f32.mrf.mxu0
        %v7572 = vadd.f32 %v7423, %v7571
        %7573 = vdwg.mxu0
        %v7574 = vand.u32 %v5670, 4294901760
        %v7575 = vsub.f32 %v5670, %v7574
        %v7576 = vand.u32 %v7575, 4294901760
        %7577 = vmatprep.subr.mxu0 %v7576
        %v7578 = vand.u32 %v5669, 4294901760
        %v7579 = vsub.f32 %v5669, %v7578
        %v7580 = vand.u32 %v7579, 4294901760
        %7581 = vmatpush1.msra.mxu0 %v7580
        %v7582 = vand.u32 %v5663, 4294901760
        %v7583 = vsub.f32 %v5663, %v7582
        %v7584 = vand.u32 %v7583, 4294901760
        %7585 = vmatprep.subr.mxu0 %v7584
        %v7586 = vand.u32 %v5662, 4294901760
        %v7587 = vsub.f32 %v5662, %v7586
        %v7588 = vand.u32 %v7587, 4294901760
        %7589 = vmatpush1.msra.mxu0 %v7588
        %v7590 = vand.u32 %v5656, 4294901760
        %v7591 = vsub.f32 %v5656, %v7590
        %v7592 = vand.u32 %v7591, 4294901760
        %7593 = vmatprep.subr.mxu0 %v7592
        %v7594 = vand.u32 %v5655, 4294901760
        %v7595 = vsub.f32 %v5655, %v7594
        %v7596 = vand.u32 %v7595, 4294901760
        %7597 = vmatpush1.msra.mxu0 %v7596
        %v7598 = vand.u32 %v5649, 4294901760
        %v7599 = vsub.f32 %v5649, %v7598
        %v7600 = vand.u32 %v7599, 4294901760
        %7601 = vmatprep.subr.mxu0 %v7600
        %v7602 = vand.u32 %v5648, 4294901760
        %v7603 = vsub.f32 %v5648, %v7602
        %v7604 = vand.u32 %v7603, 4294901760
        %7605 = vmatpush1.msra.mxu0 %v7604
        %v7606 = vand.u32 %v5642, 4294901760
        %v7607 = vsub.f32 %v5642, %v7606
        %v7608 = vand.u32 %v7607, 4294901760
        %7609 = vmatprep.subr.mxu0 %v7608
        %v7610 = vand.u32 %v5641, 4294901760
        %v7611 = vsub.f32 %v5641, %v7610
        %v7612 = vand.u32 %v7611, 4294901760
        %7613 = vmatpush1.msra.mxu0 %v7612
        %v7614 = vand.u32 %v5635, 4294901760
        %v7615 = vsub.f32 %v5635, %v7614
        %v7616 = vand.u32 %v7615, 4294901760
        %7617 = vmatprep.subr.mxu0 %v7616
        %v7618 = vand.u32 %v5634, 4294901760
        %v7619 = vsub.f32 %v5634, %v7618
        %v7620 = vand.u32 %v7619, 4294901760
        %7621 = vmatpush1.msra.mxu0 %v7620
        %v7622 = vand.u32 %v5628, 4294901760
        %v7623 = vsub.f32 %v5628, %v7622
        %v7624 = vand.u32 %v7623, 4294901760
        %7625 = vmatprep.subr.mxu0 %v7624
        %v7626 = vand.u32 %v5627, 4294901760
        %v7627 = vsub.f32 %v5627, %v7626
        %v7628 = vand.u32 %v7627, 4294901760
        %7629 = vmatpush1.msra.mxu0 %v7628
        %v7630 = vand.u32 %v5621, 4294901760
        %v7631 = vsub.f32 %v5621, %v7630
        %v7632 = vand.u32 %v7631, 4294901760
        %7633 = vmatprep.subr.mxu0 %v7632
        %v7634 = vand.u32 %v5620, 4294901760
        %v7635 = vsub.f32 %v5620, %v7634
        %v7636 = vand.u32 %v7635, 4294901760
        %7637 = vmatpush1.msra.mxu0 %v7636
        %v7638 = vand.u32 %v5614, 4294901760
        %v7639 = vsub.f32 %v5614, %v7638
        %v7640 = vand.u32 %v7639, 4294901760
        %7641 = vmatprep.subr.mxu0 %v7640
        %v7642 = vand.u32 %v5613, 4294901760
        %v7643 = vsub.f32 %v5613, %v7642
        %v7644 = vand.u32 %v7643, 4294901760
        %7645 = vmatpush1.msra.mxu0 %v7644
        %v7646 = vand.u32 %v5607, 4294901760
        %v7647 = vsub.f32 %v5607, %v7646
        %v7648 = vand.u32 %v7647, 4294901760
        %7649 = vmatprep.subr.mxu0 %v7648
        %v7650 = vand.u32 %v5606, 4294901760
        %v7651 = vsub.f32 %v5606, %v7650
        %v7652 = vand.u32 %v7651, 4294901760
        %7653 = vmatpush1.msra.mxu0 %v7652
        %v7654 = vand.u32 %v5600, 4294901760
        %v7655 = vsub.f32 %v5600, %v7654
        %v7656 = vand.u32 %v7655, 4294901760
        %7657 = vmatprep.subr.mxu0 %v7656
        %v7658 = vand.u32 %v5599, 4294901760
        %v7659 = vsub.f32 %v5599, %v7658
        %v7660 = vand.u32 %v7659, 4294901760
        %7661 = vmatpush1.msra.mxu0 %v7660
        %v7662 = vand.u32 %v5593, 4294901760
        %v7663 = vsub.f32 %v5593, %v7662
        %v7664 = vand.u32 %v7663, 4294901760
        %7665 = vmatprep.subr.mxu0 %v7664
        %v7666 = vand.u32 %v5592, 4294901760
        %v7667 = vsub.f32 %v5592, %v7666
        %v7668 = vand.u32 %v7667, 4294901760
        %7669 = vmatpush1.msra.mxu0 %v7668
        %v7670 = vand.u32 %v5586, 4294901760
        %v7671 = vsub.f32 %v5586, %v7670
        %v7672 = vand.u32 %v7671, 4294901760
        %7673 = vmatprep.subr.mxu0 %v7672
        %v7674 = vand.u32 %v5585, 4294901760
        %v7675 = vsub.f32 %v5585, %v7674
        %v7676 = vand.u32 %v7675, 4294901760
        %7677 = vmatpush1.msra.mxu0 %v7676
        %v7678 = vand.u32 %v5579, 4294901760
        %v7679 = vsub.f32 %v5579, %v7678
        %v7680 = vand.u32 %v7679, 4294901760
        %7681 = vmatprep.subr.mxu0 %v7680
        %v7682 = vand.u32 %v5578, 4294901760
        %v7683 = vsub.f32 %v5578, %v7682
        %v7684 = vand.u32 %v7683, 4294901760
        %7685 = vmatpush1.msra.mxu0 %v7684
        %v7686 = vand.u32 %v5572, 4294901760
        %v7687 = vsub.f32 %v5572, %v7686
        %v7688 = vand.u32 %v7687, 4294901760
        %7689 = vmatprep.subr.mxu0 %v7688
        %v7690 = vand.u32 %v5571, 4294901760
        %v7691 = vsub.f32 %v5571, %v7690
        %v7692 = vand.u32 %v7691, 4294901760
        %7693 = vmatpush1.msra.mxu0 %v7692
        %v7694 = vand.u32 %v5565, 4294901760
        %v7695 = vsub.f32 %v5565, %v7694
        %v7696 = vand.u32 %v7695, 4294901760
        %7697 = vmatprep.subr.mxu0 %v7696
        %v7698 = vand.u32 %v5564, 4294901760
        %v7699 = vsub.f32 %v5564, %v7698
        %v7700 = vand.u32 %v7699, 4294901760
        %7701 = vmatpush1.msra.mxu0 %v7700
        %7702 = vmatprep.subr.mxu0 0.0
        %7703 = vmatpush2.msra.mxu0 0.0
        %7704 = vmatprep.subr.mxu0 0.0
        %7705 = vmatpush2.msra.mxu0 0.0
        %7706 = vmatprep.subr.mxu0 0.0
        %7707 = vmatpush2.msra.mxu0 0.0
        %7708 = vmatprep.subr.mxu0 0.0
        %7709 = vmatpush2.msra.mxu0 0.0
        %7710 = vmatprep.subr.mxu0 0.0
        %7711 = vmatpush2.msra.mxu0 0.0
        %7712 = vmatprep.subr.mxu0 0.0
        %7713 = vmatpush2.msra.mxu0 0.0
        %7714 = vmatprep.subr.mxu0 0.0
        %7715 = vmatpush2.msra.mxu0 0.0
        %7716 = vmatprep.subr.mxu0 0.0
        %7717 = vmatpush2.msra.mxu0 0.0
        %7718 = vmatprep.subr.mxu0 0.0
        %7719 = vmatpush2.msra.mxu0 0.0
        %7720 = vmatprep.subr.mxu0 0.0
        %7721 = vmatpush2.msra.mxu0 0.0
        %7722 = vmatprep.subr.mxu0 0.0
        %7723 = vmatpush2.msra.mxu0 0.0
        %7724 = vmatprep.subr.mxu0 0.0
        %7725 = vmatpush2.msra.mxu0 0.0
        %7726 = vmatprep.subr.mxu0 0.0
        %7727 = vmatpush2.msra.mxu0 0.0
        %7728 = vmatprep.subr.mxu0 0.0
        %7729 = vmatpush2.msra.mxu0 0.0
        %v7730 = vand.u32 %v5684, 4294901760
        %v7731 = vsub.f32 %v5684, %v7730
        %v7732 = vand.u32 %v7731, 4294901760
        %7733 = vmatprep.subr.mxu0 %v7732
        %v7734 = vand.u32 %v5683, 4294901760
        %v7735 = vsub.f32 %v5683, %v7734
        %v7736 = vand.u32 %v7735, 4294901760
        %7737 = vmatpush2.msra.mxu0 %v7736
        %v7738 = vand.u32 %v5677, 4294901760
        %v7739 = vsub.f32 %v5677, %v7738
        %v7740 = vand.u32 %v7739, 4294901760
        %7741 = vmatprep.subr.mxu0 %v7740
        %v7742 = vand.u32 %v5676, 4294901760
        %v7743 = vsub.f32 %v5676, %v7742
        %v7744 = vand.u32 %v7743, 4294901760
        %7745 = vmatpush2.msra.mxu0 %v7744
        %v7746 = vand.u32 %v5689, 4294901760
        %7747 = vmatprep.mubr.f32.mxu0 %v7746
        %v7748 = vand.u32 %v5554, 4294901760
        %7749 = vmatmul.mubr.f32.gmra.mxu0 %v7748
        %v7750 = vpop.f32.mrf.mxu0
        %v7751 = vadd.f32 %v7534, %v7750
        %v7752 = vpop.f32.mrf.mxu0
        %v7753 = vadd.f32 %v7536, %v7752
        %v7754 = vand.u32 %v5692, 4294901760
        %7755 = vmatprep.mubr.f32.mxu0 %v7754
        %v7756 = vand.u32 %v5556, 4294901760
        %7757 = vmatmul.mubr.f32.gmra.mxu0 %v7756
        %v7758 = vpop.f32.mrf.mxu0
        %v7759 = vadd.f32 %v7546, %v7758
        %v7760 = vpop.f32.mrf.mxu0
        %v7761 = vadd.f32 %v7548, %v7760
        %v7762 = vand.u32 %v5695, 4294901760
        %7763 = vmatprep.mubr.f32.mxu0 %v7762
        %v7764 = vand.u32 %v5558, 4294901760
        %7765 = vmatmul.mubr.f32.gmra.mxu0 %v7764
        %v7766 = vpop.f32.mrf.mxu0
        %v7767 = vadd.f32 %v7558, %v7766
        %v7768 = vpop.f32.mrf.mxu0
        %v7769 = vadd.f32 %v7560, %v7768
        %v7770 = vand.u32 %v5698, 4294901760
        %7771 = vmatprep.mubr.f32.mxu0 %v7770
        %v7772 = vand.u32 %v5560, 4294901760
        %7773 = vmatmul.mubr.f32.gmra.mxu0 %v7772
        %v7774 = vpop.f32.mrf.mxu0
        %v7775 = vadd.f32 %v7570, %v7774
        %v7776 = vpop.f32.mrf.mxu0
        %v7777 = vadd.f32 %v7572, %v7776
        %7778 = vdwg.mxu0
        %v7779 = vand.u32 %v5670, 4294901760
        %7780 = vmatprep.subr.mxu0 %v7779
        %v7781 = vand.u32 %v5669, 4294901760
        %7782 = vmatpush1.msra.mxu0 %v7781
        %v7783 = vand.u32 %v5663, 4294901760
        %7784 = vmatprep.subr.mxu0 %v7783
        %v7785 = vand.u32 %v5662, 4294901760
        %7786 = vmatpush1.msra.mxu0 %v7785
        %v7787 = vand.u32 %v5656, 4294901760
        %7788 = vmatprep.subr.mxu0 %v7787
        %v7789 = vand.u32 %v5655, 4294901760
        %7790 = vmatpush1.msra.mxu0 %v7789
        %v7791 = vand.u32 %v5649, 4294901760
        %7792 = vmatprep.subr.mxu0 %v7791
        %v7793 = vand.u32 %v5648, 4294901760
        %7794 = vmatpush1.msra.mxu0 %v7793
        %v7795 = vand.u32 %v5642, 4294901760
        %7796 = vmatprep.subr.mxu0 %v7795
        %v7797 = vand.u32 %v5641, 4294901760
        %7798 = vmatpush1.msra.mxu0 %v7797
        %v7799 = vand.u32 %v5635, 4294901760
        %7800 = vmatprep.subr.mxu0 %v7799
        %v7801 = vand.u32 %v5634, 4294901760
        %7802 = vmatpush1.msra.mxu0 %v7801
        %v7803 = vand.u32 %v5628, 4294901760
        %7804 = vmatprep.subr.mxu0 %v7803
        %v7805 = vand.u32 %v5627, 4294901760
        %7806 = vmatpush1.msra.mxu0 %v7805
        %v7807 = vand.u32 %v5621, 4294901760
        %7808 = vmatprep.subr.mxu0 %v7807
        %v7809 = vand.u32 %v5620, 4294901760
        %7810 = vmatpush1.msra.mxu0 %v7809
        %v7811 = vand.u32 %v5614, 4294901760
        %7812 = vmatprep.subr.mxu0 %v7811
        %v7813 = vand.u32 %v5613, 4294901760
        %7814 = vmatpush1.msra.mxu0 %v7813
        %v7815 = vand.u32 %v5607, 4294901760
        %7816 = vmatprep.subr.mxu0 %v7815
        %v7817 = vand.u32 %v5606, 4294901760
        %7818 = vmatpush1.msra.mxu0 %v7817
        %v7819 = vand.u32 %v5600, 4294901760
        %7820 = vmatprep.subr.mxu0 %v7819
        %v7821 = vand.u32 %v5599, 4294901760
        %7822 = vmatpush1.msra.mxu0 %v7821
        %v7823 = vand.u32 %v5593, 4294901760
        %7824 = vmatprep.subr.mxu0 %v7823
        %v7825 = vand.u32 %v5592, 4294901760
        %7826 = vmatpush1.msra.mxu0 %v7825
        %v7827 = vand.u32 %v5586, 4294901760
        %7828 = vmatprep.subr.mxu0 %v7827
        %v7829 = vand.u32 %v5585, 4294901760
        %7830 = vmatpush1.msra.mxu0 %v7829
        %v7831 = vand.u32 %v5579, 4294901760
        %7832 = vmatprep.subr.mxu0 %v7831
        %v7833 = vand.u32 %v5578, 4294901760
        %7834 = vmatpush1.msra.mxu0 %v7833
        %v7835 = vand.u32 %v5572, 4294901760
        %7836 = vmatprep.subr.mxu0 %v7835
        %v7837 = vand.u32 %v5571, 4294901760
        %7838 = vmatpush1.msra.mxu0 %v7837
        %v7839 = vand.u32 %v5565, 4294901760
        %7840 = vmatprep.subr.mxu0 %v7839
        %v7841 = vand.u32 %v5564, 4294901760
        %7842 = vmatpush1.msra.mxu0 %v7841
        %7843 = vmatprep.subr.mxu0 0.0
        %7844 = vmatpush2.msra.mxu0 0.0
        %7845 = vmatprep.subr.mxu0 0.0
        %7846 = vmatpush2.msra.mxu0 0.0
        %7847 = vmatprep.subr.mxu0 0.0
        %7848 = vmatpush2.msra.mxu0 0.0
        %7849 = vmatprep.subr.mxu0 0.0
        %7850 = vmatpush2.msra.mxu0 0.0
        %7851 = vmatprep.subr.mxu0 0.0
        %7852 = vmatpush2.msra.mxu0 0.0
        %7853 = vmatprep.subr.mxu0 0.0
        %7854 = vmatpush2.msra.mxu0 0.0
        %7855 = vmatprep.subr.mxu0 0.0
        %7856 = vmatpush2.msra.mxu0 0.0
        %7857 = vmatprep.subr.mxu0 0.0
        %7858 = vmatpush2.msra.mxu0 0.0
        %7859 = vmatprep.subr.mxu0 0.0
        %7860 = vmatpush2.msra.mxu0 0.0
        %7861 = vmatprep.subr.mxu0 0.0
        %7862 = vmatpush2.msra.mxu0 0.0
        %7863 = vmatprep.subr.mxu0 0.0
        %7864 = vmatpush2.msra.mxu0 0.0
        %7865 = vmatprep.subr.mxu0 0.0
        %7866 = vmatpush2.msra.mxu0 0.0
        %7867 = vmatprep.subr.mxu0 0.0
        %7868 = vmatpush2.msra.mxu0 0.0
        %7869 = vmatprep.subr.mxu0 0.0
        %7870 = vmatpush2.msra.mxu0 0.0
        %v7871 = vand.u32 %v5684, 4294901760
        %7872 = vmatprep.subr.mxu0 %v7871
        %v7873 = vand.u32 %v5683, 4294901760
        %7874 = vmatpush2.msra.mxu0 %v7873
        %v7875 = vand.u32 %v5677, 4294901760
        %7876 = vmatprep.subr.mxu0 %v7875
        %v7877 = vand.u32 %v5676, 4294901760
        %7878 = vmatpush2.msra.mxu0 %v7877
        %v7879 = vand.u32 %v5689, 4294901760
        %7880 = vmatprep.mubr.f32.mxu0 %v7879
        %v7881 = vand.u32 %v5554, 4294901760
        %7882 = vmatmul.mubr.f32.gmra.mxu0 %v7881
        %v7883 = vpop.f32.mrf.mxu0
        %v7884 = vadd.f32 %v7751, %v7883
        %v7885 = vpop.f32.mrf.mxu0
        %v7886 = vadd.f32 %v7753, %v7885
        %v7887 = vand.u32 %v5692, 4294901760
        %7888 = vmatprep.mubr.f32.mxu0 %v7887
        %v7889 = vand.u32 %v5556, 4294901760
        %7890 = vmatmul.mubr.f32.gmra.mxu0 %v7889
        %v7891 = vpop.f32.mrf.mxu0
        %v7892 = vadd.f32 %v7759, %v7891
        %v7893 = vpop.f32.mrf.mxu0
        %v7894 = vadd.f32 %v7761, %v7893
        %v7895 = vand.u32 %v5695, 4294901760
        %7896 = vmatprep.mubr.f32.mxu0 %v7895
        %v7897 = vand.u32 %v5558, 4294901760
        %7898 = vmatmul.mubr.f32.gmra.mxu0 %v7897
        %v7899 = vpop.f32.mrf.mxu0
        %v7900 = vadd.f32 %v7767, %v7899
        %v7901 = vpop.f32.mrf.mxu0
        %v7902 = vadd.f32 %v7769, %v7901
        %v7903 = vand.u32 %v5698, 4294901760
        %7904 = vmatprep.mubr.f32.mxu0 %v7903
        %v7905 = vand.u32 %v5560, 4294901760
        %7906 = vmatmul.mubr.f32.gmra.mxu0 %v7905
        %v7907 = vpop.f32.mrf.mxu0
        %v7908 = vadd.f32 %v7775, %v7907
        %v7909 = vpop.f32.mrf.mxu0
        %v7910 = vadd.f32 %v7777, %v7909
        %7911 = vdwg.mxu0
        %v7912 = vand.u32 %v5672, 4294901760
        %7913 = vmatprep.subr.mxu0 %v7912
        %v7914 = vand.u32 %v5671, 4294901760
        %7915 = vmatpush1.msra.mxu0 %v7914
        %v7916 = vand.u32 %v5665, 4294901760
        %7917 = vmatprep.subr.mxu0 %v7916
        %v7918 = vand.u32 %v5664, 4294901760
        %7919 = vmatpush1.msra.mxu0 %v7918
        %v7920 = vand.u32 %v5658, 4294901760
        %7921 = vmatprep.subr.mxu0 %v7920
        %v7922 = vand.u32 %v5657, 4294901760
        %7923 = vmatpush1.msra.mxu0 %v7922
        %v7924 = vand.u32 %v5651, 4294901760
        %7925 = vmatprep.subr.mxu0 %v7924
        %v7926 = vand.u32 %v5650, 4294901760
        %7927 = vmatpush1.msra.mxu0 %v7926
        %v7928 = vand.u32 %v5644, 4294901760
        %7929 = vmatprep.subr.mxu0 %v7928
        %v7930 = vand.u32 %v5643, 4294901760
        %7931 = vmatpush1.msra.mxu0 %v7930
        %v7932 = vand.u32 %v5637, 4294901760
        %7933 = vmatprep.subr.mxu0 %v7932
        %v7934 = vand.u32 %v5636, 4294901760
        %7935 = vmatpush1.msra.mxu0 %v7934
        %v7936 = vand.u32 %v5630, 4294901760
        %7937 = vmatprep.subr.mxu0 %v7936
        %v7938 = vand.u32 %v5629, 4294901760
        %7939 = vmatpush1.msra.mxu0 %v7938
        %v7940 = vand.u32 %v5623, 4294901760
        %7941 = vmatprep.subr.mxu0 %v7940
        %v7942 = vand.u32 %v5622, 4294901760
        %7943 = vmatpush1.msra.mxu0 %v7942
        %v7944 = vand.u32 %v5616, 4294901760
        %7945 = vmatprep.subr.mxu0 %v7944
        %v7946 = vand.u32 %v5615, 4294901760
        %7947 = vmatpush1.msra.mxu0 %v7946
        %v7948 = vand.u32 %v5609, 4294901760
        %7949 = vmatprep.subr.mxu0 %v7948
        %v7950 = vand.u32 %v5608, 4294901760
        %7951 = vmatpush1.msra.mxu0 %v7950
        %v7952 = vand.u32 %v5602, 4294901760
        %7953 = vmatprep.subr.mxu0 %v7952
        %v7954 = vand.u32 %v5601, 4294901760
        %7955 = vmatpush1.msra.mxu0 %v7954
        %v7956 = vand.u32 %v5595, 4294901760
        %7957 = vmatprep.subr.mxu0 %v7956
        %v7958 = vand.u32 %v5594, 4294901760
        %7959 = vmatpush1.msra.mxu0 %v7958
        %v7960 = vand.u32 %v5588, 4294901760
        %7961 = vmatprep.subr.mxu0 %v7960
        %v7962 = vand.u32 %v5587, 4294901760
        %7963 = vmatpush1.msra.mxu0 %v7962
        %v7964 = vand.u32 %v5581, 4294901760
        %7965 = vmatprep.subr.mxu0 %v7964
        %v7966 = vand.u32 %v5580, 4294901760
        %7967 = vmatpush1.msra.mxu0 %v7966
        %v7968 = vand.u32 %v5574, 4294901760
        %7969 = vmatprep.subr.mxu0 %v7968
        %v7970 = vand.u32 %v5573, 4294901760
        %7971 = vmatpush1.msra.mxu0 %v7970
        %v7972 = vand.u32 %v5567, 4294901760
        %7973 = vmatprep.subr.mxu0 %v7972
        %v7974 = vand.u32 %v5566, 4294901760
        %7975 = vmatpush1.msra.mxu0 %v7974
        %7976 = vmatprep.subr.mxu0 0.0
        %7977 = vmatpush2.msra.mxu0 0.0
        %7978 = vmatprep.subr.mxu0 0.0
        %7979 = vmatpush2.msra.mxu0 0.0
        %7980 = vmatprep.subr.mxu0 0.0
        %7981 = vmatpush2.msra.mxu0 0.0
        %7982 = vmatprep.subr.mxu0 0.0
        %7983 = vmatpush2.msra.mxu0 0.0
        %7984 = vmatprep.subr.mxu0 0.0
        %7985 = vmatpush2.msra.mxu0 0.0
        %7986 = vmatprep.subr.mxu0 0.0
        %7987 = vmatpush2.msra.mxu0 0.0
        %7988 = vmatprep.subr.mxu0 0.0
        %7989 = vmatpush2.msra.mxu0 0.0
        %7990 = vmatprep.subr.mxu0 0.0
        %7991 = vmatpush2.msra.mxu0 0.0
        %7992 = vmatprep.subr.mxu0 0.0
        %7993 = vmatpush2.msra.mxu0 0.0
        %7994 = vmatprep.subr.mxu0 0.0
        %7995 = vmatpush2.msra.mxu0 0.0
        %7996 = vmatprep.subr.mxu0 0.0
        %7997 = vmatpush2.msra.mxu0 0.0
        %7998 = vmatprep.subr.mxu0 0.0
        %7999 = vmatpush2.msra.mxu0 0.0
        %8000 = vmatprep.subr.mxu0 0.0
        %8001 = vmatpush2.msra.mxu0 0.0
        %8002 = vmatprep.subr.mxu0 0.0
        %8003 = vmatpush2.msra.mxu0 0.0
        %v8004 = vand.u32 %v5686, 4294901760
        %8005 = vmatprep.subr.mxu0 %v8004
        %v8006 = vand.u32 %v5685, 4294901760
        %8007 = vmatpush2.msra.mxu0 %v8006
        %v8008 = vand.u32 %v5679, 4294901760
        %8009 = vmatprep.subr.mxu0 %v8008
        %v8010 = vand.u32 %v5678, 4294901760
        %8011 = vmatpush2.msra.mxu0 %v8010
        %v8012 = vand.u32 %v5689, 4294901760
        %v8013 = vsub.f32 %v5689, %v8012
        %v8014 = vand.u32 %v8013, 4294901760
        %v8015 = vsub.f32 %v8013, %v8014
        %v8016 = vand.u32 %v8015, 4294901760
        %8017 = vmatprep.mubr.f32.mxu0 %v8016
        %v8018 = vand.u32 %v5554, 4294901760
        %v8019 = vsub.f32 %v5554, %v8018
        %v8020 = vand.u32 %v8019, 4294901760
        %v8021 = vsub.f32 %v8019, %v8020
        %v8022 = vand.u32 %v8021, 4294901760
        %8023 = vmatmul.mubr.f32.gmra.mxu0 %v8022
        %v8024 = vpop.f32.mrf.mxu0
        %v8025 = vadd.f32 0.0, %v8024
        %v8026 = vpop.f32.mrf.mxu0
        %v8027 = vadd.f32 0.0, %v8026
        %v8028 = vand.u32 %v5692, 4294901760
        %v8029 = vsub.f32 %v5692, %v8028
        %v8030 = vand.u32 %v8029, 4294901760
        %v8031 = vsub.f32 %v8029, %v8030
        %v8032 = vand.u32 %v8031, 4294901760
        %8033 = vmatprep.mubr.f32.mxu0 %v8032
        %v8034 = vand.u32 %v5556, 4294901760
        %v8035 = vsub.f32 %v5556, %v8034
        %v8036 = vand.u32 %v8035, 4294901760
        %v8037 = vsub.f32 %v8035, %v8036
        %v8038 = vand.u32 %v8037, 4294901760
        %8039 = vmatmul.mubr.f32.gmra.mxu0 %v8038
        %v8040 = vpop.f32.mrf.mxu0
        %v8041 = vadd.f32 0.0, %v8040
        %v8042 = vpop.f32.mrf.mxu0
        %v8043 = vadd.f32 0.0, %v8042
        %v8044 = vand.u32 %v5695, 4294901760
        %v8045 = vsub.f32 %v5695, %v8044
        %v8046 = vand.u32 %v8045, 4294901760
        %v8047 = vsub.f32 %v8045, %v8046
        %v8048 = vand.u32 %v8047, 4294901760
        %8049 = vmatprep.mubr.f32.mxu0 %v8048
        %v8050 = vand.u32 %v5558, 4294901760
        %v8051 = vsub.f32 %v5558, %v8050
        %v8052 = vand.u32 %v8051, 4294901760
        %v8053 = vsub.f32 %v8051, %v8052
        %v8054 = vand.u32 %v8053, 4294901760
        %8055 = vmatmul.mubr.f32.gmra.mxu0 %v8054
        %v8056 = vpop.f32.mrf.mxu0
        %v8057 = vadd.f32 0.0, %v8056
        %v8058 = vpop.f32.mrf.mxu0
        %v8059 = vadd.f32 0.0, %v8058
        %v8060 = vand.u32 %v5698, 4294901760
        %v8061 = vsub.f32 %v5698, %v8060
        %v8062 = vand.u32 %v8061, 4294901760
        %v8063 = vsub.f32 %v8061, %v8062
        %v8064 = vand.u32 %v8063, 4294901760
        %8065 = vmatprep.mubr.f32.mxu0 %v8064
        %v8066 = vand.u32 %v5560, 4294901760
        %v8067 = vsub.f32 %v5560, %v8066
        %v8068 = vand.u32 %v8067, 4294901760
        %v8069 = vsub.f32 %v8067, %v8068
        %v8070 = vand.u32 %v8069, 4294901760
        %8071 = vmatmul.mubr.f32.gmra.mxu0 %v8070
        %v8072 = vpop.f32.mrf.mxu0
        %v8073 = vadd.f32 0.0, %v8072
        %v8074 = vpop.f32.mrf.mxu0
        %v8075 = vadd.f32 0.0, %v8074
        %8076 = vdwg.mxu0
        %v8077 = vand.u32 %v5672, 4294901760
        %v8078 = vsub.f32 %v5672, %v8077
        %v8079 = vand.u32 %v8078, 4294901760
        %v8080 = vsub.f32 %v8078, %v8079
        %v8081 = vand.u32 %v8080, 4294901760
        %8082 = vmatprep.subr.mxu0 %v8081
        %v8083 = vand.u32 %v5671, 4294901760
        %v8084 = vsub.f32 %v5671, %v8083
        %v8085 = vand.u32 %v8084, 4294901760
        %v8086 = vsub.f32 %v8084, %v8085
        %v8087 = vand.u32 %v8086, 4294901760
        %8088 = vmatpush1.msra.mxu0 %v8087
        %v8089 = vand.u32 %v5665, 4294901760
        %v8090 = vsub.f32 %v5665, %v8089
        %v8091 = vand.u32 %v8090, 4294901760
        %v8092 = vsub.f32 %v8090, %v8091
        %v8093 = vand.u32 %v8092, 4294901760
        %8094 = vmatprep.subr.mxu0 %v8093
        %v8095 = vand.u32 %v5664, 4294901760
        %v8096 = vsub.f32 %v5664, %v8095
        %v8097 = vand.u32 %v8096, 4294901760
        %v8098 = vsub.f32 %v8096, %v8097
        %v8099 = vand.u32 %v8098, 4294901760
        %8100 = vmatpush1.msra.mxu0 %v8099
        %v8101 = vand.u32 %v5658, 4294901760
        %v8102 = vsub.f32 %v5658, %v8101
        %v8103 = vand.u32 %v8102, 4294901760
        %v8104 = vsub.f32 %v8102, %v8103
        %v8105 = vand.u32 %v8104, 4294901760
        %8106 = vmatprep.subr.mxu0 %v8105
        %v8107 = vand.u32 %v5657, 4294901760
        %v8108 = vsub.f32 %v5657, %v8107
        %v8109 = vand.u32 %v8108, 4294901760
        %v8110 = vsub.f32 %v8108, %v8109
        %v8111 = vand.u32 %v8110, 4294901760
        %8112 = vmatpush1.msra.mxu0 %v8111
        %v8113 = vand.u32 %v5651, 4294901760
        %v8114 = vsub.f32 %v5651, %v8113
        %v8115 = vand.u32 %v8114, 4294901760
        %v8116 = vsub.f32 %v8114, %v8115
        %v8117 = vand.u32 %v8116, 4294901760
        %8118 = vmatprep.subr.mxu0 %v8117
        %v8119 = vand.u32 %v5650, 4294901760
        %v8120 = vsub.f32 %v5650, %v8119
        %v8121 = vand.u32 %v8120, 4294901760
        %v8122 = vsub.f32 %v8120, %v8121
        %v8123 = vand.u32 %v8122, 4294901760
        %8124 = vmatpush1.msra.mxu0 %v8123
        %v8125 = vand.u32 %v5644, 4294901760
        %v8126 = vsub.f32 %v5644, %v8125
        %v8127 = vand.u32 %v8126, 4294901760
        %v8128 = vsub.f32 %v8126, %v8127
        %v8129 = vand.u32 %v8128, 4294901760
        %8130 = vmatprep.subr.mxu0 %v8129
        %v8131 = vand.u32 %v5643, 4294901760
        %v8132 = vsub.f32 %v5643, %v8131
        %v8133 = vand.u32 %v8132, 4294901760
        %v8134 = vsub.f32 %v8132, %v8133
        %v8135 = vand.u32 %v8134, 4294901760
        %8136 = vmatpush1.msra.mxu0 %v8135
        %v8137 = vand.u32 %v5637, 4294901760
        %v8138 = vsub.f32 %v5637, %v8137
        %v8139 = vand.u32 %v8138, 4294901760
        %v8140 = vsub.f32 %v8138, %v8139
        %v8141 = vand.u32 %v8140, 4294901760
        %8142 = vmatprep.subr.mxu0 %v8141
        %v8143 = vand.u32 %v5636, 4294901760
        %v8144 = vsub.f32 %v5636, %v8143
        %v8145 = vand.u32 %v8144, 4294901760
        %v8146 = vsub.f32 %v8144, %v8145
        %v8147 = vand.u32 %v8146, 4294901760
        %8148 = vmatpush1.msra.mxu0 %v8147
        %v8149 = vand.u32 %v5630, 4294901760
        %v8150 = vsub.f32 %v5630, %v8149
        %v8151 = vand.u32 %v8150, 4294901760
        %v8152 = vsub.f32 %v8150, %v8151
        %v8153 = vand.u32 %v8152, 4294901760
        %8154 = vmatprep.subr.mxu0 %v8153
        %v8155 = vand.u32 %v5629, 4294901760
        %v8156 = vsub.f32 %v5629, %v8155
        %v8157 = vand.u32 %v8156, 4294901760
        %v8158 = vsub.f32 %v8156, %v8157
        %v8159 = vand.u32 %v8158, 4294901760
        %8160 = vmatpush1.msra.mxu0 %v8159
        %v8161 = vand.u32 %v5623, 4294901760
        %v8162 = vsub.f32 %v5623, %v8161
        %v8163 = vand.u32 %v8162, 4294901760
        %v8164 = vsub.f32 %v8162, %v8163
        %v8165 = vand.u32 %v8164, 4294901760
        %8166 = vmatprep.subr.mxu0 %v8165
        %v8167 = vand.u32 %v5622, 4294901760
        %v8168 = vsub.f32 %v5622, %v8167
        %v8169 = vand.u32 %v8168, 4294901760
        %v8170 = vsub.f32 %v8168, %v8169
        %v8171 = vand.u32 %v8170, 4294901760
        %8172 = vmatpush1.msra.mxu0 %v8171
        %v8173 = vand.u32 %v5616, 4294901760
        %v8174 = vsub.f32 %v5616, %v8173
        %v8175 = vand.u32 %v8174, 4294901760
        %v8176 = vsub.f32 %v8174, %v8175
        %v8177 = vand.u32 %v8176, 4294901760
        %8178 = vmatprep.subr.mxu0 %v8177
        %v8179 = vand.u32 %v5615, 4294901760
        %v8180 = vsub.f32 %v5615, %v8179
        %v8181 = vand.u32 %v8180, 4294901760
        %v8182 = vsub.f32 %v8180, %v8181
        %v8183 = vand.u32 %v8182, 4294901760
        %8184 = vmatpush1.msra.mxu0 %v8183
        %v8185 = vand.u32 %v5609, 4294901760
        %v8186 = vsub.f32 %v5609, %v8185
        %v8187 = vand.u32 %v8186, 4294901760
        %v8188 = vsub.f32 %v8186, %v8187
        %v8189 = vand.u32 %v8188, 4294901760
        %8190 = vmatprep.subr.mxu0 %v8189
        %v8191 = vand.u32 %v5608, 4294901760
        %v8192 = vsub.f32 %v5608, %v8191
        %v8193 = vand.u32 %v8192, 4294901760
        %v8194 = vsub.f32 %v8192, %v8193
        %v8195 = vand.u32 %v8194, 4294901760
        %8196 = vmatpush1.msra.mxu0 %v8195
        %v8197 = vand.u32 %v5602, 4294901760
        %v8198 = vsub.f32 %v5602, %v8197
        %v8199 = vand.u32 %v8198, 4294901760
        %v8200 = vsub.f32 %v8198, %v8199
        %v8201 = vand.u32 %v8200, 4294901760
        %8202 = vmatprep.subr.mxu0 %v8201
        %v8203 = vand.u32 %v5601, 4294901760
        %v8204 = vsub.f32 %v5601, %v8203
        %v8205 = vand.u32 %v8204, 4294901760
        %v8206 = vsub.f32 %v8204, %v8205
        %v8207 = vand.u32 %v8206, 4294901760
        %8208 = vmatpush1.msra.mxu0 %v8207
        %v8209 = vand.u32 %v5595, 4294901760
        %v8210 = vsub.f32 %v5595, %v8209
        %v8211 = vand.u32 %v8210, 4294901760
        %v8212 = vsub.f32 %v8210, %v8211
        %v8213 = vand.u32 %v8212, 4294901760
        %8214 = vmatprep.subr.mxu0 %v8213
        %v8215 = vand.u32 %v5594, 4294901760
        %v8216 = vsub.f32 %v5594, %v8215
        %v8217 = vand.u32 %v8216, 4294901760
        %v8218 = vsub.f32 %v8216, %v8217
        %v8219 = vand.u32 %v8218, 4294901760
        %8220 = vmatpush1.msra.mxu0 %v8219
        %v8221 = vand.u32 %v5588, 4294901760
        %v8222 = vsub.f32 %v5588, %v8221
        %v8223 = vand.u32 %v8222, 4294901760
        %v8224 = vsub.f32 %v8222, %v8223
        %v8225 = vand.u32 %v8224, 4294901760
        %8226 = vmatprep.subr.mxu0 %v8225
        %v8227 = vand.u32 %v5587, 4294901760
        %v8228 = vsub.f32 %v5587, %v8227
        %v8229 = vand.u32 %v8228, 4294901760
        %v8230 = vsub.f32 %v8228, %v8229
        %v8231 = vand.u32 %v8230, 4294901760
        %8232 = vmatpush1.msra.mxu0 %v8231
        %v8233 = vand.u32 %v5581, 4294901760
        %v8234 = vsub.f32 %v5581, %v8233
        %v8235 = vand.u32 %v8234, 4294901760
        %v8236 = vsub.f32 %v8234, %v8235
        %v8237 = vand.u32 %v8236, 4294901760
        %8238 = vmatprep.subr.mxu0 %v8237
        %v8239 = vand.u32 %v5580, 4294901760
        %v8240 = vsub.f32 %v5580, %v8239
        %v8241 = vand.u32 %v8240, 4294901760
        %v8242 = vsub.f32 %v8240, %v8241
        %v8243 = vand.u32 %v8242, 4294901760
        %8244 = vmatpush1.msra.mxu0 %v8243
        %v8245 = vand.u32 %v5574, 4294901760
        %v8246 = vsub.f32 %v5574, %v8245
        %v8247 = vand.u32 %v8246, 4294901760
        %v8248 = vsub.f32 %v8246, %v8247
        %v8249 = vand.u32 %v8248, 4294901760
        %8250 = vmatprep.subr.mxu0 %v8249
        %v8251 = vand.u32 %v5573, 4294901760
        %v8252 = vsub.f32 %v5573, %v8251
        %v8253 = vand.u32 %v8252, 4294901760
        %v8254 = vsub.f32 %v8252, %v8253
        %v8255 = vand.u32 %v8254, 4294901760
        %8256 = vmatpush1.msra.mxu0 %v8255
        %v8257 = vand.u32 %v5567, 4294901760
        %v8258 = vsub.f32 %v5567, %v8257
        %v8259 = vand.u32 %v8258, 4294901760
        %v8260 = vsub.f32 %v8258, %v8259
        %v8261 = vand.u32 %v8260, 4294901760
        %8262 = vmatprep.subr.mxu0 %v8261
        %v8263 = vand.u32 %v5566, 4294901760
        %v8264 = vsub.f32 %v5566, %v8263
        %v8265 = vand.u32 %v8264, 4294901760
        %v8266 = vsub.f32 %v8264, %v8265
        %v8267 = vand.u32 %v8266, 4294901760
        %8268 = vmatpush1.msra.mxu0 %v8267
        %8269 = vmatprep.subr.mxu0 0.0
        %8270 = vmatpush2.msra.mxu0 0.0
        %8271 = vmatprep.subr.mxu0 0.0
        %8272 = vmatpush2.msra.mxu0 0.0
        %8273 = vmatprep.subr.mxu0 0.0
        %8274 = vmatpush2.msra.mxu0 0.0
        %8275 = vmatprep.subr.mxu0 0.0
        %8276 = vmatpush2.msra.mxu0 0.0
        %8277 = vmatprep.subr.mxu0 0.0
        %8278 = vmatpush2.msra.mxu0 0.0
        %8279 = vmatprep.subr.mxu0 0.0
        %8280 = vmatpush2.msra.mxu0 0.0
        %8281 = vmatprep.subr.mxu0 0.0
        %8282 = vmatpush2.msra.mxu0 0.0
        %8283 = vmatprep.subr.mxu0 0.0
        %8284 = vmatpush2.msra.mxu0 0.0
        %8285 = vmatprep.subr.mxu0 0.0
        %8286 = vmatpush2.msra.mxu0 0.0
        %8287 = vmatprep.subr.mxu0 0.0
        %8288 = vmatpush2.msra.mxu0 0.0
        %8289 = vmatprep.subr.mxu0 0.0
        %8290 = vmatpush2.msra.mxu0 0.0
        %8291 = vmatprep.subr.mxu0 0.0
        %8292 = vmatpush2.msra.mxu0 0.0
        %8293 = vmatprep.subr.mxu0 0.0
        %8294 = vmatpush2.msra.mxu0 0.0
        %8295 = vmatprep.subr.mxu0 0.0
        %8296 = vmatpush2.msra.mxu0 0.0
        %v8297 = vand.u32 %v5686, 4294901760
        %v8298 = vsub.f32 %v5686, %v8297
        %v8299 = vand.u32 %v8298, 4294901760
        %v8300 = vsub.f32 %v8298, %v8299
        %v8301 = vand.u32 %v8300, 4294901760
        %8302 = vmatprep.subr.mxu0 %v8301
        %v8303 = vand.u32 %v5685, 4294901760
        %v8304 = vsub.f32 %v5685, %v8303
        %v8305 = vand.u32 %v8304, 4294901760
        %v8306 = vsub.f32 %v8304, %v8305
        %v8307 = vand.u32 %v8306, 4294901760
        %8308 = vmatpush2.msra.mxu0 %v8307
        %v8309 = vand.u32 %v5679, 4294901760
        %v8310 = vsub.f32 %v5679, %v8309
        %v8311 = vand.u32 %v8310, 4294901760
        %v8312 = vsub.f32 %v8310, %v8311
        %v8313 = vand.u32 %v8312, 4294901760
        %8314 = vmatprep.subr.mxu0 %v8313
        %v8315 = vand.u32 %v5678, 4294901760
        %v8316 = vsub.f32 %v5678, %v8315
        %v8317 = vand.u32 %v8316, 4294901760
        %v8318 = vsub.f32 %v8316, %v8317
        %v8319 = vand.u32 %v8318, 4294901760
        %8320 = vmatpush2.msra.mxu0 %v8319
        %v8321 = vand.u32 %v5689, 4294901760
        %8322 = vmatprep.mubr.f32.mxu0 %v8321
        %v8323 = vand.u32 %v5554, 4294901760
        %8324 = vmatmul.mubr.f32.gmra.mxu0 %v8323
        %v8325 = vpop.f32.mrf.mxu0
        %v8326 = vadd.f32 %v8025, %v8325
        %v8327 = vpop.f32.mrf.mxu0
        %v8328 = vadd.f32 %v8027, %v8327
        %v8329 = vand.u32 %v5692, 4294901760
        %8330 = vmatprep.mubr.f32.mxu0 %v8329
        %v8331 = vand.u32 %v5556, 4294901760
        %8332 = vmatmul.mubr.f32.gmra.mxu0 %v8331
        %v8333 = vpop.f32.mrf.mxu0
        %v8334 = vadd.f32 %v8041, %v8333
        %v8335 = vpop.f32.mrf.mxu0
        %v8336 = vadd.f32 %v8043, %v8335
        %v8337 = vand.u32 %v5695, 4294901760
        %8338 = vmatprep.mubr.f32.mxu0 %v8337
        %v8339 = vand.u32 %v5558, 4294901760
        %8340 = vmatmul.mubr.f32.gmra.mxu0 %v8339
        %v8341 = vpop.f32.mrf.mxu0
        %v8342 = vadd.f32 %v8057, %v8341
        %v8343 = vpop.f32.mrf.mxu0
        %v8344 = vadd.f32 %v8059, %v8343
        %v8345 = vand.u32 %v5698, 4294901760
        %8346 = vmatprep.mubr.f32.mxu0 %v8345
        %v8347 = vand.u32 %v5560, 4294901760
        %8348 = vmatmul.mubr.f32.gmra.mxu0 %v8347
        %v8349 = vpop.f32.mrf.mxu0
        %v8350 = vadd.f32 %v8073, %v8349
        %v8351 = vpop.f32.mrf.mxu0
        %v8352 = vadd.f32 %v8075, %v8351
        %8353 = vdwg.mxu0
        %v8354 = vand.u32 %v5672, 4294901760
        %v8355 = vsub.f32 %v5672, %v8354
        %8356 = vmatprep.subr.mxu0 %v8355
        %v8357 = vand.u32 %v5671, 4294901760
        %v8358 = vsub.f32 %v5671, %v8357
        %8359 = vmatpush1.msra.mxu0 %v8358
        %v8360 = vand.u32 %v5665, 4294901760
        %v8361 = vsub.f32 %v5665, %v8360
        %8362 = vmatprep.subr.mxu0 %v8361
        %v8363 = vand.u32 %v5664, 4294901760
        %v8364 = vsub.f32 %v5664, %v8363
        %8365 = vmatpush1.msra.mxu0 %v8364
        %v8366 = vand.u32 %v5658, 4294901760
        %v8367 = vsub.f32 %v5658, %v8366
        %8368 = vmatprep.subr.mxu0 %v8367
        %v8369 = vand.u32 %v5657, 4294901760
        %v8370 = vsub.f32 %v5657, %v8369
        %8371 = vmatpush1.msra.mxu0 %v8370
        %v8372 = vand.u32 %v5651, 4294901760
        %v8373 = vsub.f32 %v5651, %v8372
        %8374 = vmatprep.subr.mxu0 %v8373
        %v8375 = vand.u32 %v5650, 4294901760
        %v8376 = vsub.f32 %v5650, %v8375
        %8377 = vmatpush1.msra.mxu0 %v8376
        %v8378 = vand.u32 %v5644, 4294901760
        %v8379 = vsub.f32 %v5644, %v8378
        %8380 = vmatprep.subr.mxu0 %v8379
        %v8381 = vand.u32 %v5643, 4294901760
        %v8382 = vsub.f32 %v5643, %v8381
        %8383 = vmatpush1.msra.mxu0 %v8382
        %v8384 = vand.u32 %v5637, 4294901760
        %v8385 = vsub.f32 %v5637, %v8384
        %8386 = vmatprep.subr.mxu0 %v8385
        %v8387 = vand.u32 %v5636, 4294901760
        %v8388 = vsub.f32 %v5636, %v8387
        %8389 = vmatpush1.msra.mxu0 %v8388
        %v8390 = vand.u32 %v5630, 4294901760
        %v8391 = vsub.f32 %v5630, %v8390
        %8392 = vmatprep.subr.mxu0 %v8391
        %v8393 = vand.u32 %v5629, 4294901760
        %v8394 = vsub.f32 %v5629, %v8393
        %8395 = vmatpush1.msra.mxu0 %v8394
        %v8396 = vand.u32 %v5623, 4294901760
        %v8397 = vsub.f32 %v5623, %v8396
        %8398 = vmatprep.subr.mxu0 %v8397
        %v8399 = vand.u32 %v5622, 4294901760
        %v8400 = vsub.f32 %v5622, %v8399
        %8401 = vmatpush1.msra.mxu0 %v8400
        %v8402 = vand.u32 %v5616, 4294901760
        %v8403 = vsub.f32 %v5616, %v8402
        %8404 = vmatprep.subr.mxu0 %v8403
        %v8405 = vand.u32 %v5615, 4294901760
        %v8406 = vsub.f32 %v5615, %v8405
        %8407 = vmatpush1.msra.mxu0 %v8406
        %v8408 = vand.u32 %v5609, 4294901760
        %v8409 = vsub.f32 %v5609, %v8408
        %8410 = vmatprep.subr.mxu0 %v8409
        %v8411 = vand.u32 %v5608, 4294901760
        %v8412 = vsub.f32 %v5608, %v8411
        %8413 = vmatpush1.msra.mxu0 %v8412
        %v8414 = vand.u32 %v5602, 4294901760
        %v8415 = vsub.f32 %v5602, %v8414
        %8416 = vmatprep.subr.mxu0 %v8415
        %v8417 = vand.u32 %v5601, 4294901760
        %v8418 = vsub.f32 %v5601, %v8417
        %8419 = vmatpush1.msra.mxu0 %v8418
        %v8420 = vand.u32 %v5595, 4294901760
        %v8421 = vsub.f32 %v5595, %v8420
        %8422 = vmatprep.subr.mxu0 %v8421
        %v8423 = vand.u32 %v5594, 4294901760
        %v8424 = vsub.f32 %v5594, %v8423
        %8425 = vmatpush1.msra.mxu0 %v8424
        %v8426 = vand.u32 %v5588, 4294901760
        %v8427 = vsub.f32 %v5588, %v8426
        %8428 = vmatprep.subr.mxu0 %v8427
        %v8429 = vand.u32 %v5587, 4294901760
        %v8430 = vsub.f32 %v5587, %v8429
        %8431 = vmatpush1.msra.mxu0 %v8430
        %v8432 = vand.u32 %v5581, 4294901760
        %v8433 = vsub.f32 %v5581, %v8432
        %8434 = vmatprep.subr.mxu0 %v8433
        %v8435 = vand.u32 %v5580, 4294901760
        %v8436 = vsub.f32 %v5580, %v8435
        %8437 = vmatpush1.msra.mxu0 %v8436
        %v8438 = vand.u32 %v5574, 4294901760
        %v8439 = vsub.f32 %v5574, %v8438
        %8440 = vmatprep.subr.mxu0 %v8439
        %v8441 = vand.u32 %v5573, 4294901760
        %v8442 = vsub.f32 %v5573, %v8441
        %8443 = vmatpush1.msra.mxu0 %v8442
        %v8444 = vand.u32 %v5567, 4294901760
        %v8445 = vsub.f32 %v5567, %v8444
        %8446 = vmatprep.subr.mxu0 %v8445
        %v8447 = vand.u32 %v5566, 4294901760
        %v8448 = vsub.f32 %v5566, %v8447
        %8449 = vmatpush1.msra.mxu0 %v8448
        %8450 = vmatprep.subr.mxu0 0.0
        %8451 = vmatpush2.msra.mxu0 0.0
        %8452 = vmatprep.subr.mxu0 0.0
        %8453 = vmatpush2.msra.mxu0 0.0
        %8454 = vmatprep.subr.mxu0 0.0
        %8455 = vmatpush2.msra.mxu0 0.0
        %8456 = vmatprep.subr.mxu0 0.0
        %8457 = vmatpush2.msra.mxu0 0.0
        %8458 = vmatprep.subr.mxu0 0.0
        %8459 = vmatpush2.msra.mxu0 0.0
        %8460 = vmatprep.subr.mxu0 0.0
        %8461 = vmatpush2.msra.mxu0 0.0
        %8462 = vmatprep.subr.mxu0 0.0
        %8463 = vmatpush2.msra.mxu0 0.0
        %8464 = vmatprep.subr.mxu0 0.0
        %8465 = vmatpush2.msra.mxu0 0.0
        %8466 = vmatprep.subr.mxu0 0.0
        %8467 = vmatpush2.msra.mxu0 0.0
        %8468 = vmatprep.subr.mxu0 0.0
        %8469 = vmatpush2.msra.mxu0 0.0
        %8470 = vmatprep.subr.mxu0 0.0
        %8471 = vmatpush2.msra.mxu0 0.0
        %8472 = vmatprep.subr.mxu0 0.0
        %8473 = vmatpush2.msra.mxu0 0.0
        %8474 = vmatprep.subr.mxu0 0.0
        %8475 = vmatpush2.msra.mxu0 0.0
        %8476 = vmatprep.subr.mxu0 0.0
        %8477 = vmatpush2.msra.mxu0 0.0
        %v8478 = vand.u32 %v5686, 4294901760
        %v8479 = vsub.f32 %v5686, %v8478
        %8480 = vmatprep.subr.mxu0 %v8479
        %v8481 = vand.u32 %v5685, 4294901760
        %v8482 = vsub.f32 %v5685, %v8481
        %8483 = vmatpush2.msra.mxu0 %v8482
        %v8484 = vand.u32 %v5679, 4294901760
        %v8485 = vsub.f32 %v5679, %v8484
        %8486 = vmatprep.subr.mxu0 %v8485
        %v8487 = vand.u32 %v5678, 4294901760
        %v8488 = vsub.f32 %v5678, %v8487
        %8489 = vmatpush2.msra.mxu0 %v8488
        %v8490 = vand.u32 %v5689, 4294901760
        %v8491 = vsub.f32 %v5689, %v8490
        %8492 = vmatprep.mubr.f32.mxu0 %v8491
        %v8493 = vand.u32 %v5554, 4294901760
        %v8494 = vsub.f32 %v5554, %v8493
        %8495 = vmatmul.mubr.f32.gmra.mxu0 %v8494
        %v8496 = vpop.f32.mrf.mxu0
        %v8497 = vadd.f32 %v8326, %v8496
        %v8498 = vpop.f32.mrf.mxu0
        %v8499 = vadd.f32 %v8328, %v8498
        %v8500 = vand.u32 %v5692, 4294901760
        %v8501 = vsub.f32 %v5692, %v8500
        %8502 = vmatprep.mubr.f32.mxu0 %v8501
        %v8503 = vand.u32 %v5556, 4294901760
        %v8504 = vsub.f32 %v5556, %v8503
        %8505 = vmatmul.mubr.f32.gmra.mxu0 %v8504
        %v8506 = vpop.f32.mrf.mxu0
        %v8507 = vadd.f32 %v8334, %v8506
        %v8508 = vpop.f32.mrf.mxu0
        %v8509 = vadd.f32 %v8336, %v8508
        %v8510 = vand.u32 %v5695, 4294901760
        %v8511 = vsub.f32 %v5695, %v8510
        %8512 = vmatprep.mubr.f32.mxu0 %v8511
        %v8513 = vand.u32 %v5558, 4294901760
        %v8514 = vsub.f32 %v5558, %v8513
        %8515 = vmatmul.mubr.f32.gmra.mxu0 %v8514
        %v8516 = vpop.f32.mrf.mxu0
        %v8517 = vadd.f32 %v8342, %v8516
        %v8518 = vpop.f32.mrf.mxu0
        %v8519 = vadd.f32 %v8344, %v8518
        %v8520 = vand.u32 %v5698, 4294901760
        %v8521 = vsub.f32 %v5698, %v8520
        %8522 = vmatprep.mubr.f32.mxu0 %v8521
        %v8523 = vand.u32 %v5560, 4294901760
        %v8524 = vsub.f32 %v5560, %v8523
        %8525 = vmatmul.mubr.f32.gmra.mxu0 %v8524
        %v8526 = vpop.f32.mrf.mxu0
        %v8527 = vadd.f32 %v8350, %v8526
        %v8528 = vpop.f32.mrf.mxu0
        %v8529 = vadd.f32 %v8352, %v8528
        %8530 = vdwg.mxu0
        %v8531 = vand.u32 %v5672, 4294901760
        %8532 = vmatprep.subr.mxu0 %v8531
        %v8533 = vand.u32 %v5671, 4294901760
        %8534 = vmatpush1.msra.mxu0 %v8533
        %v8535 = vand.u32 %v5665, 4294901760
        %8536 = vmatprep.subr.mxu0 %v8535
        %v8537 = vand.u32 %v5664, 4294901760
        %8538 = vmatpush1.msra.mxu0 %v8537
        %v8539 = vand.u32 %v5658, 4294901760
        %8540 = vmatprep.subr.mxu0 %v8539
        %v8541 = vand.u32 %v5657, 4294901760
        %8542 = vmatpush1.msra.mxu0 %v8541
        %v8543 = vand.u32 %v5651, 4294901760
        %8544 = vmatprep.subr.mxu0 %v8543
        %v8545 = vand.u32 %v5650, 4294901760
        %8546 = vmatpush1.msra.mxu0 %v8545
        %v8547 = vand.u32 %v5644, 4294901760
        %8548 = vmatprep.subr.mxu0 %v8547
        %v8549 = vand.u32 %v5643, 4294901760
        %8550 = vmatpush1.msra.mxu0 %v8549
        %v8551 = vand.u32 %v5637, 4294901760
        %8552 = vmatprep.subr.mxu0 %v8551
        %v8553 = vand.u32 %v5636, 4294901760
        %8554 = vmatpush1.msra.mxu0 %v8553
        %v8555 = vand.u32 %v5630, 4294901760
        %8556 = vmatprep.subr.mxu0 %v8555
        %v8557 = vand.u32 %v5629, 4294901760
        %8558 = vmatpush1.msra.mxu0 %v8557
        %v8559 = vand.u32 %v5623, 4294901760
        %8560 = vmatprep.subr.mxu0 %v8559
        %v8561 = vand.u32 %v5622, 4294901760
        %8562 = vmatpush1.msra.mxu0 %v8561
        %v8563 = vand.u32 %v5616, 4294901760
        %8564 = vmatprep.subr.mxu0 %v8563
        %v8565 = vand.u32 %v5615, 4294901760
        %8566 = vmatpush1.msra.mxu0 %v8565
        %v8567 = vand.u32 %v5609, 4294901760
        %8568 = vmatprep.subr.mxu0 %v8567
        %v8569 = vand.u32 %v5608, 4294901760
        %8570 = vmatpush1.msra.mxu0 %v8569
        %v8571 = vand.u32 %v5602, 4294901760
        %8572 = vmatprep.subr.mxu0 %v8571
        %v8573 = vand.u32 %v5601, 4294901760
        %8574 = vmatpush1.msra.mxu0 %v8573
        %v8575 = vand.u32 %v5595, 4294901760
        %8576 = vmatprep.subr.mxu0 %v8575
        %v8577 = vand.u32 %v5594, 4294901760
        %8578 = vmatpush1.msra.mxu0 %v8577
        %v8579 = vand.u32 %v5588, 4294901760
        %8580 = vmatprep.subr.mxu0 %v8579
        %v8581 = vand.u32 %v5587, 4294901760
        %8582 = vmatpush1.msra.mxu0 %v8581
        %v8583 = vand.u32 %v5581, 4294901760
        %8584 = vmatprep.subr.mxu0 %v8583
        %v8585 = vand.u32 %v5580, 4294901760
        %8586 = vmatpush1.msra.mxu0 %v8585
        %v8587 = vand.u32 %v5574, 4294901760
        %8588 = vmatprep.subr.mxu0 %v8587
        %v8589 = vand.u32 %v5573, 4294901760
        %8590 = vmatpush1.msra.mxu0 %v8589
        %v8591 = vand.u32 %v5567, 4294901760
        %8592 = vmatprep.subr.mxu0 %v8591
        %v8593 = vand.u32 %v5566, 4294901760
        %8594 = vmatpush1.msra.mxu0 %v8593
        %8595 = vmatprep.subr.mxu0 0.0
        %8596 = vmatpush2.msra.mxu0 0.0
        %8597 = vmatprep.subr.mxu0 0.0
        %8598 = vmatpush2.msra.mxu0 0.0
        %8599 = vmatprep.subr.mxu0 0.0
        %8600 = vmatpush2.msra.mxu0 0.0
        %8601 = vmatprep.subr.mxu0 0.0
        %8602 = vmatpush2.msra.mxu0 0.0
        %8603 = vmatprep.subr.mxu0 0.0
        %8604 = vmatpush2.msra.mxu0 0.0
        %8605 = vmatprep.subr.mxu0 0.0
        %8606 = vmatpush2.msra.mxu0 0.0
        %8607 = vmatprep.subr.mxu0 0.0
        %8608 = vmatpush2.msra.mxu0 0.0
        %8609 = vmatprep.subr.mxu0 0.0
        %8610 = vmatpush2.msra.mxu0 0.0
        %8611 = vmatprep.subr.mxu0 0.0
        %8612 = vmatpush2.msra.mxu0 0.0
        %8613 = vmatprep.subr.mxu0 0.0
        %8614 = vmatpush2.msra.mxu0 0.0
        %8615 = vmatprep.subr.mxu0 0.0
        %8616 = vmatpush2.msra.mxu0 0.0
        %8617 = vmatprep.subr.mxu0 0.0
        %8618 = vmatpush2.msra.mxu0 0.0
        %8619 = vmatprep.subr.mxu0 0.0
        %8620 = vmatpush2.msra.mxu0 0.0
        %8621 = vmatprep.subr.mxu0 0.0
        %8622 = vmatpush2.msra.mxu0 0.0
        %v8623 = vand.u32 %v5686, 4294901760
        %8624 = vmatprep.subr.mxu0 %v8623
        %v8625 = vand.u32 %v5685, 4294901760
        %8626 = vmatpush2.msra.mxu0 %v8625
        %v8627 = vand.u32 %v5679, 4294901760
        %8628 = vmatprep.subr.mxu0 %v8627
        %v8629 = vand.u32 %v5678, 4294901760
        %8630 = vmatpush2.msra.mxu0 %v8629
        %v8631 = vand.u32 %v5689, 4294901760
        %v8632 = vsub.f32 %v5689, %v8631
        %v8633 = vand.u32 %v8632, 4294901760
        %8634 = vmatprep.mubr.f32.mxu0 %v8633
        %v8635 = vand.u32 %v5554, 4294901760
        %v8636 = vsub.f32 %v5554, %v8635
        %v8637 = vand.u32 %v8636, 4294901760
        %8638 = vmatmul.mubr.f32.gmra.mxu0 %v8637
        %v8639 = vpop.f32.mrf.mxu0
        %v8640 = vadd.f32 %v8497, %v8639
        %v8641 = vpop.f32.mrf.mxu0
        %v8642 = vadd.f32 %v8499, %v8641
        %v8643 = vand.u32 %v5692, 4294901760
        %v8644 = vsub.f32 %v5692, %v8643
        %v8645 = vand.u32 %v8644, 4294901760
        %8646 = vmatprep.mubr.f32.mxu0 %v8645
        %v8647 = vand.u32 %v5556, 4294901760
        %v8648 = vsub.f32 %v5556, %v8647
        %v8649 = vand.u32 %v8648, 4294901760
        %8650 = vmatmul.mubr.f32.gmra.mxu0 %v8649
        %v8651 = vpop.f32.mrf.mxu0
        %v8652 = vadd.f32 %v8507, %v8651
        %v8653 = vpop.f32.mrf.mxu0
        %v8654 = vadd.f32 %v8509, %v8653
        %v8655 = vand.u32 %v5695, 4294901760
        %v8656 = vsub.f32 %v5695, %v8655
        %v8657 = vand.u32 %v8656, 4294901760
        %8658 = vmatprep.mubr.f32.mxu0 %v8657
        %v8659 = vand.u32 %v5558, 4294901760
        %v8660 = vsub.f32 %v5558, %v8659
        %v8661 = vand.u32 %v8660, 4294901760
        %8662 = vmatmul.mubr.f32.gmra.mxu0 %v8661
        %v8663 = vpop.f32.mrf.mxu0
        %v8664 = vadd.f32 %v8517, %v8663
        %v8665 = vpop.f32.mrf.mxu0
        %v8666 = vadd.f32 %v8519, %v8665
        %v8667 = vand.u32 %v5698, 4294901760
        %v8668 = vsub.f32 %v5698, %v8667
        %v8669 = vand.u32 %v8668, 4294901760
        %8670 = vmatprep.mubr.f32.mxu0 %v8669
        %v8671 = vand.u32 %v5560, 4294901760
        %v8672 = vsub.f32 %v5560, %v8671
        %v8673 = vand.u32 %v8672, 4294901760
        %8674 = vmatmul.mubr.f32.gmra.mxu0 %v8673
        %v8675 = vpop.f32.mrf.mxu0
        %v8676 = vadd.f32 %v8527, %v8675
        %v8677 = vpop.f32.mrf.mxu0
        %v8678 = vadd.f32 %v8529, %v8677
        %8679 = vdwg.mxu0
        %v8680 = vand.u32 %v5672, 4294901760
        %v8681 = vsub.f32 %v5672, %v8680
        %v8682 = vand.u32 %v8681, 4294901760
        %8683 = vmatprep.subr.mxu0 %v8682
        %v8684 = vand.u32 %v5671, 4294901760
        %v8685 = vsub.f32 %v5671, %v8684
        %v8686 = vand.u32 %v8685, 4294901760
        %8687 = vmatpush1.msra.mxu0 %v8686
        %v8688 = vand.u32 %v5665, 4294901760
        %v8689 = vsub.f32 %v5665, %v8688
        %v8690 = vand.u32 %v8689, 4294901760
        %8691 = vmatprep.subr.mxu0 %v8690
        %v8692 = vand.u32 %v5664, 4294901760
        %v8693 = vsub.f32 %v5664, %v8692
        %v8694 = vand.u32 %v8693, 4294901760
        %8695 = vmatpush1.msra.mxu0 %v8694
        %v8696 = vand.u32 %v5658, 4294901760
        %v8697 = vsub.f32 %v5658, %v8696
        %v8698 = vand.u32 %v8697, 4294901760
        %8699 = vmatprep.subr.mxu0 %v8698
        %v8700 = vand.u32 %v5657, 4294901760
        %v8701 = vsub.f32 %v5657, %v8700
        %v8702 = vand.u32 %v8701, 4294901760
        %8703 = vmatpush1.msra.mxu0 %v8702
        %v8704 = vand.u32 %v5651, 4294901760
        %v8705 = vsub.f32 %v5651, %v8704
        %v8706 = vand.u32 %v8705, 4294901760
        %8707 = vmatprep.subr.mxu0 %v8706
        %v8708 = vand.u32 %v5650, 4294901760
        %v8709 = vsub.f32 %v5650, %v8708
        %v8710 = vand.u32 %v8709, 4294901760
        %8711 = vmatpush1.msra.mxu0 %v8710
        %v8712 = vand.u32 %v5644, 4294901760
        %v8713 = vsub.f32 %v5644, %v8712
        %v8714 = vand.u32 %v8713, 4294901760
        %8715 = vmatprep.subr.mxu0 %v8714
        %v8716 = vand.u32 %v5643, 4294901760
        %v8717 = vsub.f32 %v5643, %v8716
        %v8718 = vand.u32 %v8717, 4294901760
        %8719 = vmatpush1.msra.mxu0 %v8718
        %v8720 = vand.u32 %v5637, 4294901760
        %v8721 = vsub.f32 %v5637, %v8720
        %v8722 = vand.u32 %v8721, 4294901760
        %8723 = vmatprep.subr.mxu0 %v8722
        %v8724 = vand.u32 %v5636, 4294901760
        %v8725 = vsub.f32 %v5636, %v8724
        %v8726 = vand.u32 %v8725, 4294901760
        %8727 = vmatpush1.msra.mxu0 %v8726
        %v8728 = vand.u32 %v5630, 4294901760
        %v8729 = vsub.f32 %v5630, %v8728
        %v8730 = vand.u32 %v8729, 4294901760
        %8731 = vmatprep.subr.mxu0 %v8730
        %v8732 = vand.u32 %v5629, 4294901760
        %v8733 = vsub.f32 %v5629, %v8732
        %v8734 = vand.u32 %v8733, 4294901760
        %8735 = vmatpush1.msra.mxu0 %v8734
        %v8736 = vand.u32 %v5623, 4294901760
        %v8737 = vsub.f32 %v5623, %v8736
        %v8738 = vand.u32 %v8737, 4294901760
        %8739 = vmatprep.subr.mxu0 %v8738
        %v8740 = vand.u32 %v5622, 4294901760
        %v8741 = vsub.f32 %v5622, %v8740
        %v8742 = vand.u32 %v8741, 4294901760
        %8743 = vmatpush1.msra.mxu0 %v8742
        %v8744 = vand.u32 %v5616, 4294901760
        %v8745 = vsub.f32 %v5616, %v8744
        %v8746 = vand.u32 %v8745, 4294901760
        %8747 = vmatprep.subr.mxu0 %v8746
        %v8748 = vand.u32 %v5615, 4294901760
        %v8749 = vsub.f32 %v5615, %v8748
        %v8750 = vand.u32 %v8749, 4294901760
        %8751 = vmatpush1.msra.mxu0 %v8750
        %v8752 = vand.u32 %v5609, 4294901760
        %v8753 = vsub.f32 %v5609, %v8752
        %v8754 = vand.u32 %v8753, 4294901760
        %8755 = vmatprep.subr.mxu0 %v8754
        %v8756 = vand.u32 %v5608, 4294901760
        %v8757 = vsub.f32 %v5608, %v8756
        %v8758 = vand.u32 %v8757, 4294901760
        %8759 = vmatpush1.msra.mxu0 %v8758
        %v8760 = vand.u32 %v5602, 4294901760
        %v8761 = vsub.f32 %v5602, %v8760
        %v8762 = vand.u32 %v8761, 4294901760
        %8763 = vmatprep.subr.mxu0 %v8762
        %v8764 = vand.u32 %v5601, 4294901760
        %v8765 = vsub.f32 %v5601, %v8764
        %v8766 = vand.u32 %v8765, 4294901760
        %8767 = vmatpush1.msra.mxu0 %v8766
        %v8768 = vand.u32 %v5595, 4294901760
        %v8769 = vsub.f32 %v5595, %v8768
        %v8770 = vand.u32 %v8769, 4294901760
        %8771 = vmatprep.subr.mxu0 %v8770
        %v8772 = vand.u32 %v5594, 4294901760
        %v8773 = vsub.f32 %v5594, %v8772
        %v8774 = vand.u32 %v8773, 4294901760
        %8775 = vmatpush1.msra.mxu0 %v8774
        %v8776 = vand.u32 %v5588, 4294901760
        %v8777 = vsub.f32 %v5588, %v8776
        %v8778 = vand.u32 %v8777, 4294901760
        %8779 = vmatprep.subr.mxu0 %v8778
        %v8780 = vand.u32 %v5587, 4294901760
        %v8781 = vsub.f32 %v5587, %v8780
        %v8782 = vand.u32 %v8781, 4294901760
        %8783 = vmatpush1.msra.mxu0 %v8782
        %v8784 = vand.u32 %v5581, 4294901760
        %v8785 = vsub.f32 %v5581, %v8784
        %v8786 = vand.u32 %v8785, 4294901760
        %8787 = vmatprep.subr.mxu0 %v8786
        %v8788 = vand.u32 %v5580, 4294901760
        %v8789 = vsub.f32 %v5580, %v8788
        %v8790 = vand.u32 %v8789, 4294901760
        %8791 = vmatpush1.msra.mxu0 %v8790
        %v8792 = vand.u32 %v5574, 4294901760
        %v8793 = vsub.f32 %v5574, %v8792
        %v8794 = vand.u32 %v8793, 4294901760
        %8795 = vmatprep.subr.mxu0 %v8794
        %v8796 = vand.u32 %v5573, 4294901760
        %v8797 = vsub.f32 %v5573, %v8796
        %v8798 = vand.u32 %v8797, 4294901760
        %8799 = vmatpush1.msra.mxu0 %v8798
        %v8800 = vand.u32 %v5567, 4294901760
        %v8801 = vsub.f32 %v5567, %v8800
        %v8802 = vand.u32 %v8801, 4294901760
        %8803 = vmatprep.subr.mxu0 %v8802
        %v8804 = vand.u32 %v5566, 4294901760
        %v8805 = vsub.f32 %v5566, %v8804
        %v8806 = vand.u32 %v8805, 4294901760
        %8807 = vmatpush1.msra.mxu0 %v8806
        %8808 = vmatprep.subr.mxu0 0.0
        %8809 = vmatpush2.msra.mxu0 0.0
        %8810 = vmatprep.subr.mxu0 0.0
        %8811 = vmatpush2.msra.mxu0 0.0
        %8812 = vmatprep.subr.mxu0 0.0
        %8813 = vmatpush2.msra.mxu0 0.0
        %8814 = vmatprep.subr.mxu0 0.0
        %8815 = vmatpush2.msra.mxu0 0.0
        %8816 = vmatprep.subr.mxu0 0.0
        %8817 = vmatpush2.msra.mxu0 0.0
        %8818 = vmatprep.subr.mxu0 0.0
        %8819 = vmatpush2.msra.mxu0 0.0
        %8820 = vmatprep.subr.mxu0 0.0
        %8821 = vmatpush2.msra.mxu0 0.0
        %8822 = vmatprep.subr.mxu0 0.0
        %8823 = vmatpush2.msra.mxu0 0.0
        %8824 = vmatprep.subr.mxu0 0.0
        %8825 = vmatpush2.msra.mxu0 0.0
        %8826 = vmatprep.subr.mxu0 0.0
        %8827 = vmatpush2.msra.mxu0 0.0
        %8828 = vmatprep.subr.mxu0 0.0
        %8829 = vmatpush2.msra.mxu0 0.0
        %8830 = vmatprep.subr.mxu0 0.0
        %8831 = vmatpush2.msra.mxu0 0.0
        %8832 = vmatprep.subr.mxu0 0.0
        %8833 = vmatpush2.msra.mxu0 0.0
        %8834 = vmatprep.subr.mxu0 0.0
        %8835 = vmatpush2.msra.mxu0 0.0
        %v8836 = vand.u32 %v5686, 4294901760
        %v8837 = vsub.f32 %v5686, %v8836
        %v8838 = vand.u32 %v8837, 4294901760
        %8839 = vmatprep.subr.mxu0 %v8838
        %v8840 = vand.u32 %v5685, 4294901760
        %v8841 = vsub.f32 %v5685, %v8840
        %v8842 = vand.u32 %v8841, 4294901760
        %8843 = vmatpush2.msra.mxu0 %v8842
        %v8844 = vand.u32 %v5679, 4294901760
        %v8845 = vsub.f32 %v5679, %v8844
        %v8846 = vand.u32 %v8845, 4294901760
        %8847 = vmatprep.subr.mxu0 %v8846
        %v8848 = vand.u32 %v5678, 4294901760
        %v8849 = vsub.f32 %v5678, %v8848
        %v8850 = vand.u32 %v8849, 4294901760
        %8851 = vmatpush2.msra.mxu0 %v8850
        %v8852 = vand.u32 %v5689, 4294901760
        %8853 = vmatprep.mubr.f32.mxu0 %v8852
        %v8854 = vand.u32 %v5554, 4294901760
        %8855 = vmatmul.mubr.f32.gmra.mxu0 %v8854
        %v8856 = vpop.f32.mrf.mxu0
        %v8857 = vadd.f32 %v8640, %v8856
        %v8858 = vpop.f32.mrf.mxu0
        %v8859 = vadd.f32 %v8642, %v8858
        %v8860 = vand.u32 %v5692, 4294901760
        %8861 = vmatprep.mubr.f32.mxu0 %v8860
        %v8862 = vand.u32 %v5556, 4294901760
        %8863 = vmatmul.mubr.f32.gmra.mxu0 %v8862
        %v8864 = vpop.f32.mrf.mxu0
        %v8865 = vadd.f32 %v8652, %v8864
        %v8866 = vpop.f32.mrf.mxu0
        %v8867 = vadd.f32 %v8654, %v8866
        %v8868 = vand.u32 %v5695, 4294901760
        %8869 = vmatprep.mubr.f32.mxu0 %v8868
        %v8870 = vand.u32 %v5558, 4294901760
        %8871 = vmatmul.mubr.f32.gmra.mxu0 %v8870
        %v8872 = vpop.f32.mrf.mxu0
        %v8873 = vadd.f32 %v8664, %v8872
        %v8874 = vpop.f32.mrf.mxu0
        %v8875 = vadd.f32 %v8666, %v8874
        %v8876 = vand.u32 %v5698, 4294901760
        %8877 = vmatprep.mubr.f32.mxu0 %v8876
        %v8878 = vand.u32 %v5560, 4294901760
        %8879 = vmatmul.mubr.f32.gmra.mxu0 %v8878
        %v8880 = vpop.f32.mrf.mxu0
        %v8881 = vadd.f32 %v8676, %v8880
        %v8882 = vpop.f32.mrf.mxu0
        %v8883 = vadd.f32 %v8678, %v8882
        %8884 = vdwg.mxu0
        %v8885 = vand.u32 %v5672, 4294901760
        %8886 = vmatprep.subr.mxu0 %v8885
        %v8887 = vand.u32 %v5671, 4294901760
        %8888 = vmatpush1.msra.mxu0 %v8887
        %v8889 = vand.u32 %v5665, 4294901760
        %8890 = vmatprep.subr.mxu0 %v8889
        %v8891 = vand.u32 %v5664, 4294901760
        %8892 = vmatpush1.msra.mxu0 %v8891
        %v8893 = vand.u32 %v5658, 4294901760
        %8894 = vmatprep.subr.mxu0 %v8893
        %v8895 = vand.u32 %v5657, 4294901760
        %8896 = vmatpush1.msra.mxu0 %v8895
        %v8897 = vand.u32 %v5651, 4294901760
        %8898 = vmatprep.subr.mxu0 %v8897
        %v8899 = vand.u32 %v5650, 4294901760
        %8900 = vmatpush1.msra.mxu0 %v8899
        %v8901 = vand.u32 %v5644, 4294901760
        %8902 = vmatprep.subr.mxu0 %v8901
        %v8903 = vand.u32 %v5643, 4294901760
        %8904 = vmatpush1.msra.mxu0 %v8903
        %v8905 = vand.u32 %v5637, 4294901760
        %8906 = vmatprep.subr.mxu0 %v8905
        %v8907 = vand.u32 %v5636, 4294901760
        %8908 = vmatpush1.msra.mxu0 %v8907
        %v8909 = vand.u32 %v5630, 4294901760
        %8910 = vmatprep.subr.mxu0 %v8909
        %v8911 = vand.u32 %v5629, 4294901760
        %8912 = vmatpush1.msra.mxu0 %v8911
        %v8913 = vand.u32 %v5623, 4294901760
        %8914 = vmatprep.subr.mxu0 %v8913
        %v8915 = vand.u32 %v5622, 4294901760
        %8916 = vmatpush1.msra.mxu0 %v8915
        %v8917 = vand.u32 %v5616, 4294901760
        %8918 = vmatprep.subr.mxu0 %v8917
        %v8919 = vand.u32 %v5615, 4294901760
        %8920 = vmatpush1.msra.mxu0 %v8919
        %v8921 = vand.u32 %v5609, 4294901760
        %8922 = vmatprep.subr.mxu0 %v8921
        %v8923 = vand.u32 %v5608, 4294901760
        %8924 = vmatpush1.msra.mxu0 %v8923
        %v8925 = vand.u32 %v5602, 4294901760
        %8926 = vmatprep.subr.mxu0 %v8925
        %v8927 = vand.u32 %v5601, 4294901760
        %8928 = vmatpush1.msra.mxu0 %v8927
        %v8929 = vand.u32 %v5595, 4294901760
        %8930 = vmatprep.subr.mxu0 %v8929
        %v8931 = vand.u32 %v5594, 4294901760
        %8932 = vmatpush1.msra.mxu0 %v8931
        %v8933 = vand.u32 %v5588, 4294901760
        %8934 = vmatprep.subr.mxu0 %v8933
        %v8935 = vand.u32 %v5587, 4294901760
        %8936 = vmatpush1.msra.mxu0 %v8935
        %v8937 = vand.u32 %v5581, 4294901760
        %8938 = vmatprep.subr.mxu0 %v8937
        %v8939 = vand.u32 %v5580, 4294901760
        %8940 = vmatpush1.msra.mxu0 %v8939
        %v8941 = vand.u32 %v5574, 4294901760
        %8942 = vmatprep.subr.mxu0 %v8941
        %v8943 = vand.u32 %v5573, 4294901760
        %8944 = vmatpush1.msra.mxu0 %v8943
        %v8945 = vand.u32 %v5567, 4294901760
        %8946 = vmatprep.subr.mxu0 %v8945
        %v8947 = vand.u32 %v5566, 4294901760
        %8948 = vmatpush1.msra.mxu0 %v8947
        %8949 = vmatprep.subr.mxu0 0.0
        %8950 = vmatpush2.msra.mxu0 0.0
        %8951 = vmatprep.subr.mxu0 0.0
        %8952 = vmatpush2.msra.mxu0 0.0
        %8953 = vmatprep.subr.mxu0 0.0
        %8954 = vmatpush2.msra.mxu0 0.0
        %8955 = vmatprep.subr.mxu0 0.0
        %8956 = vmatpush2.msra.mxu0 0.0
        %8957 = vmatprep.subr.mxu0 0.0
        %8958 = vmatpush2.msra.mxu0 0.0
        %8959 = vmatprep.subr.mxu0 0.0
        %8960 = vmatpush2.msra.mxu0 0.0
        %8961 = vmatprep.subr.mxu0 0.0
        %8962 = vmatpush2.msra.mxu0 0.0
        %8963 = vmatprep.subr.mxu0 0.0
        %8964 = vmatpush2.msra.mxu0 0.0
        %8965 = vmatprep.subr.mxu0 0.0
        %8966 = vmatpush2.msra.mxu0 0.0
        %8967 = vmatprep.subr.mxu0 0.0
        %8968 = vmatpush2.msra.mxu0 0.0
        %8969 = vmatprep.subr.mxu0 0.0
        %8970 = vmatpush2.msra.mxu0 0.0
        %8971 = vmatprep.subr.mxu0 0.0
        %8972 = vmatpush2.msra.mxu0 0.0
        %8973 = vmatprep.subr.mxu0 0.0
        %8974 = vmatpush2.msra.mxu0 0.0
        %8975 = vmatprep.subr.mxu0 0.0
        %8976 = vmatpush2.msra.mxu0 0.0
        %v8977 = vand.u32 %v5686, 4294901760
        %8978 = vmatprep.subr.mxu0 %v8977
        %v8979 = vand.u32 %v5685, 4294901760
        %8980 = vmatpush2.msra.mxu0 %v8979
        %v8981 = vand.u32 %v5679, 4294901760
        %8982 = vmatprep.subr.mxu0 %v8981
        %v8983 = vand.u32 %v5678, 4294901760
        %8984 = vmatpush2.msra.mxu0 %v8983
        %v8985 = vand.u32 %v5689, 4294901760
        %8986 = vmatprep.mubr.f32.mxu0 %v8985
        %v8987 = vand.u32 %v5554, 4294901760
        %8988 = vmatmul.mubr.f32.gmra.mxu0 %v8987
        %v8989 = vpop.f32.mrf.mxu0
        %v8990 = vadd.f32 %v8857, %v8989
        %v8991 = vpop.f32.mrf.mxu0
        %v8992 = vadd.f32 %v8859, %v8991
        %v8993 = vand.u32 %v5692, 4294901760
        %8994 = vmatprep.mubr.f32.mxu0 %v8993
        %v8995 = vand.u32 %v5556, 4294901760
        %8996 = vmatmul.mubr.f32.gmra.mxu0 %v8995
        %v8997 = vpop.f32.mrf.mxu0
        %v8998 = vadd.f32 %v8865, %v8997
        %v8999 = vpop.f32.mrf.mxu0
        %v9000 = vadd.f32 %v8867, %v8999
        %v9001 = vand.u32 %v5695, 4294901760
        %9002 = vmatprep.mubr.f32.mxu0 %v9001
        %v9003 = vand.u32 %v5558, 4294901760
        %9004 = vmatmul.mubr.f32.gmra.mxu0 %v9003
        %v9005 = vpop.f32.mrf.mxu0
        %v9006 = vadd.f32 %v8873, %v9005
        %v9007 = vpop.f32.mrf.mxu0
        %v9008 = vadd.f32 %v8875, %v9007
        %v9009 = vand.u32 %v5698, 4294901760
        %9010 = vmatprep.mubr.f32.mxu0 %v9009
        %v9011 = vand.u32 %v5560, 4294901760
        %9012 = vmatmul.mubr.f32.gmra.mxu0 %v9011
        %v9013 = vpop.f32.mrf.mxu0
        %v9014 = vadd.f32 %v8881, %v9013
        %v9015 = vpop.f32.mrf.mxu0
        %v9016 = vadd.f32 %v8883, %v9015
        %9017 = vdwg.mxu0
        %9018 = vmatprep.subr.mxu0 0.0
        %v9019 = vand.u32 %v5673, 4294901760
        %9020 = vmatpush1.msra.mxu0 %v9019
        %9021 = vmatprep.subr.mxu0 0.0
        %v9022 = vand.u32 %v5666, 4294901760
        %9023 = vmatpush1.msra.mxu0 %v9022
        %9024 = vmatprep.subr.mxu0 0.0
        %v9025 = vand.u32 %v5659, 4294901760
        %9026 = vmatpush1.msra.mxu0 %v9025
        %9027 = vmatprep.subr.mxu0 0.0
        %v9028 = vand.u32 %v5652, 4294901760
        %9029 = vmatpush1.msra.mxu0 %v9028
        %9030 = vmatprep.subr.mxu0 0.0
        %v9031 = vand.u32 %v5645, 4294901760
        %9032 = vmatpush1.msra.mxu0 %v9031
        %9033 = vmatprep.subr.mxu0 0.0
        %v9034 = vand.u32 %v5638, 4294901760
        %9035 = vmatpush1.msra.mxu0 %v9034
        %9036 = vmatprep.subr.mxu0 0.0
        %v9037 = vand.u32 %v5631, 4294901760
        %9038 = vmatpush1.msra.mxu0 %v9037
        %9039 = vmatprep.subr.mxu0 0.0
        %v9040 = vand.u32 %v5624, 4294901760
        %9041 = vmatpush1.msra.mxu0 %v9040
        %9042 = vmatprep.subr.mxu0 0.0
        %v9043 = vand.u32 %v5617, 4294901760
        %9044 = vmatpush1.msra.mxu0 %v9043
        %9045 = vmatprep.subr.mxu0 0.0
        %v9046 = vand.u32 %v5610, 4294901760
        %9047 = vmatpush1.msra.mxu0 %v9046
        %9048 = vmatprep.subr.mxu0 0.0
        %v9049 = vand.u32 %v5603, 4294901760
        %9050 = vmatpush1.msra.mxu0 %v9049
        %9051 = vmatprep.subr.mxu0 0.0
        %v9052 = vand.u32 %v5596, 4294901760
        %9053 = vmatpush1.msra.mxu0 %v9052
        %9054 = vmatprep.subr.mxu0 0.0
        %v9055 = vand.u32 %v5589, 4294901760
        %9056 = vmatpush1.msra.mxu0 %v9055
        %9057 = vmatprep.subr.mxu0 0.0
        %v9058 = vand.u32 %v5582, 4294901760
        %9059 = vmatpush1.msra.mxu0 %v9058
        %9060 = vmatprep.subr.mxu0 0.0
        %v9061 = vand.u32 %v5575, 4294901760
        %9062 = vmatpush1.msra.mxu0 %v9061
        %9063 = vmatprep.subr.mxu0 0.0
        %v9064 = vand.u32 %v5568, 4294901760
        %9065 = vmatpush1.msra.mxu0 %v9064
        %9066 = vmatprep.subr.mxu0 0.0
        %9067 = vmatpush2.msra.mxu0 0.0
        %9068 = vmatprep.subr.mxu0 0.0
        %9069 = vmatpush2.msra.mxu0 0.0
        %9070 = vmatprep.subr.mxu0 0.0
        %9071 = vmatpush2.msra.mxu0 0.0
        %9072 = vmatprep.subr.mxu0 0.0
        %9073 = vmatpush2.msra.mxu0 0.0
        %9074 = vmatprep.subr.mxu0 0.0
        %9075 = vmatpush2.msra.mxu0 0.0
        %9076 = vmatprep.subr.mxu0 0.0
        %9077 = vmatpush2.msra.mxu0 0.0
        %9078 = vmatprep.subr.mxu0 0.0
        %9079 = vmatpush2.msra.mxu0 0.0
        %9080 = vmatprep.subr.mxu0 0.0
        %9081 = vmatpush2.msra.mxu0 0.0
        %9082 = vmatprep.subr.mxu0 0.0
        %9083 = vmatpush2.msra.mxu0 0.0
        %9084 = vmatprep.subr.mxu0 0.0
        %9085 = vmatpush2.msra.mxu0 0.0
        %9086 = vmatprep.subr.mxu0 0.0
        %9087 = vmatpush2.msra.mxu0 0.0
        %9088 = vmatprep.subr.mxu0 0.0
        %9089 = vmatpush2.msra.mxu0 0.0
        %9090 = vmatprep.subr.mxu0 0.0
        %9091 = vmatpush2.msra.mxu0 0.0
        %9092 = vmatprep.subr.mxu0 0.0
        %9093 = vmatpush2.msra.mxu0 0.0
        %9094 = vmatprep.subr.mxu0 0.0
        %v9095 = vand.u32 %v5687, 4294901760
        %9096 = vmatpush2.msra.mxu0 %v9095
        %9097 = vmatprep.subr.mxu0 0.0
        %v9098 = vand.u32 %v5680, 4294901760
        %9099 = vmatpush2.msra.mxu0 %v9098
        %v9100 = vand.u32 %v5689, 4294901760
        %v9101 = vsub.f32 %v5689, %v9100
        %v9102 = vand.u32 %v9101, 4294901760
        %v9103 = vsub.f32 %v9101, %v9102
        %v9104 = vand.u32 %v9103, 4294901760
        %9105 = vmatprep.mubr.f32.mxu0 %v9104
        %v9106 = vand.u32 %v5554, 4294901760
        %v9107 = vsub.f32 %v5554, %v9106
        %v9108 = vand.u32 %v9107, 4294901760
        %v9109 = vsub.f32 %v9107, %v9108
        %v9110 = vand.u32 %v9109, 4294901760
        %9111 = vmatmul.mubr.f32.gmra.mxu0 %v9110
        %v9112 = vpop.f32.mrf.mxu0
        %v9113 = vadd.f32 0.0, %v9112
        %v9114 = vpop.f32.mrf.mxu0
        %v9115 = vand.u32 %v5692, 4294901760
        %v9116 = vsub.f32 %v5692, %v9115
        %v9117 = vand.u32 %v9116, 4294901760
        %v9118 = vsub.f32 %v9116, %v9117
        %v9119 = vand.u32 %v9118, 4294901760
        %9120 = vmatprep.mubr.f32.mxu0 %v9119
        %v9121 = vand.u32 %v5556, 4294901760
        %v9122 = vsub.f32 %v5556, %v9121
        %v9123 = vand.u32 %v9122, 4294901760
        %v9124 = vsub.f32 %v9122, %v9123
        %v9125 = vand.u32 %v9124, 4294901760
        %9126 = vmatmul.mubr.f32.gmra.mxu0 %v9125
        %v9127 = vpop.f32.mrf.mxu0
        %v9128 = vadd.f32 0.0, %v9127
        %v9129 = vpop.f32.mrf.mxu0
        %v9130 = vand.u32 %v5695, 4294901760
        %v9131 = vsub.f32 %v5695, %v9130
        %v9132 = vand.u32 %v9131, 4294901760
        %v9133 = vsub.f32 %v9131, %v9132
        %v9134 = vand.u32 %v9133, 4294901760
        %9135 = vmatprep.mubr.f32.mxu0 %v9134
        %v9136 = vand.u32 %v5558, 4294901760
        %v9137 = vsub.f32 %v5558, %v9136
        %v9138 = vand.u32 %v9137, 4294901760
        %v9139 = vsub.f32 %v9137, %v9138
        %v9140 = vand.u32 %v9139, 4294901760
        %9141 = vmatmul.mubr.f32.gmra.mxu0 %v9140
        %v9142 = vpop.f32.mrf.mxu0
        %v9143 = vadd.f32 0.0, %v9142
        %v9144 = vpop.f32.mrf.mxu0
        %v9145 = vand.u32 %v5698, 4294901760
        %v9146 = vsub.f32 %v5698, %v9145
        %v9147 = vand.u32 %v9146, 4294901760
        %v9148 = vsub.f32 %v9146, %v9147
        %v9149 = vand.u32 %v9148, 4294901760
        %9150 = vmatprep.mubr.f32.mxu0 %v9149
        %v9151 = vand.u32 %v5560, 4294901760
        %v9152 = vsub.f32 %v5560, %v9151
        %v9153 = vand.u32 %v9152, 4294901760
        %v9154 = vsub.f32 %v9152, %v9153
        %v9155 = vand.u32 %v9154, 4294901760
        %9156 = vmatmul.mubr.f32.gmra.mxu0 %v9155
        %v9157 = vpop.f32.mrf.mxu0
        %v9158 = vadd.f32 0.0, %v9157
        %v9159 = vpop.f32.mrf.mxu0
        %9160 = vdwg.mxu0
        %9161 = vmatprep.subr.mxu0 0.0
        %v9162 = vand.u32 %v5673, 4294901760
        %v9163 = vsub.f32 %v5673, %v9162
        %v9164 = vand.u32 %v9163, 4294901760
        %v9165 = vsub.f32 %v9163, %v9164
        %v9166 = vand.u32 %v9165, 4294901760
        %9167 = vmatpush1.msra.mxu0 %v9166
        %9168 = vmatprep.subr.mxu0 0.0
        %v9169 = vand.u32 %v5666, 4294901760
        %v9170 = vsub.f32 %v5666, %v9169
        %v9171 = vand.u32 %v9170, 4294901760
        %v9172 = vsub.f32 %v9170, %v9171
        %v9173 = vand.u32 %v9172, 4294901760
        %9174 = vmatpush1.msra.mxu0 %v9173
        %9175 = vmatprep.subr.mxu0 0.0
        %v9176 = vand.u32 %v5659, 4294901760
        %v9177 = vsub.f32 %v5659, %v9176
        %v9178 = vand.u32 %v9177, 4294901760
        %v9179 = vsub.f32 %v9177, %v9178
        %v9180 = vand.u32 %v9179, 4294901760
        %9181 = vmatpush1.msra.mxu0 %v9180
        %9182 = vmatprep.subr.mxu0 0.0
        %v9183 = vand.u32 %v5652, 4294901760
        %v9184 = vsub.f32 %v5652, %v9183
        %v9185 = vand.u32 %v9184, 4294901760
        %v9186 = vsub.f32 %v9184, %v9185
        %v9187 = vand.u32 %v9186, 4294901760
        %9188 = vmatpush1.msra.mxu0 %v9187
        %9189 = vmatprep.subr.mxu0 0.0
        %v9190 = vand.u32 %v5645, 4294901760
        %v9191 = vsub.f32 %v5645, %v9190
        %v9192 = vand.u32 %v9191, 4294901760
        %v9193 = vsub.f32 %v9191, %v9192
        %v9194 = vand.u32 %v9193, 4294901760
        %9195 = vmatpush1.msra.mxu0 %v9194
        %9196 = vmatprep.subr.mxu0 0.0
        %v9197 = vand.u32 %v5638, 4294901760
        %v9198 = vsub.f32 %v5638, %v9197
        %v9199 = vand.u32 %v9198, 4294901760
        %v9200 = vsub.f32 %v9198, %v9199
        %v9201 = vand.u32 %v9200, 4294901760
        %9202 = vmatpush1.msra.mxu0 %v9201
        %9203 = vmatprep.subr.mxu0 0.0
        %v9204 = vand.u32 %v5631, 4294901760
        %v9205 = vsub.f32 %v5631, %v9204
        %v9206 = vand.u32 %v9205, 4294901760
        %v9207 = vsub.f32 %v9205, %v9206
        %v9208 = vand.u32 %v9207, 4294901760
        %9209 = vmatpush1.msra.mxu0 %v9208
        %9210 = vmatprep.subr.mxu0 0.0
        %v9211 = vand.u32 %v5624, 4294901760
        %v9212 = vsub.f32 %v5624, %v9211
        %v9213 = vand.u32 %v9212, 4294901760
        %v9214 = vsub.f32 %v9212, %v9213
        %v9215 = vand.u32 %v9214, 4294901760
        %9216 = vmatpush1.msra.mxu0 %v9215
        %9217 = vmatprep.subr.mxu0 0.0
        %v9218 = vand.u32 %v5617, 4294901760
        %v9219 = vsub.f32 %v5617, %v9218
        %v9220 = vand.u32 %v9219, 4294901760
        %v9221 = vsub.f32 %v9219, %v9220
        %v9222 = vand.u32 %v9221, 4294901760
        %9223 = vmatpush1.msra.mxu0 %v9222
        %9224 = vmatprep.subr.mxu0 0.0
        %v9225 = vand.u32 %v5610, 4294901760
        %v9226 = vsub.f32 %v5610, %v9225
        %v9227 = vand.u32 %v9226, 4294901760
        %v9228 = vsub.f32 %v9226, %v9227
        %v9229 = vand.u32 %v9228, 4294901760
        %9230 = vmatpush1.msra.mxu0 %v9229
        %9231 = vmatprep.subr.mxu0 0.0
        %v9232 = vand.u32 %v5603, 4294901760
        %v9233 = vsub.f32 %v5603, %v9232
        %v9234 = vand.u32 %v9233, 4294901760
        %v9235 = vsub.f32 %v9233, %v9234
        %v9236 = vand.u32 %v9235, 4294901760
        %9237 = vmatpush1.msra.mxu0 %v9236
        %9238 = vmatprep.subr.mxu0 0.0
        %v9239 = vand.u32 %v5596, 4294901760
        %v9240 = vsub.f32 %v5596, %v9239
        %v9241 = vand.u32 %v9240, 4294901760
        %v9242 = vsub.f32 %v9240, %v9241
        %v9243 = vand.u32 %v9242, 4294901760
        %9244 = vmatpush1.msra.mxu0 %v9243
        %9245 = vmatprep.subr.mxu0 0.0
        %v9246 = vand.u32 %v5589, 4294901760
        %v9247 = vsub.f32 %v5589, %v9246
        %v9248 = vand.u32 %v9247, 4294901760
        %v9249 = vsub.f32 %v9247, %v9248
        %v9250 = vand.u32 %v9249, 4294901760
        %9251 = vmatpush1.msra.mxu0 %v9250
        %9252 = vmatprep.subr.mxu0 0.0
        %v9253 = vand.u32 %v5582, 4294901760
        %v9254 = vsub.f32 %v5582, %v9253
        %v9255 = vand.u32 %v9254, 4294901760
        %v9256 = vsub.f32 %v9254, %v9255
        %v9257 = vand.u32 %v9256, 4294901760
        %9258 = vmatpush1.msra.mxu0 %v9257
        %9259 = vmatprep.subr.mxu0 0.0
        %v9260 = vand.u32 %v5575, 4294901760
        %v9261 = vsub.f32 %v5575, %v9260
        %v9262 = vand.u32 %v9261, 4294901760
        %v9263 = vsub.f32 %v9261, %v9262
        %v9264 = vand.u32 %v9263, 4294901760
        %9265 = vmatpush1.msra.mxu0 %v9264
        %9266 = vmatprep.subr.mxu0 0.0
        %v9267 = vand.u32 %v5568, 4294901760
        %v9268 = vsub.f32 %v5568, %v9267
        %v9269 = vand.u32 %v9268, 4294901760
        %v9270 = vsub.f32 %v9268, %v9269
        %v9271 = vand.u32 %v9270, 4294901760
        %9272 = vmatpush1.msra.mxu0 %v9271
        %9273 = vmatprep.subr.mxu0 0.0
        %9274 = vmatpush2.msra.mxu0 0.0
        %9275 = vmatprep.subr.mxu0 0.0
        %9276 = vmatpush2.msra.mxu0 0.0
        %9277 = vmatprep.subr.mxu0 0.0
        %9278 = vmatpush2.msra.mxu0 0.0
        %9279 = vmatprep.subr.mxu0 0.0
        %9280 = vmatpush2.msra.mxu0 0.0
        %9281 = vmatprep.subr.mxu0 0.0
        %9282 = vmatpush2.msra.mxu0 0.0
        %9283 = vmatprep.subr.mxu0 0.0
        %9284 = vmatpush2.msra.mxu0 0.0
        %9285 = vmatprep.subr.mxu0 0.0
        %9286 = vmatpush2.msra.mxu0 0.0
        %9287 = vmatprep.subr.mxu0 0.0
        %9288 = vmatpush2.msra.mxu0 0.0
        %9289 = vmatprep.subr.mxu0 0.0
        %9290 = vmatpush2.msra.mxu0 0.0
        %9291 = vmatprep.subr.mxu0 0.0
        %9292 = vmatpush2.msra.mxu0 0.0
        %9293 = vmatprep.subr.mxu0 0.0
        %9294 = vmatpush2.msra.mxu0 0.0
        %9295 = vmatprep.subr.mxu0 0.0
        %9296 = vmatpush2.msra.mxu0 0.0
        %9297 = vmatprep.subr.mxu0 0.0
        %9298 = vmatpush2.msra.mxu0 0.0
        %9299 = vmatprep.subr.mxu0 0.0
        %9300 = vmatpush2.msra.mxu0 0.0
        %9301 = vmatprep.subr.mxu0 0.0
        %v9302 = vand.u32 %v5687, 4294901760
        %v9303 = vsub.f32 %v5687, %v9302
        %v9304 = vand.u32 %v9303, 4294901760
        %v9305 = vsub.f32 %v9303, %v9304
        %v9306 = vand.u32 %v9305, 4294901760
        %9307 = vmatpush2.msra.mxu0 %v9306
        %9308 = vmatprep.subr.mxu0 0.0
        %v9309 = vand.u32 %v5680, 4294901760
        %v9310 = vsub.f32 %v5680, %v9309
        %v9311 = vand.u32 %v9310, 4294901760
        %v9312 = vsub.f32 %v9310, %v9311
        %v9313 = vand.u32 %v9312, 4294901760
        %9314 = vmatpush2.msra.mxu0 %v9313
        %v9315 = vand.u32 %v5689, 4294901760
        %9316 = vmatprep.mubr.f32.mxu0 %v9315
        %v9317 = vand.u32 %v5554, 4294901760
        %9318 = vmatmul.mubr.f32.gmra.mxu0 %v9317
        %v9319 = vpop.f32.mrf.mxu0
        %v9320 = vadd.f32 %v9113, %v9319
        %v9321 = vpop.f32.mrf.mxu0
        %v9322 = vand.u32 %v5692, 4294901760
        %9323 = vmatprep.mubr.f32.mxu0 %v9322
        %v9324 = vand.u32 %v5556, 4294901760
        %9325 = vmatmul.mubr.f32.gmra.mxu0 %v9324
        %v9326 = vpop.f32.mrf.mxu0
        %v9327 = vadd.f32 %v9128, %v9326
        %v9328 = vpop.f32.mrf.mxu0
        %v9329 = vand.u32 %v5695, 4294901760
        %9330 = vmatprep.mubr.f32.mxu0 %v9329
        %v9331 = vand.u32 %v5558, 4294901760
        %9332 = vmatmul.mubr.f32.gmra.mxu0 %v9331
        %v9333 = vpop.f32.mrf.mxu0
        %v9334 = vadd.f32 %v9143, %v9333
        %v9335 = vpop.f32.mrf.mxu0
        %v9336 = vand.u32 %v5698, 4294901760
        %9337 = vmatprep.mubr.f32.mxu0 %v9336
        %v9338 = vand.u32 %v5560, 4294901760
        %9339 = vmatmul.mubr.f32.gmra.mxu0 %v9338
        %v9340 = vpop.f32.mrf.mxu0
        %v9341 = vadd.f32 %v9158, %v9340
        %v9342 = vpop.f32.mrf.mxu0
        %9343 = vdwg.mxu0
        %9344 = vmatprep.subr.mxu0 0.0
        %v9345 = vand.u32 %v5673, 4294901760
        %v9346 = vsub.f32 %v5673, %v9345
        %9347 = vmatpush1.msra.mxu0 %v9346
        %9348 = vmatprep.subr.mxu0 0.0
        %v9349 = vand.u32 %v5666, 4294901760
        %v9350 = vsub.f32 %v5666, %v9349
        %9351 = vmatpush1.msra.mxu0 %v9350
        %9352 = vmatprep.subr.mxu0 0.0
        %v9353 = vand.u32 %v5659, 4294901760
        %v9354 = vsub.f32 %v5659, %v9353
        %9355 = vmatpush1.msra.mxu0 %v9354
        %9356 = vmatprep.subr.mxu0 0.0
        %v9357 = vand.u32 %v5652, 4294901760
        %v9358 = vsub.f32 %v5652, %v9357
        %9359 = vmatpush1.msra.mxu0 %v9358
        %9360 = vmatprep.subr.mxu0 0.0
        %v9361 = vand.u32 %v5645, 4294901760
        %v9362 = vsub.f32 %v5645, %v9361
        %9363 = vmatpush1.msra.mxu0 %v9362
        %9364 = vmatprep.subr.mxu0 0.0
        %v9365 = vand.u32 %v5638, 4294901760
        %v9366 = vsub.f32 %v5638, %v9365
        %9367 = vmatpush1.msra.mxu0 %v9366
        %9368 = vmatprep.subr.mxu0 0.0
        %v9369 = vand.u32 %v5631, 4294901760
        %v9370 = vsub.f32 %v5631, %v9369
        %9371 = vmatpush1.msra.mxu0 %v9370
        %9372 = vmatprep.subr.mxu0 0.0
        %v9373 = vand.u32 %v5624, 4294901760
        %v9374 = vsub.f32 %v5624, %v9373
        %9375 = vmatpush1.msra.mxu0 %v9374
        %9376 = vmatprep.subr.mxu0 0.0
        %v9377 = vand.u32 %v5617, 4294901760
        %v9378 = vsub.f32 %v5617, %v9377
        %9379 = vmatpush1.msra.mxu0 %v9378
        %9380 = vmatprep.subr.mxu0 0.0
        %v9381 = vand.u32 %v5610, 4294901760
        %v9382 = vsub.f32 %v5610, %v9381
        %9383 = vmatpush1.msra.mxu0 %v9382
        %9384 = vmatprep.subr.mxu0 0.0
        %v9385 = vand.u32 %v5603, 4294901760
        %v9386 = vsub.f32 %v5603, %v9385
        %9387 = vmatpush1.msra.mxu0 %v9386
        %9388 = vmatprep.subr.mxu0 0.0
        %v9389 = vand.u32 %v5596, 4294901760
        %v9390 = vsub.f32 %v5596, %v9389
        %9391 = vmatpush1.msra.mxu0 %v9390
        %9392 = vmatprep.subr.mxu0 0.0
        %v9393 = vand.u32 %v5589, 4294901760
        %v9394 = vsub.f32 %v5589, %v9393
        %9395 = vmatpush1.msra.mxu0 %v9394
        %9396 = vmatprep.subr.mxu0 0.0
        %v9397 = vand.u32 %v5582, 4294901760
        %v9398 = vsub.f32 %v5582, %v9397
        %9399 = vmatpush1.msra.mxu0 %v9398
        %9400 = vmatprep.subr.mxu0 0.0
        %v9401 = vand.u32 %v5575, 4294901760
        %v9402 = vsub.f32 %v5575, %v9401
        %9403 = vmatpush1.msra.mxu0 %v9402
        %9404 = vmatprep.subr.mxu0 0.0
        %v9405 = vand.u32 %v5568, 4294901760
        %v9406 = vsub.f32 %v5568, %v9405
        %9407 = vmatpush1.msra.mxu0 %v9406
        %9408 = vmatprep.subr.mxu0 0.0
        %9409 = vmatpush2.msra.mxu0 0.0
        %9410 = vmatprep.subr.mxu0 0.0
        %9411 = vmatpush2.msra.mxu0 0.0
        %9412 = vmatprep.subr.mxu0 0.0
        %9413 = vmatpush2.msra.mxu0 0.0
        %9414 = vmatprep.subr.mxu0 0.0
        %9415 = vmatpush2.msra.mxu0 0.0
        %9416 = vmatprep.subr.mxu0 0.0
        %9417 = vmatpush2.msra.mxu0 0.0
        %9418 = vmatprep.subr.mxu0 0.0
        %9419 = vmatpush2.msra.mxu0 0.0
        %9420 = vmatprep.subr.mxu0 0.0
        %9421 = vmatpush2.msra.mxu0 0.0
        %9422 = vmatprep.subr.mxu0 0.0
        %9423 = vmatpush2.msra.mxu0 0.0
        %9424 = vmatprep.subr.mxu0 0.0
        %9425 = vmatpush2.msra.mxu0 0.0
        %9426 = vmatprep.subr.mxu0 0.0
        %9427 = vmatpush2.msra.mxu0 0.0
        %9428 = vmatprep.subr.mxu0 0.0
        %9429 = vmatpush2.msra.mxu0 0.0
        %9430 = vmatprep.subr.mxu0 0.0
        %9431 = vmatpush2.msra.mxu0 0.0
        %9432 = vmatprep.subr.mxu0 0.0
        %9433 = vmatpush2.msra.mxu0 0.0
        %9434 = vmatprep.subr.mxu0 0.0
        %9435 = vmatpush2.msra.mxu0 0.0
        %9436 = vmatprep.subr.mxu0 0.0
        %v9437 = vand.u32 %v5687, 4294901760
        %v9438 = vsub.f32 %v5687, %v9437
        %9439 = vmatpush2.msra.mxu0 %v9438
        %9440 = vmatprep.subr.mxu0 0.0
        %v9441 = vand.u32 %v5680, 4294901760
        %v9442 = vsub.f32 %v5680, %v9441
        %9443 = vmatpush2.msra.mxu0 %v9442
        %v9444 = vand.u32 %v5689, 4294901760
        %v9445 = vsub.f32 %v5689, %v9444
        %9446 = vmatprep.mubr.f32.mxu0 %v9445
        %v9447 = vand.u32 %v5554, 4294901760
        %v9448 = vsub.f32 %v5554, %v9447
        %9449 = vmatmul.mubr.f32.gmra.mxu0 %v9448
        %v9450 = vpop.f32.mrf.mxu0
        %v9451 = vadd.f32 %v9320, %v9450
        %v9452 = vpop.f32.mrf.mxu0
        %v9453 = vand.u32 %v5692, 4294901760
        %v9454 = vsub.f32 %v5692, %v9453
        %9455 = vmatprep.mubr.f32.mxu0 %v9454
        %v9456 = vand.u32 %v5556, 4294901760
        %v9457 = vsub.f32 %v5556, %v9456
        %9458 = vmatmul.mubr.f32.gmra.mxu0 %v9457
        %v9459 = vpop.f32.mrf.mxu0
        %v9460 = vadd.f32 %v9327, %v9459
        %v9461 = vpop.f32.mrf.mxu0
        %v9462 = vand.u32 %v5695, 4294901760
        %v9463 = vsub.f32 %v5695, %v9462
        %9464 = vmatprep.mubr.f32.mxu0 %v9463
        %v9465 = vand.u32 %v5558, 4294901760
        %v9466 = vsub.f32 %v5558, %v9465
        %9467 = vmatmul.mubr.f32.gmra.mxu0 %v9466
        %v9468 = vpop.f32.mrf.mxu0
        %v9469 = vadd.f32 %v9334, %v9468
        %v9470 = vpop.f32.mrf.mxu0
        %v9471 = vand.u32 %v5698, 4294901760
        %v9472 = vsub.f32 %v5698, %v9471
        %9473 = vmatprep.mubr.f32.mxu0 %v9472
        %v9474 = vand.u32 %v5560, 4294901760
        %v9475 = vsub.f32 %v5560, %v9474
        %9476 = vmatmul.mubr.f32.gmra.mxu0 %v9475
        %v9477 = vpop.f32.mrf.mxu0
        %v9478 = vadd.f32 %v9341, %v9477
        %v9479 = vpop.f32.mrf.mxu0
        %9480 = vdwg.mxu0
        %9481 = vmatprep.subr.mxu0 0.0
        %v9482 = vand.u32 %v5673, 4294901760
        %9483 = vmatpush1.msra.mxu0 %v9482
        %9484 = vmatprep.subr.mxu0 0.0
        %v9485 = vand.u32 %v5666, 4294901760
        %9486 = vmatpush1.msra.mxu0 %v9485
        %9487 = vmatprep.subr.mxu0 0.0
        %v9488 = vand.u32 %v5659, 4294901760
        %9489 = vmatpush1.msra.mxu0 %v9488
        %9490 = vmatprep.subr.mxu0 0.0
        %v9491 = vand.u32 %v5652, 4294901760
        %9492 = vmatpush1.msra.mxu0 %v9491
        %9493 = vmatprep.subr.mxu0 0.0
        %v9494 = vand.u32 %v5645, 4294901760
        %9495 = vmatpush1.msra.mxu0 %v9494
        %9496 = vmatprep.subr.mxu0 0.0
        %v9497 = vand.u32 %v5638, 4294901760
        %9498 = vmatpush1.msra.mxu0 %v9497
        %9499 = vmatprep.subr.mxu0 0.0
        %v9500 = vand.u32 %v5631, 4294901760
        %9501 = vmatpush1.msra.mxu0 %v9500
        %9502 = vmatprep.subr.mxu0 0.0
        %v9503 = vand.u32 %v5624, 4294901760
        %9504 = vmatpush1.msra.mxu0 %v9503
        %9505 = vmatprep.subr.mxu0 0.0
        %v9506 = vand.u32 %v5617, 4294901760
        %9507 = vmatpush1.msra.mxu0 %v9506
        %9508 = vmatprep.subr.mxu0 0.0
        %v9509 = vand.u32 %v5610, 4294901760
        %9510 = vmatpush1.msra.mxu0 %v9509
        %9511 = vmatprep.subr.mxu0 0.0
        %v9512 = vand.u32 %v5603, 4294901760
        %9513 = vmatpush1.msra.mxu0 %v9512
        %9514 = vmatprep.subr.mxu0 0.0
        %v9515 = vand.u32 %v5596, 4294901760
        %9516 = vmatpush1.msra.mxu0 %v9515
        %9517 = vmatprep.subr.mxu0 0.0
        %v9518 = vand.u32 %v5589, 4294901760
        %9519 = vmatpush1.msra.mxu0 %v9518
        %9520 = vmatprep.subr.mxu0 0.0
        %v9521 = vand.u32 %v5582, 4294901760
        %9522 = vmatpush1.msra.mxu0 %v9521
        %9523 = vmatprep.subr.mxu0 0.0
        %v9524 = vand.u32 %v5575, 4294901760
        %9525 = vmatpush1.msra.mxu0 %v9524
        %9526 = vmatprep.subr.mxu0 0.0
        %v9527 = vand.u32 %v5568, 4294901760
        %9528 = vmatpush1.msra.mxu0 %v9527
        %9529 = vmatprep.subr.mxu0 0.0
        %9530 = vmatpush2.msra.mxu0 0.0
        %9531 = vmatprep.subr.mxu0 0.0
        %9532 = vmatpush2.msra.mxu0 0.0
        %9533 = vmatprep.subr.mxu0 0.0
        %9534 = vmatpush2.msra.mxu0 0.0
        %9535 = vmatprep.subr.mxu0 0.0
        %9536 = vmatpush2.msra.mxu0 0.0
        %9537 = vmatprep.subr.mxu0 0.0
        %9538 = vmatpush2.msra.mxu0 0.0
        %9539 = vmatprep.subr.mxu0 0.0
        %9540 = vmatpush2.msra.mxu0 0.0
        %9541 = vmatprep.subr.mxu0 0.0
        %9542 = vmatpush2.msra.mxu0 0.0
        %9543 = vmatprep.subr.mxu0 0.0
        %9544 = vmatpush2.msra.mxu0 0.0
        %9545 = vmatprep.subr.mxu0 0.0
        %9546 = vmatpush2.msra.mxu0 0.0
        %9547 = vmatprep.subr.mxu0 0.0
        %9548 = vmatpush2.msra.mxu0 0.0
        %9549 = vmatprep.subr.mxu0 0.0
        %9550 = vmatpush2.msra.mxu0 0.0
        %9551 = vmatprep.subr.mxu0 0.0
        %9552 = vmatpush2.msra.mxu0 0.0
        %9553 = vmatprep.subr.mxu0 0.0
        %9554 = vmatpush2.msra.mxu0 0.0
        %9555 = vmatprep.subr.mxu0 0.0
        %9556 = vmatpush2.msra.mxu0 0.0
        %9557 = vmatprep.subr.mxu0 0.0
        %v9558 = vand.u32 %v5687, 4294901760
        %9559 = vmatpush2.msra.mxu0 %v9558
        %9560 = vmatprep.subr.mxu0 0.0
        %v9561 = vand.u32 %v5680, 4294901760
        %9562 = vmatpush2.msra.mxu0 %v9561
        %v9563 = vand.u32 %v5689, 4294901760
        %v9564 = vsub.f32 %v5689, %v9563
        %v9565 = vand.u32 %v9564, 4294901760
        %9566 = vmatprep.mubr.f32.mxu0 %v9565
        %v9567 = vand.u32 %v5554, 4294901760
        %v9568 = vsub.f32 %v5554, %v9567
        %v9569 = vand.u32 %v9568, 4294901760
        %9570 = vmatmul.mubr.f32.gmra.mxu0 %v9569
        %v9571 = vpop.f32.mrf.mxu0
        %v9572 = vadd.f32 %v9451, %v9571
        %v9573 = vpop.f32.mrf.mxu0
        %v9574 = vand.u32 %v5692, 4294901760
        %v9575 = vsub.f32 %v5692, %v9574
        %v9576 = vand.u32 %v9575, 4294901760
        %9577 = vmatprep.mubr.f32.mxu0 %v9576
        %v9578 = vand.u32 %v5556, 4294901760
        %v9579 = vsub.f32 %v5556, %v9578
        %v9580 = vand.u32 %v9579, 4294901760
        %9581 = vmatmul.mubr.f32.gmra.mxu0 %v9580
        %v9582 = vpop.f32.mrf.mxu0
        %v9583 = vadd.f32 %v9460, %v9582
        %v9584 = vpop.f32.mrf.mxu0
        %v9585 = vand.u32 %v5695, 4294901760
        %v9586 = vsub.f32 %v5695, %v9585
        %v9587 = vand.u32 %v9586, 4294901760
        %9588 = vmatprep.mubr.f32.mxu0 %v9587
        %v9589 = vand.u32 %v5558, 4294901760
        %v9590 = vsub.f32 %v5558, %v9589
        %v9591 = vand.u32 %v9590, 4294901760
        %9592 = vmatmul.mubr.f32.gmra.mxu0 %v9591
        %v9593 = vpop.f32.mrf.mxu0
        %v9594 = vadd.f32 %v9469, %v9593
        %v9595 = vpop.f32.mrf.mxu0
        %v9596 = vand.u32 %v5698, 4294901760
        %v9597 = vsub.f32 %v5698, %v9596
        %v9598 = vand.u32 %v9597, 4294901760
        %9599 = vmatprep.mubr.f32.mxu0 %v9598
        %v9600 = vand.u32 %v5560, 4294901760
        %v9601 = vsub.f32 %v5560, %v9600
        %v9602 = vand.u32 %v9601, 4294901760
        %9603 = vmatmul.mubr.f32.gmra.mxu0 %v9602
        %v9604 = vpop.f32.mrf.mxu0
        %v9605 = vadd.f32 %v9478, %v9604
        %v9606 = vpop.f32.mrf.mxu0
        %9607 = vdwg.mxu0
        %9608 = vmatprep.subr.mxu0 0.0
        %v9609 = vand.u32 %v5673, 4294901760
        %v9610 = vsub.f32 %v5673, %v9609
        %v9611 = vand.u32 %v9610, 4294901760
        %9612 = vmatpush1.msra.mxu0 %v9611
        %9613 = vmatprep.subr.mxu0 0.0
        %v9614 = vand.u32 %v5666, 4294901760
        %v9615 = vsub.f32 %v5666, %v9614
        %v9616 = vand.u32 %v9615, 4294901760
        %9617 = vmatpush1.msra.mxu0 %v9616
        %9618 = vmatprep.subr.mxu0 0.0
        %v9619 = vand.u32 %v5659, 4294901760
        %v9620 = vsub.f32 %v5659, %v9619
        %v9621 = vand.u32 %v9620, 4294901760
        %9622 = vmatpush1.msra.mxu0 %v9621
        %9623 = vmatprep.subr.mxu0 0.0
        %v9624 = vand.u32 %v5652, 4294901760
        %v9625 = vsub.f32 %v5652, %v9624
        %v9626 = vand.u32 %v9625, 4294901760
        %9627 = vmatpush1.msra.mxu0 %v9626
        %9628 = vmatprep.subr.mxu0 0.0
        %v9629 = vand.u32 %v5645, 4294901760
        %v9630 = vsub.f32 %v5645, %v9629
        %v9631 = vand.u32 %v9630, 4294901760
        %9632 = vmatpush1.msra.mxu0 %v9631
        %9633 = vmatprep.subr.mxu0 0.0
        %v9634 = vand.u32 %v5638, 4294901760
        %v9635 = vsub.f32 %v5638, %v9634
        %v9636 = vand.u32 %v9635, 4294901760
        %9637 = vmatpush1.msra.mxu0 %v9636
        %9638 = vmatprep.subr.mxu0 0.0
        %v9639 = vand.u32 %v5631, 4294901760
        %v9640 = vsub.f32 %v5631, %v9639
        %v9641 = vand.u32 %v9640, 4294901760
        %9642 = vmatpush1.msra.mxu0 %v9641
        %9643 = vmatprep.subr.mxu0 0.0
        %v9644 = vand.u32 %v5624, 4294901760
        %v9645 = vsub.f32 %v5624, %v9644
        %v9646 = vand.u32 %v9645, 4294901760
        %9647 = vmatpush1.msra.mxu0 %v9646
        %9648 = vmatprep.subr.mxu0 0.0
        %v9649 = vand.u32 %v5617, 4294901760
        %v9650 = vsub.f32 %v5617, %v9649
        %v9651 = vand.u32 %v9650, 4294901760
        %9652 = vmatpush1.msra.mxu0 %v9651
        %9653 = vmatprep.subr.mxu0 0.0
        %v9654 = vand.u32 %v5610, 4294901760
        %v9655 = vsub.f32 %v5610, %v9654
        %v9656 = vand.u32 %v9655, 4294901760
        %9657 = vmatpush1.msra.mxu0 %v9656
        %9658 = vmatprep.subr.mxu0 0.0
        %v9659 = vand.u32 %v5603, 4294901760
        %v9660 = vsub.f32 %v5603, %v9659
        %v9661 = vand.u32 %v9660, 4294901760
        %9662 = vmatpush1.msra.mxu0 %v9661
        %9663 = vmatprep.subr.mxu0 0.0
        %v9664 = vand.u32 %v5596, 4294901760
        %v9665 = vsub.f32 %v5596, %v9664
        %v9666 = vand.u32 %v9665, 4294901760
        %9667 = vmatpush1.msra.mxu0 %v9666
        %9668 = vmatprep.subr.mxu0 0.0
        %v9669 = vand.u32 %v5589, 4294901760
        %v9670 = vsub.f32 %v5589, %v9669
        %v9671 = vand.u32 %v9670, 4294901760
        %9672 = vmatpush1.msra.mxu0 %v9671
        %9673 = vmatprep.subr.mxu0 0.0
        %v9674 = vand.u32 %v5582, 4294901760
        %v9675 = vsub.f32 %v5582, %v9674
        %v9676 = vand.u32 %v9675, 4294901760
        %9677 = vmatpush1.msra.mxu0 %v9676
        %9678 = vmatprep.subr.mxu0 0.0
        %v9679 = vand.u32 %v5575, 4294901760
        %v9680 = vsub.f32 %v5575, %v9679
        %v9681 = vand.u32 %v9680, 4294901760
        %9682 = vmatpush1.msra.mxu0 %v9681
        %9683 = vmatprep.subr.mxu0 0.0
        %v9684 = vand.u32 %v5568, 4294901760
        %v9685 = vsub.f32 %v5568, %v9684
        %v9686 = vand.u32 %v9685, 4294901760
        %9687 = vmatpush1.msra.mxu0 %v9686
        %9688 = vmatprep.subr.mxu0 0.0
        %9689 = vmatpush2.msra.mxu0 0.0
        %9690 = vmatprep.subr.mxu0 0.0
        %9691 = vmatpush2.msra.mxu0 0.0
        %9692 = vmatprep.subr.mxu0 0.0
        %9693 = vmatpush2.msra.mxu0 0.0
        %9694 = vmatprep.subr.mxu0 0.0
        %9695 = vmatpush2.msra.mxu0 0.0
        %9696 = vmatprep.subr.mxu0 0.0
        %9697 = vmatpush2.msra.mxu0 0.0
        %9698 = vmatprep.subr.mxu0 0.0
        %9699 = vmatpush2.msra.mxu0 0.0
        %9700 = vmatprep.subr.mxu0 0.0
        %9701 = vmatpush2.msra.mxu0 0.0
        %9702 = vmatprep.subr.mxu0 0.0
        %9703 = vmatpush2.msra.mxu0 0.0
        %9704 = vmatprep.subr.mxu0 0.0
        %9705 = vmatpush2.msra.mxu0 0.0
        %9706 = vmatprep.subr.mxu0 0.0
        %9707 = vmatpush2.msra.mxu0 0.0
        %9708 = vmatprep.subr.mxu0 0.0
        %9709 = vmatpush2.msra.mxu0 0.0
        %9710 = vmatprep.subr.mxu0 0.0
        %9711 = vmatpush2.msra.mxu0 0.0
        %9712 = vmatprep.subr.mxu0 0.0
        %9713 = vmatpush2.msra.mxu0 0.0
        %9714 = vmatprep.subr.mxu0 0.0
        %9715 = vmatpush2.msra.mxu0 0.0
        %9716 = vmatprep.subr.mxu0 0.0
        %v9717 = vand.u32 %v5687, 4294901760
        %v9718 = vsub.f32 %v5687, %v9717
        %v9719 = vand.u32 %v9718, 4294901760
        %9720 = vmatpush2.msra.mxu0 %v9719
        %9721 = vmatprep.subr.mxu0 0.0
        %v9722 = vand.u32 %v5680, 4294901760
        %v9723 = vsub.f32 %v5680, %v9722
        %v9724 = vand.u32 %v9723, 4294901760
        %9725 = vmatpush2.msra.mxu0 %v9724
        %v9726 = vand.u32 %v5689, 4294901760
        %9727 = vmatprep.mubr.f32.mxu0 %v9726
        %v9728 = vand.u32 %v5554, 4294901760
        %9729 = vmatmul.mubr.f32.gmra.mxu0 %v9728
        %v9730 = vpop.f32.mrf.mxu0
        %v9731 = vadd.f32 %v9572, %v9730
        %v9732 = vpop.f32.mrf.mxu0
        %v9733 = vand.u32 %v5692, 4294901760
        %9734 = vmatprep.mubr.f32.mxu0 %v9733
        %v9735 = vand.u32 %v5556, 4294901760
        %9736 = vmatmul.mubr.f32.gmra.mxu0 %v9735
        %v9737 = vpop.f32.mrf.mxu0
        %v9738 = vadd.f32 %v9583, %v9737
        %v9739 = vpop.f32.mrf.mxu0
        %v9740 = vand.u32 %v5695, 4294901760
        %9741 = vmatprep.mubr.f32.mxu0 %v9740
        %v9742 = vand.u32 %v5558, 4294901760
        %9743 = vmatmul.mubr.f32.gmra.mxu0 %v9742
        %v9744 = vpop.f32.mrf.mxu0
        %v9745 = vadd.f32 %v9594, %v9744
        %v9746 = vpop.f32.mrf.mxu0
        %v9747 = vand.u32 %v5698, 4294901760
        %9748 = vmatprep.mubr.f32.mxu0 %v9747
        %v9749 = vand.u32 %v5560, 4294901760
        %9750 = vmatmul.mubr.f32.gmra.mxu0 %v9749
        %v9751 = vpop.f32.mrf.mxu0
        %v9752 = vadd.f32 %v9605, %v9751
        %v9753 = vpop.f32.mrf.mxu0
        %9754 = vdwg.mxu0
        %9755 = vmatprep.subr.mxu0 0.0
        %v9756 = vand.u32 %v5673, 4294901760
        %9757 = vmatpush1.msra.mxu0 %v9756
        %9758 = vmatprep.subr.mxu0 0.0
        %v9759 = vand.u32 %v5666, 4294901760
        %9760 = vmatpush1.msra.mxu0 %v9759
        %9761 = vmatprep.subr.mxu0 0.0
        %v9762 = vand.u32 %v5659, 4294901760
        %9763 = vmatpush1.msra.mxu0 %v9762
        %9764 = vmatprep.subr.mxu0 0.0
        %v9765 = vand.u32 %v5652, 4294901760
        %9766 = vmatpush1.msra.mxu0 %v9765
        %9767 = vmatprep.subr.mxu0 0.0
        %v9768 = vand.u32 %v5645, 4294901760
        %9769 = vmatpush1.msra.mxu0 %v9768
        %9770 = vmatprep.subr.mxu0 0.0
        %v9771 = vand.u32 %v5638, 4294901760
        %9772 = vmatpush1.msra.mxu0 %v9771
        %9773 = vmatprep.subr.mxu0 0.0
        %v9774 = vand.u32 %v5631, 4294901760
        %9775 = vmatpush1.msra.mxu0 %v9774
        %9776 = vmatprep.subr.mxu0 0.0
        %v9777 = vand.u32 %v5624, 4294901760
        %9778 = vmatpush1.msra.mxu0 %v9777
        %9779 = vmatprep.subr.mxu0 0.0
        %v9780 = vand.u32 %v5617, 4294901760
        %9781 = vmatpush1.msra.mxu0 %v9780
        %9782 = vmatprep.subr.mxu0 0.0
        %v9783 = vand.u32 %v5610, 4294901760
        %9784 = vmatpush1.msra.mxu0 %v9783
        %9785 = vmatprep.subr.mxu0 0.0
        %v9786 = vand.u32 %v5603, 4294901760
        %9787 = vmatpush1.msra.mxu0 %v9786
        %9788 = vmatprep.subr.mxu0 0.0
        %v9789 = vand.u32 %v5596, 4294901760
        %9790 = vmatpush1.msra.mxu0 %v9789
        %9791 = vmatprep.subr.mxu0 0.0
        %v9792 = vand.u32 %v5589, 4294901760
        %9793 = vmatpush1.msra.mxu0 %v9792
        %9794 = vmatprep.subr.mxu0 0.0
        %v9795 = vand.u32 %v5582, 4294901760
        %9796 = vmatpush1.msra.mxu0 %v9795
        %9797 = vmatprep.subr.mxu0 0.0
        %v9798 = vand.u32 %v5575, 4294901760
        %9799 = vmatpush1.msra.mxu0 %v9798
        %9800 = vmatprep.subr.mxu0 0.0
        %v9801 = vand.u32 %v5568, 4294901760
        %9802 = vmatpush1.msra.mxu0 %v9801
        %9803 = vmatprep.subr.mxu0 0.0
        %9804 = vmatpush2.msra.mxu0 0.0
        %9805 = vmatprep.subr.mxu0 0.0
        %9806 = vmatpush2.msra.mxu0 0.0
        %9807 = vmatprep.subr.mxu0 0.0
        %9808 = vmatpush2.msra.mxu0 0.0
        %9809 = vmatprep.subr.mxu0 0.0
        %9810 = vmatpush2.msra.mxu0 0.0
        %9811 = vmatprep.subr.mxu0 0.0
        %9812 = vmatpush2.msra.mxu0 0.0
        %9813 = vmatprep.subr.mxu0 0.0
        %9814 = vmatpush2.msra.mxu0 0.0
        %9815 = vmatprep.subr.mxu0 0.0
        %9816 = vmatpush2.msra.mxu0 0.0
        %9817 = vmatprep.subr.mxu0 0.0
        %9818 = vmatpush2.msra.mxu0 0.0
        %9819 = vmatprep.subr.mxu0 0.0
        %9820 = vmatpush2.msra.mxu0 0.0
        %9821 = vmatprep.subr.mxu0 0.0
        %9822 = vmatpush2.msra.mxu0 0.0
        %9823 = vmatprep.subr.mxu0 0.0
        %9824 = vmatpush2.msra.mxu0 0.0
        %9825 = vmatprep.subr.mxu0 0.0
        %9826 = vmatpush2.msra.mxu0 0.0
        %9827 = vmatprep.subr.mxu0 0.0
        %9828 = vmatpush2.msra.mxu0 0.0
        %9829 = vmatprep.subr.mxu0 0.0
        %9830 = vmatpush2.msra.mxu0 0.0
        %9831 = vmatprep.subr.mxu0 0.0
        %v9832 = vand.u32 %v5687, 4294901760
        %9833 = vmatpush2.msra.mxu0 %v9832
        %9834 = vmatprep.subr.mxu0 0.0
        %v9835 = vand.u32 %v5680, 4294901760
        %9836 = vmatpush2.msra.mxu0 %v9835
        %v9837 = vand.u32 %v5689, 4294901760
        %9838 = vmatprep.mubr.f32.mxu0 %v9837
        %v9839 = vand.u32 %v5554, 4294901760
        %9840 = vmatmul.mubr.f32.gmra.mxu0 %v9839
        %v9841 = vpop.f32.mrf.mxu0
        %v9842 = vadd.f32 %v9731, %v9841
        %v9843 = vpop.f32.mrf.mxu0
        %v9844 = vand.u32 %v5692, 4294901760
        %9845 = vmatprep.mubr.f32.mxu0 %v9844
        %v9846 = vand.u32 %v5556, 4294901760
        %9847 = vmatmul.mubr.f32.gmra.mxu0 %v9846
        %v9848 = vpop.f32.mrf.mxu0
        %v9849 = vadd.f32 %v9738, %v9848
        %v9850 = vpop.f32.mrf.mxu0
        %v9851 = vand.u32 %v5695, 4294901760
        %9852 = vmatprep.mubr.f32.mxu0 %v9851
        %v9853 = vand.u32 %v5558, 4294901760
        %9854 = vmatmul.mubr.f32.gmra.mxu0 %v9853
        %v9855 = vpop.f32.mrf.mxu0
        %v9856 = vadd.f32 %v9745, %v9855
        %v9857 = vpop.f32.mrf.mxu0
        %v9858 = vand.u32 %v5698, 4294901760
        %9859 = vmatprep.mubr.f32.mxu0 %v9858
        %v9860 = vand.u32 %v5560, 4294901760
        %9861 = vmatmul.mubr.f32.gmra.mxu0 %v9860
        %v9862 = vpop.f32.mrf.mxu0
        %v9863 = vadd.f32 %v9752, %v9862
        %v9864 = vpop.f32.mrf.mxu0
        %9865 = vdwg.mxu0
        %9866 = vst [vmem:[%s200 + $0xe0] sm:$0xff] %v6778
        %9867 = vst [vmem:[%s200 + $0xe8] sm:$0xff] %v6780
        %9868 = vst [vmem:[%s200 + $0xf0] sm:$0xff] %v7884
        %9869 = vst [vmem:[%s200 + $0xf8] sm:$0xff] %v7886
        %9870 = vst [vmem:[%s200 + $0x100] sm:$0xff] %v8990
        %9871 = vst [vmem:[%s200 + $0x108] sm:$0xff] %v8992
        %9872 = vst [vmem:[%s200 + $0x110] sm:$0xff] %v9842
        %9873 = vst [vmem:[%s200 + $0x118] sm:$0xff] %v6786
        %9874 = vst [vmem:[%s200 + $0x120] sm:$0xff] %v6788
        %9875 = vst [vmem:[%s200 + $0x128] sm:$0xff] %v7892
        %9876 = vst [vmem:[%s200 + $0x130] sm:$0xff] %v7894
        %9877 = vst [vmem:[%s200 + $0x138] sm:$0xff] %v8998
        %9878 = vst [vmem:[%s200 + $0x140] sm:$0xff] %v9000
        %9879 = vst [vmem:[%s200 + $0x148] sm:$0xff] %v9849
        %9880 = vst [vmem:[%s200 + $0x150] sm:$0xff] %v6794
        %9881 = vst [vmem:[%s200 + $0x158] sm:$0xff] %v6796
        %9882 = vst [vmem:[%s200 + $0x160] sm:$0xff] %v7900
        %9883 = vst [vmem:[%s200 + $0x168] sm:$0xff] %v7902
        %9884 = vst [vmem:[%s200 + $0x170] sm:$0xff] %v9006
        %9885 = vst [vmem:[%s200 + $0x178] sm:$0xff] %v9008
        %9886 = vst [vmem:[%s200 + $0x180] sm:$0xff] %v9856
        %9887 = vst [vmem:[%s200 + $0x188] sm:$0xff] %v6802
        %9888 = vst [vmem:[%s200 + $0x190] sm:$0xff] %v6804
        %9889 = vst [vmem:[%s200 + $0x198] sm:$0xff] %v7908
        %9890 = vst [vmem:[%s200 + $0x1a0] sm:$0xff] %v7910
        %9891 = vst [vmem:[%s200 + $0x1a8] sm:$0xff] %v9014
        %9892 = vst [vmem:[%s200 + $0x1b0] sm:$0xff] %v9016
        %9893 = vst [vmem:[%s200 + $0x1b8] sm:$0xff] %v9863
        %p9894 = scmp.lt.s32.totalorder %s16, 1
        %s9895 = scalar_select %p9894, %s16, 1
        %s9896 = smul.addr %s9895, 56
        %s9897 = smul.addr %s9896, 8
        %s9898 = scalar_lea.vmem %s3, %s9897
        // Predicated region
        $region41: #{upconv_block_forward.1} parent=31 // pred_check
          %p9899 = pneg %p102
        $region42: #{upconv_block_forward.1} parent=31 // pred_check_branch
          %9901 = sbr.rel (%p9899) target = $region44
        $region43: #{upconv_block_forward.1} parent=31 // pred_region
          _
        $region44: #{upconv_block_forward.1} parent=31 // pred_fallthru
          _
      $region32: #{upconv_block_forward.1} parent=5 // pred_fallthru
        _
      %p9902 = scmp.le.s32.totalorder 2, %s11
      // Predicated region
      $region45: #{upconv_block_forward.1} parent=5 // pred_check
        %p9903 = pneg %p9902
      $region46: #{upconv_block_forward.1} parent=5 // pred_check_branch
        %9905 = sbr.rel (%p9903) target = $region48
      $region47: #{upconv_block_forward.1} parent=5 // pred_region
        %s9906 = ssub.s32 %s11, 2
        // Predicated region
        $region49: #{upconv_block_forward.1} parent=47 // pred_check
          %p9907 = pneg %p108
        $region50: #{upconv_block_forward.1} parent=47 // pred_check_branch
          %9909 = sbr.rel (%p9907) target = $region52
        $region51: #{upconv_block_forward.1} parent=47 // pred_region
          %p9910 = scmp.lt.s32.totalorder %s17, 1
          %s9911 = scalar_select %p9910, %s17, 1
          %s9912 = smul.addr %s9911, 56
          %s9913 = smul.addr %s9912, 8
          %s9914 = scalar_lea.vmem %s3, %s9913
        $region52: #{upconv_block_forward.1} parent=47 // pred_fallthru
          _
      $region48: #{upconv_block_forward.1} parent=5 // pred_fallthru
        _
    $region6: #{upconv_block_forward.1} parent=1 // loop_footer
      %s15 = sadd.s32 1, %s11
    $region7: #{upconv_block_forward.1} parent=1 // loop_footer_branch
      %10 = sbr.rel target = $region3
    $region8: #{upconv_block_forward.1} parent=1 // loop_exit
      _
    %9915 = vsyncpa [#allocation4], 1
    %s9916 = scalar_lea.sflag [#allocation4], 1
    %9917 = vsyncpa %s9916, 1
    %9918 = vsyncpa [#allocation6], 1

</llo_original>
